<compile_context>
chip_gen: v5e
topology: v5e:2x2
jax: 0.10.0
libtpu: 0.0.40
codegen_flags: <defaults>
</compile_context>

<pallas_src>
import math

import jax
import jax.numpy as jnp
import numpy as np
from jax.experimental import pallas as pl
from jax.experimental.pallas import tpu as pltpu

# ----------------------------- configuration --------------------------------
LAYERS = 2
HIDDEN = 32                 # hidden_dim
FFN = 64                    # ffn_size
HEADS = 2
IMG = (8, 8)                # img_dim
SLEN = IMG[0] * IMG[1]      # number of patches
DK = HIDDEN // HEADS        # per-head key dim
VDIM = 2 * HIDDEN           # double_v_dim=True
DV = VDIM // HEADS          # per-head value dim
EPS = 1e-5

# contraction on the last dim of both operands (A @ B.T on the MXU)
NT_DIMS = (((1,), (1,)), ((), ()))


# ------------------------------ in-kernel math -------------------------------
def _erf(x):
    # Abramowitz & Stegun 7.1.26 (|err| < 1.5e-7) — exact-erf GELU surrogate built
    # only from Mosaic-supported elementwise ops (abs/exp/where/mul/add), f32.
    a1, a2, a3, a4, a5 = 0.254829592, -0.284496736, 1.421413741, -1.453152027, 1.061405429
    p = 0.3275911
    ax = jnp.abs(x)
    t = 1.0 / (1.0 + p * ax)
    poly = ((((a5 * t + a4) * t + a3) * t + a2) * t + a1) * t
    y = 1.0 - poly * jnp.exp(-ax * ax)
    return jnp.where(x >= 0, y, -y)


def _gelu_exact(x):
    # nn.GELU() default (erf form).
    return 0.5 * x * (1.0 + _erf(x * (1.0 / math.sqrt(2.0))))


def _make_kernel(tb):
    n_rows = tb * SLEN

    def kernel(x_ref, trig_ref, maskp_ref, bsum_ref, gavg_ref, kmask_ref, vmask_ref,
               wa_ref, wb_ref, w1_ref, b32_ref, b64_ref, o_ref):
        f32 = jnp.float32
        bf16 = jnp.bfloat16

        x = x_ref[...]                           # (TB*SLEN, HIDDEN) f32, resident across layers

        for l in range(LAYERS):                  # static unroll: no HBM round-trip between layers
            bv32 = b32_ref[l]                    # (5, 32): ln1_w, ln1_b, ln2_w, ln2_b, b2
            bv64 = b64_ref[l]                    # (3, 64): gn_w, gn_b, b1

            # ---------------- LayerNorm 1 (position-wise, whole TB slab) ----------------
            mu = jnp.mean(x, axis=-1, keepdims=True)
            var = jnp.mean((x - mu) ** 2, axis=-1, keepdims=True)
            xn = (x - mu) * jax.lax.rsqrt(var + EPS) * bv32[0:1] + bv32[1:2]
            xn_bf = xn.astype(bf16)

            # ---------------- fused projections: two 128-lane MXU matmuls ----------------
            # pj lanes: [q | k*dk^-0.5 | rot(q) | rot(k*dk^-0.5)];  pg lanes: [v | g]
            pj = jnp.dot(xn_bf, wa_ref[2 * l], preferred_element_type=f32)      # (N, 128)
            pg = jnp.dot(xn_bf, wa_ref[2 * l + 1], preferred_element_type=f32)  # (N, 128)

            # xpos theta_shift as two full-width VPU FMAs (cos/sin pre-tiled to 64 lanes, TB rows)
            shifted = (pj[:, 0:2 * HIDDEN] * trig_ref[0]
                       + pj[:, 2 * HIDDEN:4 * HIDDEN] * trig_ref[1])            # (N, 64) = [qr | kr]
            qr = shifted[:, 0:HIDDEN]
            kr = shifted[:, HIDDEN:2 * HIDDEN]
            v = pg[:, 0:VDIM]
            g = pg[:, VDIM:2 * VDIM]

            # ---------------- retention: per batch element, heads packed along lanes ----------------
            outs = []
            for b in range(tb):                  # TB is small & static -> unrolled (static slices)
                r0 = b * SLEN
                qr_b = qr[r0:r0 + SLEN]          # (S, HIDDEN)
                kr_b = kr[r0:r0 + SLEN]
                v_b = v[r0:r0 + SLEN]            # (S, VDIM)

                # block-diagonal K / V stacks (sublane concat + precomputed head-lane masks)
                kst = (jnp.concatenate([kr_b] * HEADS, axis=0) * kmask_ref[...]).astype(bf16)
                vst = (jnp.concatenate([v_b] * HEADS, axis=0) * vmask_ref[...]).astype(bf16)

                # qk[:, h*S+j] = q_h[i] . k_h[j] — one 128-lane-wide NT matmul
                qk = jax.lax.dot_general(qr_b.astype(bf16), kst, NT_DIMS,
                                         preferred_element_type=f32)            # (S, H*S)
                qkm = qk * maskp_ref[...]        # per-head manhattan decay mask (f32, VPU)

                # torchscale parallel form: per-head sum-of-abs, clamp(min=1), exact divide.
                den = jnp.dot(jnp.abs(qkm).astype(bf16), bsum_ref[...],
                              preferred_element_type=f32)                       # (S, H*S) bcast per head
                qkn = qkm / jnp.maximum(den, 1.0)

                # context: heads come out already concatenated along VDIM
                ctx = jnp.dot(qkn.astype(bf16), vst, preferred_element_type=f32)  # (S, VDIM)

                # GroupNorm(heads, VDIM) statistics via block-diagonal averaging matmul
                mean_b = jnp.dot(ctx.astype(bf16), gavg_ref[...], preferred_element_type=f32)
                cc = ctx - mean_b
                var_b = jnp.dot((cc * cc).astype(bf16), gavg_ref[...], preferred_element_type=f32)
                outs.append(cc * jax.lax.rsqrt(var_b + EPS))

            y_ret = jnp.concatenate(outs, axis=0) if tb > 1 else outs[0]        # (N, VDIM)
            y_ret = y_ret * bv64[0:1] + bv64[1:2]                               # GroupNorm affine
            gate = g * jax.nn.sigmoid(g)                                        # swish gate
            y = jnp.dot((gate * y_ret).astype(bf16), wb_ref[2 * l],
                        preferred_element_type=f32) + x                         # out-proj + residual 1

            # ---------------- LayerNorm 2 + FFN (position-wise, whole TB slab) ----------------
            mu2 = jnp.mean(y, axis=-1, keepdims=True)
            var2 = jnp.mean((y - mu2) ** 2, axis=-1, keepdims=True)
            yn = (y - mu2) * jax.lax.rsqrt(var2 + EPS) * bv32[2:3] + bv32[3:4]
            h1 = _gelu_exact(jnp.dot(yn.astype(bf16), w1_ref[l],
                                     preferred_element_type=f32) + bv64[2:3])
            x = jnp.dot(h1.astype(bf16), wb_ref[2 * l + 1],
                        preferred_element_type=f32) + bv32[4:5] + y             # residual 2

        o_ref[...] = x.astype(o_ref.dtype)

    return kernel


# --------------------------- host-side constant prep --------------------------
def _rel_pos_np():
    # RetNet.get_rel_pos(manhattan=True), numpy (compile-time constants).
    angle = 1.0 / (10000.0 ** np.linspace(0.0, 1.0, DK // 2))
    angle = np.repeat(angle, 2)                                   # [a0,a0,a1,a1,...]
    decay = np.log(1.0 - 2.0 ** (-5.0 - np.arange(HEADS, dtype=np.float64)))
    idx = np.arange(SLEN, dtype=np.float64)
    sin = np.sin(idx[:, None] * angle[None, :])                   # (SLEN, DK)
    cos = np.cos(idx[:, None] * angle[None, :])
    rows = np.arange(SLEN, dtype=np.float64) // IMG[1]
    cols = np.arange(SLEN, dtype=np.float64) % IMG[1]
    mask = np.abs(rows[:, None] - rows[None, :]) + np.abs(cols[:, None] - cols[None, :])
    mask = ((mask - 1.0) / (IMG[0] + IMG[1] - 3)) ** 2 * (SLEN - 1) + 1.0
    np.fill_diagonal(mask, 0.0)
    mask = np.exp(mask[None, :, :] * decay[:, None, None])        # (HEADS, SLEN, SLEN)
    mask = mask / np.sqrt(mask.sum(axis=-1, keepdims=True))
    return sin, cos, mask


def _build_constants(tb):
    sin, cos, mask = _rel_pos_np()
    # cos/sin over HIDDEN lanes (per head), tiled to 64 lanes (for the packed [q|k] half)
    # and tiled TB times along sublanes so theta_shift is one FMA over the flat slab.
    cos2 = np.tile(np.tile(cos, (1, HEADS)), (tb, 2)).astype(np.float32)
    sin2 = np.tile(np.tile(sin, (1, HEADS)), (tb, 2)).astype(np.float32)
    trig = jnp.asarray(np.stack([cos2, sin2], axis=0))                          # (2, TB*S, 64) f32
    # decay masks packed along lanes: maskp[i, h*S+j] = mask[h, i, j]
    maskp = jnp.asarray(np.concatenate([mask[h] for h in range(HEADS)], axis=1),
                        dtype=jnp.float32)                                      # (S, H*S) f32
    # block-diagonal ones: per-head row-sum broadcast (matmul RHS -> bf16, exact 0/1)
    seg = np.arange(HEADS * SLEN) // SLEN
    bsum = jnp.asarray((seg[:, None] == seg[None, :]).astype(np.float32),
                       dtype=jnp.bfloat16)                                      # (H*S, H*S)
    # block-diagonal averaging matrix for per-head GroupNorm stats (1/32 exact in bf16)
    segv = np.arange(VDIM) // DV
    gavg = jnp.asarray((segv[:, None] == segv[None, :]).astype(np.float32) / DV,
                       dtype=jnp.bfloat16)                                      # (VDIM, VDIM)
    # per-head lane-selector masks for the block-diagonal K / V stacks (VPU use -> f32)
    lane_k = (np.arange(HIDDEN) // DK)[None, :]
    kmask = jnp.asarray(np.concatenate(
        [np.repeat((lane_k == h).astype(np.float32), SLEN, axis=0) for h in range(HEADS)], axis=0))
    lane_v = (np.arange(VDIM) // DV)[None, :]
    vmask = jnp.asarray(np.concatenate(
        [np.repeat((lane_v == h).astype(np.float32), SLEN, axis=0) for h in range(HEADS)], axis=0))
    return trig, maskp, bsum, gavg, kmask, vmask


# ------------------------------- host wrapper ---------------------------------
def _const_spec(a):
    zeros = (0,) * a.ndim
    return pl.BlockSpec(a.shape, lambda i, _z=zeros: _z)


def _choose_tb(batch):
    # Keep >= 2 grid steps when possible (v7x has 2 TensorCores); otherwise one batch per step.
    return batch // 2 if (batch % 2 == 0 and batch >= 4) else 1


def retnet_forward(x, weights):
    B = x.shape[0]
    tb = _choose_tb(B)
    n_rows = tb * SLEN
    consts = _build_constants(tb)
    wa, wb, w1, b32, b64 = weights
    xf = x.reshape(B * SLEN, HIDDEN)
    args = (xf,) + consts + (wa, wb, w1, b32, b64)
    in_specs = [pl.BlockSpec((n_rows, HIDDEN), lambda i: (i, 0))]
    in_specs += [_const_spec(a) for a in args[1:]]
    out = pl.pallas_call(
        _make_kernel(tb),
        out_shape=jax.ShapeDtypeStruct((B * SLEN, HIDDEN), x.dtype),
        grid=(B // tb,),
        in_specs=in_specs,
        out_specs=pl.BlockSpec((n_rows, HIDDEN), lambda i: (i, 0)),
        compiler_params=pltpu.CompilerParams(dimension_semantics=("parallel",)),
    )(*args)
    # incremental_state is None -> reshape to (B, img_h, img_w, hidden)
    return out.reshape(B, IMG[0], IMG[1], HIDDEN)
    # TODO(synk): forward_recurrent / forward_chunkwise (incremental decoding) not implemented.


# ------------------------------ parameter packing -----------------------------
def _rotate_every_two_cols(w):
    # columns (c0, c1, c2, c3, ...) -> (-c1, c0, -c3, c2, ...), so that
    # x @ rotate_cols(w) == rotate_every_two(x @ w)  (xpos theta_shift helper).
    w2 = w.reshape(w.shape[0], -1, 2)
    return jnp.stack([-w2[..., 1], w2[..., 0]], axis=-1).reshape(w.shape)


def init_params(key):
    def lin(k, fan_in, shape):
        bound = 1.0 / math.sqrt(fan_in)
        return jax.random.uniform(k, shape, jnp.float32, -bound, bound)

    params = []
    for l in range(LAYERS):
        ks = jax.random.split(jax.random.fold_in(key, l), 9)
        params.append(dict(
            ln1_w=jnp.ones((HIDDEN,), jnp.float32), ln1_b=jnp.zeros((HIDDEN,), jnp.float32),
            wq=lin(ks[0], HIDDEN, (HIDDEN, HIDDEN)),
            wk=lin(ks[1], HIDDEN, (HIDDEN, HIDDEN)),
            wv=lin(ks[2], HIDDEN, (HIDDEN, VDIM)),
            wg=lin(ks[3], HIDDEN, (HIDDEN, VDIM)),
            wo=lin(ks[4], VDIM, (VDIM, HIDDEN)),
            gn_w=jnp.ones((VDIM,), jnp.float32), gn_b=jnp.zeros((VDIM,), jnp.float32),
            ln2_w=jnp.ones((HIDDEN,), jnp.float32), ln2_b=jnp.zeros((HIDDEN,), jnp.float32),
            w1=lin(ks[5], HIDDEN, (HIDDEN, FFN)), b1=lin(ks[6], HIDDEN, (FFN,)),
            w2=lin(ks[7], FFN, (FFN, HIDDEN)), b2=lin(ks[8], FFN, (HIDDEN,)),
        ))
    return params


def pack_params(params):
    # Fold DK**-0.5 into wk, rotate_every_two into the rot columns, fuse projections into
    # lane-dense slabs, stack per layer, and store all matmul weights as bf16.
    scale = DK ** -0.5
    wa, wb, w1, b32, b64 = [], [], [], [], []
    for p in params:
        wk_s = p['wk'] * scale
        wqkr = jnp.concatenate([p['wq'], wk_s,
                                _rotate_every_two_cols(p['wq']),
                                _rotate_every_two_cols(wk_s)], axis=1)   # (32, 128)
        wvg = jnp.concatenate([p['wv'], p['wg']], axis=1)                # (32, 128)
        wa += [wqkr, wvg]
        wb += [p['wo'], p['w2']]                                         # both (64, 32)
        w1.append(p['w1'])                                               # (32, 64)
        b32.append(jnp.stack([p['ln1_w'], p['ln1_b'], p['ln2_w'], p['ln2_b'], p['b2']], 0))
        b64.append(jnp.stack([p['gn_w'], p['gn_b'], p['b1']], 0))
    return (jnp.stack(wa, 0).astype(jnp.bfloat16),      # (2*LAYERS, 32, 128) [wqkr, wvg] per layer
            jnp.stack(wb, 0).astype(jnp.bfloat16),      # (2*LAYERS, 64, 32)  [wo, w2]   per layer
            jnp.stack(w1, 0).astype(jnp.bfloat16),      # (LAYERS, 32, 64)
            jnp.stack(b32, 0).astype(jnp.float32),      # (LAYERS, 5, 32)
            jnp.stack(b64, 0).astype(jnp.float32))      # (LAYERS, 3, 64)


if __name__ == "__main__":
    key = jax.random.PRNGKey(0)
    xkey, pkey = jax.random.split(key)
    B = 4                                               # -> TB=2, grid=(2,)
    x = jax.random.normal(xkey, (B, SLEN, HIDDEN), jnp.float32)   # (batch, patches, features)
    weights = pack_params(init_params(pkey))
    fwd = jax.jit(retnet_forward)
    out = fwd(x, weights)
    jax.block_until_ready(out)
    assert out.shape == (B, IMG[0], IMG[1], HIDDEN)
    assert bool(jnp.all(jnp.isfinite(out)))
    print("KERNEL_OK")
</pallas_src>

<mosaic_0001>
module attributes {stable_mosaic.version = 11 : i64} {
  func.func @kernel(%arg0: i32, %arg1: memref<128x32xf32, #tpu.memory_space<vmem>>, %arg2: memref<2x128x64xf32, #tpu.memory_space<vmem>>, %arg3: memref<64x128xf32, #tpu.memory_space<vmem>>, %arg4: memref<128x128xbf16, #tpu.memory_space<vmem>>, %arg5: memref<64x64xbf16, #tpu.memory_space<vmem>>, %arg6: memref<128x32xf32, #tpu.memory_space<vmem>>, %arg7: memref<128x64xf32, #tpu.memory_space<vmem>>, %arg8: memref<4x32x128xbf16, #tpu.memory_space<vmem>>, %arg9: memref<4x64x32xbf16, #tpu.memory_space<vmem>>, %arg10: memref<2x32x64xbf16, #tpu.memory_space<vmem>>, %arg11: memref<2x5x32xf32, #tpu.memory_space<vmem>>, %arg12: memref<2x3x64xf32, #tpu.memory_space<vmem>>, %arg13: memref<128x32xf32, #tpu.memory_space<vmem>>) attributes {dimension_semantics = [#tpu.dimension_semantics<parallel>], iteration_bounds = array<i64: 2>, scalar_prefetch = 0 : i64, scratch_operands = 0 : i64, tpu.core_type = #tpu.core_type<tc>, window_params = [{transform_indices = @transform_0, window_bounds = array<i64: 128, 32>}, {pipeline_mode = #tpu.pipeline_mode<synchronous>, transform_indices = @transform_1, window_bounds = array<i64: 2, 128, 64>}, {pipeline_mode = #tpu.pipeline_mode<synchronous>, transform_indices = @transform_2, window_bounds = array<i64: 64, 128>}, {pipeline_mode = #tpu.pipeline_mode<synchronous>, transform_indices = @transform_3, window_bounds = array<i64: 128, 128>}, {pipeline_mode = #tpu.pipeline_mode<synchronous>, transform_indices = @transform_4, window_bounds = array<i64: 64, 64>}, {pipeline_mode = #tpu.pipeline_mode<synchronous>, transform_indices = @transform_5, window_bounds = array<i64: 128, 32>}, {pipeline_mode = #tpu.pipeline_mode<synchronous>, transform_indices = @transform_6, window_bounds = array<i64: 128, 64>}, {pipeline_mode = #tpu.pipeline_mode<synchronous>, transform_indices = @transform_7, window_bounds = array<i64: 4, 32, 128>}, {pipeline_mode = #tpu.pipeline_mode<synchronous>, transform_indices = @transform_8, window_bounds = array<i64: 4, 64, 32>}, {pipeline_mode = #tpu.pipeline_mode<synchronous>, transform_indices = @transform_9, window_bounds = array<i64: 2, 32, 64>}, {pipeline_mode = #tpu.pipeline_mode<synchronous>, transform_indices = @transform_10, window_bounds = array<i64: 2, 5, 32>}, {pipeline_mode = #tpu.pipeline_mode<synchronous>, transform_indices = @transform_11, window_bounds = array<i64: 2, 3, 64>}, {transform_indices = @transform_12, window_bounds = array<i64: 128, 32>}]} {
    %c0 = arith.constant 0 : index
    %c0_0 = arith.constant 0 : index
    %0 = vector.load %arg1[%c0, %c0_0] : memref<128x32xf32, #tpu.memory_space<vmem>>, vector<128x32xf32>
    %c0_1 = arith.constant 0 : index
    %c0_2 = arith.constant 0 : index
    %c0_3 = arith.constant 0 : index
    %1 = vector.load %arg11[%c0_1, %c0_2, %c0_3] : memref<2x5x32xf32, #tpu.memory_space<vmem>>, vector<1x5x32xf32>
    %2 = vector.shape_cast %1 : vector<1x5x32xf32> to vector<5x32xf32>
    %c0_4 = arith.constant 0 : index
    %c0_5 = arith.constant 0 : index
    %c0_6 = arith.constant 0 : index
    %3 = vector.load %arg12[%c0_4, %c0_5, %c0_6] : memref<2x3x64xf32, #tpu.memory_space<vmem>>, vector<1x3x64xf32>
    %4 = vector.shape_cast %3 : vector<1x3x64xf32> to vector<3x64xf32>
    %cst = arith.constant dense<0.000000e+00> : vector<128xf32>
    %5 = vector.multi_reduction <add>, %0, %cst [1] : vector<128x32xf32> to vector<128xf32>
    %6 = vector.shape_cast %5 : vector<128xf32> to vector<128x1xf32>
    %cst_7 = arith.constant 3.200000e+01 : f32
    %7 = vector.broadcast %cst_7 : f32 to vector<128x1xf32>
    %8 = arith.divf %6, %7 : vector<128x1xf32>
    %9 = vector.broadcast %8 : vector<128x1xf32> to vector<128x32xf32>
    %10 = arith.subf %0, %9 : vector<128x32xf32>
    %11 = arith.mulf %10, %10 : vector<128x32xf32>
    %cst_8 = arith.constant dense<0.000000e+00> : vector<128xf32>
    %12 = vector.multi_reduction <add>, %11, %cst_8 [1] : vector<128x32xf32> to vector<128xf32>
    %13 = vector.shape_cast %12 : vector<128xf32> to vector<128x1xf32>
    %cst_9 = arith.constant 3.200000e+01 : f32
    %14 = vector.broadcast %cst_9 : f32 to vector<128x1xf32>
    %15 = arith.divf %13, %14 : vector<128x1xf32>
    %16 = vector.broadcast %8 : vector<128x1xf32> to vector<128x32xf32>
    %17 = arith.subf %0, %16 : vector<128x32xf32>
    %cst_10 = arith.constant 9.99999974E-6 : f32
    %18 = vector.broadcast %cst_10 : f32 to vector<128x1xf32>
    %19 = arith.addf %15, %18 : vector<128x1xf32>
    %20 = math.rsqrt %19 : vector<128x1xf32>
    %21 = vector.broadcast %20 : vector<128x1xf32> to vector<128x32xf32>
    %22 = arith.mulf %17, %21 : vector<128x32xf32>
    %23 = vector.extract_strided_slice %2 {offsets = [0, 0], sizes = [1, 32], strides = [1, 1]} : vector<5x32xf32> to vector<1x32xf32>
    %24 = vector.broadcast %23 : vector<1x32xf32> to vector<128x32xf32>
    %25 = arith.mulf %22, %24 : vector<128x32xf32>
    %26 = vector.extract_strided_slice %2 {offsets = [1, 0], sizes = [1, 32], strides = [1, 1]} : vector<5x32xf32> to vector<1x32xf32>
    %27 = vector.broadcast %26 : vector<1x32xf32> to vector<128x32xf32>
    %28 = arith.addf %25, %27 : vector<128x32xf32>
    %29 = arith.truncf %28 : vector<128x32xf32> to vector<128x32xbf16>
    %c0_11 = arith.constant 0 : index
    %c0_12 = arith.constant 0 : index
    %c0_13 = arith.constant 0 : index
    %30 = vector.load %arg8[%c0_11, %c0_12, %c0_13] : memref<4x32x128xbf16, #tpu.memory_space<vmem>>, vector<1x32x128xbf16>
    %31 = vector.shape_cast %30 : vector<1x32x128xbf16> to vector<32x128xbf16>
    %cst_14 = arith.constant dense<0.000000e+00> : vector<128x128xf32>
    %32 = tpu.matmul %29, %31, %cst_14 {dimension_numbers = #tpu.dot_dimension_numbers<[1], [0], [0], [1], [0, 0, 1, 1], [], []>} : vector<128x32xbf16>, vector<32x128xbf16>, vector<128x128xf32> -> vector<128x128xf32>
    %c1 = arith.constant 1 : index
    %c0_15 = arith.constant 0 : index
    %c0_16 = arith.constant 0 : index
    %33 = vector.load %arg8[%c1, %c0_15, %c0_16] : memref<4x32x128xbf16, #tpu.memory_space<vmem>>, vector<1x32x128xbf16>
    %34 = vector.shape_cast %33 : vector<1x32x128xbf16> to vector<32x128xbf16>
    %cst_17 = arith.constant dense<0.000000e+00> : vector<128x128xf32>
    %35 = tpu.matmul %29, %34, %cst_17 {dimension_numbers = #tpu.dot_dimension_numbers<[1], [0], [0], [1], [0, 0, 1, 1], [], []>} : vector<128x32xbf16>, vector<32x128xbf16>, vector<128x128xf32> -> vector<128x128xf32>
    %36 = vector.extract_strided_slice %32 {offsets = [0, 0], sizes = [128, 64], strides = [1, 1]} : vector<128x128xf32> to vector<128x64xf32>
    %c0_18 = arith.constant 0 : index
    %c0_19 = arith.constant 0 : index
    %c0_20 = arith.constant 0 : index
    %37 = vector.load %arg2[%c0_18, %c0_19, %c0_20] : memref<2x128x64xf32, #tpu.memory_space<vmem>>, vector<1x128x64xf32>
    %38 = vector.shape_cast %37 : vector<1x128x64xf32> to vector<128x64xf32>
    %39 = arith.mulf %36, %38 : vector<128x64xf32>
    %40 = vector.extract_strided_slice %32 {offsets = [0, 64], sizes = [128, 64], strides = [1, 1]} : vector<128x128xf32> to vector<128x64xf32>
    %c1_21 = arith.constant 1 : index
    %c0_22 = arith.constant 0 : index
    %c0_23 = arith.constant 0 : index
    %41 = vector.load %arg2[%c1_21, %c0_22, %c0_23] : memref<2x128x64xf32, #tpu.memory_space<vmem>>, vector<1x128x64xf32>
    %42 = vector.shape_cast %41 : vector<1x128x64xf32> to vector<128x64xf32>
    %43 = arith.mulf %40, %42 : vector<128x64xf32>
    %44 = arith.addf %39, %43 : vector<128x64xf32>
    %45 = vector.extract_strided_slice %44 {offsets = [0, 0], sizes = [128, 32], strides = [1, 1]} : vector<128x64xf32> to vector<128x32xf32>
    %46 = vector.extract_strided_slice %44 {offsets = [0, 32], sizes = [128, 32], strides = [1, 1]} : vector<128x64xf32> to vector<128x32xf32>
    %47 = vector.extract_strided_slice %35 {offsets = [0, 0], sizes = [128, 64], strides = [1, 1]} : vector<128x128xf32> to vector<128x64xf32>
    %48 = vector.extract_strided_slice %35 {offsets = [0, 64], sizes = [128, 64], strides = [1, 1]} : vector<128x128xf32> to vector<128x64xf32>
    %49 = vector.extract_strided_slice %45 {offsets = [0, 0], sizes = [64, 32], strides = [1, 1]} : vector<128x32xf32> to vector<64x32xf32>
    %50 = vector.extract_strided_slice %46 {offsets = [0, 0], sizes = [64, 32], strides = [1, 1]} : vector<128x32xf32> to vector<64x32xf32>
    %51 = vector.extract_strided_slice %47 {offsets = [0, 0], sizes = [64, 64], strides = [1, 1]} : vector<128x64xf32> to vector<64x64xf32>
    %52 = tpu.concatenate %50, %50 in 0 : vector<64x32xf32>, vector<64x32xf32> -> vector<128x32xf32>
    %c0_24 = arith.constant 0 : index
    %c0_25 = arith.constant 0 : index
    %53 = vector.load %arg6[%c0_24, %c0_25] : memref<128x32xf32, #tpu.memory_space<vmem>>, vector<128x32xf32>
    %54 = arith.mulf %52, %53 : vector<128x32xf32>
    %55 = arith.truncf %54 : vector<128x32xf32> to vector<128x32xbf16>
    %56 = tpu.concatenate %51, %51 in 0 : vector<64x64xf32>, vector<64x64xf32> -> vector<128x64xf32>
    %c0_26 = arith.constant 0 : index
    %c0_27 = arith.constant 0 : index
    %57 = vector.load %arg7[%c0_26, %c0_27] : memref<128x64xf32, #tpu.memory_space<vmem>>, vector<128x64xf32>
    %58 = arith.mulf %56, %57 : vector<128x64xf32>
    %59 = arith.truncf %58 : vector<128x64xf32> to vector<128x64xbf16>
    %60 = arith.truncf %49 : vector<64x32xf32> to vector<64x32xbf16>
    %cst_28 = arith.constant dense<0.000000e+00> : vector<64x128xf32>
    %61 = tpu.matmul %60, %55, %cst_28 {dimension_numbers = #tpu.dot_dimension_numbers<[1], [1], [0], [0], [0, 0, 1, 0], [], []>} : vector<64x32xbf16>, vector<128x32xbf16>, vector<64x128xf32> -> vector<64x128xf32>
    %c0_29 = arith.constant 0 : index
    %c0_30 = arith.constant 0 : index
    %62 = vector.load %arg3[%c0_29, %c0_30] : memref<64x128xf32, #tpu.memory_space<vmem>>, vector<64x128xf32>
    %63 = arith.mulf %61, %62 : vector<64x128xf32>
    %64 = math.absf %63 : vector<64x128xf32>
    %65 = arith.truncf %64 : vector<64x128xf32> to vector<64x128xbf16>
    %c0_31 = arith.constant 0 : index
    %c0_32 = arith.constant 0 : index
    %66 = vector.load %arg4[%c0_31, %c0_32] : memref<128x128xbf16, #tpu.memory_space<vmem>>, vector<128x128xbf16>
    %cst_33 = arith.constant dense<0.000000e+00> : vector<64x128xf32>
    %67 = tpu.matmul %65, %66, %cst_33 {dimension_numbers = #tpu.dot_dimension_numbers<[1], [0], [0], [1], [0, 0, 1, 1], [], []>} : vector<64x128xbf16>, vector<128x128xbf16>, vector<64x128xf32> -> vector<64x128xf32>
    %cst_34 = arith.constant 1.000000e+00 : f32
    %68 = vector.broadcast %cst_34 : f32 to vector<64x128xf32>
    %69 = arith.maximumf %67, %68 : vector<64x128xf32>
    %70 = arith.divf %63, %69 : vector<64x128xf32>
    %71 = arith.truncf %70 : vector<64x128xf32> to vector<64x128xbf16>
    %cst_35 = arith.constant dense<0.000000e+00> : vector<64x64xf32>
    %72 = tpu.matmul %71, %59, %cst_35 {dimension_numbers = #tpu.dot_dimension_numbers<[1], [0], [0], [1], [0, 0, 1, 1], [], []>} : vector<64x128xbf16>, vector<128x64xbf16>, vector<64x64xf32> -> vector<64x64xf32>
    %73 = arith.truncf %72 : vector<64x64xf32> to vector<64x64xbf16>
    %c0_36 = arith.constant 0 : index
    %c0_37 = arith.constant 0 : index
    %74 = vector.load %arg5[%c0_36, %c0_37] : memref<64x64xbf16, #tpu.memory_space<vmem>>, vector<64x64xbf16>
    %cst_38 = arith.constant dense<0.000000e+00> : vector<64x64xf32>
    %75 = tpu.matmul %73, %74, %cst_38 {dimension_numbers = #tpu.dot_dimension_numbers<[1], [0], [0], [1], [0, 0, 1, 1], [], []>} : vector<64x64xbf16>, vector<64x64xbf16>, vector<64x64xf32> -> vector<64x64xf32>
    %76 = arith.subf %72, %75 : vector<64x64xf32>
    %77 = arith.mulf %76, %76 : vector<64x64xf32>
    %78 = arith.truncf %77 : vector<64x64xf32> to vector<64x64xbf16>
    %c0_39 = arith.constant 0 : index
    %c0_40 = arith.constant 0 : index
    %79 = vector.load %arg5[%c0_39, %c0_40] : memref<64x64xbf16, #tpu.memory_space<vmem>>, vector<64x64xbf16>
    %cst_41 = arith.constant dense<0.000000e+00> : vector<64x64xf32>
    %80 = tpu.matmul %78, %79, %cst_41 {dimension_numbers = #tpu.dot_dimension_numbers<[1], [0], [0], [1], [0, 0, 1, 1], [], []>} : vector<64x64xbf16>, vector<64x64xbf16>, vector<64x64xf32> -> vector<64x64xf32>
    %cst_42 = arith.constant 9.99999974E-6 : f32
    %81 = vector.broadcast %cst_42 : f32 to vector<64x64xf32>
    %82 = arith.addf %80, %81 : vector<64x64xf32>
    %83 = math.rsqrt %82 : vector<64x64xf32>
    %84 = arith.mulf %76, %83 : vector<64x64xf32>
    %85 = vector.extract_strided_slice %45 {offsets = [64, 0], sizes = [64, 32], strides = [1, 1]} : vector<128x32xf32> to vector<64x32xf32>
    %86 = vector.extract_strided_slice %46 {offsets = [64, 0], sizes = [64, 32], strides = [1, 1]} : vector<128x32xf32> to vector<64x32xf32>
    %87 = vector.extract_strided_slice %47 {offsets = [64, 0], sizes = [64, 64], strides = [1, 1]} : vector<128x64xf32> to vector<64x64xf32>
    %88 = tpu.concatenate %86, %86 in 0 : vector<64x32xf32>, vector<64x32xf32> -> vector<128x32xf32>
    %c0_43 = arith.constant 0 : index
    %c0_44 = arith.constant 0 : index
    %89 = vector.load %arg6[%c0_43, %c0_44] : memref<128x32xf32, #tpu.memory_space<vmem>>, vector<128x32xf32>
    %90 = arith.mulf %88, %89 : vector<128x32xf32>
    %91 = arith.truncf %90 : vector<128x32xf32> to vector<128x32xbf16>
    %92 = tpu.concatenate %87, %87 in 0 : vector<64x64xf32>, vector<64x64xf32> -> vector<128x64xf32>
    %c0_45 = arith.constant 0 : index
    %c0_46 = arith.constant 0 : index
    %93 = vector.load %arg7[%c0_45, %c0_46] : memref<128x64xf32, #tpu.memory_space<vmem>>, vector<128x64xf32>
    %94 = arith.mulf %92, %93 : vector<128x64xf32>
    %95 = arith.truncf %94 : vector<128x64xf32> to vector<128x64xbf16>
    %96 = arith.truncf %85 : vector<64x32xf32> to vector<64x32xbf16>
    %cst_47 = arith.constant dense<0.000000e+00> : vector<64x128xf32>
    %97 = tpu.matmul %96, %91, %cst_47 {dimension_numbers = #tpu.dot_dimension_numbers<[1], [1], [0], [0], [0, 0, 1, 0], [], []>} : vector<64x32xbf16>, vector<128x32xbf16>, vector<64x128xf32> -> vector<64x128xf32>
    %c0_48 = arith.constant 0 : index
    %c0_49 = arith.constant 0 : index
    %98 = vector.load %arg3[%c0_48, %c0_49] : memref<64x128xf32, #tpu.memory_space<vmem>>, vector<64x128xf32>
    %99 = arith.mulf %97, %98 : vector<64x128xf32>
    %100 = math.absf %99 : vector<64x128xf32>
    %101 = arith.truncf %100 : vector<64x128xf32> to vector<64x128xbf16>
    %c0_50 = arith.constant 0 : index
    %c0_51 = arith.constant 0 : index
    %102 = vector.load %arg4[%c0_50, %c0_51] : memref<128x128xbf16, #tpu.memory_space<vmem>>, vector<128x128xbf16>
    %cst_52 = arith.constant dense<0.000000e+00> : vector<64x128xf32>
    %103 = tpu.matmul %101, %102, %cst_52 {dimension_numbers = #tpu.dot_dimension_numbers<[1], [0], [0], [1], [0, 0, 1, 1], [], []>} : vector<64x128xbf16>, vector<128x128xbf16>, vector<64x128xf32> -> vector<64x128xf32>
    %cst_53 = arith.constant 1.000000e+00 : f32
    %104 = vector.broadcast %cst_53 : f32 to vector<64x128xf32>
    %105 = arith.maximumf %103, %104 : vector<64x128xf32>
    %106 = arith.divf %99, %105 : vector<64x128xf32>
    %107 = arith.truncf %106 : vector<64x128xf32> to vector<64x128xbf16>
    %cst_54 = arith.constant dense<0.000000e+00> : vector<64x64xf32>
    %108 = tpu.matmul %107, %95, %cst_54 {dimension_numbers = #tpu.dot_dimension_numbers<[1], [0], [0], [1], [0, 0, 1, 1], [], []>} : vector<64x128xbf16>, vector<128x64xbf16>, vector<64x64xf32> -> vector<64x64xf32>
    %109 = arith.truncf %108 : vector<64x64xf32> to vector<64x64xbf16>
    %c0_55 = arith.constant 0 : index
    %c0_56 = arith.constant 0 : index
    %110 = vector.load %arg5[%c0_55, %c0_56] : memref<64x64xbf16, #tpu.memory_space<vmem>>, vector<64x64xbf16>
    %cst_57 = arith.constant dense<0.000000e+00> : vector<64x64xf32>
    %111 = tpu.matmul %109, %110, %cst_57 {dimension_numbers = #tpu.dot_dimension_numbers<[1], [0], [0], [1], [0, 0, 1, 1], [], []>} : vector<64x64xbf16>, vector<64x64xbf16>, vector<64x64xf32> -> vector<64x64xf32>
    %112 = arith.subf %108, %111 : vector<64x64xf32>
    %113 = arith.mulf %112, %112 : vector<64x64xf32>
    %114 = arith.truncf %113 : vector<64x64xf32> to vector<64x64xbf16>
    %c0_58 = arith.constant 0 : index
    %c0_59 = arith.constant 0 : index
    %115 = vector.load %arg5[%c0_58, %c0_59] : memref<64x64xbf16, #tpu.memory_space<vmem>>, vector<64x64xbf16>
    %cst_60 = arith.constant dense<0.000000e+00> : vector<64x64xf32>
    %116 = tpu.matmul %114, %115, %cst_60 {dimension_numbers = #tpu.dot_dimension_numbers<[1], [0], [0], [1], [0, 0, 1, 1], [], []>} : vector<64x64xbf16>, vector<64x64xbf16>, vector<64x64xf32> -> vector<64x64xf32>
    %cst_61 = arith.constant 9.99999974E-6 : f32
    %117 = vector.broadcast %cst_61 : f32 to vector<64x64xf32>
    %118 = arith.addf %116, %117 : vector<64x64xf32>
    %119 = math.rsqrt %118 : vector<64x64xf32>
    %120 = arith.mulf %112, %119 : vector<64x64xf32>
    %121 = tpu.concatenate %84, %120 in 0 : vector<64x64xf32>, vector<64x64xf32> -> vector<128x64xf32>
    %122 = vector.extract_strided_slice %4 {offsets = [0, 0], sizes = [1, 64], strides = [1, 1]} : vector<3x64xf32> to vector<1x64xf32>
    %123 = vector.broadcast %122 : vector<1x64xf32> to vector<128x64xf32>
    %124 = arith.mulf %121, %123 : vector<128x64xf32>
    %125 = vector.extract_strided_slice %4 {offsets = [1, 0], sizes = [1, 64], strides = [1, 1]} : vector<3x64xf32> to vector<1x64xf32>
    %126 = vector.broadcast %125 : vector<1x64xf32> to vector<128x64xf32>
    %127 = arith.addf %124, %126 : vector<128x64xf32>
    %128 = arith.negf %48 : vector<128x64xf32>
    %129 = math.exp %128 : vector<128x64xf32>
    %cst_62 = arith.constant 1.000000e+00 : f32
    %130 = vector.broadcast %cst_62 : f32 to vector<128x64xf32>
    %131 = arith.addf %130, %129 : vector<128x64xf32>
    %132 = arith.divf %130, %131 : vector<128x64xf32>
    %133 = arith.mulf %48, %132 : vector<128x64xf32>
    %134 = arith.mulf %133, %127 : vector<128x64xf32>
    %135 = arith.truncf %134 : vector<128x64xf32> to vector<128x64xbf16>
    %c0_63 = arith.constant 0 : index
    %c0_64 = arith.constant 0 : index
    %c0_65 = arith.constant 0 : index
    %136 = vector.load %arg9[%c0_63, %c0_64, %c0_65] : memref<4x64x32xbf16, #tpu.memory_space<vmem>>, vector<1x64x32xbf16>
    %137 = vector.shape_cast %136 : vector<1x64x32xbf16> to vector<64x32xbf16>
    %cst_66 = arith.constant dense<0.000000e+00> : vector<128x32xf32>
    %138 = tpu.matmul %135, %137, %cst_66 {dimension_numbers = #tpu.dot_dimension_numbers<[1], [0], [0], [1], [0, 0, 1, 1], [], []>} : vector<128x64xbf16>, vector<64x32xbf16>, vector<128x32xf32> -> vector<128x32xf32>
    %139 = arith.addf %138, %0 : vector<128x32xf32>
    %cst_67 = arith.constant dense<0.000000e+00> : vector<128xf32>
    %140 = vector.multi_reduction <add>, %139, %cst_67 [1] : vector<128x32xf32> to vector<128xf32>
    %141 = vector.shape_cast %140 : vector<128xf32> to vector<128x1xf32>
    %cst_68 = arith.constant 3.200000e+01 : f32
    %142 = vector.broadcast %cst_68 : f32 to vector<128x1xf32>
    %143 = arith.divf %141, %142 : vector<128x1xf32>
    %144 = vector.broadcast %143 : vector<128x1xf32> to vector<128x32xf32>
    %145 = arith.subf %139, %144 : vector<128x32xf32>
    %146 = arith.mulf %145, %145 : vector<128x32xf32>
    %cst_69 = arith.constant dense<0.000000e+00> : vector<128xf32>
    %147 = vector.multi_reduction <add>, %146, %cst_69 [1] : vector<128x32xf32> to vector<128xf32>
    %148 = vector.shape_cast %147 : vector<128xf32> to vector<128x1xf32>
    %cst_70 = arith.constant 3.200000e+01 : f32
    %149 = vector.broadcast %cst_70 : f32 to vector<128x1xf32>
    %150 = arith.divf %148, %149 : vector<128x1xf32>
    %151 = vector.broadcast %143 : vector<128x1xf32> to vector<128x32xf32>
    %152 = arith.subf %139, %151 : vector<128x32xf32>
    %cst_71 = arith.constant 9.99999974E-6 : f32
    %153 = vector.broadcast %cst_71 : f32 to vector<128x1xf32>
    %154 = arith.addf %150, %153 : vector<128x1xf32>
    %155 = math.rsqrt %154 : vector<128x1xf32>
    %156 = vector.broadcast %155 : vector<128x1xf32> to vector<128x32xf32>
    %157 = arith.mulf %152, %156 : vector<128x32xf32>
    %158 = vector.extract_strided_slice %2 {offsets = [2, 0], sizes = [1, 32], strides = [1, 1]} : vector<5x32xf32> to vector<1x32xf32>
    %159 = vector.broadcast %158 : vector<1x32xf32> to vector<128x32xf32>
    %160 = arith.mulf %157, %159 : vector<128x32xf32>
    %161 = vector.extract_strided_slice %2 {offsets = [3, 0], sizes = [1, 32], strides = [1, 1]} : vector<5x32xf32> to vector<1x32xf32>
    %162 = vector.broadcast %161 : vector<1x32xf32> to vector<128x32xf32>
    %163 = arith.addf %160, %162 : vector<128x32xf32>
    %164 = arith.truncf %163 : vector<128x32xf32> to vector<128x32xbf16>
    %c0_72 = arith.constant 0 : index
    %c0_73 = arith.constant 0 : index
    %c0_74 = arith.constant 0 : index
    %165 = vector.load %arg10[%c0_72, %c0_73, %c0_74] : memref<2x32x64xbf16, #tpu.memory_space<vmem>>, vector<1x32x64xbf16>
    %166 = vector.shape_cast %165 : vector<1x32x64xbf16> to vector<32x64xbf16>
    %cst_75 = arith.constant dense<0.000000e+00> : vector<128x64xf32>
    %167 = tpu.matmul %164, %166, %cst_75 {dimension_numbers = #tpu.dot_dimension_numbers<[1], [0], [0], [1], [0, 0, 1, 1], [], []>} : vector<128x32xbf16>, vector<32x64xbf16>, vector<128x64xf32> -> vector<128x64xf32>
    %168 = vector.extract_strided_slice %4 {offsets = [2, 0], sizes = [1, 64], strides = [1, 1]} : vector<3x64xf32> to vector<1x64xf32>
    %169 = vector.broadcast %168 : vector<1x64xf32> to vector<128x64xf32>
    %170 = arith.addf %167, %169 : vector<128x64xf32>
    %cst_76 = arith.constant 5.000000e-01 : f32
    %171 = vector.broadcast %cst_76 : f32 to vector<128x64xf32>
    %172 = arith.mulf %171, %170 : vector<128x64xf32>
    %cst_77 = arith.constant 0.707106769 : f32
    %173 = vector.broadcast %cst_77 : f32 to vector<128x64xf32>
    %174 = arith.mulf %170, %173 : vector<128x64xf32>
    %175 = math.absf %174 : vector<128x64xf32>
    %cst_78 = arith.constant 0.327591091 : f32
    %176 = vector.broadcast %cst_78 : f32 to vector<128x64xf32>
    %177 = arith.mulf %176, %175 : vector<128x64xf32>
    %cst_79 = arith.constant 1.000000e+00 : f32
    %178 = vector.broadcast %cst_79 : f32 to vector<128x64xf32>
    %179 = arith.addf %178, %177 : vector<128x64xf32>
    %cst_80 = arith.constant 1.000000e+00 : f32
    %180 = vector.broadcast %cst_80 : f32 to vector<128x64xf32>
    %181 = arith.divf %180, %179 : vector<128x64xf32>
    %cst_81 = arith.constant 1.06140542 : f32
    %182 = vector.broadcast %cst_81 : f32 to vector<128x64xf32>
    %183 = arith.mulf %182, %181 : vector<128x64xf32>
    %cst_82 = arith.constant -1.45315206 : f32
    %184 = vector.broadcast %cst_82 : f32 to vector<128x64xf32>
    %185 = arith.addf %183, %184 : vector<128x64xf32>
    %186 = arith.mulf %185, %181 : vector<128x64xf32>
    %cst_83 = arith.constant 1.42141378 : f32
    %187 = vector.broadcast %cst_83 : f32 to vector<128x64xf32>
    %188 = arith.addf %186, %187 : vector<128x64xf32>
    %189 = arith.mulf %188, %181 : vector<128x64xf32>
    %cst_84 = arith.constant -0.284496725 : f32
    %190 = vector.broadcast %cst_84 : f32 to vector<128x64xf32>
    %191 = arith.addf %189, %190 : vector<128x64xf32>
    %192 = arith.mulf %191, %181 : vector<128x64xf32>
    %cst_85 = arith.constant 0.254829586 : f32
    %193 = vector.broadcast %cst_85 : f32 to vector<128x64xf32>
    %194 = arith.addf %192, %193 : vector<128x64xf32>
    %195 = arith.mulf %194, %181 : vector<128x64xf32>
    %cst_86 = arith.constant 0.000000e+00 : f32
    %196 = vector.broadcast %cst_86 : f32 to vector<128x64xf32>
    %197 = arith.subf %196, %175 : vector<128x64xf32>
    %198 = arith.mulf %197, %175 : vector<128x64xf32>
    %199 = math.exp %198 : vector<128x64xf32>
    %200 = arith.mulf %195, %199 : vector<128x64xf32>
    %cst_87 = arith.constant 1.000000e+00 : f32
    %201 = vector.broadcast %cst_87 : f32 to vector<128x64xf32>
    %202 = arith.subf %201, %200 : vector<128x64xf32>
    %cst_88 = arith.constant 0.000000e+00 : f32
    %203 = vector.broadcast %cst_88 : f32 to vector<128x64xf32>
    %204 = arith.cmpf oge, %174, %203 : vector<128x64xf32>
    %cst_89 = arith.constant 0.000000e+00 : f32
    %205 = vector.broadcast %cst_89 : f32 to vector<128x64xf32>
    %206 = arith.subf %205, %202 : vector<128x64xf32>
    %207 = arith.select %204, %202, %206 : vector<128x64xi1>, vector<128x64xf32>
    %cst_90 = arith.constant 1.000000e+00 : f32
    %208 = vector.broadcast %cst_90 : f32 to vector<128x64xf32>
    %209 = arith.addf %208, %207 : vector<128x64xf32>
    %210 = arith.mulf %172, %209 : vector<128x64xf32>
    %211 = arith.truncf %210 : vector<128x64xf32> to vector<128x64xbf16>
    %c1_91 = arith.constant 1 : index
    %c0_92 = arith.constant 0 : index
    %c0_93 = arith.constant 0 : index
    %212 = vector.load %arg9[%c1_91, %c0_92, %c0_93] : memref<4x64x32xbf16, #tpu.memory_space<vmem>>, vector<1x64x32xbf16>
    %213 = vector.shape_cast %212 : vector<1x64x32xbf16> to vector<64x32xbf16>
    %cst_94 = arith.constant dense<0.000000e+00> : vector<128x32xf32>
    %214 = tpu.matmul %211, %213, %cst_94 {dimension_numbers = #tpu.dot_dimension_numbers<[1], [0], [0], [1], [0, 0, 1, 1], [], []>} : vector<128x64xbf16>, vector<64x32xbf16>, vector<128x32xf32> -> vector<128x32xf32>
    %215 = vector.extract_strided_slice %2 {offsets = [4, 0], sizes = [1, 32], strides = [1, 1]} : vector<5x32xf32> to vector<1x32xf32>
    %216 = vector.broadcast %215 : vector<1x32xf32> to vector<128x32xf32>
    %217 = arith.addf %214, %216 : vector<128x32xf32>
    %218 = arith.addf %217, %139 : vector<128x32xf32>
    %c1_95 = arith.constant 1 : index
    %c0_96 = arith.constant 0 : index
    %c0_97 = arith.constant 0 : index
    %219 = vector.load %arg11[%c1_95, %c0_96, %c0_97] : memref<2x5x32xf32, #tpu.memory_space<vmem>>, vector<1x5x32xf32>
    %220 = vector.shape_cast %219 : vector<1x5x32xf32> to vector<5x32xf32>
    %c1_98 = arith.constant 1 : index
    %c0_99 = arith.constant 0 : index
    %c0_100 = arith.constant 0 : index
    %221 = vector.load %arg12[%c1_98, %c0_99, %c0_100] : memref<2x3x64xf32, #tpu.memory_space<vmem>>, vector<1x3x64xf32>
    %222 = vector.shape_cast %221 : vector<1x3x64xf32> to vector<3x64xf32>
    %cst_101 = arith.constant dense<0.000000e+00> : vector<128xf32>
    %223 = vector.multi_reduction <add>, %218, %cst_101 [1] : vector<128x32xf32> to vector<128xf32>
    %224 = vector.shape_cast %223 : vector<128xf32> to vector<128x1xf32>
    %cst_102 = arith.constant 3.200000e+01 : f32
    %225 = vector.broadcast %cst_102 : f32 to vector<128x1xf32>
    %226 = arith.divf %224, %225 : vector<128x1xf32>
    %227 = vector.broadcast %226 : vector<128x1xf32> to vector<128x32xf32>
    %228 = arith.subf %218, %227 : vector<128x32xf32>
    %229 = arith.mulf %228, %228 : vector<128x32xf32>
    %cst_103 = arith.constant dense<0.000000e+00> : vector<128xf32>
    %230 = vector.multi_reduction <add>, %229, %cst_103 [1] : vector<128x32xf32> to vector<128xf32>
    %231 = vector.shape_cast %230 : vector<128xf32> to vector<128x1xf32>
    %cst_104 = arith.constant 3.200000e+01 : f32
    %232 = vector.broadcast %cst_104 : f32 to vector<128x1xf32>
    %233 = arith.divf %231, %232 : vector<128x1xf32>
    %234 = vector.broadcast %226 : vector<128x1xf32> to vector<128x32xf32>
    %235 = arith.subf %218, %234 : vector<128x32xf32>
    %cst_105 = arith.constant 9.99999974E-6 : f32
    %236 = vector.broadcast %cst_105 : f32 to vector<128x1xf32>
    %237 = arith.addf %233, %236 : vector<128x1xf32>
    %238 = math.rsqrt %237 : vector<128x1xf32>
    %239 = vector.broadcast %238 : vector<128x1xf32> to vector<128x32xf32>
    %240 = arith.mulf %235, %239 : vector<128x32xf32>
    %241 = vector.extract_strided_slice %220 {offsets = [0, 0], sizes = [1, 32], strides = [1, 1]} : vector<5x32xf32> to vector<1x32xf32>
    %242 = vector.broadcast %241 : vector<1x32xf32> to vector<128x32xf32>
    %243 = arith.mulf %240, %242 : vector<128x32xf32>
    %244 = vector.extract_strided_slice %220 {offsets = [1, 0], sizes = [1, 32], strides = [1, 1]} : vector<5x32xf32> to vector<1x32xf32>
    %245 = vector.broadcast %244 : vector<1x32xf32> to vector<128x32xf32>
    %246 = arith.addf %243, %245 : vector<128x32xf32>
    %247 = arith.truncf %246 : vector<128x32xf32> to vector<128x32xbf16>
    %c2 = arith.constant 2 : index
    %c0_106 = arith.constant 0 : index
    %c0_107 = arith.constant 0 : index
    %248 = vector.load %arg8[%c2, %c0_106, %c0_107] : memref<4x32x128xbf16, #tpu.memory_space<vmem>>, vector<1x32x128xbf16>
    %249 = vector.shape_cast %248 : vector<1x32x128xbf16> to vector<32x128xbf16>
    %cst_108 = arith.constant dense<0.000000e+00> : vector<128x128xf32>
    %250 = tpu.matmul %247, %249, %cst_108 {dimension_numbers = #tpu.dot_dimension_numbers<[1], [0], [0], [1], [0, 0, 1, 1], [], []>} : vector<128x32xbf16>, vector<32x128xbf16>, vector<128x128xf32> -> vector<128x128xf32>
    %c3 = arith.constant 3 : index
    %c0_109 = arith.constant 0 : index
    %c0_110 = arith.constant 0 : index
    %251 = vector.load %arg8[%c3, %c0_109, %c0_110] : memref<4x32x128xbf16, #tpu.memory_space<vmem>>, vector<1x32x128xbf16>
    %252 = vector.shape_cast %251 : vector<1x32x128xbf16> to vector<32x128xbf16>
    %cst_111 = arith.constant dense<0.000000e+00> : vector<128x128xf32>
    %253 = tpu.matmul %247, %252, %cst_111 {dimension_numbers = #tpu.dot_dimension_numbers<[1], [0], [0], [1], [0, 0, 1, 1], [], []>} : vector<128x32xbf16>, vector<32x128xbf16>, vector<128x128xf32> -> vector<128x128xf32>
    %254 = vector.extract_strided_slice %250 {offsets = [0, 0], sizes = [128, 64], strides = [1, 1]} : vector<128x128xf32> to vector<128x64xf32>
    %c0_112 = arith.constant 0 : index
    %c0_113 = arith.constant 0 : index
    %c0_114 = arith.constant 0 : index
    %255 = vector.load %arg2[%c0_112, %c0_113, %c0_114] : memref<2x128x64xf32, #tpu.memory_space<vmem>>, vector<1x128x64xf32>
    %256 = vector.shape_cast %255 : vector<1x128x64xf32> to vector<128x64xf32>
    %257 = arith.mulf %254, %256 : vector<128x64xf32>
    %258 = vector.extract_strided_slice %250 {offsets = [0, 64], sizes = [128, 64], strides = [1, 1]} : vector<128x128xf32> to vector<128x64xf32>
    %c1_115 = arith.constant 1 : index
    %c0_116 = arith.constant 0 : index
    %c0_117 = arith.constant 0 : index
    %259 = vector.load %arg2[%c1_115, %c0_116, %c0_117] : memref<2x128x64xf32, #tpu.memory_space<vmem>>, vector<1x128x64xf32>
    %260 = vector.shape_cast %259 : vector<1x128x64xf32> to vector<128x64xf32>
    %261 = arith.mulf %258, %260 : vector<128x64xf32>
    %262 = arith.addf %257, %261 : vector<128x64xf32>
    %263 = vector.extract_strided_slice %262 {offsets = [0, 0], sizes = [128, 32], strides = [1, 1]} : vector<128x64xf32> to vector<128x32xf32>
    %264 = vector.extract_strided_slice %262 {offsets = [0, 32], sizes = [128, 32], strides = [1, 1]} : vector<128x64xf32> to vector<128x32xf32>
    %265 = vector.extract_strided_slice %253 {offsets = [0, 0], sizes = [128, 64], strides = [1, 1]} : vector<128x128xf32> to vector<128x64xf32>
    %266 = vector.extract_strided_slice %253 {offsets = [0, 64], sizes = [128, 64], strides = [1, 1]} : vector<128x128xf32> to vector<128x64xf32>
    %267 = vector.extract_strided_slice %263 {offsets = [0, 0], sizes = [64, 32], strides = [1, 1]} : vector<128x32xf32> to vector<64x32xf32>
    %268 = vector.extract_strided_slice %264 {offsets = [0, 0], sizes = [64, 32], strides = [1, 1]} : vector<128x32xf32> to vector<64x32xf32>
    %269 = vector.extract_strided_slice %265 {offsets = [0, 0], sizes = [64, 64], strides = [1, 1]} : vector<128x64xf32> to vector<64x64xf32>
    %270 = tpu.concatenate %268, %268 in 0 : vector<64x32xf32>, vector<64x32xf32> -> vector<128x32xf32>
    %c0_118 = arith.constant 0 : index
    %c0_119 = arith.constant 0 : index
    %271 = vector.load %arg6[%c0_118, %c0_119] : memref<128x32xf32, #tpu.memory_space<vmem>>, vector<128x32xf32>
    %272 = arith.mulf %270, %271 : vector<128x32xf32>
    %273 = arith.truncf %272 : vector<128x32xf32> to vector<128x32xbf16>
    %274 = tpu.concatenate %269, %269 in 0 : vector<64x64xf32>, vector<64x64xf32> -> vector<128x64xf32>
    %c0_120 = arith.constant 0 : index
    %c0_121 = arith.constant 0 : index
    %275 = vector.load %arg7[%c0_120, %c0_121] : memref<128x64xf32, #tpu.memory_space<vmem>>, vector<128x64xf32>
    %276 = arith.mulf %274, %275 : vector<128x64xf32>
    %277 = arith.truncf %276 : vector<128x64xf32> to vector<128x64xbf16>
    %278 = arith.truncf %267 : vector<64x32xf32> to vector<64x32xbf16>
    %cst_122 = arith.constant dense<0.000000e+00> : vector<64x128xf32>
    %279 = tpu.matmul %278, %273, %cst_122 {dimension_numbers = #tpu.dot_dimension_numbers<[1], [1], [0], [0], [0, 0, 1, 0], [], []>} : vector<64x32xbf16>, vector<128x32xbf16>, vector<64x128xf32> -> vector<64x128xf32>
    %c0_123 = arith.constant 0 : index
    %c0_124 = arith.constant 0 : index
    %280 = vector.load %arg3[%c0_123, %c0_124] : memref<64x128xf32, #tpu.memory_space<vmem>>, vector<64x128xf32>
    %281 = arith.mulf %279, %280 : vector<64x128xf32>
    %282 = math.absf %281 : vector<64x128xf32>
    %283 = arith.truncf %282 : vector<64x128xf32> to vector<64x128xbf16>
    %c0_125 = arith.constant 0 : index
    %c0_126 = arith.constant 0 : index
    %284 = vector.load %arg4[%c0_125, %c0_126] : memref<128x128xbf16, #tpu.memory_space<vmem>>, vector<128x128xbf16>
    %cst_127 = arith.constant dense<0.000000e+00> : vector<64x128xf32>
    %285 = tpu.matmul %283, %284, %cst_127 {dimension_numbers = #tpu.dot_dimension_numbers<[1], [0], [0], [1], [0, 0, 1, 1], [], []>} : vector<64x128xbf16>, vector<128x128xbf16>, vector<64x128xf32> -> vector<64x128xf32>
    %cst_128 = arith.constant 1.000000e+00 : f32
    %286 = vector.broadcast %cst_128 : f32 to vector<64x128xf32>
    %287 = arith.maximumf %285, %286 : vector<64x128xf32>
    %288 = arith.divf %281, %287 : vector<64x128xf32>
    %289 = arith.truncf %288 : vector<64x128xf32> to vector<64x128xbf16>
    %cst_129 = arith.constant dense<0.000000e+00> : vector<64x64xf32>
    %290 = tpu.matmul %289, %277, %cst_129 {dimension_numbers = #tpu.dot_dimension_numbers<[1], [0], [0], [1], [0, 0, 1, 1], [], []>} : vector<64x128xbf16>, vector<128x64xbf16>, vector<64x64xf32> -> vector<64x64xf32>
    %291 = arith.truncf %290 : vector<64x64xf32> to vector<64x64xbf16>
    %c0_130 = arith.constant 0 : index
    %c0_131 = arith.constant 0 : index
    %292 = vector.load %arg5[%c0_130, %c0_131] : memref<64x64xbf16, #tpu.memory_space<vmem>>, vector<64x64xbf16>
    %cst_132 = arith.constant dense<0.000000e+00> : vector<64x64xf32>
    %293 = tpu.matmul %291, %292, %cst_132 {dimension_numbers = #tpu.dot_dimension_numbers<[1], [0], [0], [1], [0, 0, 1, 1], [], []>} : vector<64x64xbf16>, vector<64x64xbf16>, vector<64x64xf32> -> vector<64x64xf32>
    %294 = arith.subf %290, %293 : vector<64x64xf32>
    %295 = arith.mulf %294, %294 : vector<64x64xf32>
    %296 = arith.truncf %295 : vector<64x64xf32> to vector<64x64xbf16>
    %c0_133 = arith.constant 0 : index
    %c0_134 = arith.constant 0 : index
    %297 = vector.load %arg5[%c0_133, %c0_134] : memref<64x64xbf16, #tpu.memory_space<vmem>>, vector<64x64xbf16>
    %cst_135 = arith.constant dense<0.000000e+00> : vector<64x64xf32>
    %298 = tpu.matmul %296, %297, %cst_135 {dimension_numbers = #tpu.dot_dimension_numbers<[1], [0], [0], [1], [0, 0, 1, 1], [], []>} : vector<64x64xbf16>, vector<64x64xbf16>, vector<64x64xf32> -> vector<64x64xf32>
    %cst_136 = arith.constant 9.99999974E-6 : f32
    %299 = vector.broadcast %cst_136 : f32 to vector<64x64xf32>
    %300 = arith.addf %298, %299 : vector<64x64xf32>
    %301 = math.rsqrt %300 : vector<64x64xf32>
    %302 = arith.mulf %294, %301 : vector<64x64xf32>
    %303 = vector.extract_strided_slice %263 {offsets = [64, 0], sizes = [64, 32], strides = [1, 1]} : vector<128x32xf32> to vector<64x32xf32>
    %304 = vector.extract_strided_slice %264 {offsets = [64, 0], sizes = [64, 32], strides = [1, 1]} : vector<128x32xf32> to vector<64x32xf32>
    %305 = vector.extract_strided_slice %265 {offsets = [64, 0], sizes = [64, 64], strides = [1, 1]} : vector<128x64xf32> to vector<64x64xf32>
    %306 = tpu.concatenate %304, %304 in 0 : vector<64x32xf32>, vector<64x32xf32> -> vector<128x32xf32>
    %c0_137 = arith.constant 0 : index
    %c0_138 = arith.constant 0 : index
    %307 = vector.load %arg6[%c0_137, %c0_138] : memref<128x32xf32, #tpu.memory_space<vmem>>, vector<128x32xf32>
    %308 = arith.mulf %306, %307 : vector<128x32xf32>
    %309 = arith.truncf %308 : vector<128x32xf32> to vector<128x32xbf16>
    %310 = tpu.concatenate %305, %305 in 0 : vector<64x64xf32>, vector<64x64xf32> -> vector<128x64xf32>
    %c0_139 = arith.constant 0 : index
    %c0_140 = arith.constant 0 : index
    %311 = vector.load %arg7[%c0_139, %c0_140] : memref<128x64xf32, #tpu.memory_space<vmem>>, vector<128x64xf32>
    %312 = arith.mulf %310, %311 : vector<128x64xf32>
    %313 = arith.truncf %312 : vector<128x64xf32> to vector<128x64xbf16>
    %314 = arith.truncf %303 : vector<64x32xf32> to vector<64x32xbf16>
    %cst_141 = arith.constant dense<0.000000e+00> : vector<64x128xf32>
    %315 = tpu.matmul %314, %309, %cst_141 {dimension_numbers = #tpu.dot_dimension_numbers<[1], [1], [0], [0], [0, 0, 1, 0], [], []>} : vector<64x32xbf16>, vector<128x32xbf16>, vector<64x128xf32> -> vector<64x128xf32>
    %c0_142 = arith.constant 0 : index
    %c0_143 = arith.constant 0 : index
    %316 = vector.load %arg3[%c0_142, %c0_143] : memref<64x128xf32, #tpu.memory_space<vmem>>, vector<64x128xf32>
    %317 = arith.mulf %315, %316 : vector<64x128xf32>
    %318 = math.absf %317 : vector<64x128xf32>
    %319 = arith.truncf %318 : vector<64x128xf32> to vector<64x128xbf16>
    %c0_144 = arith.constant 0 : index
    %c0_145 = arith.constant 0 : index
    %320 = vector.load %arg4[%c0_144, %c0_145] : memref<128x128xbf16, #tpu.memory_space<vmem>>, vector<128x128xbf16>
    %cst_146 = arith.constant dense<0.000000e+00> : vector<64x128xf32>
    %321 = tpu.matmul %319, %320, %cst_146 {dimension_numbers = #tpu.dot_dimension_numbers<[1], [0], [0], [1], [0, 0, 1, 1], [], []>} : vector<64x128xbf16>, vector<128x128xbf16>, vector<64x128xf32> -> vector<64x128xf32>
    %cst_147 = arith.constant 1.000000e+00 : f32
    %322 = vector.broadcast %cst_147 : f32 to vector<64x128xf32>
    %323 = arith.maximumf %321, %322 : vector<64x128xf32>
    %324 = arith.divf %317, %323 : vector<64x128xf32>
    %325 = arith.truncf %324 : vector<64x128xf32> to vector<64x128xbf16>
    %cst_148 = arith.constant dense<0.000000e+00> : vector<64x64xf32>
    %326 = tpu.matmul %325, %313, %cst_148 {dimension_numbers = #tpu.dot_dimension_numbers<[1], [0], [0], [1], [0, 0, 1, 1], [], []>} : vector<64x128xbf16>, vector<128x64xbf16>, vector<64x64xf32> -> vector<64x64xf32>
    %327 = arith.truncf %326 : vector<64x64xf32> to vector<64x64xbf16>
    %c0_149 = arith.constant 0 : index
    %c0_150 = arith.constant 0 : index
    %328 = vector.load %arg5[%c0_149, %c0_150] : memref<64x64xbf16, #tpu.memory_space<vmem>>, vector<64x64xbf16>
    %cst_151 = arith.constant dense<0.000000e+00> : vector<64x64xf32>
    %329 = tpu.matmul %327, %328, %cst_151 {dimension_numbers = #tpu.dot_dimension_numbers<[1], [0], [0], [1], [0, 0, 1, 1], [], []>} : vector<64x64xbf16>, vector<64x64xbf16>, vector<64x64xf32> -> vector<64x64xf32>
    %330 = arith.subf %326, %329 : vector<64x64xf32>
    %331 = arith.mulf %330, %330 : vector<64x64xf32>
    %332 = arith.truncf %331 : vector<64x64xf32> to vector<64x64xbf16>
    %c0_152 = arith.constant 0 : index
    %c0_153 = arith.constant 0 : index
    %333 = vector.load %arg5[%c0_152, %c0_153] : memref<64x64xbf16, #tpu.memory_space<vmem>>, vector<64x64xbf16>
    %cst_154 = arith.constant dense<0.000000e+00> : vector<64x64xf32>
    %334 = tpu.matmul %332, %333, %cst_154 {dimension_numbers = #tpu.dot_dimension_numbers<[1], [0], [0], [1], [0, 0, 1, 1], [], []>} : vector<64x64xbf16>, vector<64x64xbf16>, vector<64x64xf32> -> vector<64x64xf32>
    %cst_155 = arith.constant 9.99999974E-6 : f32
    %335 = vector.broadcast %cst_155 : f32 to vector<64x64xf32>
    %336 = arith.addf %334, %335 : vector<64x64xf32>
    %337 = math.rsqrt %336 : vector<64x64xf32>
    %338 = arith.mulf %330, %337 : vector<64x64xf32>
    %339 = tpu.concatenate %302, %338 in 0 : vector<64x64xf32>, vector<64x64xf32> -> vector<128x64xf32>
    %340 = vector.extract_strided_slice %222 {offsets = [0, 0], sizes = [1, 64], strides = [1, 1]} : vector<3x64xf32> to vector<1x64xf32>
    %341 = vector.broadcast %340 : vector<1x64xf32> to vector<128x64xf32>
    %342 = arith.mulf %339, %341 : vector<128x64xf32>
    %343 = vector.extract_strided_slice %222 {offsets = [1, 0], sizes = [1, 64], strides = [1, 1]} : vector<3x64xf32> to vector<1x64xf32>
    %344 = vector.broadcast %343 : vector<1x64xf32> to vector<128x64xf32>
    %345 = arith.addf %342, %344 : vector<128x64xf32>
    %346 = arith.negf %266 : vector<128x64xf32>
    %347 = math.exp %346 : vector<128x64xf32>
    %cst_156 = arith.constant 1.000000e+00 : f32
    %348 = vector.broadcast %cst_156 : f32 to vector<128x64xf32>
    %349 = arith.addf %348, %347 : vector<128x64xf32>
    %350 = arith.divf %348, %349 : vector<128x64xf32>
    %351 = arith.mulf %266, %350 : vector<128x64xf32>
    %352 = arith.mulf %351, %345 : vector<128x64xf32>
    %353 = arith.truncf %352 : vector<128x64xf32> to vector<128x64xbf16>
    %c2_157 = arith.constant 2 : index
    %c0_158 = arith.constant 0 : index
    %c0_159 = arith.constant 0 : index
    %354 = vector.load %arg9[%c2_157, %c0_158, %c0_159] : memref<4x64x32xbf16, #tpu.memory_space<vmem>>, vector<1x64x32xbf16>
    %355 = vector.shape_cast %354 : vector<1x64x32xbf16> to vector<64x32xbf16>
    %cst_160 = arith.constant dense<0.000000e+00> : vector<128x32xf32>
    %356 = tpu.matmul %353, %355, %cst_160 {dimension_numbers = #tpu.dot_dimension_numbers<[1], [0], [0], [1], [0, 0, 1, 1], [], []>} : vector<128x64xbf16>, vector<64x32xbf16>, vector<128x32xf32> -> vector<128x32xf32>
    %357 = arith.addf %356, %218 : vector<128x32xf32>
    %cst_161 = arith.constant dense<0.000000e+00> : vector<128xf32>
    %358 = vector.multi_reduction <add>, %357, %cst_161 [1] : vector<128x32xf32> to vector<128xf32>
    %359 = vector.shape_cast %358 : vector<128xf32> to vector<128x1xf32>
    %cst_162 = arith.constant 3.200000e+01 : f32
    %360 = vector.broadcast %cst_162 : f32 to vector<128x1xf32>
    %361 = arith.divf %359, %360 : vector<128x1xf32>
    %362 = vector.broadcast %361 : vector<128x1xf32> to vector<128x32xf32>
    %363 = arith.subf %357, %362 : vector<128x32xf32>
    %364 = arith.mulf %363, %363 : vector<128x32xf32>
    %cst_163 = arith.constant dense<0.000000e+00> : vector<128xf32>
    %365 = vector.multi_reduction <add>, %364, %cst_163 [1] : vector<128x32xf32> to vector<128xf32>
    %366 = vector.shape_cast %365 : vector<128xf32> to vector<128x1xf32>
    %cst_164 = arith.constant 3.200000e+01 : f32
    %367 = vector.broadcast %cst_164 : f32 to vector<128x1xf32>
    %368 = arith.divf %366, %367 : vector<128x1xf32>
    %369 = vector.broadcast %361 : vector<128x1xf32> to vector<128x32xf32>
    %370 = arith.subf %357, %369 : vector<128x32xf32>
    %cst_165 = arith.constant 9.99999974E-6 : f32
    %371 = vector.broadcast %cst_165 : f32 to vector<128x1xf32>
    %372 = arith.addf %368, %371 : vector<128x1xf32>
    %373 = math.rsqrt %372 : vector<128x1xf32>
    %374 = vector.broadcast %373 : vector<128x1xf32> to vector<128x32xf32>
    %375 = arith.mulf %370, %374 : vector<128x32xf32>
    %376 = vector.extract_strided_slice %220 {offsets = [2, 0], sizes = [1, 32], strides = [1, 1]} : vector<5x32xf32> to vector<1x32xf32>
    %377 = vector.broadcast %376 : vector<1x32xf32> to vector<128x32xf32>
    %378 = arith.mulf %375, %377 : vector<128x32xf32>
    %379 = vector.extract_strided_slice %220 {offsets = [3, 0], sizes = [1, 32], strides = [1, 1]} : vector<5x32xf32> to vector<1x32xf32>
    %380 = vector.broadcast %379 : vector<1x32xf32> to vector<128x32xf32>
    %381 = arith.addf %378, %380 : vector<128x32xf32>
    %382 = arith.truncf %381 : vector<128x32xf32> to vector<128x32xbf16>
    %c1_166 = arith.constant 1 : index
    %c0_167 = arith.constant 0 : index
    %c0_168 = arith.constant 0 : index
    %383 = vector.load %arg10[%c1_166, %c0_167, %c0_168] : memref<2x32x64xbf16, #tpu.memory_space<vmem>>, vector<1x32x64xbf16>
    %384 = vector.shape_cast %383 : vector<1x32x64xbf16> to vector<32x64xbf16>
    %cst_169 = arith.constant dense<0.000000e+00> : vector<128x64xf32>
    %385 = tpu.matmul %382, %384, %cst_169 {dimension_numbers = #tpu.dot_dimension_numbers<[1], [0], [0], [1], [0, 0, 1, 1], [], []>} : vector<128x32xbf16>, vector<32x64xbf16>, vector<128x64xf32> -> vector<128x64xf32>
    %386 = vector.extract_strided_slice %222 {offsets = [2, 0], sizes = [1, 64], strides = [1, 1]} : vector<3x64xf32> to vector<1x64xf32>
    %387 = vector.broadcast %386 : vector<1x64xf32> to vector<128x64xf32>
    %388 = arith.addf %385, %387 : vector<128x64xf32>
    %cst_170 = arith.constant 5.000000e-01 : f32
    %389 = vector.broadcast %cst_170 : f32 to vector<128x64xf32>
    %390 = arith.mulf %389, %388 : vector<128x64xf32>
    %cst_171 = arith.constant 0.707106769 : f32
    %391 = vector.broadcast %cst_171 : f32 to vector<128x64xf32>
    %392 = arith.mulf %388, %391 : vector<128x64xf32>
    %393 = math.absf %392 : vector<128x64xf32>
    %cst_172 = arith.constant 0.327591091 : f32
    %394 = vector.broadcast %cst_172 : f32 to vector<128x64xf32>
    %395 = arith.mulf %394, %393 : vector<128x64xf32>
    %cst_173 = arith.constant 1.000000e+00 : f32
    %396 = vector.broadcast %cst_173 : f32 to vector<128x64xf32>
    %397 = arith.addf %396, %395 : vector<128x64xf32>
    %cst_174 = arith.constant 1.000000e+00 : f32
    %398 = vector.broadcast %cst_174 : f32 to vector<128x64xf32>
    %399 = arith.divf %398, %397 : vector<128x64xf32>
    %cst_175 = arith.constant 1.06140542 : f32
    %400 = vector.broadcast %cst_175 : f32 to vector<128x64xf32>
    %401 = arith.mulf %400, %399 : vector<128x64xf32>
    %cst_176 = arith.constant -1.45315206 : f32
    %402 = vector.broadcast %cst_176 : f32 to vector<128x64xf32>
    %403 = arith.addf %401, %402 : vector<128x64xf32>
    %404 = arith.mulf %403, %399 : vector<128x64xf32>
    %cst_177 = arith.constant 1.42141378 : f32
    %405 = vector.broadcast %cst_177 : f32 to vector<128x64xf32>
    %406 = arith.addf %404, %405 : vector<128x64xf32>
    %407 = arith.mulf %406, %399 : vector<128x64xf32>
    %cst_178 = arith.constant -0.284496725 : f32
    %408 = vector.broadcast %cst_178 : f32 to vector<128x64xf32>
    %409 = arith.addf %407, %408 : vector<128x64xf32>
    %410 = arith.mulf %409, %399 : vector<128x64xf32>
    %cst_179 = arith.constant 0.254829586 : f32
    %411 = vector.broadcast %cst_179 : f32 to vector<128x64xf32>
    %412 = arith.addf %410, %411 : vector<128x64xf32>
    %413 = arith.mulf %412, %399 : vector<128x64xf32>
    %cst_180 = arith.constant 0.000000e+00 : f32
    %414 = vector.broadcast %cst_180 : f32 to vector<128x64xf32>
    %415 = arith.subf %414, %393 : vector<128x64xf32>
    %416 = arith.mulf %415, %393 : vector<128x64xf32>
    %417 = math.exp %416 : vector<128x64xf32>
    %418 = arith.mulf %413, %417 : vector<128x64xf32>
    %cst_181 = arith.constant 1.000000e+00 : f32
    %419 = vector.broadcast %cst_181 : f32 to vector<128x64xf32>
    %420 = arith.subf %419, %418 : vector<128x64xf32>
    %cst_182 = arith.constant 0.000000e+00 : f32
    %421 = vector.broadcast %cst_182 : f32 to vector<128x64xf32>
    %422 = arith.cmpf oge, %392, %421 : vector<128x64xf32>
    %cst_183 = arith.constant 0.000000e+00 : f32
    %423 = vector.broadcast %cst_183 : f32 to vector<128x64xf32>
    %424 = arith.subf %423, %420 : vector<128x64xf32>
    %425 = arith.select %422, %420, %424 : vector<128x64xi1>, vector<128x64xf32>
    %cst_184 = arith.constant 1.000000e+00 : f32
    %426 = vector.broadcast %cst_184 : f32 to vector<128x64xf32>
    %427 = arith.addf %426, %425 : vector<128x64xf32>
    %428 = arith.mulf %390, %427 : vector<128x64xf32>
    %429 = arith.truncf %428 : vector<128x64xf32> to vector<128x64xbf16>
    %c3_185 = arith.constant 3 : index
    %c0_186 = arith.constant 0 : index
    %c0_187 = arith.constant 0 : index
    %430 = vector.load %arg9[%c3_185, %c0_186, %c0_187] : memref<4x64x32xbf16, #tpu.memory_space<vmem>>, vector<1x64x32xbf16>
    %431 = vector.shape_cast %430 : vector<1x64x32xbf16> to vector<64x32xbf16>
    %cst_188 = arith.constant dense<0.000000e+00> : vector<128x32xf32>
    %432 = tpu.matmul %429, %431, %cst_188 {dimension_numbers = #tpu.dot_dimension_numbers<[1], [0], [0], [1], [0, 0, 1, 1], [], []>} : vector<128x64xbf16>, vector<64x32xbf16>, vector<128x32xf32> -> vector<128x32xf32>
    %433 = vector.extract_strided_slice %220 {offsets = [4, 0], sizes = [1, 32], strides = [1, 1]} : vector<5x32xf32> to vector<1x32xf32>
    %434 = vector.broadcast %433 : vector<1x32xf32> to vector<128x32xf32>
    %435 = arith.addf %432, %434 : vector<128x32xf32>
    %436 = arith.addf %435, %357 : vector<128x32xf32>
    %c0_189 = arith.constant 0 : index
    %c0_190 = arith.constant 0 : index
    %437 = vector.load %arg13[%c0_189, %c0_190] : memref<128x32xf32, #tpu.memory_space<vmem>>, vector<128x32xf32>
    tpu.vector_store %arg13[%c0_189, %c0_190], %436 {strides = array<i32>} : memref<128x32xf32, #tpu.memory_space<vmem>>, vector<128x32xf32>,
    return
  }
  func.func @transform_0(%arg0: i32) -> (i32, i32) {
    %c0_i32 = arith.constant 0 : i32
    %c0_i32_0 = arith.constant 0 : i32
    return %arg0, %c0_i32 : i32, i32
  }
  func.func @transform_1(%arg0: i32) -> (i32, i32, i32) {
    %c0_i32 = arith.constant 0 : i32
    %c0_i32_0 = arith.constant 0 : i32
    %c0_i32_1 = arith.constant 0 : i32
    %c0_i32_2 = arith.constant 0 : i32
    return %c0_i32, %c0_i32_0, %c0_i32_1 : i32, i32, i32
  }
  func.func @transform_2(%arg0: i32) -> (i32, i32) {
    %c0_i32 = arith.constant 0 : i32
    %c0_i32_0 = arith.constant 0 : i32
    %c0_i32_1 = arith.constant 0 : i32
    return %c0_i32, %c0_i32_0 : i32, i32
  }
  func.func @transform_3(%arg0: i32) -> (i32, i32) {
    %c0_i32 = arith.constant 0 : i32
    %c0_i32_0 = arith.constant 0 : i32
    %c0_i32_1 = arith.constant 0 : i32
    return %c0_i32, %c0_i32_0 : i32, i32
  }
  func.func @transform_4(%arg0: i32) -> (i32, i32) {
    %c0_i32 = arith.constant 0 : i32
    %c0_i32_0 = arith.constant 0 : i32
    %c0_i32_1 = arith.constant 0 : i32
    return %c0_i32, %c0_i32_0 : i32, i32
  }
  func.func @transform_5(%arg0: i32) -> (i32, i32) {
    %c0_i32 = arith.constant 0 : i32
    %c0_i32_0 = arith.constant 0 : i32
    %c0_i32_1 = arith.constant 0 : i32
    return %c0_i32, %c0_i32_0 : i32, i32
  }
  func.func @transform_6(%arg0: i32) -> (i32, i32) {
    %c0_i32 = arith.constant 0 : i32
    %c0_i32_0 = arith.constant 0 : i32
    %c0_i32_1 = arith.constant 0 : i32
    return %c0_i32, %c0_i32_0 : i32, i32
  }
  func.func @transform_7(%arg0: i32) -> (i32, i32, i32) {
    %c0_i32 = arith.constant 0 : i32
    %c0_i32_0 = arith.constant 0 : i32
    %c0_i32_1 = arith.constant 0 : i32
    %c0_i32_2 = arith.constant 0 : i32
    return %c0_i32, %c0_i32_0, %c0_i32_1 : i32, i32, i32
  }
  func.func @transform_8(%arg0: i32) -> (i32, i32, i32) {
    %c0_i32 = arith.constant 0 : i32
    %c0_i32_0 = arith.constant 0 : i32
    %c0_i32_1 = arith.constant 0 : i32
    %c0_i32_2 = arith.constant 0 : i32
    return %c0_i32, %c0_i32_0, %c0_i32_1 : i32, i32, i32
  }
  func.func @transform_9(%arg0: i32) -> (i32, i32, i32) {
    %c0_i32 = arith.constant 0 : i32
    %c0_i32_0 = arith.constant 0 : i32
    %c0_i32_1 = arith.constant 0 : i32
    %c0_i32_2 = arith.constant 0 : i32
    return %c0_i32, %c0_i32_0, %c0_i32_1 : i32, i32, i32
  }
  func.func @transform_10(%arg0: i32) -> (i32, i32, i32) {
    %c0_i32 = arith.constant 0 : i32
    %c0_i32_0 = arith.constant 0 : i32
    %c0_i32_1 = arith.constant 0 : i32
    %c0_i32_2 = arith.constant 0 : i32
    return %c0_i32, %c0_i32_0, %c0_i32_1 : i32, i32, i32
  }
  func.func @transform_11(%arg0: i32) -> (i32, i32, i32) {
    %c0_i32 = arith.constant 0 : i32
    %c0_i32_0 = arith.constant 0 : i32
    %c0_i32_1 = arith.constant 0 : i32
    %c0_i32_2 = arith.constant 0 : i32
    return %c0_i32, %c0_i32_0, %c0_i32_1 : i32, i32, i32
  }
  func.func @transform_12(%arg0: i32) -> (i32, i32) {
    %c0_i32 = arith.constant 0 : i32
    %c0_i32_0 = arith.constant 0 : i32
    return %arg0, %c0_i32 : i32, i32
  }
}

</mosaic_0001>

<llo_original>
// kernel: retnet_forward.1
$region0: #{retnet_forward.1}
  #allocation0 [shape = 'u32[]', space=smem, size = 0x4, offset = 0x4, fixed_abs, tag = 'smem constant byte address 0x4 - core index']
  #allocation1 [shape = 'u32[72,128]{1,0:T(1,128)}', space=vmem, size = 0x9000, scoped, tag = 'internal scratch']
  %s0 = inlined_call_operand.vmem [shape: f32[256,32], index: 0, kind: input, shape index: {}]
  %s1 = inlined_call_operand.vmem [shape: f32[2,128,64], index: 1, kind: input, shape index: {}]
  %s2 = inlined_call_operand.hbm [shape: f32[64,128], index: 2, kind: input, shape index: {}]
  %s3 = inlined_call_operand.hbm [shape: bf16[128,128], index: 3, kind: input, shape index: {}]
  %s4 = inlined_call_operand.hbm [shape: bf16[64,64], index: 4, kind: input, shape index: {}]
  %s5 = inlined_call_operand.hbm [shape: f32[128,32], index: 5, kind: input, shape index: {}]
  %s6 = inlined_call_operand.vmem [shape: f32[128,64], index: 6, kind: input, shape index: {}]
  %s7 = inlined_call_operand.vmem [shape: bf16[4,32,128], index: 7, kind: input, shape index: {}]
  %s8 = inlined_call_operand.vmem [shape: bf16[4,64,32], index: 8, kind: input, shape index: {}]
  %s9 = inlined_call_operand.vmem [shape: bf16[2,32,64], index: 9, kind: input, shape index: {}]
  %s10 = inlined_call_operand.vmem [shape: f32[2,5,32], index: 10, kind: input, shape index: {}]
  %s11 = inlined_call_operand.vmem [shape: f32[2,3,64], index: 11, kind: input, shape index: {}]
  %s12 = inlined_call_operand.hbm [shape: f32[256,32], index: 12, kind: output, shape index: {}]
  %s13 = sld [smem:[#allocation0]]
  $region97: #{retnet_forward.1} parent=0
    _
  %s15 = ssub.s32 1, %s13
  %s16 = scalar_select 0, %s15, %s13
  $region1: #{retnet_forward.1} parent=0
    #allocation2 [shape = 'u8[32768]{0}', space=vmem, size = 0x8000, scoped, tag = 'input window, operand 2, single buffered']
    #allocation3 [shape = 's32[2]{0}', space=sflag, size = 0x8, scoped, tag = 'scoped memory for retnet_forward.1']
    #allocation4 [shape = 's32[2]{0}', space=sflag, size = 0x8, scoped, tag = 'scoped memory for retnet_forward.1']
    #allocation5 [shape = 'u8[32768]{0}', space=vmem, size = 0x8000, scoped, tag = 'input window, operand 3, single buffered']
    #allocation6 [shape = 's32[1]{0}', space=sflag, size = 0x4, scoped, tag = 'scoped memory for retnet_forward.1']
    #allocation7 [shape = 'u8[16384]{0}', space=vmem, size = 0x4000, scoped, tag = 'input window, operand 4, single buffered']
    #allocation8 [shape = 'u8[65536]{0}', space=vmem, size = 0x10000, scoped, tag = 'input window, operand 5, single buffered']
    #allocation9 [shape = 's32[1]{0}', space=sflag, size = 0x4, scoped, tag = 'scoped memory for retnet_forward.1']
    #allocation10 [shape = 'u8[131072]{0}', space=vmem, size = 0x20000, scoped, tag = 'output window, operand 0']
    %17 = vsyncpa [#allocation3], 0
    %18 = vsyncpa [#allocation6], 0
    %19 = vsyncpa [#allocation9], 0
    %20 = vsyncpa [#allocation4], 0
    %s21 = scalar_lea.sflag [#allocation4], 1
    %22 = vsyncpa %s21, 0
    loop: start=0, step=1, limit=4
    $region2: #{retnet_forward.1} parent=1 // loop_pre_header
      _
    $region3: #{retnet_forward.1} parent=1 // loop_header
      %s24 = sphi 0, %s28
      %p25 = scmp.ge.s32.totalorder %s24, 4
      %s34 = sphi 0, %s36
      %s37 = sphi 0, %s34
      %s38 = sphi 0, %s37
      %s54 = sphi 0, %s38
      %s58 = sphi 0, %s58
      %s60 = sphi 0, %s58
      %s61 = sphi 0, %s60
      %s75 = sphi 0, %s61
      %s79 = sphi 0, %s79
      %s81 = sphi 0, %s79
      %s82 = sphi 0, %s81
      %s96 = sphi 0, %s82
      %s100 = sphi 0, %s100
      %s102 = sphi 0, %s100
      %s103 = sphi 0, %s102
      %s117 = sphi 0, %s103
      %s121 = sphi 0, %s121
      %s123 = sphi 0, %s121
      %s124 = sphi 0, %s123
      %s138 = sphi 0, %s124
      %s142 = sphi 0, %s142
      %s144 = sphi 0, %s142
      %s145 = sphi 0, %s144
      %s159 = sphi 0, %s145
      %s163 = sphi 0, %s163
      %s165 = sphi 0, %s163
      %s166 = sphi 0, %s165
      %s180 = sphi 0, %s166
      %s184 = sphi 0, %s184
      %s186 = sphi 0, %s184
      %s187 = sphi 0, %s186
      %s201 = sphi 0, %s187
      %s205 = sphi 0, %s205
      %s207 = sphi 0, %s205
      %s208 = sphi 0, %s207
      %s222 = sphi 0, %s208
      %s226 = sphi 0, %s226
      %s228 = sphi 0, %s226
      %s229 = sphi 0, %s228
      %s243 = sphi 0, %s229
      %s247 = sphi 0, %s247
      %s249 = sphi 0, %s247
      %s250 = sphi 0, %s249
      %s264 = sphi 0, %s250
      %s268 = sphi 0, %s268
      %s270 = sphi 0, %s268
      %s271 = sphi 0, %s270
      %s285 = sphi 0, %s271
      %s291 = sphi 0, %s293
      %s294 = sphi 0, %s291
      %s295 = sphi 0, %s294
      %s311 = sphi 0, %s295
    $region4: #{retnet_forward.1} parent=1 // loop_header_branch
      %27 = sbr.rel (%p25) target = $region8
    $region5: #{retnet_forward.1} parent=1 // loop_body
      %s29 = ssub.s32 %s24, 1
      %s30 = ssub.s32 %s24, 2
      %s31 = sadd.s32 %s24, 1
      %s32 = ssub.s32 %s24, %s31
      %p33 = scmp.eq.s32.totalorder %s32, 0
      %s35 = sadd.s32 %s34, 1
      %s36 = scalar_select %p33, %s34, %s35
      %p39 = pneg %p33
      %p40 = scmp.eq.s32.totalorder %s24, 1
      %p41 = por %p39, %p40
      %p42 = scmp.ne.s32.totalorder %s34, %s37
      %p43 = scmp.eq.s32.totalorder %s24, 0
      %p44 = por %p42, %p43
      %p45 = scmp.ne.s32.totalorder %s34, %s37
      %p46 = scmp.eq.s32.totalorder %s29, 1
      %p47 = por %p45, %p46
      %p48 = scmp.ne.s32.totalorder %s37, %s38
      %p49 = scmp.eq.s32.totalorder %s29, 0
      %p50 = por %p48, %p49
      %p51 = scmp.ne.s32.totalorder %s37, %s38
      %p52 = scmp.eq.s32.totalorder %s30, 1
      %p53 = por %p51, %p52
      %p55 = scmp.ne.s32.totalorder %s38, %s54
      %p56 = scmp.eq.s32.totalorder %s30, 0
      %p57 = por %p55, %p56
      %s59 = sadd.s32 %s58, 1
      %p62 = scmp.eq.s32.totalorder %s24, 1
      %p63 = scmp.ne.s32.totalorder %s58, %s60
      %p64 = scmp.eq.s32.totalorder %s24, 0
      %p65 = por %p63, %p64
      %p66 = scmp.ne.s32.totalorder %s58, %s60
      %p67 = scmp.eq.s32.totalorder %s29, 1
      %p68 = por %p66, %p67
      %p69 = scmp.ne.s32.totalorder %s60, %s61
      %p70 = scmp.eq.s32.totalorder %s29, 0
      %p71 = por %p69, %p70
      %p72 = scmp.ne.s32.totalorder %s60, %s61
      %p73 = scmp.eq.s32.totalorder %s30, 1
      %p74 = por %p72, %p73
      %p76 = scmp.ne.s32.totalorder %s61, %s75
      %p77 = scmp.eq.s32.totalorder %s30, 0
      %p78 = por %p76, %p77
      %s80 = sadd.s32 %s79, 1
      %p83 = scmp.eq.s32.totalorder %s24, 1
      %p84 = scmp.ne.s32.totalorder %s79, %s81
      %p85 = scmp.eq.s32.totalorder %s24, 0
      %p86 = por %p84, %p85
      %p87 = scmp.ne.s32.totalorder %s79, %s81
      %p88 = scmp.eq.s32.totalorder %s29, 1
      %p89 = por %p87, %p88
      %p90 = scmp.ne.s32.totalorder %s81, %s82
      %p91 = scmp.eq.s32.totalorder %s29, 0
      %p92 = por %p90, %p91
      %p93 = scmp.ne.s32.totalorder %s81, %s82
      %p94 = scmp.eq.s32.totalorder %s30, 1
      %p95 = por %p93, %p94
      %p97 = scmp.ne.s32.totalorder %s82, %s96
      %p98 = scmp.eq.s32.totalorder %s30, 0
      %p99 = por %p97, %p98
      %s101 = sadd.s32 %s100, 1
      %p104 = scmp.eq.s32.totalorder %s24, 1
      %p105 = scmp.ne.s32.totalorder %s100, %s102
      %p106 = scmp.eq.s32.totalorder %s24, 0
      %p107 = por %p105, %p106
      %p108 = scmp.ne.s32.totalorder %s100, %s102
      %p109 = scmp.eq.s32.totalorder %s29, 1
      %p110 = por %p108, %p109
      %p111 = scmp.ne.s32.totalorder %s102, %s103
      %p112 = scmp.eq.s32.totalorder %s29, 0
      %p113 = por %p111, %p112
      %p114 = scmp.ne.s32.totalorder %s102, %s103
      %p115 = scmp.eq.s32.totalorder %s30, 1
      %p116 = por %p114, %p115
      %p118 = scmp.ne.s32.totalorder %s103, %s117
      %p119 = scmp.eq.s32.totalorder %s30, 0
      %p120 = por %p118, %p119
      %s122 = sadd.s32 %s121, 1
      %p125 = scmp.eq.s32.totalorder %s24, 1
      %p126 = scmp.ne.s32.totalorder %s121, %s123
      %p127 = scmp.eq.s32.totalorder %s24, 0
      %p128 = por %p126, %p127
      %p129 = scmp.ne.s32.totalorder %s121, %s123
      %p130 = scmp.eq.s32.totalorder %s29, 1
      %p131 = por %p129, %p130
      %p132 = scmp.ne.s32.totalorder %s123, %s124
      %p133 = scmp.eq.s32.totalorder %s29, 0
      %p134 = por %p132, %p133
      %p135 = scmp.ne.s32.totalorder %s123, %s124
      %p136 = scmp.eq.s32.totalorder %s30, 1
      %p137 = por %p135, %p136
      %p139 = scmp.ne.s32.totalorder %s124, %s138
      %p140 = scmp.eq.s32.totalorder %s30, 0
      %p141 = por %p139, %p140
      %s143 = sadd.s32 %s142, 1
      %p146 = scmp.eq.s32.totalorder %s24, 1
      %p147 = scmp.ne.s32.totalorder %s142, %s144
      %p148 = scmp.eq.s32.totalorder %s24, 0
      %p149 = por %p147, %p148
      %p150 = scmp.ne.s32.totalorder %s142, %s144
      %p151 = scmp.eq.s32.totalorder %s29, 1
      %p152 = por %p150, %p151
      %p153 = scmp.ne.s32.totalorder %s144, %s145
      %p154 = scmp.eq.s32.totalorder %s29, 0
      %p155 = por %p153, %p154
      %p156 = scmp.ne.s32.totalorder %s144, %s145
      %p157 = scmp.eq.s32.totalorder %s30, 1
      %p158 = por %p156, %p157
      %p160 = scmp.ne.s32.totalorder %s145, %s159
      %p161 = scmp.eq.s32.totalorder %s30, 0
      %p162 = por %p160, %p161
      %s164 = sadd.s32 %s163, 1
      %p167 = scmp.eq.s32.totalorder %s24, 1
      %p168 = scmp.ne.s32.totalorder %s163, %s165
      %p169 = scmp.eq.s32.totalorder %s24, 0
      %p170 = por %p168, %p169
      %p171 = scmp.ne.s32.totalorder %s163, %s165
      %p172 = scmp.eq.s32.totalorder %s29, 1
      %p173 = por %p171, %p172
      %p174 = scmp.ne.s32.totalorder %s165, %s166
      %p175 = scmp.eq.s32.totalorder %s29, 0
      %p176 = por %p174, %p175
      %p177 = scmp.ne.s32.totalorder %s165, %s166
      %p178 = scmp.eq.s32.totalorder %s30, 1
      %p179 = por %p177, %p178
      %p181 = scmp.ne.s32.totalorder %s166, %s180
      %p182 = scmp.eq.s32.totalorder %s30, 0
      %p183 = por %p181, %p182
      %s185 = sadd.s32 %s184, 1
      %p188 = scmp.eq.s32.totalorder %s24, 1
      %p189 = scmp.ne.s32.totalorder %s184, %s186
      %p190 = scmp.eq.s32.totalorder %s24, 0
      %p191 = por %p189, %p190
      %p192 = scmp.ne.s32.totalorder %s184, %s186
      %p193 = scmp.eq.s32.totalorder %s29, 1
      %p194 = por %p192, %p193
      %p195 = scmp.ne.s32.totalorder %s186, %s187
      %p196 = scmp.eq.s32.totalorder %s29, 0
      %p197 = por %p195, %p196
      %p198 = scmp.ne.s32.totalorder %s186, %s187
      %p199 = scmp.eq.s32.totalorder %s30, 1
      %p200 = por %p198, %p199
      %p202 = scmp.ne.s32.totalorder %s187, %s201
      %p203 = scmp.eq.s32.totalorder %s30, 0
      %p204 = por %p202, %p203
      %s206 = sadd.s32 %s205, 1
      %p209 = scmp.eq.s32.totalorder %s24, 1
      %p210 = scmp.ne.s32.totalorder %s205, %s207
      %p211 = scmp.eq.s32.totalorder %s24, 0
      %p212 = por %p210, %p211
      %p213 = scmp.ne.s32.totalorder %s205, %s207
      %p214 = scmp.eq.s32.totalorder %s29, 1
      %p215 = por %p213, %p214
      %p216 = scmp.ne.s32.totalorder %s207, %s208
      %p217 = scmp.eq.s32.totalorder %s29, 0
      %p218 = por %p216, %p217
      %p219 = scmp.ne.s32.totalorder %s207, %s208
      %p220 = scmp.eq.s32.totalorder %s30, 1
      %p221 = por %p219, %p220
      %p223 = scmp.ne.s32.totalorder %s208, %s222
      %p224 = scmp.eq.s32.totalorder %s30, 0
      %p225 = por %p223, %p224
      %s227 = sadd.s32 %s226, 1
      %p230 = scmp.eq.s32.totalorder %s24, 1
      %p231 = scmp.ne.s32.totalorder %s226, %s228
      %p232 = scmp.eq.s32.totalorder %s24, 0
      %p233 = por %p231, %p232
      %p234 = scmp.ne.s32.totalorder %s226, %s228
      %p235 = scmp.eq.s32.totalorder %s29, 1
      %p236 = por %p234, %p235
      %p237 = scmp.ne.s32.totalorder %s228, %s229
      %p238 = scmp.eq.s32.totalorder %s29, 0
      %p239 = por %p237, %p238
      %p240 = scmp.ne.s32.totalorder %s228, %s229
      %p241 = scmp.eq.s32.totalorder %s30, 1
      %p242 = por %p240, %p241
      %p244 = scmp.ne.s32.totalorder %s229, %s243
      %p245 = scmp.eq.s32.totalorder %s30, 0
      %p246 = por %p244, %p245
      %s248 = sadd.s32 %s247, 1
      %p251 = scmp.eq.s32.totalorder %s24, 1
      %p252 = scmp.ne.s32.totalorder %s247, %s249
      %p253 = scmp.eq.s32.totalorder %s24, 0
      %p254 = por %p252, %p253
      %p255 = scmp.ne.s32.totalorder %s247, %s249
      %p256 = scmp.eq.s32.totalorder %s29, 1
      %p257 = por %p255, %p256
      %p258 = scmp.ne.s32.totalorder %s249, %s250
      %p259 = scmp.eq.s32.totalorder %s29, 0
      %p260 = por %p258, %p259
      %p261 = scmp.ne.s32.totalorder %s249, %s250
      %p262 = scmp.eq.s32.totalorder %s30, 1
      %p263 = por %p261, %p262
      %p265 = scmp.ne.s32.totalorder %s250, %s264
      %p266 = scmp.eq.s32.totalorder %s30, 0
      %p267 = por %p265, %p266
      %s269 = sadd.s32 %s268, 1
      %p272 = scmp.eq.s32.totalorder %s24, 1
      %p273 = scmp.ne.s32.totalorder %s268, %s270
      %p274 = scmp.eq.s32.totalorder %s24, 0
      %p275 = por %p273, %p274
      %p276 = scmp.ne.s32.totalorder %s268, %s270
      %p277 = scmp.eq.s32.totalorder %s29, 1
      %p278 = por %p276, %p277
      %p279 = scmp.ne.s32.totalorder %s270, %s271
      %p280 = scmp.eq.s32.totalorder %s29, 0
      %p281 = por %p279, %p280
      %p282 = scmp.ne.s32.totalorder %s270, %s271
      %p283 = scmp.eq.s32.totalorder %s30, 1
      %p284 = por %p282, %p283
      %p286 = scmp.ne.s32.totalorder %s271, %s285
      %p287 = scmp.eq.s32.totalorder %s30, 0
      %p288 = por %p286, %p287
      %s289 = ssub.s32 %s24, %s31
      %p290 = scmp.eq.s32.totalorder %s289, 0
      %s292 = sadd.s32 %s291, 1
      %s293 = scalar_select %p290, %s291, %s292
      %p296 = pneg %p290
      %p297 = scmp.eq.s32.totalorder %s24, 1
      %p298 = por %p296, %p297
      %p299 = scmp.ne.s32.totalorder %s291, %s294
      %p300 = scmp.eq.s32.totalorder %s24, 0
      %p301 = por %p299, %p300
      %p302 = scmp.ne.s32.totalorder %s291, %s294
      %p303 = scmp.eq.s32.totalorder %s29, 1
      %p304 = por %p302, %p303
      %p305 = scmp.ne.s32.totalorder %s294, %s295
      %p306 = scmp.eq.s32.totalorder %s29, 0
      %p307 = por %p305, %p306
      %p308 = scmp.ne.s32.totalorder %s294, %s295
      %p309 = scmp.eq.s32.totalorder %s30, 1
      %p310 = por %p308, %p309
      %p312 = scmp.ne.s32.totalorder %s295, %s311
      %p313 = scmp.eq.s32.totalorder %s30, 0
      %p314 = por %p312, %p313
      %p315 = scmp.le.s32.totalorder 1, %s24
      %p316 = scmp.lt.s32.totalorder %s24, 3
      %p317 = pnand %p315, %p316
      %p318 = pneg %p317
      // Predicated region
      $region9: #{retnet_forward.1} parent=5 // pred_check
        _
      $region10: #{retnet_forward.1} parent=5 // pred_check_branch
        %320 = sbr.rel (%p317) target = $region12
      $region11: #{retnet_forward.1} parent=5 // pred_region
        %s321 = ssub.s32 %s24, 1
        // Predicated region
        $region13: #{retnet_forward.1} parent=11 // pred_check
          %p322 = pneg %p71
        $region14: #{retnet_forward.1} parent=11 // pred_check_branch
          %324 = sbr.rel (%p322) target = $region16
        $region15: #{retnet_forward.1} parent=11 // pred_region
          _
        $region16: #{retnet_forward.1} parent=11 // pred_fallthru
          _
        // Predicated region
        $region17: #{retnet_forward.1} parent=11 // pred_check
          %p325 = pneg %p92
        $region18: #{retnet_forward.1} parent=11 // pred_check_branch
          %327 = sbr.rel (%p325) target = $region20
        $region19: #{retnet_forward.1} parent=11 // pred_region
          %329 = vsyncadd [#allocation3], 0
          %s330 = sshll.u32 %s2, 4
          %s331 = int_to_ptr.hbm [resolvable:$true] %s330
          %s332 = sshll.u32 [#allocation2], 4
          %s333 = int_to_ptr.vmem [resolvable:$true] %s332
          %338 = dma.hbm_to_vmem [thread:$0]  %s331, 1024, %s333, [#allocation3], 128, 128, 8
        $region20: #{retnet_forward.1} parent=11 // pred_fallthru
          _
        // Predicated region
        $region21: #{retnet_forward.1} parent=11 // pred_check
          %p339 = pneg %p113
        $region22: #{retnet_forward.1} parent=11 // pred_check_branch
          %341 = sbr.rel (%p339) target = $region24
        $region23: #{retnet_forward.1} parent=11 // pred_region
          %343 = vsyncadd [#allocation6], 0
          %s344 = sshll.u32 %s3, 4
          %s345 = int_to_ptr.hbm [resolvable:$true] %s344
          %s346 = sshll.u32 [#allocation5], 4
          %s347 = int_to_ptr.vmem [resolvable:$true] %s346
          %352 = dma.hbm_to_vmem [thread:$0]  %s345, 1024, %s347, [#allocation6], 64, 64, 4
        $region24: #{retnet_forward.1} parent=11 // pred_fallthru
          _
        // Predicated region
        $region25: #{retnet_forward.1} parent=11 // pred_check
          %p353 = pneg %p134
        $region26: #{retnet_forward.1} parent=11 // pred_check_branch
          %355 = sbr.rel (%p353) target = $region28
        $region27: #{retnet_forward.1} parent=11 // pred_region
          %357 = vsyncadd [#allocation6], 0
          %s358 = sshll.u32 %s4, 4
          %s359 = int_to_ptr.hbm [resolvable:$true] %s358
          %s360 = sshll.u32 [#allocation7], 4
          %s361 = int_to_ptr.vmem [resolvable:$true] %s360
          %366 = dma.hbm_to_vmem [thread:$0]  %s359, 512, %s361, [#allocation6], 64, 64, 4
        $region28: #{retnet_forward.1} parent=11 // pred_fallthru
          _
        // Predicated region
        $region29: #{retnet_forward.1} parent=11 // pred_check
          %p367 = pneg %p155
        $region30: #{retnet_forward.1} parent=11 // pred_check_branch
          %369 = sbr.rel (%p367) target = $region32
        $region31: #{retnet_forward.1} parent=11 // pred_region
          %371 = vsyncadd [#allocation9], 0
          %s372 = sshll.u32 %s5, 4
          %s373 = int_to_ptr.hbm [resolvable:$true] %s372
          %s374 = sshll.u32 [#allocation8], 4
          %s375 = int_to_ptr.vmem [resolvable:$true] %s374
          %380 = dma.hbm_to_vmem [thread:$0]  %s373, 2048, %s375, [#allocation9], 128, 128, 8
        $region32: #{retnet_forward.1} parent=11 // pred_fallthru
          _
        // Predicated region
        $region33: #{retnet_forward.1} parent=11 // pred_check
          %p381 = pneg %p176
        $region34: #{retnet_forward.1} parent=11 // pred_check_branch
          %383 = sbr.rel (%p381) target = $region36
        $region35: #{retnet_forward.1} parent=11 // pred_region
          _
        $region36: #{retnet_forward.1} parent=11 // pred_fallthru
          _
        // Predicated region
        $region37: #{retnet_forward.1} parent=11 // pred_check
          %p384 = pneg %p197
        $region38: #{retnet_forward.1} parent=11 // pred_check_branch
          %386 = sbr.rel (%p384) target = $region40
        $region39: #{retnet_forward.1} parent=11 // pred_region
          _
        $region40: #{retnet_forward.1} parent=11 // pred_fallthru
          _
        // Predicated region
        $region41: #{retnet_forward.1} parent=11 // pred_check
          %p387 = pneg %p218
        $region42: #{retnet_forward.1} parent=11 // pred_check_branch
          %389 = sbr.rel (%p387) target = $region44
        $region43: #{retnet_forward.1} parent=11 // pred_region
          _
        $region44: #{retnet_forward.1} parent=11 // pred_fallthru
          _
        // Predicated region
        $region45: #{retnet_forward.1} parent=11 // pred_check
          %p390 = pneg %p239
        $region46: #{retnet_forward.1} parent=11 // pred_check_branch
          %392 = sbr.rel (%p390) target = $region48
        $region47: #{retnet_forward.1} parent=11 // pred_region
          _
        $region48: #{retnet_forward.1} parent=11 // pred_fallthru
          _
        // Predicated region
        $region49: #{retnet_forward.1} parent=11 // pred_check
          %p393 = pneg %p260
        $region50: #{retnet_forward.1} parent=11 // pred_check_branch
          %395 = sbr.rel (%p393) target = $region52
        $region51: #{retnet_forward.1} parent=11 // pred_region
          _
        $region52: #{retnet_forward.1} parent=11 // pred_fallthru
          _
        // Predicated region
        $region53: #{retnet_forward.1} parent=11 // pred_check
          %p396 = pneg %p281
        $region54: #{retnet_forward.1} parent=11 // pred_check_branch
          %398 = sbr.rel (%p396) target = $region56
        $region55: #{retnet_forward.1} parent=11 // pred_region
          _
        $region56: #{retnet_forward.1} parent=11 // pred_fallthru
          _
      $region12: #{retnet_forward.1} parent=5 // pred_fallthru
        _
      %p399 = scmp.lt.s32.totalorder %s24, 2
      // Predicated region
      $region57: #{retnet_forward.1} parent=5 // pred_check
        %p400 = pneg %p399
      $region58: #{retnet_forward.1} parent=5 // pred_check_branch
        %402 = sbr.rel (%p400) target = $region60
      $region59: #{retnet_forward.1} parent=5 // pred_region
        // Predicated region
        $region61: #{retnet_forward.1} parent=59 // pred_check
          %p403 = pneg %p44
        $region62: #{retnet_forward.1} parent=59 // pred_check_branch
          %405 = sbr.rel (%p403) target = $region64
        $region63: #{retnet_forward.1} parent=59 // pred_region
          %s406 = smul.u32 16, %s24
          %p407 = scmp.lt.s32.totalorder %s406, 31
          %s408 = scalar_select %p407, %s406, 31
          %s409 = smul.addr %s408, 8
          %s410 = scalar_lea.vmem %s0, %s409
          %s411 = smul.u32 16, %s24
        $region64: #{retnet_forward.1} parent=59 // pred_fallthru
          _
      $region60: #{retnet_forward.1} parent=5 // pred_fallthru
        _
      %p412 = scmp.le.s32.totalorder 1, %s24
      %p413 = scmp.lt.s32.totalorder %s24, 3
      %p414 = pnand %p412, %p413
      %p415 = pneg %p414
      // Predicated region
      $region65: #{retnet_forward.1} parent=5 // pred_check
        _
      $region66: #{retnet_forward.1} parent=5 // pred_check_branch
        %417 = sbr.rel (%p414) target = $region68
      $region67: #{retnet_forward.1} parent=5 // pred_region
        %s418 = ssub.s32 %s24, 1
        // Predicated region
        $region69: #{retnet_forward.1} parent=67 // pred_check
          %p419 = pneg %p92
        $region70: #{retnet_forward.1} parent=67 // pred_check_branch
          %421 = sbr.rel (%p419) target = $region72
        $region71: #{retnet_forward.1} parent=67 // pred_region
          %423 = dma.done [#allocation3], 1024
        $region72: #{retnet_forward.1} parent=67 // pred_fallthru
          _
        // Predicated region
        $region73: #{retnet_forward.1} parent=67 // pred_check
          %p424 = pneg %p113
        $region74: #{retnet_forward.1} parent=67 // pred_check_branch
          %426 = sbr.rel (%p424) target = $region76
        $region75: #{retnet_forward.1} parent=67 // pred_region
          %428 = dma.done [#allocation6], 1024
        $region76: #{retnet_forward.1} parent=67 // pred_fallthru
          _
        // Predicated region
        $region77: #{retnet_forward.1} parent=67 // pred_check
          %p429 = pneg %p134
        $region78: #{retnet_forward.1} parent=67 // pred_check_branch
          %431 = sbr.rel (%p429) target = $region80
        $region79: #{retnet_forward.1} parent=67 // pred_region
          %433 = dma.done [#allocation6], 512
        $region80: #{retnet_forward.1} parent=67 // pred_fallthru
          _
        // Predicated region
        $region81: #{retnet_forward.1} parent=67 // pred_check
          %p434 = pneg %p155
        $region82: #{retnet_forward.1} parent=67 // pred_check_branch
          %436 = sbr.rel (%p434) target = $region84
        $region83: #{retnet_forward.1} parent=67 // pred_region
          %438 = dma.done [#allocation9], 2048
        $region84: #{retnet_forward.1} parent=67 // pred_fallthru
          _
        %s439 = smul.u32 16, %s29
        %p440 = scmp.lt.s32.totalorder %s439, 31
        %s441 = scalar_select %p440, %s439, 31
        %s442 = smul.addr %s441, 8
        %s443 = scalar_lea.vmem %s0, %s442
        %p444 = pneg %p50
        %p445 = pneg %p47
        %p446 = pneg %p71
        %p447 = pneg %p68
        %p448 = pneg %p92
        %p449 = pneg %p89
        %p450 = pneg %p113
        %p451 = pneg %p110
        %p452 = pneg %p134
        %p453 = pneg %p131
        %p454 = pneg %p155
        %p455 = pneg %p152
        %p456 = pneg %p176
        %p457 = pneg %p173
        %p458 = pneg %p197
        %p459 = pneg %p194
        %p460 = pneg %p218
        %p461 = pneg %p215
        %p462 = pneg %p239
        %p463 = pneg %p236
        %p464 = pneg %p260
        %p465 = pneg %p257
        %p466 = pneg %p281
        %p467 = pneg %p278
        %p468 = pneg %p307
        %p469 = pneg %p304
        %s470 = sand.u32 %s294, 1
        %s471 = scalar_lea.sflag [#allocation4], %s470
        %s472 = sand.u32 %s294, 1
        %s473 = smul.addr %s472, 128
        %s474 = scalar_lea.vmem [#allocation10], %s473
        %s475 = smul.u32 16, %s29
        %p476 = scmp.lt.s32.totalorder %s475, 31
        %s477 = scalar_select %p476, %s475, 31
        %s478 = smul.addr %s477, 8
        %s479 = scalar_lea.vmem %s0, %s478
        %s480 = smul.u32 16, %s29
        %s481 = smul.u32 16, %s29
        %v483 = vld [vmem:[%s479] sm:$0xff]
        %v484 = vld [vmem:[%s479 + $0x8] sm:$0xff]
        %v485 = vld [vmem:[%s479 + $0x10] sm:$0xff]
        %v486 = vld [vmem:[%s479 + $0x18] sm:$0xff]
        %v487 = vld [vmem:[%s479 + $0x20] sm:$0xff]
        %v488 = vld [vmem:[%s479 + $0x28] sm:$0xff]
        %v489 = vld [vmem:[%s479 + $0x30] sm:$0xff]
        %v490 = vld [vmem:[%s479 + $0x38] sm:$0xff]
        %v491 = vld [vmem:[%s479 + $0x40] sm:$0xff]
        %v492 = vld [vmem:[%s479 + $0x48] sm:$0xff]
        %v493 = vld [vmem:[%s479 + $0x50] sm:$0xff]
        %v494 = vld [vmem:[%s479 + $0x58] sm:$0xff]
        %v495 = vld [vmem:[%s479 + $0x60] sm:$0xff]
        %v496 = vld [vmem:[%s479 + $0x68] sm:$0xff]
        %v497 = vld [vmem:[%s479 + $0x70] sm:$0xff]
        %v498 = vld [vmem:[%s479 + $0x78] sm:$0xff]
        %v499 = vld [vmem:[%s10] sm:$0x1f]
        %v500 = vld [vmem:[%s11] sm:$0x7]
        %vm501 = vcmask 261120
        %v502 = vsel %vm501, %v483, 0.0
        %503 = vadd.xlane.f32.xlu0 %v502
        %v504 = vpop.xlane.xlu0 %503
        %v505 = vsel %vm501, %v484, 0.0
        %506 = vadd.xlane.f32.xlu0 %v505
        %v507 = vpop.xlane.xlu0 %506
        %v508 = vsel %vm501, %v485, 0.0
        %509 = vadd.xlane.f32.xlu0 %v508
        %v510 = vpop.xlane.xlu0 %509
        %v511 = vsel %vm501, %v486, 0.0
        %512 = vadd.xlane.f32.xlu0 %v511
        %v513 = vpop.xlane.xlu0 %512
        %v514 = vsel %vm501, %v487, 0.0
        %515 = vadd.xlane.f32.xlu0 %v514
        %v516 = vpop.xlane.xlu0 %515
        %v517 = vsel %vm501, %v488, 0.0
        %518 = vadd.xlane.f32.xlu0 %v517
        %v519 = vpop.xlane.xlu0 %518
        %v520 = vsel %vm501, %v489, 0.0
        %521 = vadd.xlane.f32.xlu0 %v520
        %v522 = vpop.xlane.xlu0 %521
        %v523 = vsel %vm501, %v490, 0.0
        %524 = vadd.xlane.f32.xlu0 %v523
        %v525 = vpop.xlane.xlu0 %524
        %v526 = vsel %vm501, %v491, 0.0
        %527 = vadd.xlane.f32.xlu0 %v526
        %v528 = vpop.xlane.xlu0 %527
        %v529 = vsel %vm501, %v492, 0.0
        %530 = vadd.xlane.f32.xlu0 %v529
        %v531 = vpop.xlane.xlu0 %530
        %v532 = vsel %vm501, %v493, 0.0
        %533 = vadd.xlane.f32.xlu0 %v532
        %v534 = vpop.xlane.xlu0 %533
        %v535 = vsel %vm501, %v494, 0.0
        %536 = vadd.xlane.f32.xlu0 %v535
        %v537 = vpop.xlane.xlu0 %536
        %v538 = vsel %vm501, %v495, 0.0
        %539 = vadd.xlane.f32.xlu0 %v538
        %v540 = vpop.xlane.xlu0 %539
        %v541 = vsel %vm501, %v496, 0.0
        %542 = vadd.xlane.f32.xlu0 %v541
        %v543 = vpop.xlane.xlu0 %542
        %v544 = vsel %vm501, %v497, 0.0
        %545 = vadd.xlane.f32.xlu0 %v544
        %v546 = vpop.xlane.xlu0 %545
        %v547 = vsel %vm501, %v498, 0.0
        %548 = vadd.xlane.f32.xlu0 %v547
        %v549 = vpop.xlane.xlu0 %548
        %v550 = vrcp.pop 32.0
        %v551 = vmul.f32 32.0, %v550
        %v552 = vsub.f32 1.0, %v551
        %v553 = vmul.f32 %v550, %v552
        %v554 = vadd.f32 %v550, %v553
        %vm555 = vweird.f32 %v550
        %v556 = vsel %vm555, %v550, %v554
        %v557 = vmul.f32 %v504, %v556
        %v558 = vmul.f32 %v507, %v556
        %v559 = vmul.f32 %v510, %v556
        %v560 = vmul.f32 %v513, %v556
        %v561 = vmul.f32 %v516, %v556
        %v562 = vmul.f32 %v519, %v556
        %v563 = vmul.f32 %v522, %v556
        %v564 = vmul.f32 %v525, %v556
        %v565 = vmul.f32 %v528, %v556
        %v566 = vmul.f32 %v531, %v556
        %v567 = vmul.f32 %v534, %v556
        %v568 = vmul.f32 %v537, %v556
        %v569 = vmul.f32 %v540, %v556
        %v570 = vmul.f32 %v543, %v556
        %v571 = vmul.f32 %v546, %v556
        %v572 = vmul.f32 %v549, %v556
        %v573 = vsub.f32 %v483, %v557
        %v574 = vsub.f32 %v484, %v558
        %v575 = vsub.f32 %v485, %v559
        %v576 = vsub.f32 %v486, %v560
        %v577 = vsub.f32 %v487, %v561
        %v578 = vsub.f32 %v488, %v562
        %v579 = vsub.f32 %v489, %v563
        %v580 = vsub.f32 %v490, %v564
        %v581 = vsub.f32 %v491, %v565
        %v582 = vsub.f32 %v492, %v566
        %v583 = vsub.f32 %v493, %v567
        %v584 = vsub.f32 %v494, %v568
        %v585 = vsub.f32 %v495, %v569
        %v586 = vsub.f32 %v496, %v570
        %v587 = vsub.f32 %v497, %v571
        %v588 = vsub.f32 %v498, %v572
        %v589 = vmul.f32 %v573, %v573
        %v590 = vmul.f32 %v574, %v574
        %v591 = vmul.f32 %v575, %v575
        %v592 = vmul.f32 %v576, %v576
        %v593 = vmul.f32 %v577, %v577
        %v594 = vmul.f32 %v578, %v578
        %v595 = vmul.f32 %v579, %v579
        %v596 = vmul.f32 %v580, %v580
        %v597 = vmul.f32 %v581, %v581
        %v598 = vmul.f32 %v582, %v582
        %v599 = vmul.f32 %v583, %v583
        %v600 = vmul.f32 %v584, %v584
        %v601 = vmul.f32 %v585, %v585
        %v602 = vmul.f32 %v586, %v586
        %v603 = vmul.f32 %v587, %v587
        %v604 = vmul.f32 %v588, %v588
        %v605 = vsel %vm501, %v589, 0.0
        %606 = vadd.xlane.f32.xlu0 %v605
        %v607 = vpop.xlane.xlu0 %606
        %v608 = vsel %vm501, %v590, 0.0
        %609 = vadd.xlane.f32.xlu0 %v608
        %v610 = vpop.xlane.xlu0 %609
        %v611 = vsel %vm501, %v591, 0.0
        %612 = vadd.xlane.f32.xlu0 %v611
        %v613 = vpop.xlane.xlu0 %612
        %v614 = vsel %vm501, %v592, 0.0
        %615 = vadd.xlane.f32.xlu0 %v614
        %v616 = vpop.xlane.xlu0 %615
        %v617 = vsel %vm501, %v593, 0.0
        %618 = vadd.xlane.f32.xlu0 %v617
        %v619 = vpop.xlane.xlu0 %618
        %v620 = vsel %vm501, %v594, 0.0
        %621 = vadd.xlane.f32.xlu0 %v620
        %v622 = vpop.xlane.xlu0 %621
        %v623 = vsel %vm501, %v595, 0.0
        %624 = vadd.xlane.f32.xlu0 %v623
        %v625 = vpop.xlane.xlu0 %624
        %v626 = vsel %vm501, %v596, 0.0
        %627 = vadd.xlane.f32.xlu0 %v626
        %v628 = vpop.xlane.xlu0 %627
        %v629 = vsel %vm501, %v597, 0.0
        %630 = vadd.xlane.f32.xlu0 %v629
        %v631 = vpop.xlane.xlu0 %630
        %v632 = vsel %vm501, %v598, 0.0
        %633 = vadd.xlane.f32.xlu0 %v632
        %v634 = vpop.xlane.xlu0 %633
        %v635 = vsel %vm501, %v599, 0.0
        %636 = vadd.xlane.f32.xlu0 %v635
        %v637 = vpop.xlane.xlu0 %636
        %v638 = vsel %vm501, %v600, 0.0
        %639 = vadd.xlane.f32.xlu0 %v638
        %v640 = vpop.xlane.xlu0 %639
        %v641 = vsel %vm501, %v601, 0.0
        %642 = vadd.xlane.f32.xlu0 %v641
        %v643 = vpop.xlane.xlu0 %642
        %v644 = vsel %vm501, %v602, 0.0
        %645 = vadd.xlane.f32.xlu0 %v644
        %v646 = vpop.xlane.xlu0 %645
        %v647 = vsel %vm501, %v603, 0.0
        %648 = vadd.xlane.f32.xlu0 %v647
        %v649 = vpop.xlane.xlu0 %648
        %v650 = vsel %vm501, %v604, 0.0
        %651 = vadd.xlane.f32.xlu0 %v650
        %v652 = vpop.xlane.xlu0 %651
        %v653 = vmul.f32 %v607, %v556
        %v654 = vmul.f32 %v610, %v556
        %v655 = vmul.f32 %v613, %v556
        %v656 = vmul.f32 %v616, %v556
        %v657 = vmul.f32 %v619, %v556
        %v658 = vmul.f32 %v622, %v556
        %v659 = vmul.f32 %v625, %v556
        %v660 = vmul.f32 %v628, %v556
        %v661 = vmul.f32 %v631, %v556
        %v662 = vmul.f32 %v634, %v556
        %v663 = vmul.f32 %v637, %v556
        %v664 = vmul.f32 %v640, %v556
        %v665 = vmul.f32 %v643, %v556
        %v666 = vmul.f32 %v646, %v556
        %v667 = vmul.f32 %v649, %v556
        %v668 = vmul.f32 %v652, %v556
        %v669 = vadd.f32 %v653, 1e-05
        %v670 = vadd.f32 %v654, 1e-05
        %v671 = vadd.f32 %v655, 1e-05
        %v672 = vadd.f32 %v656, 1e-05
        %v673 = vadd.f32 %v657, 1e-05
        %v674 = vadd.f32 %v658, 1e-05
        %v675 = vadd.f32 %v659, 1e-05
        %v676 = vadd.f32 %v660, 1e-05
        %v677 = vadd.f32 %v661, 1e-05
        %v678 = vadd.f32 %v662, 1e-05
        %v679 = vadd.f32 %v663, 1e-05
        %v680 = vadd.f32 %v664, 1e-05
        %v681 = vadd.f32 %v665, 1e-05
        %v682 = vadd.f32 %v666, 1e-05
        %v683 = vadd.f32 %v667, 1e-05
        %v684 = vadd.f32 %v668, 1e-05
        %v685 = vrsqrt.pop %v669
        %v686 = vmul.f32 %v685, %v669
        %v687 = vmul.f32 %v686, %v685
        %v688 = vmul.f32 0.5, %v687
        %v689 = vsub.f32 1.5, %v688
        %v690 = vmul.f32 %v685, %v689
        %vm691 = vweird.f32 %v669
        %vm692 = vweird.f32 %v685
        %vm693 = vmor %vm691, %vm692
        %v694 = vsel %vm693, %v685, %v690
        %v695 = vrsqrt.pop %v670
        %v696 = vmul.f32 %v695, %v670
        %v697 = vmul.f32 %v696, %v695
        %v698 = vmul.f32 0.5, %v697
        %v699 = vsub.f32 1.5, %v698
        %v700 = vmul.f32 %v695, %v699
        %vm701 = vweird.f32 %v670
        %vm702 = vweird.f32 %v695
        %vm703 = vmor %vm701, %vm702
        %v704 = vsel %vm703, %v695, %v700
        %v705 = vrsqrt.pop %v671
        %v706 = vmul.f32 %v705, %v671
        %v707 = vmul.f32 %v706, %v705
        %v708 = vmul.f32 0.5, %v707
        %v709 = vsub.f32 1.5, %v708
        %v710 = vmul.f32 %v705, %v709
        %vm711 = vweird.f32 %v671
        %vm712 = vweird.f32 %v705
        %vm713 = vmor %vm711, %vm712
        %v714 = vsel %vm713, %v705, %v710
        %v715 = vrsqrt.pop %v672
        %v716 = vmul.f32 %v715, %v672
        %v717 = vmul.f32 %v716, %v715
        %v718 = vmul.f32 0.5, %v717
        %v719 = vsub.f32 1.5, %v718
        %v720 = vmul.f32 %v715, %v719
        %vm721 = vweird.f32 %v672
        %vm722 = vweird.f32 %v715
        %vm723 = vmor %vm721, %vm722
        %v724 = vsel %vm723, %v715, %v720
        %v725 = vrsqrt.pop %v673
        %v726 = vmul.f32 %v725, %v673
        %v727 = vmul.f32 %v726, %v725
        %v728 = vmul.f32 0.5, %v727
        %v729 = vsub.f32 1.5, %v728
        %v730 = vmul.f32 %v725, %v729
        %vm731 = vweird.f32 %v673
        %vm732 = vweird.f32 %v725
        %vm733 = vmor %vm731, %vm732
        %v734 = vsel %vm733, %v725, %v730
        %v735 = vrsqrt.pop %v674
        %v736 = vmul.f32 %v735, %v674
        %v737 = vmul.f32 %v736, %v735
        %v738 = vmul.f32 0.5, %v737
        %v739 = vsub.f32 1.5, %v738
        %v740 = vmul.f32 %v735, %v739
        %vm741 = vweird.f32 %v674
        %vm742 = vweird.f32 %v735
        %vm743 = vmor %vm741, %vm742
        %v744 = vsel %vm743, %v735, %v740
        %v745 = vrsqrt.pop %v675
        %v746 = vmul.f32 %v745, %v675
        %v747 = vmul.f32 %v746, %v745
        %v748 = vmul.f32 0.5, %v747
        %v749 = vsub.f32 1.5, %v748
        %v750 = vmul.f32 %v745, %v749
        %vm751 = vweird.f32 %v675
        %vm752 = vweird.f32 %v745
        %vm753 = vmor %vm751, %vm752
        %v754 = vsel %vm753, %v745, %v750
        %v755 = vrsqrt.pop %v676
        %v756 = vmul.f32 %v755, %v676
        %v757 = vmul.f32 %v756, %v755
        %v758 = vmul.f32 0.5, %v757
        %v759 = vsub.f32 1.5, %v758
        %v760 = vmul.f32 %v755, %v759
        %vm761 = vweird.f32 %v676
        %vm762 = vweird.f32 %v755
        %vm763 = vmor %vm761, %vm762
        %v764 = vsel %vm763, %v755, %v760
        %v765 = vrsqrt.pop %v677
        %v766 = vmul.f32 %v765, %v677
        %v767 = vmul.f32 %v766, %v765
        %v768 = vmul.f32 0.5, %v767
        %v769 = vsub.f32 1.5, %v768
        %v770 = vmul.f32 %v765, %v769
        %vm771 = vweird.f32 %v677
        %vm772 = vweird.f32 %v765
        %vm773 = vmor %vm771, %vm772
        %v774 = vsel %vm773, %v765, %v770
        %v775 = vrsqrt.pop %v678
        %v776 = vmul.f32 %v775, %v678
        %v777 = vmul.f32 %v776, %v775
        %v778 = vmul.f32 0.5, %v777
        %v779 = vsub.f32 1.5, %v778
        %v780 = vmul.f32 %v775, %v779
        %vm781 = vweird.f32 %v678
        %vm782 = vweird.f32 %v775
        %vm783 = vmor %vm781, %vm782
        %v784 = vsel %vm783, %v775, %v780
        %v785 = vrsqrt.pop %v679
        %v786 = vmul.f32 %v785, %v679
        %v787 = vmul.f32 %v786, %v785
        %v788 = vmul.f32 0.5, %v787
        %v789 = vsub.f32 1.5, %v788
        %v790 = vmul.f32 %v785, %v789
        %vm791 = vweird.f32 %v679
        %vm792 = vweird.f32 %v785
        %vm793 = vmor %vm791, %vm792
        %v794 = vsel %vm793, %v785, %v790
        %v795 = vrsqrt.pop %v680
        %v796 = vmul.f32 %v795, %v680
        %v797 = vmul.f32 %v796, %v795
        %v798 = vmul.f32 0.5, %v797
        %v799 = vsub.f32 1.5, %v798
        %v800 = vmul.f32 %v795, %v799
        %vm801 = vweird.f32 %v680
        %vm802 = vweird.f32 %v795
        %vm803 = vmor %vm801, %vm802
        %v804 = vsel %vm803, %v795, %v800
        %v805 = vrsqrt.pop %v681
        %v806 = vmul.f32 %v805, %v681
        %v807 = vmul.f32 %v806, %v805
        %v808 = vmul.f32 0.5, %v807
        %v809 = vsub.f32 1.5, %v808
        %v810 = vmul.f32 %v805, %v809
        %vm811 = vweird.f32 %v681
        %vm812 = vweird.f32 %v805
        %vm813 = vmor %vm811, %vm812
        %v814 = vsel %vm813, %v805, %v810
        %v815 = vrsqrt.pop %v682
        %v816 = vmul.f32 %v815, %v682
        %v817 = vmul.f32 %v816, %v815
        %v818 = vmul.f32 0.5, %v817
        %v819 = vsub.f32 1.5, %v818
        %v820 = vmul.f32 %v815, %v819
        %vm821 = vweird.f32 %v682
        %vm822 = vweird.f32 %v815
        %vm823 = vmor %vm821, %vm822
        %v824 = vsel %vm823, %v815, %v820
        %v825 = vrsqrt.pop %v683
        %v826 = vmul.f32 %v825, %v683
        %v827 = vmul.f32 %v826, %v825
        %v828 = vmul.f32 0.5, %v827
        %v829 = vsub.f32 1.5, %v828
        %v830 = vmul.f32 %v825, %v829
        %vm831 = vweird.f32 %v683
        %vm832 = vweird.f32 %v825
        %vm833 = vmor %vm831, %vm832
        %v834 = vsel %vm833, %v825, %v830
        %v835 = vrsqrt.pop %v684
        %v836 = vmul.f32 %v835, %v684
        %v837 = vmul.f32 %v836, %v835
        %v838 = vmul.f32 0.5, %v837
        %v839 = vsub.f32 1.5, %v838
        %v840 = vmul.f32 %v835, %v839
        %vm841 = vweird.f32 %v684
        %vm842 = vweird.f32 %v835
        %vm843 = vmor %vm841, %vm842
        %v844 = vsel %vm843, %v835, %v840
        %v845 = vmul.f32 %v573, %v694
        %v846 = vmul.f32 %v574, %v704
        %v847 = vmul.f32 %v575, %v714
        %v848 = vmul.f32 %v576, %v724
        %v849 = vmul.f32 %v577, %v734
        %v850 = vmul.f32 %v578, %v744
        %v851 = vmul.f32 %v579, %v754
        %v852 = vmul.f32 %v580, %v764
        %v853 = vmul.f32 %v581, %v774
        %v854 = vmul.f32 %v582, %v784
        %v855 = vmul.f32 %v583, %v794
        %v856 = vmul.f32 %v584, %v804
        %v857 = vmul.f32 %v585, %v814
        %v858 = vmul.f32 %v586, %v824
        %v859 = vmul.f32 %v587, %v834
        %v860 = vmul.f32 %v588, %v844
        %v861 = vperm.slane %v499, 0
        %v862 = vmul.f32 %v845, %v861
        %v863 = vmul.f32 %v846, %v861
        %v864 = vmul.f32 %v847, %v861
        %v865 = vmul.f32 %v848, %v861
        %v866 = vmul.f32 %v849, %v861
        %v867 = vmul.f32 %v850, %v861
        %v868 = vmul.f32 %v851, %v861
        %v869 = vmul.f32 %v852, %v861
        %v870 = vmul.f32 %v853, %v861
        %v871 = vmul.f32 %v854, %v861
        %v872 = vmul.f32 %v855, %v861
        %v873 = vmul.f32 %v856, %v861
        %v874 = vmul.f32 %v857, %v861
        %v875 = vmul.f32 %v858, %v861
        %v876 = vmul.f32 %v859, %v861
        %v877 = vmul.f32 %v860, %v861
        %v878 = vperm.slane %v499, 1
        %v879 = vadd.f32 %v862, %v878
        %v880 = vadd.f32 %v863, %v878
        %v881 = vadd.f32 %v864, %v878
        %v882 = vadd.f32 %v865, %v878
        %v883 = vadd.f32 %v866, %v878
        %v884 = vadd.f32 %v867, %v878
        %v885 = vadd.f32 %v868, %v878
        %v886 = vadd.f32 %v869, %v878
        %v887 = vadd.f32 %v870, %v878
        %v888 = vadd.f32 %v871, %v878
        %v889 = vadd.f32 %v872, %v878
        %v890 = vadd.f32 %v873, %v878
        %v891 = vadd.f32 %v874, %v878
        %v892 = vadd.f32 %v875, %v878
        %v893 = vadd.f32 %v876, %v878
        %v894 = vadd.f32 %v877, %v878
        %v895 = vpack.c.bf16 %v880, %v879
        %v896 = vpack.c.bf16 %v882, %v881
        %v897 = vpack.c.bf16 %v884, %v883
        %v898 = vpack.c.bf16 %v886, %v885
        %v899 = vpack.c.bf16 %v888, %v887
        %v900 = vpack.c.bf16 %v890, %v889
        %v901 = vpack.c.bf16 %v892, %v891
        %v902 = vpack.c.bf16 %v894, %v893
        %v903 = vld [vmem:[%s7] sm:$0xf]
        %v904 = vld [vmem:[%s7 + $0x4] sm:$0xf]
        %v905 = vld [vmem:[%s7 + $0x8] sm:$0xf]
        %v906 = vld [vmem:[%s7 + $0xc] sm:$0xf]
        %v911 = vunpack.c.l.b16 %v903
        %v912 = vunpack.c.l.b16 %v904
        %v913 = vunpack.c.l.b16 %v905
        %v914 = vunpack.c.l.b16 %v906
        %v915 = vpack.c.b16 %v912, %v911
        %v916 = vpack.c.b16 %v914, %v913
        %v920 = vsel %vm501, %v895, 0
        %v923 = vsel %vm501, %v896, 0
        %v926 = vsel %vm501, %v897, 0
        %v929 = vsel %vm501, %v898, 0
        %v932 = vsel %vm501, %v899, 0
        %v935 = vsel %vm501, %v900, 0
        %v938 = vsel %vm501, %v901, 0
        %v941 = vsel %vm501, %v902, 0
        %943 = vmatpush.bf16.msra.mxu0 0
        %944 = vmatpush.bf16.msra.mxu0 0
        %945 = vmatpush.bf16.msra.mxu0 0
        %946 = vmatpush.bf16.msra.mxu0 0
        %947 = vmatpush.bf16.msra.mxu0 0
        %948 = vmatpush.bf16.msra.mxu0 0
        %949 = vmatpush.bf16.msra.mxu0 %v916
        %950 = vmatpush.bf16.msra.mxu0 %v915
        %951 = vmatmul.bf16.gmra.mxu0 %v920
        %v952 = vpop.f32.mrf.mxu0
        %v953 = vadd.f32 0.0, %v952
        %v954 = vpop.f32.mrf.mxu0
        %v955 = vadd.f32 0.0, %v954
        %956 = vmatmul.bf16.gmra.mxu0 %v923
        %v957 = vpop.f32.mrf.mxu0
        %v958 = vadd.f32 0.0, %v957
        %v959 = vpop.f32.mrf.mxu0
        %v960 = vadd.f32 0.0, %v959
        %961 = vmatmul.bf16.gmra.mxu0 %v926
        %v962 = vpop.f32.mrf.mxu0
        %v963 = vadd.f32 0.0, %v962
        %v964 = vpop.f32.mrf.mxu0
        %v965 = vadd.f32 0.0, %v964
        %966 = vmatmul.bf16.gmra.mxu0 %v929
        %v967 = vpop.f32.mrf.mxu0
        %v968 = vadd.f32 0.0, %v967
        %v969 = vpop.f32.mrf.mxu0
        %v970 = vadd.f32 0.0, %v969
        %971 = vmatmul.bf16.gmra.mxu0 %v932
        %v972 = vpop.f32.mrf.mxu0
        %v973 = vadd.f32 0.0, %v972
        %v974 = vpop.f32.mrf.mxu0
        %v975 = vadd.f32 0.0, %v974
        %976 = vmatmul.bf16.gmra.mxu0 %v935
        %v977 = vpop.f32.mrf.mxu0
        %v978 = vadd.f32 0.0, %v977
        %v979 = vpop.f32.mrf.mxu0
        %v980 = vadd.f32 0.0, %v979
        %981 = vmatmul.bf16.gmra.mxu0 %v938
        %v982 = vpop.f32.mrf.mxu0
        %v983 = vadd.f32 0.0, %v982
        %v984 = vpop.f32.mrf.mxu0
        %v985 = vadd.f32 0.0, %v984
        %986 = vmatmul.bf16.gmra.mxu0 %v941
        %v987 = vpop.f32.mrf.mxu0
        %v988 = vadd.f32 0.0, %v987
        %v989 = vpop.f32.mrf.mxu0
        %v990 = vadd.f32 0.0, %v989
        %991 = vdwg.mxu0
        %s992 = scalar_lea.vmem %s7, 16
        %v993 = vld [vmem:[%s992] sm:$0xf]
        %v994 = vld [vmem:[%s992 + $0x4] sm:$0xf]
        %v995 = vld [vmem:[%s992 + $0x8] sm:$0xf]
        %v996 = vld [vmem:[%s992 + $0xc] sm:$0xf]
        %v1001 = vunpack.c.l.b16 %v993
        %v1002 = vunpack.c.l.b16 %v994
        %v1003 = vunpack.c.l.b16 %v995
        %v1004 = vunpack.c.l.b16 %v996
        %v1005 = vpack.c.b16 %v1002, %v1001
        %v1006 = vpack.c.b16 %v1004, %v1003
        %1009 = vmatpush.bf16.msra.mxu0 0
        %1010 = vmatpush.bf16.msra.mxu0 0
        %1011 = vmatpush.bf16.msra.mxu0 0
        %1012 = vmatpush.bf16.msra.mxu0 0
        %1013 = vmatpush.bf16.msra.mxu0 0
        %1014 = vmatpush.bf16.msra.mxu0 0
        %1015 = vmatpush.bf16.msra.mxu0 %v1006
        %1016 = vmatpush.bf16.msra.mxu0 %v1005
        %1017 = vmatmul.bf16.gmra.mxu0 %v920
        %v1018 = vpop.f32.mrf.mxu0
        %v1019 = vadd.f32 0.0, %v1018
        %v1020 = vpop.f32.mrf.mxu0
        %v1021 = vadd.f32 0.0, %v1020
        %1022 = vmatmul.bf16.gmra.mxu0 %v923
        %v1023 = vpop.f32.mrf.mxu0
        %v1024 = vadd.f32 0.0, %v1023
        %v1025 = vpop.f32.mrf.mxu0
        %v1026 = vadd.f32 0.0, %v1025
        %1027 = vmatmul.bf16.gmra.mxu0 %v926
        %v1028 = vpop.f32.mrf.mxu0
        %v1029 = vadd.f32 0.0, %v1028
        %v1030 = vpop.f32.mrf.mxu0
        %v1031 = vadd.f32 0.0, %v1030
        %1032 = vmatmul.bf16.gmra.mxu0 %v929
        %v1033 = vpop.f32.mrf.mxu0
        %v1034 = vadd.f32 0.0, %v1033
        %v1035 = vpop.f32.mrf.mxu0
        %v1036 = vadd.f32 0.0, %v1035
        %1037 = vmatmul.bf16.gmra.mxu0 %v932
        %v1038 = vpop.f32.mrf.mxu0
        %v1039 = vadd.f32 0.0, %v1038
        %v1040 = vpop.f32.mrf.mxu0
        %v1041 = vadd.f32 0.0, %v1040
        %1042 = vmatmul.bf16.gmra.mxu0 %v935
        %v1043 = vpop.f32.mrf.mxu0
        %v1044 = vadd.f32 0.0, %v1043
        %v1045 = vpop.f32.mrf.mxu0
        %v1046 = vadd.f32 0.0, %v1045
        %1047 = vmatmul.bf16.gmra.mxu0 %v938
        %v1048 = vpop.f32.mrf.mxu0
        %v1049 = vadd.f32 0.0, %v1048
        %v1050 = vpop.f32.mrf.mxu0
        %v1051 = vadd.f32 0.0, %v1050
        %1052 = vmatmul.bf16.gmra.mxu0 %v941
        %v1053 = vpop.f32.mrf.mxu0
        %v1054 = vadd.f32 0.0, %v1053
        %v1055 = vpop.f32.mrf.mxu0
        %v1056 = vadd.f32 0.0, %v1055
        %1057 = vdwg.mxu0
        %v1058 = vld [vmem:[%s1] sm:$0xff]
        %v1059 = vld [vmem:[%s1 + $0x8] sm:$0xff]
        %v1060 = vld [vmem:[%s1 + $0x10] sm:$0xff]
        %v1061 = vld [vmem:[%s1 + $0x18] sm:$0xff]
        %v1062 = vld [vmem:[%s1 + $0x20] sm:$0xff]
        %v1063 = vld [vmem:[%s1 + $0x28] sm:$0xff]
        %v1064 = vld [vmem:[%s1 + $0x30] sm:$0xff]
        %v1065 = vld [vmem:[%s1 + $0x38] sm:$0xff]
        %v1066 = vld [vmem:[%s1 + $0x40] sm:$0xff]
        %v1067 = vld [vmem:[%s1 + $0x48] sm:$0xff]
        %v1068 = vld [vmem:[%s1 + $0x50] sm:$0xff]
        %v1069 = vld [vmem:[%s1 + $0x58] sm:$0xff]
        %v1070 = vld [vmem:[%s1 + $0x60] sm:$0xff]
        %v1071 = vld [vmem:[%s1 + $0x68] sm:$0xff]
        %v1072 = vld [vmem:[%s1 + $0x70] sm:$0xff]
        %v1073 = vld [vmem:[%s1 + $0x78] sm:$0xff]
        %v1074 = vmul.f32 %v953, %v1058
        %v1075 = vmul.f32 %v955, %v1059
        %v1076 = vmul.f32 %v958, %v1060
        %v1077 = vmul.f32 %v960, %v1061
        %v1078 = vmul.f32 %v963, %v1062
        %v1079 = vmul.f32 %v965, %v1063
        %v1080 = vmul.f32 %v968, %v1064
        %v1081 = vmul.f32 %v970, %v1065
        %v1082 = vmul.f32 %v973, %v1066
        %v1083 = vmul.f32 %v975, %v1067
        %v1084 = vmul.f32 %v978, %v1068
        %v1085 = vmul.f32 %v980, %v1069
        %v1086 = vmul.f32 %v983, %v1070
        %v1087 = vmul.f32 %v985, %v1071
        %v1088 = vmul.f32 %v988, %v1072
        %v1089 = vmul.f32 %v990, %v1073
        %s1090 = scalar_lea.vmem %s1, 128
        %v1091 = vld [vmem:[%s1090] sm:$0xff]
        %v1092 = vld [vmem:[%s1090 + $0x8] sm:$0xff]
        %v1093 = vld [vmem:[%s1090 + $0x10] sm:$0xff]
        %v1094 = vld [vmem:[%s1090 + $0x18] sm:$0xff]
        %v1095 = vld [vmem:[%s1090 + $0x20] sm:$0xff]
        %v1096 = vld [vmem:[%s1090 + $0x28] sm:$0xff]
        %v1097 = vld [vmem:[%s1090 + $0x30] sm:$0xff]
        %v1098 = vld [vmem:[%s1090 + $0x38] sm:$0xff]
        %v1099 = vld [vmem:[%s1090 + $0x40] sm:$0xff]
        %v1100 = vld [vmem:[%s1090 + $0x48] sm:$0xff]
        %v1101 = vld [vmem:[%s1090 + $0x50] sm:$0xff]
        %v1102 = vld [vmem:[%s1090 + $0x58] sm:$0xff]
        %v1103 = vld [vmem:[%s1090 + $0x60] sm:$0xff]
        %v1104 = vld [vmem:[%s1090 + $0x68] sm:$0xff]
        %v1105 = vld [vmem:[%s1090 + $0x70] sm:$0xff]
        %v1106 = vld [vmem:[%s1090 + $0x78] sm:$0xff]
        %1123 = vrot.lane.b32.xlu0 %v1091, 64
        %v1124 = vpop.permute.xlu0 %1123
        %1125 = vrot.lane.b32.xlu0 %v1092, 64
        %v1126 = vpop.permute.xlu0 %1125
        %1127 = vrot.lane.b32.xlu0 %v1093, 64
        %v1128 = vpop.permute.xlu0 %1127
        %1129 = vrot.lane.b32.xlu0 %v1094, 64
        %v1130 = vpop.permute.xlu0 %1129
        %1131 = vrot.lane.b32.xlu0 %v1095, 64
        %v1132 = vpop.permute.xlu0 %1131
        %1133 = vrot.lane.b32.xlu0 %v1096, 64
        %v1134 = vpop.permute.xlu0 %1133
        %1135 = vrot.lane.b32.xlu0 %v1097, 64
        %v1136 = vpop.permute.xlu0 %1135
        %1137 = vrot.lane.b32.xlu0 %v1098, 64
        %v1138 = vpop.permute.xlu0 %1137
        %1139 = vrot.lane.b32.xlu0 %v1099, 64
        %v1140 = vpop.permute.xlu0 %1139
        %1141 = vrot.lane.b32.xlu0 %v1100, 64
        %v1142 = vpop.permute.xlu0 %1141
        %1143 = vrot.lane.b32.xlu0 %v1101, 64
        %v1144 = vpop.permute.xlu0 %1143
        %1145 = vrot.lane.b32.xlu0 %v1102, 64
        %v1146 = vpop.permute.xlu0 %1145
        %1147 = vrot.lane.b32.xlu0 %v1103, 64
        %v1148 = vpop.permute.xlu0 %1147
        %1149 = vrot.lane.b32.xlu0 %v1104, 64
        %v1150 = vpop.permute.xlu0 %1149
        %1151 = vrot.lane.b32.xlu0 %v1105, 64
        %v1152 = vpop.permute.xlu0 %1151
        %1153 = vrot.lane.b32.xlu0 %v1106, 64
        %v1154 = vpop.permute.xlu0 %1153
        %v1171 = vmul.f32 %v953, %v1124
        %v1172 = vmul.f32 %v955, %v1126
        %v1173 = vmul.f32 %v958, %v1128
        %v1174 = vmul.f32 %v960, %v1130
        %v1175 = vmul.f32 %v963, %v1132
        %v1176 = vmul.f32 %v965, %v1134
        %v1177 = vmul.f32 %v968, %v1136
        %v1178 = vmul.f32 %v970, %v1138
        %v1179 = vmul.f32 %v973, %v1140
        %v1180 = vmul.f32 %v975, %v1142
        %v1181 = vmul.f32 %v978, %v1144
        %v1182 = vmul.f32 %v980, %v1146
        %v1183 = vmul.f32 %v983, %v1148
        %v1184 = vmul.f32 %v985, %v1150
        %v1185 = vmul.f32 %v988, %v1152
        %v1186 = vmul.f32 %v990, %v1154
        %1203 = vrot.lane.b32.xlu0 %v1171, 64
        %v1204 = vpop.permute.xlu0 %1203
        %1205 = vrot.lane.b32.xlu0 %v1172, 64
        %v1206 = vpop.permute.xlu0 %1205
        %1207 = vrot.lane.b32.xlu0 %v1173, 64
        %v1208 = vpop.permute.xlu0 %1207
        %1209 = vrot.lane.b32.xlu0 %v1174, 64
        %v1210 = vpop.permute.xlu0 %1209
        %1211 = vrot.lane.b32.xlu0 %v1175, 64
        %v1212 = vpop.permute.xlu0 %1211
        %1213 = vrot.lane.b32.xlu0 %v1176, 64
        %v1214 = vpop.permute.xlu0 %1213
        %1215 = vrot.lane.b32.xlu0 %v1177, 64
        %v1216 = vpop.permute.xlu0 %1215
        %1217 = vrot.lane.b32.xlu0 %v1178, 64
        %v1218 = vpop.permute.xlu0 %1217
        %1219 = vrot.lane.b32.xlu0 %v1179, 64
        %v1220 = vpop.permute.xlu0 %1219
        %1221 = vrot.lane.b32.xlu0 %v1180, 64
        %v1222 = vpop.permute.xlu0 %1221
        %1223 = vrot.lane.b32.xlu0 %v1181, 64
        %v1224 = vpop.permute.xlu0 %1223
        %1225 = vrot.lane.b32.xlu0 %v1182, 64
        %v1226 = vpop.permute.xlu0 %1225
        %1227 = vrot.lane.b32.xlu0 %v1183, 64
        %v1228 = vpop.permute.xlu0 %1227
        %1229 = vrot.lane.b32.xlu0 %v1184, 64
        %v1230 = vpop.permute.xlu0 %1229
        %1231 = vrot.lane.b32.xlu0 %v1185, 64
        %v1232 = vpop.permute.xlu0 %1231
        %1233 = vrot.lane.b32.xlu0 %v1186, 64
        %v1234 = vpop.permute.xlu0 %1233
        %v1251 = vadd.f32 %v1074, %v1204
        %v1252 = vadd.f32 %v1075, %v1206
        %v1253 = vadd.f32 %v1076, %v1208
        %v1254 = vadd.f32 %v1077, %v1210
        %v1255 = vadd.f32 %v1078, %v1212
        %v1256 = vadd.f32 %v1079, %v1214
        %v1257 = vadd.f32 %v1080, %v1216
        %v1258 = vadd.f32 %v1081, %v1218
        %v1259 = vadd.f32 %v1082, %v1220
        %v1260 = vadd.f32 %v1083, %v1222
        %v1261 = vadd.f32 %v1084, %v1224
        %v1262 = vadd.f32 %v1085, %v1226
        %v1263 = vadd.f32 %v1086, %v1228
        %v1264 = vadd.f32 %v1087, %v1230
        %v1265 = vadd.f32 %v1088, %v1232
        %v1266 = vadd.f32 %v1089, %v1234
        %v1267 = vld [vmem:[#allocation8] sm:$0xff]
        %v1268 = vld [vmem:[#allocation8 + $0x8] sm:$0xff]
        %v1269 = vld [vmem:[#allocation8 + $0x10] sm:$0xff]
        %v1270 = vld [vmem:[#allocation8 + $0x18] sm:$0xff]
        %v1271 = vld [vmem:[#allocation8 + $0x20] sm:$0xff]
        %v1272 = vld [vmem:[#allocation8 + $0x28] sm:$0xff]
        %v1273 = vld [vmem:[#allocation8 + $0x30] sm:$0xff]
        %v1274 = vld [vmem:[#allocation8 + $0x38] sm:$0xff]
        %v1275 = vld [vmem:[#allocation8 + $0x40] sm:$0xff]
        %v1276 = vld [vmem:[#allocation8 + $0x48] sm:$0xff]
        %v1277 = vld [vmem:[#allocation8 + $0x50] sm:$0xff]
        %v1278 = vld [vmem:[#allocation8 + $0x58] sm:$0xff]
        %v1279 = vld [vmem:[#allocation8 + $0x60] sm:$0xff]
        %v1280 = vld [vmem:[#allocation8 + $0x68] sm:$0xff]
        %v1281 = vld [vmem:[#allocation8 + $0x70] sm:$0xff]
        %v1282 = vld [vmem:[#allocation8 + $0x78] sm:$0xff]
        %1299 = vrot.lane.b32.xlu0 %v1267, 32
        %v1300 = vpop.permute.xlu0 %1299
        %1301 = vrot.lane.b32.xlu0 %v1268, 32
        %v1302 = vpop.permute.xlu0 %1301
        %1303 = vrot.lane.b32.xlu0 %v1269, 32
        %v1304 = vpop.permute.xlu0 %1303
        %1305 = vrot.lane.b32.xlu0 %v1270, 32
        %v1306 = vpop.permute.xlu0 %1305
        %1307 = vrot.lane.b32.xlu0 %v1271, 32
        %v1308 = vpop.permute.xlu0 %1307
        %1309 = vrot.lane.b32.xlu0 %v1272, 32
        %v1310 = vpop.permute.xlu0 %1309
        %1311 = vrot.lane.b32.xlu0 %v1273, 32
        %v1312 = vpop.permute.xlu0 %1311
        %1313 = vrot.lane.b32.xlu0 %v1274, 32
        %v1314 = vpop.permute.xlu0 %1313
        %1315 = vrot.lane.b32.xlu0 %v1275, 32
        %v1316 = vpop.permute.xlu0 %1315
        %1317 = vrot.lane.b32.xlu0 %v1276, 32
        %v1318 = vpop.permute.xlu0 %1317
        %1319 = vrot.lane.b32.xlu0 %v1277, 32
        %v1320 = vpop.permute.xlu0 %1319
        %1321 = vrot.lane.b32.xlu0 %v1278, 32
        %v1322 = vpop.permute.xlu0 %1321
        %1323 = vrot.lane.b32.xlu0 %v1279, 32
        %v1324 = vpop.permute.xlu0 %1323
        %1325 = vrot.lane.b32.xlu0 %v1280, 32
        %v1326 = vpop.permute.xlu0 %1325
        %1327 = vrot.lane.b32.xlu0 %v1281, 32
        %v1328 = vpop.permute.xlu0 %1327
        %1329 = vrot.lane.b32.xlu0 %v1282, 32
        %v1330 = vpop.permute.xlu0 %1329
        %v1347 = vmul.f32 %v1251, %v1300
        %v1348 = vmul.f32 %v1252, %v1302
        %v1349 = vmul.f32 %v1253, %v1304
        %v1350 = vmul.f32 %v1254, %v1306
        %v1351 = vmul.f32 %v1255, %v1308
        %v1352 = vmul.f32 %v1256, %v1310
        %v1353 = vmul.f32 %v1257, %v1312
        %v1354 = vmul.f32 %v1258, %v1314
        %v1355 = vmul.f32 %v1251, %v1316
        %v1356 = vmul.f32 %v1252, %v1318
        %v1357 = vmul.f32 %v1253, %v1320
        %v1358 = vmul.f32 %v1254, %v1322
        %v1359 = vmul.f32 %v1255, %v1324
        %v1360 = vmul.f32 %v1256, %v1326
        %v1361 = vmul.f32 %v1257, %v1328
        %v1362 = vmul.f32 %v1258, %v1330
        %v1363 = vpack.c.bf16 %v1348, %v1347
        %v1364 = vpack.c.bf16 %v1350, %v1349
        %v1365 = vpack.c.bf16 %v1352, %v1351
        %v1366 = vpack.c.bf16 %v1354, %v1353
        %v1367 = vpack.c.bf16 %v1356, %v1355
        %v1368 = vpack.c.bf16 %v1358, %v1357
        %v1369 = vpack.c.bf16 %v1360, %v1359
        %v1370 = vpack.c.bf16 %v1362, %v1361
        %v1371 = vld [vmem:[%s6] sm:$0xff]
        %v1372 = vld [vmem:[%s6 + $0x8] sm:$0xff]
        %v1373 = vld [vmem:[%s6 + $0x10] sm:$0xff]
        %v1374 = vld [vmem:[%s6 + $0x18] sm:$0xff]
        %v1375 = vld [vmem:[%s6 + $0x20] sm:$0xff]
        %v1376 = vld [vmem:[%s6 + $0x28] sm:$0xff]
        %v1377 = vld [vmem:[%s6 + $0x30] sm:$0xff]
        %v1378 = vld [vmem:[%s6 + $0x38] sm:$0xff]
        %v1379 = vld [vmem:[%s6 + $0x40] sm:$0xff]
        %v1380 = vld [vmem:[%s6 + $0x48] sm:$0xff]
        %v1381 = vld [vmem:[%s6 + $0x50] sm:$0xff]
        %v1382 = vld [vmem:[%s6 + $0x58] sm:$0xff]
        %v1383 = vld [vmem:[%s6 + $0x60] sm:$0xff]
        %v1384 = vld [vmem:[%s6 + $0x68] sm:$0xff]
        %v1385 = vld [vmem:[%s6 + $0x70] sm:$0xff]
        %v1386 = vld [vmem:[%s6 + $0x78] sm:$0xff]
        %v1387 = vmul.f32 %v1019, %v1371
        %v1388 = vmul.f32 %v1021, %v1372
        %v1389 = vmul.f32 %v1024, %v1373
        %v1390 = vmul.f32 %v1026, %v1374
        %v1391 = vmul.f32 %v1029, %v1375
        %v1392 = vmul.f32 %v1031, %v1376
        %v1393 = vmul.f32 %v1034, %v1377
        %v1394 = vmul.f32 %v1036, %v1378
        %v1395 = vmul.f32 %v1019, %v1379
        %v1396 = vmul.f32 %v1021, %v1380
        %v1397 = vmul.f32 %v1024, %v1381
        %v1398 = vmul.f32 %v1026, %v1382
        %v1399 = vmul.f32 %v1029, %v1383
        %v1400 = vmul.f32 %v1031, %v1384
        %v1401 = vmul.f32 %v1034, %v1385
        %v1402 = vmul.f32 %v1036, %v1386
        %v1403 = vpack.c.bf16 %v1388, %v1387
        %v1404 = vpack.c.bf16 %v1390, %v1389
        %v1405 = vpack.c.bf16 %v1392, %v1391
        %v1406 = vpack.c.bf16 %v1394, %v1393
        %v1407 = vpack.c.bf16 %v1396, %v1395
        %v1408 = vpack.c.bf16 %v1398, %v1397
        %v1409 = vpack.c.bf16 %v1400, %v1399
        %v1410 = vpack.c.bf16 %v1402, %v1401
        %v1411 = vpack.c.bf16 %v1252, %v1251
        %v1412 = vpack.c.bf16 %v1254, %v1253
        %v1413 = vpack.c.bf16 %v1256, %v1255
        %v1414 = vpack.c.bf16 %v1258, %v1257
        %1423 = vrot.lane.b32.xlu0 %v1363, 96
        %v1424 = vpop.permute.xlu0 %1423
        %1425 = vrot.lane.b32.xlu0 %v1364, 96
        %v1426 = vpop.permute.xlu0 %1425
        %1427 = vrot.lane.b32.xlu0 %v1365, 96
        %v1428 = vpop.permute.xlu0 %1427
        %1429 = vrot.lane.b32.xlu0 %v1366, 96
        %v1430 = vpop.permute.xlu0 %1429
        %1431 = vrot.lane.b32.xlu0 %v1367, 96
        %v1432 = vpop.permute.xlu0 %1431
        %1433 = vrot.lane.b32.xlu0 %v1368, 96
        %v1434 = vpop.permute.xlu0 %1433
        %1435 = vrot.lane.b32.xlu0 %v1369, 96
        %v1436 = vpop.permute.xlu0 %1435
        %1437 = vrot.lane.b32.xlu0 %v1370, 96
        %v1438 = vpop.permute.xlu0 %1437
        %v1440 = vsel %vm501, %v1411, 0
        %v1443 = vsel %vm501, %v1412, 0
        %v1446 = vsel %vm501, %v1413, 0
        %v1449 = vsel %vm501, %v1414, 0
        %v1452 = vsel %vm501, %v1424, 0
        %v1455 = vsel %vm501, %v1426, 0
        %v1458 = vsel %vm501, %v1428, 0
        %v1461 = vsel %vm501, %v1430, 0
        %v1464 = vsel %vm501, %v1432, 0
        %v1467 = vsel %vm501, %v1434, 0
        %v1470 = vsel %vm501, %v1436, 0
        %v1473 = vsel %vm501, %v1438, 0
        %1475 = vmatpush.bf16.xpose.msra.mxu0 %v1473
        %1476 = vmatpush.bf16.xpose.msra.mxu0 %v1470
        %1477 = vmatpush.bf16.xpose.msra.mxu0 %v1467
        %1478 = vmatpush.bf16.xpose.msra.mxu0 %v1464
        %1479 = vmatpush.bf16.xpose.msra.mxu0 %v1461
        %1480 = vmatpush.bf16.xpose.msra.mxu0 %v1458
        %1481 = vmatpush.bf16.xpose.msra.mxu0 %v1455
        %1482 = vmatpush.bf16.xpose.msra.mxu0 %v1452
        %1483 = vmatmul.bf16.gmra.mxu0 %v1440
        %v1484 = vpop.f32.mrf.mxu0
        %v1485 = vadd.f32 0.0, %v1484
        %v1486 = vpop.f32.mrf.mxu0
        %v1487 = vadd.f32 0.0, %v1486
        %1488 = vmatmul.bf16.gmra.mxu0 %v1443
        %v1489 = vpop.f32.mrf.mxu0
        %v1490 = vadd.f32 0.0, %v1489
        %v1491 = vpop.f32.mrf.mxu0
        %v1492 = vadd.f32 0.0, %v1491
        %1493 = vmatmul.bf16.gmra.mxu0 %v1446
        %v1494 = vpop.f32.mrf.mxu0
        %v1495 = vadd.f32 0.0, %v1494
        %v1496 = vpop.f32.mrf.mxu0
        %v1497 = vadd.f32 0.0, %v1496
        %1498 = vmatmul.bf16.gmra.mxu0 %v1449
        %v1499 = vpop.f32.mrf.mxu0
        %v1500 = vadd.f32 0.0, %v1499
        %v1501 = vpop.f32.mrf.mxu0
        %v1502 = vadd.f32 0.0, %v1501
        %1503 = vdwg.mxu0
        %v1504 = vld [vmem:[#allocation2] sm:$0xff]
        %v1505 = vld [vmem:[#allocation2 + $0x8] sm:$0xff]
        %v1506 = vld [vmem:[#allocation2 + $0x10] sm:$0xff]
        %v1507 = vld [vmem:[#allocation2 + $0x18] sm:$0xff]
        %v1508 = vld [vmem:[#allocation2 + $0x20] sm:$0xff]
        %v1509 = vld [vmem:[#allocation2 + $0x28] sm:$0xff]
        %v1510 = vld [vmem:[#allocation2 + $0x30] sm:$0xff]
        %v1511 = vld [vmem:[#allocation2 + $0x38] sm:$0xff]
        %v1512 = vmul.f32 %v1485, %v1504
        %v1513 = vmul.f32 %v1487, %v1505
        %v1514 = vmul.f32 %v1490, %v1506
        %v1515 = vmul.f32 %v1492, %v1507
        %v1516 = vmul.f32 %v1495, %v1508
        %v1517 = vmul.f32 %v1497, %v1509
        %v1518 = vmul.f32 %v1500, %v1510
        %v1519 = vmul.f32 %v1502, %v1511
        %v1520 = vand.u32 2147483647, %v1512
        %v1521 = vand.u32 2147483647, %v1513
        %v1522 = vand.u32 2147483647, %v1514
        %v1523 = vand.u32 2147483647, %v1515
        %v1524 = vand.u32 2147483647, %v1516
        %v1525 = vand.u32 2147483647, %v1517
        %v1526 = vand.u32 2147483647, %v1518
        %v1527 = vand.u32 2147483647, %v1519
        %v1528 = vpack.c.bf16 %v1521, %v1520
        %v1529 = vpack.c.bf16 %v1523, %v1522
        %v1530 = vpack.c.bf16 %v1525, %v1524
        %v1531 = vpack.c.bf16 %v1527, %v1526
        %v1532 = vld [vmem:[#allocation5] sm:$0xf]
        %v1533 = vld [vmem:[#allocation5 + $0x4] sm:$0xf]
        %v1534 = vld [vmem:[#allocation5 + $0x8] sm:$0xf]
        %v1535 = vld [vmem:[#allocation5 + $0xc] sm:$0xf]
        %v1536 = vld [vmem:[#allocation5 + $0x10] sm:$0xf]
        %v1537 = vld [vmem:[#allocation5 + $0x14] sm:$0xf]
        %v1538 = vld [vmem:[#allocation5 + $0x18] sm:$0xf]
        %v1539 = vld [vmem:[#allocation5 + $0x1c] sm:$0xf]
        %v1540 = vld [vmem:[#allocation5 + $0x20] sm:$0xf]
        %v1541 = vld [vmem:[#allocation5 + $0x24] sm:$0xf]
        %v1542 = vld [vmem:[#allocation5 + $0x28] sm:$0xf]
        %v1543 = vld [vmem:[#allocation5 + $0x2c] sm:$0xf]
        %v1544 = vld [vmem:[#allocation5 + $0x30] sm:$0xf]
        %v1545 = vld [vmem:[#allocation5 + $0x34] sm:$0xf]
        %v1546 = vld [vmem:[#allocation5 + $0x38] sm:$0xf]
        %v1547 = vld [vmem:[#allocation5 + $0x3c] sm:$0xf]
        %v1564 = vunpack.c.l.b16 %v1532
        %v1565 = vunpack.c.l.b16 %v1533
        %v1566 = vunpack.c.l.b16 %v1534
        %v1567 = vunpack.c.l.b16 %v1535
        %v1568 = vunpack.c.l.b16 %v1536
        %v1569 = vunpack.c.l.b16 %v1537
        %v1570 = vunpack.c.l.b16 %v1538
        %v1571 = vunpack.c.l.b16 %v1539
        %v1572 = vunpack.c.l.b16 %v1540
        %v1573 = vunpack.c.l.b16 %v1541
        %v1574 = vunpack.c.l.b16 %v1542
        %v1575 = vunpack.c.l.b16 %v1543
        %v1576 = vunpack.c.l.b16 %v1544
        %v1577 = vunpack.c.l.b16 %v1545
        %v1578 = vunpack.c.l.b16 %v1546
        %v1579 = vunpack.c.l.b16 %v1547
        %v1580 = vpack.c.b16 %v1565, %v1564
        %v1581 = vpack.c.b16 %v1567, %v1566
        %v1582 = vpack.c.b16 %v1569, %v1568
        %v1583 = vpack.c.b16 %v1571, %v1570
        %v1584 = vpack.c.b16 %v1573, %v1572
        %v1585 = vpack.c.b16 %v1575, %v1574
        %v1586 = vpack.c.b16 %v1577, %v1576
        %v1587 = vpack.c.b16 %v1579, %v1578
        %1596 = vmatpush.bf16.msra.mxu0 %v1587
        %1597 = vmatpush.bf16.msra.mxu0 %v1586
        %1598 = vmatpush.bf16.msra.mxu0 %v1585
        %1599 = vmatpush.bf16.msra.mxu0 %v1584
        %1600 = vmatpush.bf16.msra.mxu0 %v1583
        %1601 = vmatpush.bf16.msra.mxu0 %v1582
        %1602 = vmatpush.bf16.msra.mxu0 %v1581
        %1603 = vmatpush.bf16.msra.mxu0 %v1580
        %1604 = vmatmul.bf16.gmra.mxu0 %v1528
        %v1605 = vpop.f32.mrf.mxu0
        %v1606 = vadd.f32 0.0, %v1605
        %v1607 = vpop.f32.mrf.mxu0
        %v1608 = vadd.f32 0.0, %v1607
        %1609 = vmatmul.bf16.gmra.mxu0 %v1529
        %v1610 = vpop.f32.mrf.mxu0
        %v1611 = vadd.f32 0.0, %v1610
        %v1612 = vpop.f32.mrf.mxu0
        %v1613 = vadd.f32 0.0, %v1612
        %1614 = vmatmul.bf16.gmra.mxu0 %v1530
        %v1615 = vpop.f32.mrf.mxu0
        %v1616 = vadd.f32 0.0, %v1615
        %v1617 = vpop.f32.mrf.mxu0
        %v1618 = vadd.f32 0.0, %v1617
        %1619 = vmatmul.bf16.gmra.mxu0 %v1531
        %v1620 = vpop.f32.mrf.mxu0
        %v1621 = vadd.f32 0.0, %v1620
        %v1622 = vpop.f32.mrf.mxu0
        %v1623 = vadd.f32 0.0, %v1622
        %1624 = vdwg.mxu0
        %v1625 = vmax.f32 %v1606, 1.0
        %v1626 = vmax.f32 %v1608, 1.0
        %v1627 = vmax.f32 %v1611, 1.0
        %v1628 = vmax.f32 %v1613, 1.0
        %v1629 = vmax.f32 %v1616, 1.0
        %v1630 = vmax.f32 %v1618, 1.0
        %v1631 = vmax.f32 %v1621, 1.0
        %v1632 = vmax.f32 %v1623, 1.0
        %v1633 = vrcp.pop %v1625
        %v1634 = vmul.f32 %v1625, %v1633
        %v1635 = vsub.f32 1.0, %v1634
        %v1636 = vmul.f32 %v1633, %v1635
        %v1637 = vadd.f32 %v1633, %v1636
        %vm1638 = vweird.f32 %v1625
        %vm1639 = vweird.f32 %v1633
        %vm1640 = vmor %vm1638, %vm1639
        %v1641 = vsel %vm1640, %v1633, %v1637
        %v1642 = vand.u32 2147483647, %v1625
        %vm1643 = vcmp.eq.f32.partialorder %v1642, 8.507059e+37
        %v1644 = vand.u32 %v1625, 2147483648
        %v1645 = vor.u32 1.1754944e-38, %v1644
        %v1646 = vsel %vm1643, %v1645, %v1641
        %v1647 = vmul.f32 %v1512, %v1646
        %v1648 = vrcp.pop %v1626
        %v1649 = vmul.f32 %v1626, %v1648
        %v1650 = vsub.f32 1.0, %v1649
        %v1651 = vmul.f32 %v1648, %v1650
        %v1652 = vadd.f32 %v1648, %v1651
        %vm1653 = vweird.f32 %v1626
        %vm1654 = vweird.f32 %v1648
        %vm1655 = vmor %vm1653, %vm1654
        %v1656 = vsel %vm1655, %v1648, %v1652
        %v1657 = vand.u32 2147483647, %v1626
        %vm1658 = vcmp.eq.f32.partialorder %v1657, 8.507059e+37
        %v1659 = vand.u32 %v1626, 2147483648
        %v1660 = vor.u32 1.1754944e-38, %v1659
        %v1661 = vsel %vm1658, %v1660, %v1656
        %v1662 = vmul.f32 %v1513, %v1661
        %v1663 = vrcp.pop %v1627
        %v1664 = vmul.f32 %v1627, %v1663
        %v1665 = vsub.f32 1.0, %v1664
        %v1666 = vmul.f32 %v1663, %v1665
        %v1667 = vadd.f32 %v1663, %v1666
        %vm1668 = vweird.f32 %v1627
        %vm1669 = vweird.f32 %v1663
        %vm1670 = vmor %vm1668, %vm1669
        %v1671 = vsel %vm1670, %v1663, %v1667
        %v1672 = vand.u32 2147483647, %v1627
        %vm1673 = vcmp.eq.f32.partialorder %v1672, 8.507059e+37
        %v1674 = vand.u32 %v1627, 2147483648
        %v1675 = vor.u32 1.1754944e-38, %v1674
        %v1676 = vsel %vm1673, %v1675, %v1671
        %v1677 = vmul.f32 %v1514, %v1676
        %v1678 = vrcp.pop %v1628
        %v1679 = vmul.f32 %v1628, %v1678
        %v1680 = vsub.f32 1.0, %v1679
        %v1681 = vmul.f32 %v1678, %v1680
        %v1682 = vadd.f32 %v1678, %v1681
        %vm1683 = vweird.f32 %v1628
        %vm1684 = vweird.f32 %v1678
        %vm1685 = vmor %vm1683, %vm1684
        %v1686 = vsel %vm1685, %v1678, %v1682
        %v1687 = vand.u32 2147483647, %v1628
        %vm1688 = vcmp.eq.f32.partialorder %v1687, 8.507059e+37
        %v1689 = vand.u32 %v1628, 2147483648
        %v1690 = vor.u32 1.1754944e-38, %v1689
        %v1691 = vsel %vm1688, %v1690, %v1686
        %v1692 = vmul.f32 %v1515, %v1691
        %v1693 = vrcp.pop %v1629
        %v1694 = vmul.f32 %v1629, %v1693
        %v1695 = vsub.f32 1.0, %v1694
        %v1696 = vmul.f32 %v1693, %v1695
        %v1697 = vadd.f32 %v1693, %v1696
        %vm1698 = vweird.f32 %v1629
        %vm1699 = vweird.f32 %v1693
        %vm1700 = vmor %vm1698, %vm1699
        %v1701 = vsel %vm1700, %v1693, %v1697
        %v1702 = vand.u32 2147483647, %v1629
        %vm1703 = vcmp.eq.f32.partialorder %v1702, 8.507059e+37
        %v1704 = vand.u32 %v1629, 2147483648
        %v1705 = vor.u32 1.1754944e-38, %v1704
        %v1706 = vsel %vm1703, %v1705, %v1701
        %v1707 = vmul.f32 %v1516, %v1706
        %v1708 = vrcp.pop %v1630
        %v1709 = vmul.f32 %v1630, %v1708
        %v1710 = vsub.f32 1.0, %v1709
        %v1711 = vmul.f32 %v1708, %v1710
        %v1712 = vadd.f32 %v1708, %v1711
        %vm1713 = vweird.f32 %v1630
        %vm1714 = vweird.f32 %v1708
        %vm1715 = vmor %vm1713, %vm1714
        %v1716 = vsel %vm1715, %v1708, %v1712
        %v1717 = vand.u32 2147483647, %v1630
        %vm1718 = vcmp.eq.f32.partialorder %v1717, 8.507059e+37
        %v1719 = vand.u32 %v1630, 2147483648
        %v1720 = vor.u32 1.1754944e-38, %v1719
        %v1721 = vsel %vm1718, %v1720, %v1716
        %v1722 = vmul.f32 %v1517, %v1721
        %v1723 = vrcp.pop %v1631
        %v1724 = vmul.f32 %v1631, %v1723
        %v1725 = vsub.f32 1.0, %v1724
        %v1726 = vmul.f32 %v1723, %v1725
        %v1727 = vadd.f32 %v1723, %v1726
        %vm1728 = vweird.f32 %v1631
        %vm1729 = vweird.f32 %v1723
        %vm1730 = vmor %vm1728, %vm1729
        %v1731 = vsel %vm1730, %v1723, %v1727
        %v1732 = vand.u32 2147483647, %v1631
        %vm1733 = vcmp.eq.f32.partialorder %v1732, 8.507059e+37
        %v1734 = vand.u32 %v1631, 2147483648
        %v1735 = vor.u32 1.1754944e-38, %v1734
        %v1736 = vsel %vm1733, %v1735, %v1731
        %v1737 = vmul.f32 %v1518, %v1736
        %v1738 = vrcp.pop %v1632
        %v1739 = vmul.f32 %v1632, %v1738
        %v1740 = vsub.f32 1.0, %v1739
        %v1741 = vmul.f32 %v1738, %v1740
        %v1742 = vadd.f32 %v1738, %v1741
        %vm1743 = vweird.f32 %v1632
        %vm1744 = vweird.f32 %v1738
        %vm1745 = vmor %vm1743, %vm1744
        %v1746 = vsel %vm1745, %v1738, %v1742
        %v1747 = vand.u32 2147483647, %v1632
        %vm1748 = vcmp.eq.f32.partialorder %v1747, 8.507059e+37
        %v1749 = vand.u32 %v1632, 2147483648
        %v1750 = vor.u32 1.1754944e-38, %v1749
        %v1751 = vsel %vm1748, %v1750, %v1746
        %v1752 = vmul.f32 %v1519, %v1751
        %v1753 = vpack.c.bf16 %v1662, %v1647
        %v1754 = vpack.c.bf16 %v1692, %v1677
        %v1755 = vpack.c.bf16 %v1722, %v1707
        %v1756 = vpack.c.bf16 %v1752, %v1737
        %1757 = vmatpush.bf16.msra.mxu0 %v1410
        %1758 = vmatpush.bf16.msra.mxu0 %v1409
        %1759 = vmatpush.bf16.msra.mxu0 %v1408
        %1760 = vmatpush.bf16.msra.mxu0 %v1407
        %1761 = vmatpush.bf16.msra.mxu0 %v1406
        %1762 = vmatpush.bf16.msra.mxu0 %v1405
        %1763 = vmatpush.bf16.msra.mxu0 %v1404
        %1764 = vmatpush.bf16.msra.mxu0 %v1403
        %1765 = vmatmul.bf16.gmra.mxu0 %v1753
        %v1766 = vpop.f32.mrf.mxu0
        %v1767 = vadd.f32 0.0, %v1766
        %v1768 = vpop.f32.mrf.mxu0
        %v1769 = vadd.f32 0.0, %v1768
        %1770 = vmatmul.bf16.gmra.mxu0 %v1754
        %v1771 = vpop.f32.mrf.mxu0
        %v1772 = vadd.f32 0.0, %v1771
        %v1773 = vpop.f32.mrf.mxu0
        %v1774 = vadd.f32 0.0, %v1773
        %1775 = vmatmul.bf16.gmra.mxu0 %v1755
        %v1776 = vpop.f32.mrf.mxu0
        %v1777 = vadd.f32 0.0, %v1776
        %v1778 = vpop.f32.mrf.mxu0
        %v1779 = vadd.f32 0.0, %v1778
        %1780 = vmatmul.bf16.gmra.mxu0 %v1756
        %v1781 = vpop.f32.mrf.mxu0
        %v1782 = vadd.f32 0.0, %v1781
        %v1783 = vpop.f32.mrf.mxu0
        %v1784 = vadd.f32 0.0, %v1783
        %1785 = vdwg.mxu0
        %v1786 = vpack.c.bf16 %v1769, %v1767
        %v1787 = vpack.c.bf16 %v1774, %v1772
        %v1788 = vpack.c.bf16 %v1779, %v1777
        %v1789 = vpack.c.bf16 %v1784, %v1782
        %v1790 = vld [vmem:[#allocation7] sm:$0xf]
        %v1791 = vld [vmem:[#allocation7 + $0x4] sm:$0xf]
        %v1792 = vld [vmem:[#allocation7 + $0x8] sm:$0xf]
        %v1793 = vld [vmem:[#allocation7 + $0xc] sm:$0xf]
        %v1794 = vld [vmem:[#allocation7 + $0x10] sm:$0xf]
        %v1795 = vld [vmem:[#allocation7 + $0x14] sm:$0xf]
        %v1796 = vld [vmem:[#allocation7 + $0x18] sm:$0xf]
        %v1797 = vld [vmem:[#allocation7 + $0x1c] sm:$0xf]
        %v1806 = vunpack.c.l.b16 %v1790
        %v1807 = vunpack.c.l.b16 %v1791
        %v1808 = vunpack.c.l.b16 %v1792
        %v1809 = vunpack.c.l.b16 %v1793
        %v1810 = vunpack.c.l.b16 %v1794
        %v1811 = vunpack.c.l.b16 %v1795
        %v1812 = vunpack.c.l.b16 %v1796
        %v1813 = vunpack.c.l.b16 %v1797
        %v1814 = vpack.c.b16 %v1807, %v1806
        %v1815 = vpack.c.b16 %v1809, %v1808
        %v1816 = vpack.c.b16 %v1811, %v1810
        %v1817 = vpack.c.b16 %v1813, %v1812
        %vm1822 = vcmask 523264
        %v1824 = vsel %vm1822, %v1786, 0
        %v1827 = vsel %vm1822, %v1787, 0
        %v1830 = vsel %vm1822, %v1788, 0
        %v1833 = vsel %vm1822, %v1789, 0
        %1835 = vmatpush.bf16.msra.mxu0 0
        %1836 = vmatpush.bf16.msra.mxu0 0
        %1837 = vmatpush.bf16.msra.mxu0 0
        %1838 = vmatpush.bf16.msra.mxu0 0
        %1839 = vmatpush.bf16.msra.mxu0 %v1817
        %1840 = vmatpush.bf16.msra.mxu0 %v1816
        %1841 = vmatpush.bf16.msra.mxu0 %v1815
        %1842 = vmatpush.bf16.msra.mxu0 %v1814
        %1843 = vmatmul.bf16.gmra.mxu0 %v1824
        %v1844 = vpop.f32.mrf.mxu0
        %v1845 = vadd.f32 0.0, %v1844
        %v1846 = vpop.f32.mrf.mxu0
        %v1847 = vadd.f32 0.0, %v1846
        %1848 = vmatmul.bf16.gmra.mxu0 %v1827
        %v1849 = vpop.f32.mrf.mxu0
        %v1850 = vadd.f32 0.0, %v1849
        %v1851 = vpop.f32.mrf.mxu0
        %v1852 = vadd.f32 0.0, %v1851
        %1853 = vmatmul.bf16.gmra.mxu0 %v1830
        %v1854 = vpop.f32.mrf.mxu0
        %v1855 = vadd.f32 0.0, %v1854
        %v1856 = vpop.f32.mrf.mxu0
        %v1857 = vadd.f32 0.0, %v1856
        %1858 = vmatmul.bf16.gmra.mxu0 %v1833
        %v1859 = vpop.f32.mrf.mxu0
        %v1860 = vadd.f32 0.0, %v1859
        %v1861 = vpop.f32.mrf.mxu0
        %v1862 = vadd.f32 0.0, %v1861
        %1863 = vdwg.mxu0
        %v1864 = vsub.f32 %v1767, %v1845
        %v1865 = vsub.f32 %v1769, %v1847
        %v1866 = vsub.f32 %v1772, %v1850
        %v1867 = vsub.f32 %v1774, %v1852
        %v1868 = vsub.f32 %v1777, %v1855
        %v1869 = vsub.f32 %v1779, %v1857
        %v1870 = vsub.f32 %v1782, %v1860
        %v1871 = vsub.f32 %v1784, %v1862
        %v1872 = vmul.f32 %v1864, %v1864
        %v1873 = vmul.f32 %v1865, %v1865
        %v1874 = vmul.f32 %v1866, %v1866
        %v1875 = vmul.f32 %v1867, %v1867
        %v1876 = vmul.f32 %v1868, %v1868
        %v1877 = vmul.f32 %v1869, %v1869
        %v1878 = vmul.f32 %v1870, %v1870
        %v1879 = vmul.f32 %v1871, %v1871
        %v1880 = vpack.c.bf16 %v1873, %v1872
        %v1881 = vpack.c.bf16 %v1875, %v1874
        %v1882 = vpack.c.bf16 %v1877, %v1876
        %v1883 = vpack.c.bf16 %v1879, %v1878
        %v1885 = vsel %vm1822, %v1880, 0
        %v1888 = vsel %vm1822, %v1881, 0
        %v1891 = vsel %vm1822, %v1882, 0
        %v1894 = vsel %vm1822, %v1883, 0
        %1896 = vmatpush.bf16.msra.mxu0 0
        %1897 = vmatpush.bf16.msra.mxu0 0
        %1898 = vmatpush.bf16.msra.mxu0 0
        %1899 = vmatpush.bf16.msra.mxu0 0
        %1900 = vmatpush.bf16.msra.mxu0 %v1817
        %1901 = vmatpush.bf16.msra.mxu0 %v1816
        %1902 = vmatpush.bf16.msra.mxu0 %v1815
        %1903 = vmatpush.bf16.msra.mxu0 %v1814
        %1904 = vmatmul.bf16.gmra.mxu0 %v1885
        %v1905 = vpop.f32.mrf.mxu0
        %v1906 = vadd.f32 1e-05, %v1905
        %v1907 = vpop.f32.mrf.mxu0
        %v1908 = vadd.f32 1e-05, %v1907
        %1909 = vmatmul.bf16.gmra.mxu0 %v1888
        %v1910 = vpop.f32.mrf.mxu0
        %v1911 = vadd.f32 1e-05, %v1910
        %v1912 = vpop.f32.mrf.mxu0
        %v1913 = vadd.f32 1e-05, %v1912
        %1914 = vmatmul.bf16.gmra.mxu0 %v1891
        %v1915 = vpop.f32.mrf.mxu0
        %v1916 = vadd.f32 1e-05, %v1915
        %v1917 = vpop.f32.mrf.mxu0
        %v1918 = vadd.f32 1e-05, %v1917
        %1919 = vmatmul.bf16.gmra.mxu0 %v1894
        %v1920 = vpop.f32.mrf.mxu0
        %v1921 = vadd.f32 1e-05, %v1920
        %v1922 = vpop.f32.mrf.mxu0
        %v1923 = vadd.f32 1e-05, %v1922
        %1924 = vdwg.mxu0
        %v1925 = vrsqrt.pop %v1906
        %v1926 = vmul.f32 %v1925, %v1906
        %v1927 = vmul.f32 %v1926, %v1925
        %v1928 = vmul.f32 0.5, %v1927
        %v1929 = vsub.f32 1.5, %v1928
        %v1930 = vmul.f32 %v1925, %v1929
        %vm1931 = vweird.f32 %v1906
        %vm1932 = vweird.f32 %v1925
        %vm1933 = vmor %vm1931, %vm1932
        %v1934 = vsel %vm1933, %v1925, %v1930
        %v1935 = vrsqrt.pop %v1908
        %v1936 = vmul.f32 %v1935, %v1908
        %v1937 = vmul.f32 %v1936, %v1935
        %v1938 = vmul.f32 0.5, %v1937
        %v1939 = vsub.f32 1.5, %v1938
        %v1940 = vmul.f32 %v1935, %v1939
        %vm1941 = vweird.f32 %v1908
        %vm1942 = vweird.f32 %v1935
        %vm1943 = vmor %vm1941, %vm1942
        %v1944 = vsel %vm1943, %v1935, %v1940
        %v1945 = vrsqrt.pop %v1911
        %v1946 = vmul.f32 %v1945, %v1911
        %v1947 = vmul.f32 %v1946, %v1945
        %v1948 = vmul.f32 0.5, %v1947
        %v1949 = vsub.f32 1.5, %v1948
        %v1950 = vmul.f32 %v1945, %v1949
        %vm1951 = vweird.f32 %v1911
        %vm1952 = vweird.f32 %v1945
        %vm1953 = vmor %vm1951, %vm1952
        %v1954 = vsel %vm1953, %v1945, %v1950
        %v1955 = vrsqrt.pop %v1913
        %v1956 = vmul.f32 %v1955, %v1913
        %v1957 = vmul.f32 %v1956, %v1955
        %v1958 = vmul.f32 0.5, %v1957
        %v1959 = vsub.f32 1.5, %v1958
        %v1960 = vmul.f32 %v1955, %v1959
        %vm1961 = vweird.f32 %v1913
        %vm1962 = vweird.f32 %v1955
        %vm1963 = vmor %vm1961, %vm1962
        %v1964 = vsel %vm1963, %v1955, %v1960
        %v1965 = vrsqrt.pop %v1916
        %v1966 = vmul.f32 %v1965, %v1916
        %v1967 = vmul.f32 %v1966, %v1965
        %v1968 = vmul.f32 0.5, %v1967
        %v1969 = vsub.f32 1.5, %v1968
        %v1970 = vmul.f32 %v1965, %v1969
        %vm1971 = vweird.f32 %v1916
        %vm1972 = vweird.f32 %v1965
        %vm1973 = vmor %vm1971, %vm1972
        %v1974 = vsel %vm1973, %v1965, %v1970
        %v1975 = vrsqrt.pop %v1918
        %v1976 = vmul.f32 %v1975, %v1918
        %v1977 = vmul.f32 %v1976, %v1975
        %v1978 = vmul.f32 0.5, %v1977
        %v1979 = vsub.f32 1.5, %v1978
        %v1980 = vmul.f32 %v1975, %v1979
        %vm1981 = vweird.f32 %v1918
        %vm1982 = vweird.f32 %v1975
        %vm1983 = vmor %vm1981, %vm1982
        %v1984 = vsel %vm1983, %v1975, %v1980
        %v1985 = vrsqrt.pop %v1921
        %v1986 = vmul.f32 %v1985, %v1921
        %v1987 = vmul.f32 %v1986, %v1985
        %v1988 = vmul.f32 0.5, %v1987
        %v1989 = vsub.f32 1.5, %v1988
        %v1990 = vmul.f32 %v1985, %v1989
        %vm1991 = vweird.f32 %v1921
        %vm1992 = vweird.f32 %v1985
        %vm1993 = vmor %vm1991, %vm1992
        %v1994 = vsel %vm1993, %v1985, %v1990
        %v1995 = vrsqrt.pop %v1923
        %v1996 = vmul.f32 %v1995, %v1923
        %v1997 = vmul.f32 %v1996, %v1995
        %v1998 = vmul.f32 0.5, %v1997
        %v1999 = vsub.f32 1.5, %v1998
        %v2000 = vmul.f32 %v1995, %v1999
        %vm2001 = vweird.f32 %v1923
        %vm2002 = vweird.f32 %v1995
        %vm2003 = vmor %vm2001, %vm2002
        %v2004 = vsel %vm2003, %v1995, %v2000
        %v2005 = vmul.f32 %v1864, %v1934
        %v2006 = vmul.f32 %v1865, %v1944
        %v2007 = vmul.f32 %v1866, %v1954
        %v2008 = vmul.f32 %v1867, %v1964
        %v2009 = vmul.f32 %v1868, %v1974
        %v2010 = vmul.f32 %v1869, %v1984
        %v2011 = vmul.f32 %v1870, %v1994
        %v2012 = vmul.f32 %v1871, %v2004
        %v2013 = vmul.f32 %v1259, %v1300
        %v2014 = vmul.f32 %v1260, %v1302
        %v2015 = vmul.f32 %v1261, %v1304
        %v2016 = vmul.f32 %v1262, %v1306
        %v2017 = vmul.f32 %v1263, %v1308
        %v2018 = vmul.f32 %v1264, %v1310
        %v2019 = vmul.f32 %v1265, %v1312
        %v2020 = vmul.f32 %v1266, %v1314
        %v2021 = vmul.f32 %v1259, %v1316
        %v2022 = vmul.f32 %v1260, %v1318
        %v2023 = vmul.f32 %v1261, %v1320
        %v2024 = vmul.f32 %v1262, %v1322
        %v2025 = vmul.f32 %v1263, %v1324
        %v2026 = vmul.f32 %v1264, %v1326
        %v2027 = vmul.f32 %v1265, %v1328
        %v2028 = vmul.f32 %v1266, %v1330
        %v2029 = vpack.c.bf16 %v2014, %v2013
        %v2030 = vpack.c.bf16 %v2016, %v2015
        %v2031 = vpack.c.bf16 %v2018, %v2017
        %v2032 = vpack.c.bf16 %v2020, %v2019
        %v2033 = vpack.c.bf16 %v2022, %v2021
        %v2034 = vpack.c.bf16 %v2024, %v2023
        %v2035 = vpack.c.bf16 %v2026, %v2025
        %v2036 = vpack.c.bf16 %v2028, %v2027
        %v2037 = vmul.f32 %v1039, %v1371
        %v2038 = vmul.f32 %v1041, %v1372
        %v2039 = vmul.f32 %v1044, %v1373
        %v2040 = vmul.f32 %v1046, %v1374
        %v2041 = vmul.f32 %v1049, %v1375
        %v2042 = vmul.f32 %v1051, %v1376
        %v2043 = vmul.f32 %v1054, %v1377
        %v2044 = vmul.f32 %v1056, %v1378
        %v2045 = vmul.f32 %v1039, %v1379
        %v2046 = vmul.f32 %v1041, %v1380
        %v2047 = vmul.f32 %v1044, %v1381
        %v2048 = vmul.f32 %v1046, %v1382
        %v2049 = vmul.f32 %v1049, %v1383
        %v2050 = vmul.f32 %v1051, %v1384
        %v2051 = vmul.f32 %v1054, %v1385
        %v2052 = vmul.f32 %v1056, %v1386
        %v2053 = vpack.c.bf16 %v2038, %v2037
        %v2054 = vpack.c.bf16 %v2040, %v2039
        %v2055 = vpack.c.bf16 %v2042, %v2041
        %v2056 = vpack.c.bf16 %v2044, %v2043
        %v2057 = vpack.c.bf16 %v2046, %v2045
        %v2058 = vpack.c.bf16 %v2048, %v2047
        %v2059 = vpack.c.bf16 %v2050, %v2049
        %v2060 = vpack.c.bf16 %v2052, %v2051
        %v2061 = vpack.c.bf16 %v1260, %v1259
        %v2062 = vpack.c.bf16 %v1262, %v1261
        %v2063 = vpack.c.bf16 %v1264, %v1263
        %v2064 = vpack.c.bf16 %v1266, %v1265
        %2073 = vrot.lane.b32.xlu0 %v2029, 96
        %v2074 = vpop.permute.xlu0 %2073
        %2075 = vrot.lane.b32.xlu0 %v2030, 96
        %v2076 = vpop.permute.xlu0 %2075
        %2077 = vrot.lane.b32.xlu0 %v2031, 96
        %v2078 = vpop.permute.xlu0 %2077
        %2079 = vrot.lane.b32.xlu0 %v2032, 96
        %v2080 = vpop.permute.xlu0 %2079
        %2081 = vrot.lane.b32.xlu0 %v2033, 96
        %v2082 = vpop.permute.xlu0 %2081
        %2083 = vrot.lane.b32.xlu0 %v2034, 96
        %v2084 = vpop.permute.xlu0 %2083
        %2085 = vrot.lane.b32.xlu0 %v2035, 96
        %v2086 = vpop.permute.xlu0 %2085
        %2087 = vrot.lane.b32.xlu0 %v2036, 96
        %v2088 = vpop.permute.xlu0 %2087
        %v2090 = vsel %vm501, %v2061, 0
        %v2093 = vsel %vm501, %v2062, 0
        %v2096 = vsel %vm501, %v2063, 0
        %v2099 = vsel %vm501, %v2064, 0
        %v2102 = vsel %vm501, %v2074, 0
        %v2105 = vsel %vm501, %v2076, 0
        %v2108 = vsel %vm501, %v2078, 0
        %v2111 = vsel %vm501, %v2080, 0
        %v2114 = vsel %vm501, %v2082, 0
        %v2117 = vsel %vm501, %v2084, 0
        %v2120 = vsel %vm501, %v2086, 0
        %v2123 = vsel %vm501, %v2088, 0
        %2125 = vmatpush.bf16.xpose.msra.mxu0 %v2123
        %2126 = vmatpush.bf16.xpose.msra.mxu0 %v2120
        %2127 = vmatpush.bf16.xpose.msra.mxu0 %v2117
        %2128 = vmatpush.bf16.xpose.msra.mxu0 %v2114
        %2129 = vmatpush.bf16.xpose.msra.mxu0 %v2111
        %2130 = vmatpush.bf16.xpose.msra.mxu0 %v2108
        %2131 = vmatpush.bf16.xpose.msra.mxu0 %v2105
        %2132 = vmatpush.bf16.xpose.msra.mxu0 %v2102
        %2133 = vmatmul.bf16.gmra.mxu0 %v2090
        %v2134 = vpop.f32.mrf.mxu0
        %v2135 = vadd.f32 0.0, %v2134
        %v2136 = vpop.f32.mrf.mxu0
        %v2137 = vadd.f32 0.0, %v2136
        %2138 = vmatmul.bf16.gmra.mxu0 %v2093
        %v2139 = vpop.f32.mrf.mxu0
        %v2140 = vadd.f32 0.0, %v2139
        %v2141 = vpop.f32.mrf.mxu0
        %v2142 = vadd.f32 0.0, %v2141
        %2143 = vmatmul.bf16.gmra.mxu0 %v2096
        %v2144 = vpop.f32.mrf.mxu0
        %v2145 = vadd.f32 0.0, %v2144
        %v2146 = vpop.f32.mrf.mxu0
        %v2147 = vadd.f32 0.0, %v2146
        %2148 = vmatmul.bf16.gmra.mxu0 %v2099
        %v2149 = vpop.f32.mrf.mxu0
        %v2150 = vadd.f32 0.0, %v2149
        %v2151 = vpop.f32.mrf.mxu0
        %v2152 = vadd.f32 0.0, %v2151
        %2153 = vdwg.mxu0
        %v2154 = vmul.f32 %v2135, %v1504
        %v2155 = vmul.f32 %v2137, %v1505
        %v2156 = vmul.f32 %v2140, %v1506
        %v2157 = vmul.f32 %v2142, %v1507
        %v2158 = vmul.f32 %v2145, %v1508
        %v2159 = vmul.f32 %v2147, %v1509
        %v2160 = vmul.f32 %v2150, %v1510
        %v2161 = vmul.f32 %v2152, %v1511
        %v2162 = vand.u32 2147483647, %v2154
        %v2163 = vand.u32 2147483647, %v2155
        %v2164 = vand.u32 2147483647, %v2156
        %v2165 = vand.u32 2147483647, %v2157
        %v2166 = vand.u32 2147483647, %v2158
        %v2167 = vand.u32 2147483647, %v2159
        %v2168 = vand.u32 2147483647, %v2160
        %v2169 = vand.u32 2147483647, %v2161
        %v2170 = vpack.c.bf16 %v2163, %v2162
        %v2171 = vpack.c.bf16 %v2165, %v2164
        %v2172 = vpack.c.bf16 %v2167, %v2166
        %v2173 = vpack.c.bf16 %v2169, %v2168
        %2174 = vmatpush.bf16.msra.mxu0 %v1587
        %2175 = vmatpush.bf16.msra.mxu0 %v1586
        %2176 = vmatpush.bf16.msra.mxu0 %v1585
        %2177 = vmatpush.bf16.msra.mxu0 %v1584
        %2178 = vmatpush.bf16.msra.mxu0 %v1583
        %2179 = vmatpush.bf16.msra.mxu0 %v1582
        %2180 = vmatpush.bf16.msra.mxu0 %v1581
        %2181 = vmatpush.bf16.msra.mxu0 %v1580
        %2182 = vmatmul.bf16.gmra.mxu0 %v2170
        %v2183 = vpop.f32.mrf.mxu0
        %v2184 = vadd.f32 0.0, %v2183
        %v2185 = vpop.f32.mrf.mxu0
        %v2186 = vadd.f32 0.0, %v2185
        %2187 = vmatmul.bf16.gmra.mxu0 %v2171
        %v2188 = vpop.f32.mrf.mxu0
        %v2189 = vadd.f32 0.0, %v2188
        %v2190 = vpop.f32.mrf.mxu0
        %v2191 = vadd.f32 0.0, %v2190
        %2192 = vmatmul.bf16.gmra.mxu0 %v2172
        %v2193 = vpop.f32.mrf.mxu0
        %v2194 = vadd.f32 0.0, %v2193
        %v2195 = vpop.f32.mrf.mxu0
        %v2196 = vadd.f32 0.0, %v2195
        %2197 = vmatmul.bf16.gmra.mxu0 %v2173
        %v2198 = vpop.f32.mrf.mxu0
        %v2199 = vadd.f32 0.0, %v2198
        %v2200 = vpop.f32.mrf.mxu0
        %v2201 = vadd.f32 0.0, %v2200
        %2202 = vdwg.mxu0
        %v2203 = vmax.f32 %v2184, 1.0
        %v2204 = vmax.f32 %v2186, 1.0
        %v2205 = vmax.f32 %v2189, 1.0
        %v2206 = vmax.f32 %v2191, 1.0
        %v2207 = vmax.f32 %v2194, 1.0
        %v2208 = vmax.f32 %v2196, 1.0
        %v2209 = vmax.f32 %v2199, 1.0
        %v2210 = vmax.f32 %v2201, 1.0
        %v2211 = vrcp.pop %v2203
        %v2212 = vmul.f32 %v2203, %v2211
        %v2213 = vsub.f32 1.0, %v2212
        %v2214 = vmul.f32 %v2211, %v2213
        %v2215 = vadd.f32 %v2211, %v2214
        %vm2216 = vweird.f32 %v2203
        %vm2217 = vweird.f32 %v2211
        %vm2218 = vmor %vm2216, %vm2217
        %v2219 = vsel %vm2218, %v2211, %v2215
        %v2220 = vand.u32 2147483647, %v2203
        %vm2221 = vcmp.eq.f32.partialorder %v2220, 8.507059e+37
        %v2222 = vand.u32 %v2203, 2147483648
        %v2223 = vor.u32 1.1754944e-38, %v2222
        %v2224 = vsel %vm2221, %v2223, %v2219
        %v2225 = vmul.f32 %v2154, %v2224
        %v2226 = vrcp.pop %v2204
        %v2227 = vmul.f32 %v2204, %v2226
        %v2228 = vsub.f32 1.0, %v2227
        %v2229 = vmul.f32 %v2226, %v2228
        %v2230 = vadd.f32 %v2226, %v2229
        %vm2231 = vweird.f32 %v2204
        %vm2232 = vweird.f32 %v2226
        %vm2233 = vmor %vm2231, %vm2232
        %v2234 = vsel %vm2233, %v2226, %v2230
        %v2235 = vand.u32 2147483647, %v2204
        %vm2236 = vcmp.eq.f32.partialorder %v2235, 8.507059e+37
        %v2237 = vand.u32 %v2204, 2147483648
        %v2238 = vor.u32 1.1754944e-38, %v2237
        %v2239 = vsel %vm2236, %v2238, %v2234
        %v2240 = vmul.f32 %v2155, %v2239
        %v2241 = vrcp.pop %v2205
        %v2242 = vmul.f32 %v2205, %v2241
        %v2243 = vsub.f32 1.0, %v2242
        %v2244 = vmul.f32 %v2241, %v2243
        %v2245 = vadd.f32 %v2241, %v2244
        %vm2246 = vweird.f32 %v2205
        %vm2247 = vweird.f32 %v2241
        %vm2248 = vmor %vm2246, %vm2247
        %v2249 = vsel %vm2248, %v2241, %v2245
        %v2250 = vand.u32 2147483647, %v2205
        %vm2251 = vcmp.eq.f32.partialorder %v2250, 8.507059e+37
        %v2252 = vand.u32 %v2205, 2147483648
        %v2253 = vor.u32 1.1754944e-38, %v2252
        %v2254 = vsel %vm2251, %v2253, %v2249
        %v2255 = vmul.f32 %v2156, %v2254
        %v2256 = vrcp.pop %v2206
        %v2257 = vmul.f32 %v2206, %v2256
        %v2258 = vsub.f32 1.0, %v2257
        %v2259 = vmul.f32 %v2256, %v2258
        %v2260 = vadd.f32 %v2256, %v2259
        %vm2261 = vweird.f32 %v2206
        %vm2262 = vweird.f32 %v2256
        %vm2263 = vmor %vm2261, %vm2262
        %v2264 = vsel %vm2263, %v2256, %v2260
        %v2265 = vand.u32 2147483647, %v2206
        %vm2266 = vcmp.eq.f32.partialorder %v2265, 8.507059e+37
        %v2267 = vand.u32 %v2206, 2147483648
        %v2268 = vor.u32 1.1754944e-38, %v2267
        %v2269 = vsel %vm2266, %v2268, %v2264
        %v2270 = vmul.f32 %v2157, %v2269
        %v2271 = vrcp.pop %v2207
        %v2272 = vmul.f32 %v2207, %v2271
        %v2273 = vsub.f32 1.0, %v2272
        %v2274 = vmul.f32 %v2271, %v2273
        %v2275 = vadd.f32 %v2271, %v2274
        %vm2276 = vweird.f32 %v2207
        %vm2277 = vweird.f32 %v2271
        %vm2278 = vmor %vm2276, %vm2277
        %v2279 = vsel %vm2278, %v2271, %v2275
        %v2280 = vand.u32 2147483647, %v2207
        %vm2281 = vcmp.eq.f32.partialorder %v2280, 8.507059e+37
        %v2282 = vand.u32 %v2207, 2147483648
        %v2283 = vor.u32 1.1754944e-38, %v2282
        %v2284 = vsel %vm2281, %v2283, %v2279
        %v2285 = vmul.f32 %v2158, %v2284
        %v2286 = vrcp.pop %v2208
        %v2287 = vmul.f32 %v2208, %v2286
        %v2288 = vsub.f32 1.0, %v2287
        %v2289 = vmul.f32 %v2286, %v2288
        %v2290 = vadd.f32 %v2286, %v2289
        %vm2291 = vweird.f32 %v2208
        %vm2292 = vweird.f32 %v2286
        %vm2293 = vmor %vm2291, %vm2292
        %v2294 = vsel %vm2293, %v2286, %v2290
        %v2295 = vand.u32 2147483647, %v2208
        %vm2296 = vcmp.eq.f32.partialorder %v2295, 8.507059e+37
        %v2297 = vand.u32 %v2208, 2147483648
        %v2298 = vor.u32 1.1754944e-38, %v2297
        %v2299 = vsel %vm2296, %v2298, %v2294
        %v2300 = vmul.f32 %v2159, %v2299
        %v2301 = vrcp.pop %v2209
        %v2302 = vmul.f32 %v2209, %v2301
        %v2303 = vsub.f32 1.0, %v2302
        %v2304 = vmul.f32 %v2301, %v2303
        %v2305 = vadd.f32 %v2301, %v2304
        %vm2306 = vweird.f32 %v2209
        %vm2307 = vweird.f32 %v2301
        %vm2308 = vmor %vm2306, %vm2307
        %v2309 = vsel %vm2308, %v2301, %v2305
        %v2310 = vand.u32 2147483647, %v2209
        %vm2311 = vcmp.eq.f32.partialorder %v2310, 8.507059e+37
        %v2312 = vand.u32 %v2209, 2147483648
        %v2313 = vor.u32 1.1754944e-38, %v2312
        %v2314 = vsel %vm2311, %v2313, %v2309
        %v2315 = vmul.f32 %v2160, %v2314
        %v2316 = vrcp.pop %v2210
        %v2317 = vmul.f32 %v2210, %v2316
        %v2318 = vsub.f32 1.0, %v2317
        %v2319 = vmul.f32 %v2316, %v2318
        %v2320 = vadd.f32 %v2316, %v2319
        %vm2321 = vweird.f32 %v2210
        %vm2322 = vweird.f32 %v2316
        %vm2323 = vmor %vm2321, %vm2322
        %v2324 = vsel %vm2323, %v2316, %v2320
        %v2325 = vand.u32 2147483647, %v2210
        %vm2326 = vcmp.eq.f32.partialorder %v2325, 8.507059e+37
        %v2327 = vand.u32 %v2210, 2147483648
        %v2328 = vor.u32 1.1754944e-38, %v2327
        %v2329 = vsel %vm2326, %v2328, %v2324
        %v2330 = vmul.f32 %v2161, %v2329
        %v2331 = vpack.c.bf16 %v2240, %v2225
        %v2332 = vpack.c.bf16 %v2270, %v2255
        %v2333 = vpack.c.bf16 %v2300, %v2285
        %v2334 = vpack.c.bf16 %v2330, %v2315
        %2335 = vmatpush.bf16.msra.mxu0 %v2060
        %2336 = vmatpush.bf16.msra.mxu0 %v2059
        %2337 = vmatpush.bf16.msra.mxu0 %v2058
        %2338 = vmatpush.bf16.msra.mxu0 %v2057
        %2339 = vmatpush.bf16.msra.mxu0 %v2056
        %2340 = vmatpush.bf16.msra.mxu0 %v2055
        %2341 = vmatpush.bf16.msra.mxu0 %v2054
        %2342 = vmatpush.bf16.msra.mxu0 %v2053
        %2343 = vmatmul.bf16.gmra.mxu0 %v2331
        %v2344 = vpop.f32.mrf.mxu0
        %v2345 = vadd.f32 0.0, %v2344
        %v2346 = vpop.f32.mrf.mxu0
        %v2347 = vadd.f32 0.0, %v2346
        %2348 = vmatmul.bf16.gmra.mxu0 %v2332
        %v2349 = vpop.f32.mrf.mxu0
        %v2350 = vadd.f32 0.0, %v2349
        %v2351 = vpop.f32.mrf.mxu0
        %v2352 = vadd.f32 0.0, %v2351
        %2353 = vmatmul.bf16.gmra.mxu0 %v2333
        %v2354 = vpop.f32.mrf.mxu0
        %v2355 = vadd.f32 0.0, %v2354
        %v2356 = vpop.f32.mrf.mxu0
        %v2357 = vadd.f32 0.0, %v2356
        %2358 = vmatmul.bf16.gmra.mxu0 %v2334
        %v2359 = vpop.f32.mrf.mxu0
        %v2360 = vadd.f32 0.0, %v2359
        %v2361 = vpop.f32.mrf.mxu0
        %v2362 = vadd.f32 0.0, %v2361
        %2363 = vdwg.mxu0
        %v2364 = vpack.c.bf16 %v2347, %v2345
        %v2365 = vpack.c.bf16 %v2352, %v2350
        %v2366 = vpack.c.bf16 %v2357, %v2355
        %v2367 = vpack.c.bf16 %v2362, %v2360
        %v2369 = vsel %vm1822, %v2364, 0
        %v2372 = vsel %vm1822, %v2365, 0
        %v2375 = vsel %vm1822, %v2366, 0
        %v2378 = vsel %vm1822, %v2367, 0
        %2380 = vmatpush.bf16.msra.mxu0 0
        %2381 = vmatpush.bf16.msra.mxu0 0
        %2382 = vmatpush.bf16.msra.mxu0 0
        %2383 = vmatpush.bf16.msra.mxu0 0
        %2384 = vmatpush.bf16.msra.mxu0 %v1817
        %2385 = vmatpush.bf16.msra.mxu0 %v1816
        %2386 = vmatpush.bf16.msra.mxu0 %v1815
        %2387 = vmatpush.bf16.msra.mxu0 %v1814
        %2388 = vmatmul.bf16.gmra.mxu0 %v2369
        %v2389 = vpop.f32.mrf.mxu0
        %v2390 = vadd.f32 0.0, %v2389
        %v2391 = vpop.f32.mrf.mxu0
        %v2392 = vadd.f32 0.0, %v2391
        %2393 = vmatmul.bf16.gmra.mxu0 %v2372
        %v2394 = vpop.f32.mrf.mxu0
        %v2395 = vadd.f32 0.0, %v2394
        %v2396 = vpop.f32.mrf.mxu0
        %v2397 = vadd.f32 0.0, %v2396
        %2398 = vmatmul.bf16.gmra.mxu0 %v2375
        %v2399 = vpop.f32.mrf.mxu0
        %v2400 = vadd.f32 0.0, %v2399
        %v2401 = vpop.f32.mrf.mxu0
        %v2402 = vadd.f32 0.0, %v2401
        %2403 = vmatmul.bf16.gmra.mxu0 %v2378
        %v2404 = vpop.f32.mrf.mxu0
        %v2405 = vadd.f32 0.0, %v2404
        %v2406 = vpop.f32.mrf.mxu0
        %v2407 = vadd.f32 0.0, %v2406
        %2408 = vdwg.mxu0
        %v2409 = vsub.f32 %v2345, %v2390
        %v2410 = vsub.f32 %v2347, %v2392
        %v2411 = vsub.f32 %v2350, %v2395
        %v2412 = vsub.f32 %v2352, %v2397
        %v2413 = vsub.f32 %v2355, %v2400
        %v2414 = vsub.f32 %v2357, %v2402
        %v2415 = vsub.f32 %v2360, %v2405
        %v2416 = vsub.f32 %v2362, %v2407
        %v2417 = vmul.f32 %v2409, %v2409
        %v2418 = vmul.f32 %v2410, %v2410
        %v2419 = vmul.f32 %v2411, %v2411
        %v2420 = vmul.f32 %v2412, %v2412
        %v2421 = vmul.f32 %v2413, %v2413
        %v2422 = vmul.f32 %v2414, %v2414
        %v2423 = vmul.f32 %v2415, %v2415
        %v2424 = vmul.f32 %v2416, %v2416
        %v2425 = vpack.c.bf16 %v2418, %v2417
        %v2426 = vpack.c.bf16 %v2420, %v2419
        %v2427 = vpack.c.bf16 %v2422, %v2421
        %v2428 = vpack.c.bf16 %v2424, %v2423
        %v2430 = vsel %vm1822, %v2425, 0
        %v2433 = vsel %vm1822, %v2426, 0
        %v2436 = vsel %vm1822, %v2427, 0
        %v2439 = vsel %vm1822, %v2428, 0
        %2441 = vmatpush.bf16.msra.mxu0 0
        %2442 = vmatpush.bf16.msra.mxu0 0
        %2443 = vmatpush.bf16.msra.mxu0 0
        %2444 = vmatpush.bf16.msra.mxu0 0
        %2445 = vmatpush.bf16.msra.mxu0 %v1817
        %2446 = vmatpush.bf16.msra.mxu0 %v1816
        %2447 = vmatpush.bf16.msra.mxu0 %v1815
        %2448 = vmatpush.bf16.msra.mxu0 %v1814
        %2449 = vmatmul.bf16.gmra.mxu0 %v2430
        %v2450 = vpop.f32.mrf.mxu0
        %v2451 = vadd.f32 1e-05, %v2450
        %v2452 = vpop.f32.mrf.mxu0
        %v2453 = vadd.f32 1e-05, %v2452
        %2454 = vmatmul.bf16.gmra.mxu0 %v2433
        %v2455 = vpop.f32.mrf.mxu0
        %v2456 = vadd.f32 1e-05, %v2455
        %v2457 = vpop.f32.mrf.mxu0
        %v2458 = vadd.f32 1e-05, %v2457
        %2459 = vmatmul.bf16.gmra.mxu0 %v2436
        %v2460 = vpop.f32.mrf.mxu0
        %v2461 = vadd.f32 1e-05, %v2460
        %v2462 = vpop.f32.mrf.mxu0
        %v2463 = vadd.f32 1e-05, %v2462
        %2464 = vmatmul.bf16.gmra.mxu0 %v2439
        %v2465 = vpop.f32.mrf.mxu0
        %v2466 = vadd.f32 1e-05, %v2465
        %v2467 = vpop.f32.mrf.mxu0
        %v2468 = vadd.f32 1e-05, %v2467
        %2469 = vdwg.mxu0
        %v2470 = vrsqrt.pop %v2451
        %v2471 = vmul.f32 %v2470, %v2451
        %v2472 = vmul.f32 %v2471, %v2470
        %v2473 = vmul.f32 0.5, %v2472
        %v2474 = vsub.f32 1.5, %v2473
        %v2475 = vmul.f32 %v2470, %v2474
        %vm2476 = vweird.f32 %v2451
        %vm2477 = vweird.f32 %v2470
        %vm2478 = vmor %vm2476, %vm2477
        %v2479 = vsel %vm2478, %v2470, %v2475
        %v2480 = vrsqrt.pop %v2453
        %v2481 = vmul.f32 %v2480, %v2453
        %v2482 = vmul.f32 %v2481, %v2480
        %v2483 = vmul.f32 0.5, %v2482
        %v2484 = vsub.f32 1.5, %v2483
        %v2485 = vmul.f32 %v2480, %v2484
        %vm2486 = vweird.f32 %v2453
        %vm2487 = vweird.f32 %v2480
        %vm2488 = vmor %vm2486, %vm2487
        %v2489 = vsel %vm2488, %v2480, %v2485
        %v2490 = vrsqrt.pop %v2456
        %v2491 = vmul.f32 %v2490, %v2456
        %v2492 = vmul.f32 %v2491, %v2490
        %v2493 = vmul.f32 0.5, %v2492
        %v2494 = vsub.f32 1.5, %v2493
        %v2495 = vmul.f32 %v2490, %v2494
        %vm2496 = vweird.f32 %v2456
        %vm2497 = vweird.f32 %v2490
        %vm2498 = vmor %vm2496, %vm2497
        %v2499 = vsel %vm2498, %v2490, %v2495
        %v2500 = vrsqrt.pop %v2458
        %v2501 = vmul.f32 %v2500, %v2458
        %v2502 = vmul.f32 %v2501, %v2500
        %v2503 = vmul.f32 0.5, %v2502
        %v2504 = vsub.f32 1.5, %v2503
        %v2505 = vmul.f32 %v2500, %v2504
        %vm2506 = vweird.f32 %v2458
        %vm2507 = vweird.f32 %v2500
        %vm2508 = vmor %vm2506, %vm2507
        %v2509 = vsel %vm2508, %v2500, %v2505
        %v2510 = vrsqrt.pop %v2461
        %v2511 = vmul.f32 %v2510, %v2461
        %v2512 = vmul.f32 %v2511, %v2510
        %v2513 = vmul.f32 0.5, %v2512
        %v2514 = vsub.f32 1.5, %v2513
        %v2515 = vmul.f32 %v2510, %v2514
        %vm2516 = vweird.f32 %v2461
        %vm2517 = vweird.f32 %v2510
        %vm2518 = vmor %vm2516, %vm2517
        %v2519 = vsel %vm2518, %v2510, %v2515
        %v2520 = vrsqrt.pop %v2463
        %v2521 = vmul.f32 %v2520, %v2463
        %v2522 = vmul.f32 %v2521, %v2520
        %v2523 = vmul.f32 0.5, %v2522
        %v2524 = vsub.f32 1.5, %v2523
        %v2525 = vmul.f32 %v2520, %v2524
        %vm2526 = vweird.f32 %v2463
        %vm2527 = vweird.f32 %v2520
        %vm2528 = vmor %vm2526, %vm2527
        %v2529 = vsel %vm2528, %v2520, %v2525
        %v2530 = vrsqrt.pop %v2466
        %v2531 = vmul.f32 %v2530, %v2466
        %v2532 = vmul.f32 %v2531, %v2530
        %v2533 = vmul.f32 0.5, %v2532
        %v2534 = vsub.f32 1.5, %v2533
        %v2535 = vmul.f32 %v2530, %v2534
        %vm2536 = vweird.f32 %v2466
        %vm2537 = vweird.f32 %v2530
        %vm2538 = vmor %vm2536, %vm2537
        %v2539 = vsel %vm2538, %v2530, %v2535
        %v2540 = vrsqrt.pop %v2468
        %v2541 = vmul.f32 %v2540, %v2468
        %v2542 = vmul.f32 %v2541, %v2540
        %v2543 = vmul.f32 0.5, %v2542
        %v2544 = vsub.f32 1.5, %v2543
        %v2545 = vmul.f32 %v2540, %v2544
        %vm2546 = vweird.f32 %v2468
        %vm2547 = vweird.f32 %v2540
        %vm2548 = vmor %vm2546, %vm2547
        %v2549 = vsel %vm2548, %v2540, %v2545
        %v2550 = vmul.f32 %v2409, %v2479
        %v2551 = vmul.f32 %v2410, %v2489
        %v2552 = vmul.f32 %v2411, %v2499
        %v2553 = vmul.f32 %v2412, %v2509
        %v2554 = vmul.f32 %v2413, %v2519
        %v2555 = vmul.f32 %v2414, %v2529
        %v2556 = vmul.f32 %v2415, %v2539
        %v2557 = vmul.f32 %v2416, %v2549
        %v2558 = vperm.slane %v500, 0
        %v2559 = vmul.f32 %v2005, %v2558
        %v2560 = vmul.f32 %v2006, %v2558
        %v2561 = vmul.f32 %v2007, %v2558
        %v2562 = vmul.f32 %v2008, %v2558
        %v2563 = vmul.f32 %v2009, %v2558
        %v2564 = vmul.f32 %v2010, %v2558
        %v2565 = vmul.f32 %v2011, %v2558
        %v2566 = vmul.f32 %v2012, %v2558
        %v2567 = vmul.f32 %v2550, %v2558
        %v2568 = vmul.f32 %v2551, %v2558
        %v2569 = vmul.f32 %v2552, %v2558
        %v2570 = vmul.f32 %v2553, %v2558
        %v2571 = vmul.f32 %v2554, %v2558
        %v2572 = vmul.f32 %v2555, %v2558
        %v2573 = vmul.f32 %v2556, %v2558
        %v2574 = vmul.f32 %v2557, %v2558
        %v2575 = vperm.slane %v500, 1
        %v2576 = vadd.f32 %v2559, %v2575
        %v2577 = vadd.f32 %v2560, %v2575
        %v2578 = vadd.f32 %v2561, %v2575
        %v2579 = vadd.f32 %v2562, %v2575
        %v2580 = vadd.f32 %v2563, %v2575
        %v2581 = vadd.f32 %v2564, %v2575
        %v2582 = vadd.f32 %v2565, %v2575
        %v2583 = vadd.f32 %v2566, %v2575
        %v2584 = vadd.f32 %v2567, %v2575
        %v2585 = vadd.f32 %v2568, %v2575
        %v2586 = vadd.f32 %v2569, %v2575
        %v2587 = vadd.f32 %v2570, %v2575
        %v2588 = vadd.f32 %v2571, %v2575
        %v2589 = vadd.f32 %v2572, %v2575
        %v2590 = vadd.f32 %v2573, %v2575
        %v2591 = vadd.f32 %v2574, %v2575
        %v2592 = vxor.u32 %v1019, 2147483648
        %v2593 = vxor.u32 %v1021, 2147483648
        %v2594 = vxor.u32 %v1024, 2147483648
        %v2595 = vxor.u32 %v1026, 2147483648
        %v2596 = vxor.u32 %v1029, 2147483648
        %v2597 = vxor.u32 %v1031, 2147483648
        %v2598 = vxor.u32 %v1034, 2147483648
        %v2599 = vxor.u32 %v1036, 2147483648
        %v2600 = vxor.u32 %v1039, 2147483648
        %v2601 = vxor.u32 %v1041, 2147483648
        %v2602 = vxor.u32 %v1044, 2147483648
        %v2603 = vxor.u32 %v1046, 2147483648
        %v2604 = vxor.u32 %v1049, 2147483648
        %v2605 = vxor.u32 %v1051, 2147483648
        %v2606 = vxor.u32 %v1054, 2147483648
        %v2607 = vxor.u32 %v1056, 2147483648
        %v2608 = vmul.f32 %v2592, 1.442695
        %v2609 = vpow.pop %v2608
        %v2610 = vmul.f32 %v2593, 1.442695
        %v2611 = vpow.pop %v2610
        %v2612 = vmul.f32 %v2594, 1.442695
        %v2613 = vpow.pop %v2612
        %v2614 = vmul.f32 %v2595, 1.442695
        %v2615 = vpow.pop %v2614
        %v2616 = vmul.f32 %v2596, 1.442695
        %v2617 = vpow.pop %v2616
        %v2618 = vmul.f32 %v2597, 1.442695
        %v2619 = vpow.pop %v2618
        %v2620 = vmul.f32 %v2598, 1.442695
        %v2621 = vpow.pop %v2620
        %v2622 = vmul.f32 %v2599, 1.442695
        %v2623 = vpow.pop %v2622
        %v2624 = vmul.f32 %v2600, 1.442695
        %v2625 = vpow.pop %v2624
        %v2626 = vmul.f32 %v2601, 1.442695
        %v2627 = vpow.pop %v2626
        %v2628 = vmul.f32 %v2602, 1.442695
        %v2629 = vpow.pop %v2628
        %v2630 = vmul.f32 %v2603, 1.442695
        %v2631 = vpow.pop %v2630
        %v2632 = vmul.f32 %v2604, 1.442695
        %v2633 = vpow.pop %v2632
        %v2634 = vmul.f32 %v2605, 1.442695
        %v2635 = vpow.pop %v2634
        %v2636 = vmul.f32 %v2606, 1.442695
        %v2637 = vpow.pop %v2636
        %v2638 = vmul.f32 %v2607, 1.442695
        %v2639 = vpow.pop %v2638
        %v2640 = vadd.f32 %v2609, 1.0
        %v2641 = vadd.f32 %v2611, 1.0
        %v2642 = vadd.f32 %v2613, 1.0
        %v2643 = vadd.f32 %v2615, 1.0
        %v2644 = vadd.f32 %v2617, 1.0
        %v2645 = vadd.f32 %v2619, 1.0
        %v2646 = vadd.f32 %v2621, 1.0
        %v2647 = vadd.f32 %v2623, 1.0
        %v2648 = vadd.f32 %v2625, 1.0
        %v2649 = vadd.f32 %v2627, 1.0
        %v2650 = vadd.f32 %v2629, 1.0
        %v2651 = vadd.f32 %v2631, 1.0
        %v2652 = vadd.f32 %v2633, 1.0
        %v2653 = vadd.f32 %v2635, 1.0
        %v2654 = vadd.f32 %v2637, 1.0
        %v2655 = vadd.f32 %v2639, 1.0
        %v2656 = vrcp.pop %v2640
        %v2657 = vmul.f32 %v2640, %v2656
        %v2658 = vsub.f32 1.0, %v2657
        %v2659 = vmul.f32 %v2656, %v2658
        %v2660 = vadd.f32 %v2656, %v2659
        %vm2661 = vweird.f32 %v2640
        %vm2662 = vweird.f32 %v2656
        %vm2663 = vmor %vm2661, %vm2662
        %v2664 = vsel %vm2663, %v2656, %v2660
        %v2665 = vand.u32 2147483647, %v2640
        %vm2666 = vcmp.eq.f32.partialorder %v2665, 8.507059e+37
        %v2667 = vand.u32 %v2640, 2147483648
        %v2668 = vor.u32 1.1754944e-38, %v2667
        %v2669 = vsel %vm2666, %v2668, %v2664
        %v2670 = vmul.f32 1.0, %v2669
        %v2671 = vrcp.pop %v2641
        %v2672 = vmul.f32 %v2641, %v2671
        %v2673 = vsub.f32 1.0, %v2672
        %v2674 = vmul.f32 %v2671, %v2673
        %v2675 = vadd.f32 %v2671, %v2674
        %vm2676 = vweird.f32 %v2641
        %vm2677 = vweird.f32 %v2671
        %vm2678 = vmor %vm2676, %vm2677
        %v2679 = vsel %vm2678, %v2671, %v2675
        %v2680 = vand.u32 2147483647, %v2641
        %vm2681 = vcmp.eq.f32.partialorder %v2680, 8.507059e+37
        %v2682 = vand.u32 %v2641, 2147483648
        %v2683 = vor.u32 1.1754944e-38, %v2682
        %v2684 = vsel %vm2681, %v2683, %v2679
        %v2685 = vmul.f32 1.0, %v2684
        %v2686 = vrcp.pop %v2642
        %v2687 = vmul.f32 %v2642, %v2686
        %v2688 = vsub.f32 1.0, %v2687
        %v2689 = vmul.f32 %v2686, %v2688
        %v2690 = vadd.f32 %v2686, %v2689
        %vm2691 = vweird.f32 %v2642
        %vm2692 = vweird.f32 %v2686
        %vm2693 = vmor %vm2691, %vm2692
        %v2694 = vsel %vm2693, %v2686, %v2690
        %v2695 = vand.u32 2147483647, %v2642
        %vm2696 = vcmp.eq.f32.partialorder %v2695, 8.507059e+37
        %v2697 = vand.u32 %v2642, 2147483648
        %v2698 = vor.u32 1.1754944e-38, %v2697
        %v2699 = vsel %vm2696, %v2698, %v2694
        %v2700 = vmul.f32 1.0, %v2699
        %v2701 = vrcp.pop %v2643
        %v2702 = vmul.f32 %v2643, %v2701
        %v2703 = vsub.f32 1.0, %v2702
        %v2704 = vmul.f32 %v2701, %v2703
        %v2705 = vadd.f32 %v2701, %v2704
        %vm2706 = vweird.f32 %v2643
        %vm2707 = vweird.f32 %v2701
        %vm2708 = vmor %vm2706, %vm2707
        %v2709 = vsel %vm2708, %v2701, %v2705
        %v2710 = vand.u32 2147483647, %v2643
        %vm2711 = vcmp.eq.f32.partialorder %v2710, 8.507059e+37
        %v2712 = vand.u32 %v2643, 2147483648
        %v2713 = vor.u32 1.1754944e-38, %v2712
        %v2714 = vsel %vm2711, %v2713, %v2709
        %v2715 = vmul.f32 1.0, %v2714
        %v2716 = vrcp.pop %v2644
        %v2717 = vmul.f32 %v2644, %v2716
        %v2718 = vsub.f32 1.0, %v2717
        %v2719 = vmul.f32 %v2716, %v2718
        %v2720 = vadd.f32 %v2716, %v2719
        %vm2721 = vweird.f32 %v2644
        %vm2722 = vweird.f32 %v2716
        %vm2723 = vmor %vm2721, %vm2722
        %v2724 = vsel %vm2723, %v2716, %v2720
        %v2725 = vand.u32 2147483647, %v2644
        %vm2726 = vcmp.eq.f32.partialorder %v2725, 8.507059e+37
        %v2727 = vand.u32 %v2644, 2147483648
        %v2728 = vor.u32 1.1754944e-38, %v2727
        %v2729 = vsel %vm2726, %v2728, %v2724
        %v2730 = vmul.f32 1.0, %v2729
        %v2731 = vrcp.pop %v2645
        %v2732 = vmul.f32 %v2645, %v2731
        %v2733 = vsub.f32 1.0, %v2732
        %v2734 = vmul.f32 %v2731, %v2733
        %v2735 = vadd.f32 %v2731, %v2734
        %vm2736 = vweird.f32 %v2645
        %vm2737 = vweird.f32 %v2731
        %vm2738 = vmor %vm2736, %vm2737
        %v2739 = vsel %vm2738, %v2731, %v2735
        %v2740 = vand.u32 2147483647, %v2645
        %vm2741 = vcmp.eq.f32.partialorder %v2740, 8.507059e+37
        %v2742 = vand.u32 %v2645, 2147483648
        %v2743 = vor.u32 1.1754944e-38, %v2742
        %v2744 = vsel %vm2741, %v2743, %v2739
        %v2745 = vmul.f32 1.0, %v2744
        %v2746 = vrcp.pop %v2646
        %v2747 = vmul.f32 %v2646, %v2746
        %v2748 = vsub.f32 1.0, %v2747
        %v2749 = vmul.f32 %v2746, %v2748
        %v2750 = vadd.f32 %v2746, %v2749
        %vm2751 = vweird.f32 %v2646
        %vm2752 = vweird.f32 %v2746
        %vm2753 = vmor %vm2751, %vm2752
        %v2754 = vsel %vm2753, %v2746, %v2750
        %v2755 = vand.u32 2147483647, %v2646
        %vm2756 = vcmp.eq.f32.partialorder %v2755, 8.507059e+37
        %v2757 = vand.u32 %v2646, 2147483648
        %v2758 = vor.u32 1.1754944e-38, %v2757
        %v2759 = vsel %vm2756, %v2758, %v2754
        %v2760 = vmul.f32 1.0, %v2759
        %v2761 = vrcp.pop %v2647
        %v2762 = vmul.f32 %v2647, %v2761
        %v2763 = vsub.f32 1.0, %v2762
        %v2764 = vmul.f32 %v2761, %v2763
        %v2765 = vadd.f32 %v2761, %v2764
        %vm2766 = vweird.f32 %v2647
        %vm2767 = vweird.f32 %v2761
        %vm2768 = vmor %vm2766, %vm2767
        %v2769 = vsel %vm2768, %v2761, %v2765
        %v2770 = vand.u32 2147483647, %v2647
        %vm2771 = vcmp.eq.f32.partialorder %v2770, 8.507059e+37
        %v2772 = vand.u32 %v2647, 2147483648
        %v2773 = vor.u32 1.1754944e-38, %v2772
        %v2774 = vsel %vm2771, %v2773, %v2769
        %v2775 = vmul.f32 1.0, %v2774
        %v2776 = vrcp.pop %v2648
        %v2777 = vmul.f32 %v2648, %v2776
        %v2778 = vsub.f32 1.0, %v2777
        %v2779 = vmul.f32 %v2776, %v2778
        %v2780 = vadd.f32 %v2776, %v2779
        %vm2781 = vweird.f32 %v2648
        %vm2782 = vweird.f32 %v2776
        %vm2783 = vmor %vm2781, %vm2782
        %v2784 = vsel %vm2783, %v2776, %v2780
        %v2785 = vand.u32 2147483647, %v2648
        %vm2786 = vcmp.eq.f32.partialorder %v2785, 8.507059e+37
        %v2787 = vand.u32 %v2648, 2147483648
        %v2788 = vor.u32 1.1754944e-38, %v2787
        %v2789 = vsel %vm2786, %v2788, %v2784
        %v2790 = vmul.f32 1.0, %v2789
        %v2791 = vrcp.pop %v2649
        %v2792 = vmul.f32 %v2649, %v2791
        %v2793 = vsub.f32 1.0, %v2792
        %v2794 = vmul.f32 %v2791, %v2793
        %v2795 = vadd.f32 %v2791, %v2794
        %vm2796 = vweird.f32 %v2649
        %vm2797 = vweird.f32 %v2791
        %vm2798 = vmor %vm2796, %vm2797
        %v2799 = vsel %vm2798, %v2791, %v2795
        %v2800 = vand.u32 2147483647, %v2649
        %vm2801 = vcmp.eq.f32.partialorder %v2800, 8.507059e+37
        %v2802 = vand.u32 %v2649, 2147483648
        %v2803 = vor.u32 1.1754944e-38, %v2802
        %v2804 = vsel %vm2801, %v2803, %v2799
        %v2805 = vmul.f32 1.0, %v2804
        %v2806 = vrcp.pop %v2650
        %v2807 = vmul.f32 %v2650, %v2806
        %v2808 = vsub.f32 1.0, %v2807
        %v2809 = vmul.f32 %v2806, %v2808
        %v2810 = vadd.f32 %v2806, %v2809
        %vm2811 = vweird.f32 %v2650
        %vm2812 = vweird.f32 %v2806
        %vm2813 = vmor %vm2811, %vm2812
        %v2814 = vsel %vm2813, %v2806, %v2810
        %v2815 = vand.u32 2147483647, %v2650
        %vm2816 = vcmp.eq.f32.partialorder %v2815, 8.507059e+37
        %v2817 = vand.u32 %v2650, 2147483648
        %v2818 = vor.u32 1.1754944e-38, %v2817
        %v2819 = vsel %vm2816, %v2818, %v2814
        %v2820 = vmul.f32 1.0, %v2819
        %v2821 = vrcp.pop %v2651
        %v2822 = vmul.f32 %v2651, %v2821
        %v2823 = vsub.f32 1.0, %v2822
        %v2824 = vmul.f32 %v2821, %v2823
        %v2825 = vadd.f32 %v2821, %v2824
        %vm2826 = vweird.f32 %v2651
        %vm2827 = vweird.f32 %v2821
        %vm2828 = vmor %vm2826, %vm2827
        %v2829 = vsel %vm2828, %v2821, %v2825
        %v2830 = vand.u32 2147483647, %v2651
        %vm2831 = vcmp.eq.f32.partialorder %v2830, 8.507059e+37
        %v2832 = vand.u32 %v2651, 2147483648
        %v2833 = vor.u32 1.1754944e-38, %v2832
        %v2834 = vsel %vm2831, %v2833, %v2829
        %v2835 = vmul.f32 1.0, %v2834
        %v2836 = vrcp.pop %v2652
        %v2837 = vmul.f32 %v2652, %v2836
        %v2838 = vsub.f32 1.0, %v2837
        %v2839 = vmul.f32 %v2836, %v2838
        %v2840 = vadd.f32 %v2836, %v2839
        %vm2841 = vweird.f32 %v2652
        %vm2842 = vweird.f32 %v2836
        %vm2843 = vmor %vm2841, %vm2842
        %v2844 = vsel %vm2843, %v2836, %v2840
        %v2845 = vand.u32 2147483647, %v2652
        %vm2846 = vcmp.eq.f32.partialorder %v2845, 8.507059e+37
        %v2847 = vand.u32 %v2652, 2147483648
        %v2848 = vor.u32 1.1754944e-38, %v2847
        %v2849 = vsel %vm2846, %v2848, %v2844
        %v2850 = vmul.f32 1.0, %v2849
        %v2851 = vrcp.pop %v2653
        %v2852 = vmul.f32 %v2653, %v2851
        %v2853 = vsub.f32 1.0, %v2852
        %v2854 = vmul.f32 %v2851, %v2853
        %v2855 = vadd.f32 %v2851, %v2854
        %vm2856 = vweird.f32 %v2653
        %vm2857 = vweird.f32 %v2851
        %vm2858 = vmor %vm2856, %vm2857
        %v2859 = vsel %vm2858, %v2851, %v2855
        %v2860 = vand.u32 2147483647, %v2653
        %vm2861 = vcmp.eq.f32.partialorder %v2860, 8.507059e+37
        %v2862 = vand.u32 %v2653, 2147483648
        %v2863 = vor.u32 1.1754944e-38, %v2862
        %v2864 = vsel %vm2861, %v2863, %v2859
        %v2865 = vmul.f32 1.0, %v2864
        %v2866 = vrcp.pop %v2654
        %v2867 = vmul.f32 %v2654, %v2866
        %v2868 = vsub.f32 1.0, %v2867
        %v2869 = vmul.f32 %v2866, %v2868
        %v2870 = vadd.f32 %v2866, %v2869
        %vm2871 = vweird.f32 %v2654
        %vm2872 = vweird.f32 %v2866
        %vm2873 = vmor %vm2871, %vm2872
        %v2874 = vsel %vm2873, %v2866, %v2870
        %v2875 = vand.u32 2147483647, %v2654
        %vm2876 = vcmp.eq.f32.partialorder %v2875, 8.507059e+37
        %v2877 = vand.u32 %v2654, 2147483648
        %v2878 = vor.u32 1.1754944e-38, %v2877
        %v2879 = vsel %vm2876, %v2878, %v2874
        %v2880 = vmul.f32 1.0, %v2879
        %v2881 = vrcp.pop %v2655
        %v2882 = vmul.f32 %v2655, %v2881
        %v2883 = vsub.f32 1.0, %v2882
        %v2884 = vmul.f32 %v2881, %v2883
        %v2885 = vadd.f32 %v2881, %v2884
        %vm2886 = vweird.f32 %v2655
        %vm2887 = vweird.f32 %v2881
        %vm2888 = vmor %vm2886, %vm2887
        %v2889 = vsel %vm2888, %v2881, %v2885
        %v2890 = vand.u32 2147483647, %v2655
        %vm2891 = vcmp.eq.f32.partialorder %v2890, 8.507059e+37
        %v2892 = vand.u32 %v2655, 2147483648
        %v2893 = vor.u32 1.1754944e-38, %v2892
        %v2894 = vsel %vm2891, %v2893, %v2889
        %v2895 = vmul.f32 1.0, %v2894
        %v2896 = vmul.f32 %v1019, %v2670
        %v2897 = vmul.f32 %v1021, %v2685
        %v2898 = vmul.f32 %v1024, %v2700
        %v2899 = vmul.f32 %v1026, %v2715
        %v2900 = vmul.f32 %v1029, %v2730
        %v2901 = vmul.f32 %v1031, %v2745
        %v2902 = vmul.f32 %v1034, %v2760
        %v2903 = vmul.f32 %v1036, %v2775
        %v2904 = vmul.f32 %v1039, %v2790
        %v2905 = vmul.f32 %v1041, %v2805
        %v2906 = vmul.f32 %v1044, %v2820
        %v2907 = vmul.f32 %v1046, %v2835
        %v2908 = vmul.f32 %v1049, %v2850
        %v2909 = vmul.f32 %v1051, %v2865
        %v2910 = vmul.f32 %v1054, %v2880
        %v2911 = vmul.f32 %v1056, %v2895
        %2928 = vrot.lane.b32.xlu0 %v2576, 64
        %v2929 = vpop.permute.xlu0 %2928
        %2930 = vrot.lane.b32.xlu0 %v2577, 64
        %v2931 = vpop.permute.xlu0 %2930
        %2932 = vrot.lane.b32.xlu0 %v2578, 64
        %v2933 = vpop.permute.xlu0 %2932
        %2934 = vrot.lane.b32.xlu0 %v2579, 64
        %v2935 = vpop.permute.xlu0 %2934
        %2936 = vrot.lane.b32.xlu0 %v2580, 64
        %v2937 = vpop.permute.xlu0 %2936
        %2938 = vrot.lane.b32.xlu0 %v2581, 64
        %v2939 = vpop.permute.xlu0 %2938
        %2940 = vrot.lane.b32.xlu0 %v2582, 64
        %v2941 = vpop.permute.xlu0 %2940
        %2942 = vrot.lane.b32.xlu0 %v2583, 64
        %v2943 = vpop.permute.xlu0 %2942
        %2944 = vrot.lane.b32.xlu0 %v2584, 64
        %v2945 = vpop.permute.xlu0 %2944
        %2946 = vrot.lane.b32.xlu0 %v2585, 64
        %v2947 = vpop.permute.xlu0 %2946
        %2948 = vrot.lane.b32.xlu0 %v2586, 64
        %v2949 = vpop.permute.xlu0 %2948
        %2950 = vrot.lane.b32.xlu0 %v2587, 64
        %v2951 = vpop.permute.xlu0 %2950
        %2952 = vrot.lane.b32.xlu0 %v2588, 64
        %v2953 = vpop.permute.xlu0 %2952
        %2954 = vrot.lane.b32.xlu0 %v2589, 64
        %v2955 = vpop.permute.xlu0 %2954
        %2956 = vrot.lane.b32.xlu0 %v2590, 64
        %v2957 = vpop.permute.xlu0 %2956
        %2958 = vrot.lane.b32.xlu0 %v2591, 64
        %v2959 = vpop.permute.xlu0 %2958
        %v2976 = vmul.f32 %v2896, %v2929
        %v2977 = vmul.f32 %v2897, %v2931
        %v2978 = vmul.f32 %v2898, %v2933
        %v2979 = vmul.f32 %v2899, %v2935
        %v2980 = vmul.f32 %v2900, %v2937
        %v2981 = vmul.f32 %v2901, %v2939
        %v2982 = vmul.f32 %v2902, %v2941
        %v2983 = vmul.f32 %v2903, %v2943
        %v2984 = vmul.f32 %v2904, %v2945
        %v2985 = vmul.f32 %v2905, %v2947
        %v2986 = vmul.f32 %v2906, %v2949
        %v2987 = vmul.f32 %v2907, %v2951
        %v2988 = vmul.f32 %v2908, %v2953
        %v2989 = vmul.f32 %v2909, %v2955
        %v2990 = vmul.f32 %v2910, %v2957
        %v2991 = vmul.f32 %v2911, %v2959
        %v2992 = vpack.c.bf16 %v2977, %v2976
        %v2993 = vpack.c.bf16 %v2979, %v2978
        %v2994 = vpack.c.bf16 %v2981, %v2980
        %v2995 = vpack.c.bf16 %v2983, %v2982
        %v2996 = vpack.c.bf16 %v2985, %v2984
        %v2997 = vpack.c.bf16 %v2987, %v2986
        %v2998 = vpack.c.bf16 %v2989, %v2988
        %v2999 = vpack.c.bf16 %v2991, %v2990
        %v3000 = vld [vmem:[%s8] sm:$0xf]
        %v3001 = vld [vmem:[%s8 + $0x4] sm:$0xf]
        %v3002 = vld [vmem:[%s8 + $0x8] sm:$0xf]
        %v3003 = vld [vmem:[%s8 + $0xc] sm:$0xf]
        %v3004 = vld [vmem:[%s8 + $0x10] sm:$0xf]
        %v3005 = vld [vmem:[%s8 + $0x14] sm:$0xf]
        %v3006 = vld [vmem:[%s8 + $0x18] sm:$0xf]
        %v3007 = vld [vmem:[%s8 + $0x1c] sm:$0xf]
        %3016 = vrot.lane.b32.xlu0 %v2992, 64
        %v3017 = vpop.permute.xlu0 %3016
        %3018 = vrot.lane.b32.xlu0 %v2993, 64
        %v3019 = vpop.permute.xlu0 %3018
        %3020 = vrot.lane.b32.xlu0 %v2994, 64
        %v3021 = vpop.permute.xlu0 %3020
        %3022 = vrot.lane.b32.xlu0 %v2995, 64
        %v3023 = vpop.permute.xlu0 %3022
        %3024 = vrot.lane.b32.xlu0 %v2996, 64
        %v3025 = vpop.permute.xlu0 %3024
        %3026 = vrot.lane.b32.xlu0 %v2997, 64
        %v3027 = vpop.permute.xlu0 %3026
        %3028 = vrot.lane.b32.xlu0 %v2998, 64
        %v3029 = vpop.permute.xlu0 %3028
        %3030 = vrot.lane.b32.xlu0 %v2999, 64
        %v3031 = vpop.permute.xlu0 %3030
        %v3040 = vunpack.c.l.b16 %v3000
        %v3041 = vunpack.c.l.b16 %v3001
        %v3042 = vunpack.c.l.b16 %v3002
        %v3043 = vunpack.c.l.b16 %v3003
        %v3044 = vunpack.c.l.b16 %v3004
        %v3045 = vunpack.c.l.b16 %v3005
        %v3046 = vunpack.c.l.b16 %v3006
        %v3047 = vunpack.c.l.b16 %v3007
        %v3048 = vpack.c.b16 %v3041, %v3040
        %v3049 = vpack.c.b16 %v3043, %v3042
        %v3050 = vpack.c.b16 %v3045, %v3044
        %v3051 = vpack.c.b16 %v3047, %v3046
        %v3057 = vsel %vm1822, %v3017, 0
        %v3060 = vsel %vm1822, %v3019, 0
        %v3063 = vsel %vm1822, %v3021, 0
        %v3066 = vsel %vm1822, %v3023, 0
        %v3069 = vsel %vm1822, %v3025, 0
        %v3072 = vsel %vm1822, %v3027, 0
        %v3075 = vsel %vm1822, %v3029, 0
        %v3078 = vsel %vm1822, %v3031, 0
        %3080 = vmatpush.bf16.msra.mxu0 0
        %3081 = vmatpush.bf16.msra.mxu0 0
        %3082 = vmatpush.bf16.msra.mxu0 0
        %3083 = vmatpush.bf16.msra.mxu0 0
        %3084 = vmatpush.bf16.msra.mxu0 %v3051
        %3085 = vmatpush.bf16.msra.mxu0 %v3050
        %3086 = vmatpush.bf16.msra.mxu0 %v3049
        %3087 = vmatpush.bf16.msra.mxu0 %v3048
        %3088 = vmatmul.bf16.gmra.mxu0 %v3057
        %v3089 = vpop.f32.mrf.mxu0
        %v3090 = vadd.f32 %v483, %v3089
        %v3091 = vpop.f32.mrf.mxu0
        %v3092 = vadd.f32 %v484, %v3091
        %3093 = vmatmul.bf16.gmra.mxu0 %v3060
        %v3094 = vpop.f32.mrf.mxu0
        %v3095 = vadd.f32 %v485, %v3094
        %v3096 = vpop.f32.mrf.mxu0
        %v3097 = vadd.f32 %v486, %v3096
        %3098 = vmatmul.bf16.gmra.mxu0 %v3063
        %v3099 = vpop.f32.mrf.mxu0
        %v3100 = vadd.f32 %v487, %v3099
        %v3101 = vpop.f32.mrf.mxu0
        %v3102 = vadd.f32 %v488, %v3101
        %3103 = vmatmul.bf16.gmra.mxu0 %v3066
        %v3104 = vpop.f32.mrf.mxu0
        %v3105 = vadd.f32 %v489, %v3104
        %v3106 = vpop.f32.mrf.mxu0
        %v3107 = vadd.f32 %v490, %v3106
        %3108 = vmatmul.bf16.gmra.mxu0 %v3069
        %v3109 = vpop.f32.mrf.mxu0
        %v3110 = vadd.f32 %v491, %v3109
        %v3111 = vpop.f32.mrf.mxu0
        %v3112 = vadd.f32 %v492, %v3111
        %3113 = vmatmul.bf16.gmra.mxu0 %v3072
        %v3114 = vpop.f32.mrf.mxu0
        %v3115 = vadd.f32 %v493, %v3114
        %v3116 = vpop.f32.mrf.mxu0
        %v3117 = vadd.f32 %v494, %v3116
        %3118 = vmatmul.bf16.gmra.mxu0 %v3075
        %v3119 = vpop.f32.mrf.mxu0
        %v3120 = vadd.f32 %v495, %v3119
        %v3121 = vpop.f32.mrf.mxu0
        %v3122 = vadd.f32 %v496, %v3121
        %3123 = vmatmul.bf16.gmra.mxu0 %v3078
        %v3124 = vpop.f32.mrf.mxu0
        %v3125 = vadd.f32 %v497, %v3124
        %v3126 = vpop.f32.mrf.mxu0
        %v3127 = vadd.f32 %v498, %v3126
        %3128 = vdwg.mxu0
        %v3129 = vsel %vm501, %v3090, 0.0
        %3130 = vadd.xlane.f32.xlu0 %v3129
        %v3131 = vpop.xlane.xlu0 %3130
        %v3132 = vsel %vm501, %v3092, 0.0
        %3133 = vadd.xlane.f32.xlu0 %v3132
        %v3134 = vpop.xlane.xlu0 %3133
        %v3135 = vsel %vm501, %v3095, 0.0
        %3136 = vadd.xlane.f32.xlu0 %v3135
        %v3137 = vpop.xlane.xlu0 %3136
        %v3138 = vsel %vm501, %v3097, 0.0
        %3139 = vadd.xlane.f32.xlu0 %v3138
        %v3140 = vpop.xlane.xlu0 %3139
        %v3141 = vsel %vm501, %v3100, 0.0
        %3142 = vadd.xlane.f32.xlu0 %v3141
        %v3143 = vpop.xlane.xlu0 %3142
        %v3144 = vsel %vm501, %v3102, 0.0
        %3145 = vadd.xlane.f32.xlu0 %v3144
        %v3146 = vpop.xlane.xlu0 %3145
        %v3147 = vsel %vm501, %v3105, 0.0
        %3148 = vadd.xlane.f32.xlu0 %v3147
        %v3149 = vpop.xlane.xlu0 %3148
        %v3150 = vsel %vm501, %v3107, 0.0
        %3151 = vadd.xlane.f32.xlu0 %v3150
        %v3152 = vpop.xlane.xlu0 %3151
        %v3153 = vsel %vm501, %v3110, 0.0
        %3154 = vadd.xlane.f32.xlu0 %v3153
        %v3155 = vpop.xlane.xlu0 %3154
        %v3156 = vsel %vm501, %v3112, 0.0
        %3157 = vadd.xlane.f32.xlu0 %v3156
        %v3158 = vpop.xlane.xlu0 %3157
        %v3159 = vsel %vm501, %v3115, 0.0
        %3160 = vadd.xlane.f32.xlu0 %v3159
        %v3161 = vpop.xlane.xlu0 %3160
        %v3162 = vsel %vm501, %v3117, 0.0
        %3163 = vadd.xlane.f32.xlu0 %v3162
        %v3164 = vpop.xlane.xlu0 %3163
        %v3165 = vsel %vm501, %v3120, 0.0
        %3166 = vadd.xlane.f32.xlu0 %v3165
        %v3167 = vpop.xlane.xlu0 %3166
        %v3168 = vsel %vm501, %v3122, 0.0
        %3169 = vadd.xlane.f32.xlu0 %v3168
        %v3170 = vpop.xlane.xlu0 %3169
        %v3171 = vsel %vm501, %v3125, 0.0
        %3172 = vadd.xlane.f32.xlu0 %v3171
        %v3173 = vpop.xlane.xlu0 %3172
        %v3174 = vsel %vm501, %v3127, 0.0
        %3175 = vadd.xlane.f32.xlu0 %v3174
        %v3176 = vpop.xlane.xlu0 %3175
        %v3177 = vmul.f32 %v3131, %v556
        %v3178 = vmul.f32 %v3134, %v556
        %v3179 = vmul.f32 %v3137, %v556
        %v3180 = vmul.f32 %v3140, %v556
        %v3181 = vmul.f32 %v3143, %v556
        %v3182 = vmul.f32 %v3146, %v556
        %v3183 = vmul.f32 %v3149, %v556
        %v3184 = vmul.f32 %v3152, %v556
        %v3185 = vmul.f32 %v3155, %v556
        %v3186 = vmul.f32 %v3158, %v556
        %v3187 = vmul.f32 %v3161, %v556
        %v3188 = vmul.f32 %v3164, %v556
        %v3189 = vmul.f32 %v3167, %v556
        %v3190 = vmul.f32 %v3170, %v556
        %v3191 = vmul.f32 %v3173, %v556
        %v3192 = vmul.f32 %v3176, %v556
        %v3193 = vsub.f32 %v3090, %v3177
        %v3194 = vsub.f32 %v3092, %v3178
        %v3195 = vsub.f32 %v3095, %v3179
        %v3196 = vsub.f32 %v3097, %v3180
        %v3197 = vsub.f32 %v3100, %v3181
        %v3198 = vsub.f32 %v3102, %v3182
        %v3199 = vsub.f32 %v3105, %v3183
        %v3200 = vsub.f32 %v3107, %v3184
        %v3201 = vsub.f32 %v3110, %v3185
        %v3202 = vsub.f32 %v3112, %v3186
        %v3203 = vsub.f32 %v3115, %v3187
        %v3204 = vsub.f32 %v3117, %v3188
        %v3205 = vsub.f32 %v3120, %v3189
        %v3206 = vsub.f32 %v3122, %v3190
        %v3207 = vsub.f32 %v3125, %v3191
        %v3208 = vsub.f32 %v3127, %v3192
        %v3209 = vmul.f32 %v3193, %v3193
        %v3210 = vmul.f32 %v3194, %v3194
        %v3211 = vmul.f32 %v3195, %v3195
        %v3212 = vmul.f32 %v3196, %v3196
        %v3213 = vmul.f32 %v3197, %v3197
        %v3214 = vmul.f32 %v3198, %v3198
        %v3215 = vmul.f32 %v3199, %v3199
        %v3216 = vmul.f32 %v3200, %v3200
        %v3217 = vmul.f32 %v3201, %v3201
        %v3218 = vmul.f32 %v3202, %v3202
        %v3219 = vmul.f32 %v3203, %v3203
        %v3220 = vmul.f32 %v3204, %v3204
        %v3221 = vmul.f32 %v3205, %v3205
        %v3222 = vmul.f32 %v3206, %v3206
        %v3223 = vmul.f32 %v3207, %v3207
        %v3224 = vmul.f32 %v3208, %v3208
        %v3225 = vsel %vm501, %v3209, 0.0
        %3226 = vadd.xlane.f32.xlu0 %v3225
        %v3227 = vpop.xlane.xlu0 %3226
        %v3228 = vsel %vm501, %v3210, 0.0
        %3229 = vadd.xlane.f32.xlu0 %v3228
        %v3230 = vpop.xlane.xlu0 %3229
        %v3231 = vsel %vm501, %v3211, 0.0
        %3232 = vadd.xlane.f32.xlu0 %v3231
        %v3233 = vpop.xlane.xlu0 %3232
        %v3234 = vsel %vm501, %v3212, 0.0
        %3235 = vadd.xlane.f32.xlu0 %v3234
        %v3236 = vpop.xlane.xlu0 %3235
        %v3237 = vsel %vm501, %v3213, 0.0
        %3238 = vadd.xlane.f32.xlu0 %v3237
        %v3239 = vpop.xlane.xlu0 %3238
        %v3240 = vsel %vm501, %v3214, 0.0
        %3241 = vadd.xlane.f32.xlu0 %v3240
        %v3242 = vpop.xlane.xlu0 %3241
        %v3243 = vsel %vm501, %v3215, 0.0
        %3244 = vadd.xlane.f32.xlu0 %v3243
        %v3245 = vpop.xlane.xlu0 %3244
        %v3246 = vsel %vm501, %v3216, 0.0
        %3247 = vadd.xlane.f32.xlu0 %v3246
        %v3248 = vpop.xlane.xlu0 %3247
        %v3249 = vsel %vm501, %v3217, 0.0
        %3250 = vadd.xlane.f32.xlu0 %v3249
        %v3251 = vpop.xlane.xlu0 %3250
        %v3252 = vsel %vm501, %v3218, 0.0
        %3253 = vadd.xlane.f32.xlu0 %v3252
        %v3254 = vpop.xlane.xlu0 %3253
        %v3255 = vsel %vm501, %v3219, 0.0
        %3256 = vadd.xlane.f32.xlu0 %v3255
        %v3257 = vpop.xlane.xlu0 %3256
        %v3258 = vsel %vm501, %v3220, 0.0
        %3259 = vadd.xlane.f32.xlu0 %v3258
        %v3260 = vpop.xlane.xlu0 %3259
        %v3261 = vsel %vm501, %v3221, 0.0
        %3262 = vadd.xlane.f32.xlu0 %v3261
        %v3263 = vpop.xlane.xlu0 %3262
        %v3264 = vsel %vm501, %v3222, 0.0
        %3265 = vadd.xlane.f32.xlu0 %v3264
        %v3266 = vpop.xlane.xlu0 %3265
        %v3267 = vsel %vm501, %v3223, 0.0
        %3268 = vadd.xlane.f32.xlu0 %v3267
        %v3269 = vpop.xlane.xlu0 %3268
        %v3270 = vsel %vm501, %v3224, 0.0
        %3271 = vadd.xlane.f32.xlu0 %v3270
        %v3272 = vpop.xlane.xlu0 %3271
        %v3273 = vmul.f32 %v3227, %v556
        %v3274 = vmul.f32 %v3230, %v556
        %v3275 = vmul.f32 %v3233, %v556
        %v3276 = vmul.f32 %v3236, %v556
        %v3277 = vmul.f32 %v3239, %v556
        %v3278 = vmul.f32 %v3242, %v556
        %v3279 = vmul.f32 %v3245, %v556
        %v3280 = vmul.f32 %v3248, %v556
        %v3281 = vmul.f32 %v3251, %v556
        %v3282 = vmul.f32 %v3254, %v556
        %v3283 = vmul.f32 %v3257, %v556
        %v3284 = vmul.f32 %v3260, %v556
        %v3285 = vmul.f32 %v3263, %v556
        %v3286 = vmul.f32 %v3266, %v556
        %v3287 = vmul.f32 %v3269, %v556
        %v3288 = vmul.f32 %v3272, %v556
        %v3289 = vadd.f32 %v3273, 1e-05
        %v3290 = vadd.f32 %v3274, 1e-05
        %v3291 = vadd.f32 %v3275, 1e-05
        %v3292 = vadd.f32 %v3276, 1e-05
        %v3293 = vadd.f32 %v3277, 1e-05
        %v3294 = vadd.f32 %v3278, 1e-05
        %v3295 = vadd.f32 %v3279, 1e-05
        %v3296 = vadd.f32 %v3280, 1e-05
        %v3297 = vadd.f32 %v3281, 1e-05
        %v3298 = vadd.f32 %v3282, 1e-05
        %v3299 = vadd.f32 %v3283, 1e-05
        %v3300 = vadd.f32 %v3284, 1e-05
        %v3301 = vadd.f32 %v3285, 1e-05
        %v3302 = vadd.f32 %v3286, 1e-05
        %v3303 = vadd.f32 %v3287, 1e-05
        %v3304 = vadd.f32 %v3288, 1e-05
        %v3305 = vrsqrt.pop %v3289
        %v3306 = vmul.f32 %v3305, %v3289
        %v3307 = vmul.f32 %v3306, %v3305
        %v3308 = vmul.f32 0.5, %v3307
        %v3309 = vsub.f32 1.5, %v3308
        %v3310 = vmul.f32 %v3305, %v3309
        %vm3311 = vweird.f32 %v3289
        %vm3312 = vweird.f32 %v3305
        %vm3313 = vmor %vm3311, %vm3312
        %v3314 = vsel %vm3313, %v3305, %v3310
        %v3315 = vrsqrt.pop %v3290
        %v3316 = vmul.f32 %v3315, %v3290
        %v3317 = vmul.f32 %v3316, %v3315
        %v3318 = vmul.f32 0.5, %v3317
        %v3319 = vsub.f32 1.5, %v3318
        %v3320 = vmul.f32 %v3315, %v3319
        %vm3321 = vweird.f32 %v3290
        %vm3322 = vweird.f32 %v3315
        %vm3323 = vmor %vm3321, %vm3322
        %v3324 = vsel %vm3323, %v3315, %v3320
        %v3325 = vrsqrt.pop %v3291
        %v3326 = vmul.f32 %v3325, %v3291
        %v3327 = vmul.f32 %v3326, %v3325
        %v3328 = vmul.f32 0.5, %v3327
        %v3329 = vsub.f32 1.5, %v3328
        %v3330 = vmul.f32 %v3325, %v3329
        %vm3331 = vweird.f32 %v3291
        %vm3332 = vweird.f32 %v3325
        %vm3333 = vmor %vm3331, %vm3332
        %v3334 = vsel %vm3333, %v3325, %v3330
        %v3335 = vrsqrt.pop %v3292
        %v3336 = vmul.f32 %v3335, %v3292
        %v3337 = vmul.f32 %v3336, %v3335
        %v3338 = vmul.f32 0.5, %v3337
        %v3339 = vsub.f32 1.5, %v3338
        %v3340 = vmul.f32 %v3335, %v3339
        %vm3341 = vweird.f32 %v3292
        %vm3342 = vweird.f32 %v3335
        %vm3343 = vmor %vm3341, %vm3342
        %v3344 = vsel %vm3343, %v3335, %v3340
        %v3345 = vrsqrt.pop %v3293
        %v3346 = vmul.f32 %v3345, %v3293
        %v3347 = vmul.f32 %v3346, %v3345
        %v3348 = vmul.f32 0.5, %v3347
        %v3349 = vsub.f32 1.5, %v3348
        %v3350 = vmul.f32 %v3345, %v3349
        %vm3351 = vweird.f32 %v3293
        %vm3352 = vweird.f32 %v3345
        %vm3353 = vmor %vm3351, %vm3352
        %v3354 = vsel %vm3353, %v3345, %v3350
        %v3355 = vrsqrt.pop %v3294
        %v3356 = vmul.f32 %v3355, %v3294
        %v3357 = vmul.f32 %v3356, %v3355
        %v3358 = vmul.f32 0.5, %v3357
        %v3359 = vsub.f32 1.5, %v3358
        %v3360 = vmul.f32 %v3355, %v3359
        %vm3361 = vweird.f32 %v3294
        %vm3362 = vweird.f32 %v3355
        %vm3363 = vmor %vm3361, %vm3362
        %v3364 = vsel %vm3363, %v3355, %v3360
        %v3365 = vrsqrt.pop %v3295
        %v3366 = vmul.f32 %v3365, %v3295
        %v3367 = vmul.f32 %v3366, %v3365
        %v3368 = vmul.f32 0.5, %v3367
        %v3369 = vsub.f32 1.5, %v3368
        %v3370 = vmul.f32 %v3365, %v3369
        %vm3371 = vweird.f32 %v3295
        %vm3372 = vweird.f32 %v3365
        %vm3373 = vmor %vm3371, %vm3372
        %v3374 = vsel %vm3373, %v3365, %v3370
        %v3375 = vrsqrt.pop %v3296
        %v3376 = vmul.f32 %v3375, %v3296
        %v3377 = vmul.f32 %v3376, %v3375
        %v3378 = vmul.f32 0.5, %v3377
        %v3379 = vsub.f32 1.5, %v3378
        %v3380 = vmul.f32 %v3375, %v3379
        %vm3381 = vweird.f32 %v3296
        %vm3382 = vweird.f32 %v3375
        %vm3383 = vmor %vm3381, %vm3382
        %v3384 = vsel %vm3383, %v3375, %v3380
        %v3385 = vrsqrt.pop %v3297
        %v3386 = vmul.f32 %v3385, %v3297
        %v3387 = vmul.f32 %v3386, %v3385
        %v3388 = vmul.f32 0.5, %v3387
        %v3389 = vsub.f32 1.5, %v3388
        %v3390 = vmul.f32 %v3385, %v3389
        %vm3391 = vweird.f32 %v3297
        %vm3392 = vweird.f32 %v3385
        %vm3393 = vmor %vm3391, %vm3392
        %v3394 = vsel %vm3393, %v3385, %v3390
        %v3395 = vrsqrt.pop %v3298
        %v3396 = vmul.f32 %v3395, %v3298
        %v3397 = vmul.f32 %v3396, %v3395
        %v3398 = vmul.f32 0.5, %v3397
        %v3399 = vsub.f32 1.5, %v3398
        %v3400 = vmul.f32 %v3395, %v3399
        %vm3401 = vweird.f32 %v3298
        %vm3402 = vweird.f32 %v3395
        %vm3403 = vmor %vm3401, %vm3402
        %v3404 = vsel %vm3403, %v3395, %v3400
        %v3405 = vrsqrt.pop %v3299
        %v3406 = vmul.f32 %v3405, %v3299
        %v3407 = vmul.f32 %v3406, %v3405
        %v3408 = vmul.f32 0.5, %v3407
        %v3409 = vsub.f32 1.5, %v3408
        %v3410 = vmul.f32 %v3405, %v3409
        %vm3411 = vweird.f32 %v3299
        %vm3412 = vweird.f32 %v3405
        %vm3413 = vmor %vm3411, %vm3412
        %v3414 = vsel %vm3413, %v3405, %v3410
        %v3415 = vrsqrt.pop %v3300
        %v3416 = vmul.f32 %v3415, %v3300
        %v3417 = vmul.f32 %v3416, %v3415
        %v3418 = vmul.f32 0.5, %v3417
        %v3419 = vsub.f32 1.5, %v3418
        %v3420 = vmul.f32 %v3415, %v3419
        %vm3421 = vweird.f32 %v3300
        %vm3422 = vweird.f32 %v3415
        %vm3423 = vmor %vm3421, %vm3422
        %v3424 = vsel %vm3423, %v3415, %v3420
        %v3425 = vrsqrt.pop %v3301
        %v3426 = vmul.f32 %v3425, %v3301
        %v3427 = vmul.f32 %v3426, %v3425
        %v3428 = vmul.f32 0.5, %v3427
        %v3429 = vsub.f32 1.5, %v3428
        %v3430 = vmul.f32 %v3425, %v3429
        %vm3431 = vweird.f32 %v3301
        %vm3432 = vweird.f32 %v3425
        %vm3433 = vmor %vm3431, %vm3432
        %v3434 = vsel %vm3433, %v3425, %v3430
        %v3435 = vrsqrt.pop %v3302
        %v3436 = vmul.f32 %v3435, %v3302
        %v3437 = vmul.f32 %v3436, %v3435
        %v3438 = vmul.f32 0.5, %v3437
        %v3439 = vsub.f32 1.5, %v3438
        %v3440 = vmul.f32 %v3435, %v3439
        %vm3441 = vweird.f32 %v3302
        %vm3442 = vweird.f32 %v3435
        %vm3443 = vmor %vm3441, %vm3442
        %v3444 = vsel %vm3443, %v3435, %v3440
        %v3445 = vrsqrt.pop %v3303
        %v3446 = vmul.f32 %v3445, %v3303
        %v3447 = vmul.f32 %v3446, %v3445
        %v3448 = vmul.f32 0.5, %v3447
        %v3449 = vsub.f32 1.5, %v3448
        %v3450 = vmul.f32 %v3445, %v3449
        %vm3451 = vweird.f32 %v3303
        %vm3452 = vweird.f32 %v3445
        %vm3453 = vmor %vm3451, %vm3452
        %v3454 = vsel %vm3453, %v3445, %v3450
        %v3455 = vrsqrt.pop %v3304
        %v3456 = vmul.f32 %v3455, %v3304
        %v3457 = vmul.f32 %v3456, %v3455
        %v3458 = vmul.f32 0.5, %v3457
        %v3459 = vsub.f32 1.5, %v3458
        %v3460 = vmul.f32 %v3455, %v3459
        %vm3461 = vweird.f32 %v3304
        %vm3462 = vweird.f32 %v3455
        %vm3463 = vmor %vm3461, %vm3462
        %v3464 = vsel %vm3463, %v3455, %v3460
        %v3465 = vmul.f32 %v3193, %v3314
        %v3466 = vmul.f32 %v3194, %v3324
        %v3467 = vmul.f32 %v3195, %v3334
        %v3468 = vmul.f32 %v3196, %v3344
        %v3469 = vmul.f32 %v3197, %v3354
        %v3470 = vmul.f32 %v3198, %v3364
        %v3471 = vmul.f32 %v3199, %v3374
        %v3472 = vmul.f32 %v3200, %v3384
        %v3473 = vmul.f32 %v3201, %v3394
        %v3474 = vmul.f32 %v3202, %v3404
        %v3475 = vmul.f32 %v3203, %v3414
        %v3476 = vmul.f32 %v3204, %v3424
        %v3477 = vmul.f32 %v3205, %v3434
        %v3478 = vmul.f32 %v3206, %v3444
        %v3479 = vmul.f32 %v3207, %v3454
        %v3480 = vmul.f32 %v3208, %v3464
        %v3481 = vperm.slane %v499, 2
        %v3482 = vmul.f32 %v3465, %v3481
        %v3483 = vmul.f32 %v3466, %v3481
        %v3484 = vmul.f32 %v3467, %v3481
        %v3485 = vmul.f32 %v3468, %v3481
        %v3486 = vmul.f32 %v3469, %v3481
        %v3487 = vmul.f32 %v3470, %v3481
        %v3488 = vmul.f32 %v3471, %v3481
        %v3489 = vmul.f32 %v3472, %v3481
        %v3490 = vmul.f32 %v3473, %v3481
        %v3491 = vmul.f32 %v3474, %v3481
        %v3492 = vmul.f32 %v3475, %v3481
        %v3493 = vmul.f32 %v3476, %v3481
        %v3494 = vmul.f32 %v3477, %v3481
        %v3495 = vmul.f32 %v3478, %v3481
        %v3496 = vmul.f32 %v3479, %v3481
        %v3497 = vmul.f32 %v3480, %v3481
        %v3498 = vperm.slane %v499, 3
        %v3499 = vadd.f32 %v3482, %v3498
        %v3500 = vadd.f32 %v3483, %v3498
        %v3501 = vadd.f32 %v3484, %v3498
        %v3502 = vadd.f32 %v3485, %v3498
        %v3503 = vadd.f32 %v3486, %v3498
        %v3504 = vadd.f32 %v3487, %v3498
        %v3505 = vadd.f32 %v3488, %v3498
        %v3506 = vadd.f32 %v3489, %v3498
        %v3507 = vadd.f32 %v3490, %v3498
        %v3508 = vadd.f32 %v3491, %v3498
        %v3509 = vadd.f32 %v3492, %v3498
        %v3510 = vadd.f32 %v3493, %v3498
        %v3511 = vadd.f32 %v3494, %v3498
        %v3512 = vadd.f32 %v3495, %v3498
        %v3513 = vadd.f32 %v3496, %v3498
        %v3514 = vadd.f32 %v3497, %v3498
        %v3515 = vpack.c.bf16 %v3500, %v3499
        %v3516 = vpack.c.bf16 %v3502, %v3501
        %v3517 = vpack.c.bf16 %v3504, %v3503
        %v3518 = vpack.c.bf16 %v3506, %v3505
        %v3519 = vpack.c.bf16 %v3508, %v3507
        %v3520 = vpack.c.bf16 %v3510, %v3509
        %v3521 = vpack.c.bf16 %v3512, %v3511
        %v3522 = vpack.c.bf16 %v3514, %v3513
        %v3523 = vld [vmem:[%s9] sm:$0xf]
        %v3524 = vld [vmem:[%s9 + $0x4] sm:$0xf]
        %v3525 = vld [vmem:[%s9 + $0x8] sm:$0xf]
        %v3526 = vld [vmem:[%s9 + $0xc] sm:$0xf]
        %v3527 = vperm.slane %v500, 2
        %v3532 = vunpack.c.l.b16 %v3523
        %v3533 = vunpack.c.l.b16 %v3524
        %v3534 = vunpack.c.l.b16 %v3525
        %v3535 = vunpack.c.l.b16 %v3526
        %v3536 = vpack.c.b16 %v3533, %v3532
        %v3537 = vpack.c.b16 %v3535, %v3534
        %v3541 = vsel %vm501, %v3515, 0
        %v3544 = vsel %vm501, %v3516, 0
        %v3547 = vsel %vm501, %v3517, 0
        %v3550 = vsel %vm501, %v3518, 0
        %v3553 = vsel %vm501, %v3519, 0
        %v3556 = vsel %vm501, %v3520, 0
        %v3559 = vsel %vm501, %v3521, 0
        %v3562 = vsel %vm501, %v3522, 0
        %3564 = vmatpush.bf16.msra.mxu0 0
        %3565 = vmatpush.bf16.msra.mxu0 0
        %3566 = vmatpush.bf16.msra.mxu0 0
        %3567 = vmatpush.bf16.msra.mxu0 0
        %3568 = vmatpush.bf16.msra.mxu0 0
        %3569 = vmatpush.bf16.msra.mxu0 0
        %3570 = vmatpush.bf16.msra.mxu0 %v3537
        %3571 = vmatpush.bf16.msra.mxu0 %v3536
        %3572 = vmatmul.bf16.gmra.mxu0 %v3541
        %v3573 = vpop.f32.mrf.mxu0
        %v3574 = vadd.f32 %v3527, %v3573
        %v3575 = vpop.f32.mrf.mxu0
        %v3576 = vadd.f32 %v3527, %v3575
        %3577 = vmatmul.bf16.gmra.mxu0 %v3544
        %v3578 = vpop.f32.mrf.mxu0
        %v3579 = vadd.f32 %v3527, %v3578
        %v3580 = vpop.f32.mrf.mxu0
        %v3581 = vadd.f32 %v3527, %v3580
        %3582 = vmatmul.bf16.gmra.mxu0 %v3547
        %v3583 = vpop.f32.mrf.mxu0
        %v3584 = vadd.f32 %v3527, %v3583
        %v3585 = vpop.f32.mrf.mxu0
        %v3586 = vadd.f32 %v3527, %v3585
        %3587 = vmatmul.bf16.gmra.mxu0 %v3550
        %v3588 = vpop.f32.mrf.mxu0
        %v3589 = vadd.f32 %v3527, %v3588
        %v3590 = vpop.f32.mrf.mxu0
        %v3591 = vadd.f32 %v3527, %v3590
        %3592 = vmatmul.bf16.gmra.mxu0 %v3553
        %v3593 = vpop.f32.mrf.mxu0
        %v3594 = vadd.f32 %v3527, %v3593
        %v3595 = vpop.f32.mrf.mxu0
        %v3596 = vadd.f32 %v3527, %v3595
        %3597 = vmatmul.bf16.gmra.mxu0 %v3556
        %v3598 = vpop.f32.mrf.mxu0
        %v3599 = vadd.f32 %v3527, %v3598
        %v3600 = vpop.f32.mrf.mxu0
        %v3601 = vadd.f32 %v3527, %v3600
        %3602 = vmatmul.bf16.gmra.mxu0 %v3559
        %v3603 = vpop.f32.mrf.mxu0
        %v3604 = vadd.f32 %v3527, %v3603
        %v3605 = vpop.f32.mrf.mxu0
        %v3606 = vadd.f32 %v3527, %v3605
        %3607 = vmatmul.bf16.gmra.mxu0 %v3562
        %v3608 = vpop.f32.mrf.mxu0
        %v3609 = vadd.f32 %v3527, %v3608
        %v3610 = vpop.f32.mrf.mxu0
        %v3611 = vadd.f32 %v3527, %v3610
        %3612 = vdwg.mxu0
        %v3613 = vmul.f32 %v3574, 0.5
        %v3614 = vmul.f32 %v3576, 0.5
        %v3615 = vmul.f32 %v3579, 0.5
        %v3616 = vmul.f32 %v3581, 0.5
        %v3617 = vmul.f32 %v3584, 0.5
        %v3618 = vmul.f32 %v3586, 0.5
        %v3619 = vmul.f32 %v3589, 0.5
        %v3620 = vmul.f32 %v3591, 0.5
        %v3621 = vmul.f32 %v3594, 0.5
        %v3622 = vmul.f32 %v3596, 0.5
        %v3623 = vmul.f32 %v3599, 0.5
        %v3624 = vmul.f32 %v3601, 0.5
        %v3625 = vmul.f32 %v3604, 0.5
        %v3626 = vmul.f32 %v3606, 0.5
        %v3627 = vmul.f32 %v3609, 0.5
        %v3628 = vmul.f32 %v3611, 0.5
        %v3629 = vmul.f32 %v3574, 0.70710677
        %v3630 = vmul.f32 %v3576, 0.70710677
        %v3631 = vmul.f32 %v3579, 0.70710677
        %v3632 = vmul.f32 %v3581, 0.70710677
        %v3633 = vmul.f32 %v3584, 0.70710677
        %v3634 = vmul.f32 %v3586, 0.70710677
        %v3635 = vmul.f32 %v3589, 0.70710677
        %v3636 = vmul.f32 %v3591, 0.70710677
        %v3637 = vmul.f32 %v3594, 0.70710677
        %v3638 = vmul.f32 %v3596, 0.70710677
        %v3639 = vmul.f32 %v3599, 0.70710677
        %v3640 = vmul.f32 %v3601, 0.70710677
        %v3641 = vmul.f32 %v3604, 0.70710677
        %v3642 = vmul.f32 %v3606, 0.70710677
        %v3643 = vmul.f32 %v3609, 0.70710677
        %v3644 = vmul.f32 %v3611, 0.70710677
        %v3645 = vand.u32 2147483647, %v3629
        %v3646 = vand.u32 2147483647, %v3630
        %v3647 = vand.u32 2147483647, %v3631
        %v3648 = vand.u32 2147483647, %v3632
        %v3649 = vand.u32 2147483647, %v3633
        %v3650 = vand.u32 2147483647, %v3634
        %v3651 = vand.u32 2147483647, %v3635
        %v3652 = vand.u32 2147483647, %v3636
        %v3653 = vand.u32 2147483647, %v3637
        %v3654 = vand.u32 2147483647, %v3638
        %v3655 = vand.u32 2147483647, %v3639
        %v3656 = vand.u32 2147483647, %v3640
        %v3657 = vand.u32 2147483647, %v3641
        %v3658 = vand.u32 2147483647, %v3642
        %v3659 = vand.u32 2147483647, %v3643
        %v3660 = vand.u32 2147483647, %v3644
        %v3661 = vmul.f32 %v3645, 0.3275911
        %v3662 = vmul.f32 %v3646, 0.3275911
        %v3663 = vmul.f32 %v3647, 0.3275911
        %v3664 = vmul.f32 %v3648, 0.3275911
        %v3665 = vmul.f32 %v3649, 0.3275911
        %v3666 = vmul.f32 %v3650, 0.3275911
        %v3667 = vmul.f32 %v3651, 0.3275911
        %v3668 = vmul.f32 %v3652, 0.3275911
        %v3669 = vmul.f32 %v3653, 0.3275911
        %v3670 = vmul.f32 %v3654, 0.3275911
        %v3671 = vmul.f32 %v3655, 0.3275911
        %v3672 = vmul.f32 %v3656, 0.3275911
        %v3673 = vmul.f32 %v3657, 0.3275911
        %v3674 = vmul.f32 %v3658, 0.3275911
        %v3675 = vmul.f32 %v3659, 0.3275911
        %v3676 = vmul.f32 %v3660, 0.3275911
        %v3677 = vadd.f32 %v3661, 1.0
        %v3678 = vadd.f32 %v3662, 1.0
        %v3679 = vadd.f32 %v3663, 1.0
        %v3680 = vadd.f32 %v3664, 1.0
        %v3681 = vadd.f32 %v3665, 1.0
        %v3682 = vadd.f32 %v3666, 1.0
        %v3683 = vadd.f32 %v3667, 1.0
        %v3684 = vadd.f32 %v3668, 1.0
        %v3685 = vadd.f32 %v3669, 1.0
        %v3686 = vadd.f32 %v3670, 1.0
        %v3687 = vadd.f32 %v3671, 1.0
        %v3688 = vadd.f32 %v3672, 1.0
        %v3689 = vadd.f32 %v3673, 1.0
        %v3690 = vadd.f32 %v3674, 1.0
        %v3691 = vadd.f32 %v3675, 1.0
        %v3692 = vadd.f32 %v3676, 1.0
        %v3693 = vrcp.pop %v3677
        %v3694 = vmul.f32 %v3677, %v3693
        %v3695 = vsub.f32 1.0, %v3694
        %v3696 = vmul.f32 %v3693, %v3695
        %v3697 = vadd.f32 %v3693, %v3696
        %vm3698 = vweird.f32 %v3677
        %vm3699 = vweird.f32 %v3693
        %vm3700 = vmor %vm3698, %vm3699
        %v3701 = vsel %vm3700, %v3693, %v3697
        %v3702 = vand.u32 2147483647, %v3677
        %vm3703 = vcmp.eq.f32.partialorder %v3702, 8.507059e+37
        %v3704 = vand.u32 %v3677, 2147483648
        %v3705 = vor.u32 1.1754944e-38, %v3704
        %v3706 = vsel %vm3703, %v3705, %v3701
        %v3707 = vmul.f32 1.0, %v3706
        %v3708 = vrcp.pop %v3678
        %v3709 = vmul.f32 %v3678, %v3708
        %v3710 = vsub.f32 1.0, %v3709
        %v3711 = vmul.f32 %v3708, %v3710
        %v3712 = vadd.f32 %v3708, %v3711
        %vm3713 = vweird.f32 %v3678
        %vm3714 = vweird.f32 %v3708
        %vm3715 = vmor %vm3713, %vm3714
        %v3716 = vsel %vm3715, %v3708, %v3712
        %v3717 = vand.u32 2147483647, %v3678
        %vm3718 = vcmp.eq.f32.partialorder %v3717, 8.507059e+37
        %v3719 = vand.u32 %v3678, 2147483648
        %v3720 = vor.u32 1.1754944e-38, %v3719
        %v3721 = vsel %vm3718, %v3720, %v3716
        %v3722 = vmul.f32 1.0, %v3721
        %v3723 = vrcp.pop %v3679
        %v3724 = vmul.f32 %v3679, %v3723
        %v3725 = vsub.f32 1.0, %v3724
        %v3726 = vmul.f32 %v3723, %v3725
        %v3727 = vadd.f32 %v3723, %v3726
        %vm3728 = vweird.f32 %v3679
        %vm3729 = vweird.f32 %v3723
        %vm3730 = vmor %vm3728, %vm3729
        %v3731 = vsel %vm3730, %v3723, %v3727
        %v3732 = vand.u32 2147483647, %v3679
        %vm3733 = vcmp.eq.f32.partialorder %v3732, 8.507059e+37
        %v3734 = vand.u32 %v3679, 2147483648
        %v3735 = vor.u32 1.1754944e-38, %v3734
        %v3736 = vsel %vm3733, %v3735, %v3731
        %v3737 = vmul.f32 1.0, %v3736
        %v3738 = vrcp.pop %v3680
        %v3739 = vmul.f32 %v3680, %v3738
        %v3740 = vsub.f32 1.0, %v3739
        %v3741 = vmul.f32 %v3738, %v3740
        %v3742 = vadd.f32 %v3738, %v3741
        %vm3743 = vweird.f32 %v3680
        %vm3744 = vweird.f32 %v3738
        %vm3745 = vmor %vm3743, %vm3744
        %v3746 = vsel %vm3745, %v3738, %v3742
        %v3747 = vand.u32 2147483647, %v3680
        %vm3748 = vcmp.eq.f32.partialorder %v3747, 8.507059e+37
        %v3749 = vand.u32 %v3680, 2147483648
        %v3750 = vor.u32 1.1754944e-38, %v3749
        %v3751 = vsel %vm3748, %v3750, %v3746
        %v3752 = vmul.f32 1.0, %v3751
        %v3753 = vrcp.pop %v3681
        %v3754 = vmul.f32 %v3681, %v3753
        %v3755 = vsub.f32 1.0, %v3754
        %v3756 = vmul.f32 %v3753, %v3755
        %v3757 = vadd.f32 %v3753, %v3756
        %vm3758 = vweird.f32 %v3681
        %vm3759 = vweird.f32 %v3753
        %vm3760 = vmor %vm3758, %vm3759
        %v3761 = vsel %vm3760, %v3753, %v3757
        %v3762 = vand.u32 2147483647, %v3681
        %vm3763 = vcmp.eq.f32.partialorder %v3762, 8.507059e+37
        %v3764 = vand.u32 %v3681, 2147483648
        %v3765 = vor.u32 1.1754944e-38, %v3764
        %v3766 = vsel %vm3763, %v3765, %v3761
        %v3767 = vmul.f32 1.0, %v3766
        %v3768 = vrcp.pop %v3682
        %v3769 = vmul.f32 %v3682, %v3768
        %v3770 = vsub.f32 1.0, %v3769
        %v3771 = vmul.f32 %v3768, %v3770
        %v3772 = vadd.f32 %v3768, %v3771
        %vm3773 = vweird.f32 %v3682
        %vm3774 = vweird.f32 %v3768
        %vm3775 = vmor %vm3773, %vm3774
        %v3776 = vsel %vm3775, %v3768, %v3772
        %v3777 = vand.u32 2147483647, %v3682
        %vm3778 = vcmp.eq.f32.partialorder %v3777, 8.507059e+37
        %v3779 = vand.u32 %v3682, 2147483648
        %v3780 = vor.u32 1.1754944e-38, %v3779
        %v3781 = vsel %vm3778, %v3780, %v3776
        %v3782 = vmul.f32 1.0, %v3781
        %v3783 = vrcp.pop %v3683
        %v3784 = vmul.f32 %v3683, %v3783
        %v3785 = vsub.f32 1.0, %v3784
        %v3786 = vmul.f32 %v3783, %v3785
        %v3787 = vadd.f32 %v3783, %v3786
        %vm3788 = vweird.f32 %v3683
        %vm3789 = vweird.f32 %v3783
        %vm3790 = vmor %vm3788, %vm3789
        %v3791 = vsel %vm3790, %v3783, %v3787
        %v3792 = vand.u32 2147483647, %v3683
        %vm3793 = vcmp.eq.f32.partialorder %v3792, 8.507059e+37
        %v3794 = vand.u32 %v3683, 2147483648
        %v3795 = vor.u32 1.1754944e-38, %v3794
        %v3796 = vsel %vm3793, %v3795, %v3791
        %v3797 = vmul.f32 1.0, %v3796
        %v3798 = vrcp.pop %v3684
        %v3799 = vmul.f32 %v3684, %v3798
        %v3800 = vsub.f32 1.0, %v3799
        %v3801 = vmul.f32 %v3798, %v3800
        %v3802 = vadd.f32 %v3798, %v3801
        %vm3803 = vweird.f32 %v3684
        %vm3804 = vweird.f32 %v3798
        %vm3805 = vmor %vm3803, %vm3804
        %v3806 = vsel %vm3805, %v3798, %v3802
        %v3807 = vand.u32 2147483647, %v3684
        %vm3808 = vcmp.eq.f32.partialorder %v3807, 8.507059e+37
        %v3809 = vand.u32 %v3684, 2147483648
        %v3810 = vor.u32 1.1754944e-38, %v3809
        %v3811 = vsel %vm3808, %v3810, %v3806
        %v3812 = vmul.f32 1.0, %v3811
        %v3813 = vrcp.pop %v3685
        %v3814 = vmul.f32 %v3685, %v3813
        %v3815 = vsub.f32 1.0, %v3814
        %v3816 = vmul.f32 %v3813, %v3815
        %v3817 = vadd.f32 %v3813, %v3816
        %vm3818 = vweird.f32 %v3685
        %vm3819 = vweird.f32 %v3813
        %vm3820 = vmor %vm3818, %vm3819
        %v3821 = vsel %vm3820, %v3813, %v3817
        %v3822 = vand.u32 2147483647, %v3685
        %vm3823 = vcmp.eq.f32.partialorder %v3822, 8.507059e+37
        %v3824 = vand.u32 %v3685, 2147483648
        %v3825 = vor.u32 1.1754944e-38, %v3824
        %v3826 = vsel %vm3823, %v3825, %v3821
        %v3827 = vmul.f32 1.0, %v3826
        %v3828 = vrcp.pop %v3686
        %v3829 = vmul.f32 %v3686, %v3828
        %v3830 = vsub.f32 1.0, %v3829
        %v3831 = vmul.f32 %v3828, %v3830
        %v3832 = vadd.f32 %v3828, %v3831
        %vm3833 = vweird.f32 %v3686
        %vm3834 = vweird.f32 %v3828
        %vm3835 = vmor %vm3833, %vm3834
        %v3836 = vsel %vm3835, %v3828, %v3832
        %v3837 = vand.u32 2147483647, %v3686
        %vm3838 = vcmp.eq.f32.partialorder %v3837, 8.507059e+37
        %v3839 = vand.u32 %v3686, 2147483648
        %v3840 = vor.u32 1.1754944e-38, %v3839
        %v3841 = vsel %vm3838, %v3840, %v3836
        %v3842 = vmul.f32 1.0, %v3841
        %v3843 = vrcp.pop %v3687
        %v3844 = vmul.f32 %v3687, %v3843
        %v3845 = vsub.f32 1.0, %v3844
        %v3846 = vmul.f32 %v3843, %v3845
        %v3847 = vadd.f32 %v3843, %v3846
        %vm3848 = vweird.f32 %v3687
        %vm3849 = vweird.f32 %v3843
        %vm3850 = vmor %vm3848, %vm3849
        %v3851 = vsel %vm3850, %v3843, %v3847
        %v3852 = vand.u32 2147483647, %v3687
        %vm3853 = vcmp.eq.f32.partialorder %v3852, 8.507059e+37
        %v3854 = vand.u32 %v3687, 2147483648
        %v3855 = vor.u32 1.1754944e-38, %v3854
        %v3856 = vsel %vm3853, %v3855, %v3851
        %v3857 = vmul.f32 1.0, %v3856
        %v3858 = vrcp.pop %v3688
        %v3859 = vmul.f32 %v3688, %v3858
        %v3860 = vsub.f32 1.0, %v3859
        %v3861 = vmul.f32 %v3858, %v3860
        %v3862 = vadd.f32 %v3858, %v3861
        %vm3863 = vweird.f32 %v3688
        %vm3864 = vweird.f32 %v3858
        %vm3865 = vmor %vm3863, %vm3864
        %v3866 = vsel %vm3865, %v3858, %v3862
        %v3867 = vand.u32 2147483647, %v3688
        %vm3868 = vcmp.eq.f32.partialorder %v3867, 8.507059e+37
        %v3869 = vand.u32 %v3688, 2147483648
        %v3870 = vor.u32 1.1754944e-38, %v3869
        %v3871 = vsel %vm3868, %v3870, %v3866
        %v3872 = vmul.f32 1.0, %v3871
        %v3873 = vrcp.pop %v3689
        %v3874 = vmul.f32 %v3689, %v3873
        %v3875 = vsub.f32 1.0, %v3874
        %v3876 = vmul.f32 %v3873, %v3875
        %v3877 = vadd.f32 %v3873, %v3876
        %vm3878 = vweird.f32 %v3689
        %vm3879 = vweird.f32 %v3873
        %vm3880 = vmor %vm3878, %vm3879
        %v3881 = vsel %vm3880, %v3873, %v3877
        %v3882 = vand.u32 2147483647, %v3689
        %vm3883 = vcmp.eq.f32.partialorder %v3882, 8.507059e+37
        %v3884 = vand.u32 %v3689, 2147483648
        %v3885 = vor.u32 1.1754944e-38, %v3884
        %v3886 = vsel %vm3883, %v3885, %v3881
        %v3887 = vmul.f32 1.0, %v3886
        %v3888 = vrcp.pop %v3690
        %v3889 = vmul.f32 %v3690, %v3888
        %v3890 = vsub.f32 1.0, %v3889
        %v3891 = vmul.f32 %v3888, %v3890
        %v3892 = vadd.f32 %v3888, %v3891
        %vm3893 = vweird.f32 %v3690
        %vm3894 = vweird.f32 %v3888
        %vm3895 = vmor %vm3893, %vm3894
        %v3896 = vsel %vm3895, %v3888, %v3892
        %v3897 = vand.u32 2147483647, %v3690
        %vm3898 = vcmp.eq.f32.partialorder %v3897, 8.507059e+37
        %v3899 = vand.u32 %v3690, 2147483648
        %v3900 = vor.u32 1.1754944e-38, %v3899
        %v3901 = vsel %vm3898, %v3900, %v3896
        %v3902 = vmul.f32 1.0, %v3901
        %v3903 = vrcp.pop %v3691
        %v3904 = vmul.f32 %v3691, %v3903
        %v3905 = vsub.f32 1.0, %v3904
        %v3906 = vmul.f32 %v3903, %v3905
        %v3907 = vadd.f32 %v3903, %v3906
        %vm3908 = vweird.f32 %v3691
        %vm3909 = vweird.f32 %v3903
        %vm3910 = vmor %vm3908, %vm3909
        %v3911 = vsel %vm3910, %v3903, %v3907
        %v3912 = vand.u32 2147483647, %v3691
        %vm3913 = vcmp.eq.f32.partialorder %v3912, 8.507059e+37
        %v3914 = vand.u32 %v3691, 2147483648
        %v3915 = vor.u32 1.1754944e-38, %v3914
        %v3916 = vsel %vm3913, %v3915, %v3911
        %v3917 = vmul.f32 1.0, %v3916
        %v3918 = vrcp.pop %v3692
        %v3919 = vmul.f32 %v3692, %v3918
        %v3920 = vsub.f32 1.0, %v3919
        %v3921 = vmul.f32 %v3918, %v3920
        %v3922 = vadd.f32 %v3918, %v3921
        %vm3923 = vweird.f32 %v3692
        %vm3924 = vweird.f32 %v3918
        %vm3925 = vmor %vm3923, %vm3924
        %v3926 = vsel %vm3925, %v3918, %v3922
        %v3927 = vand.u32 2147483647, %v3692
        %vm3928 = vcmp.eq.f32.partialorder %v3927, 8.507059e+37
        %v3929 = vand.u32 %v3692, 2147483648
        %v3930 = vor.u32 1.1754944e-38, %v3929
        %v3931 = vsel %vm3928, %v3930, %v3926
        %v3932 = vmul.f32 1.0, %v3931
        %v3933 = vmul.f32 %v3707, 1.0614054
        %v3934 = vmul.f32 %v3722, 1.0614054
        %v3935 = vmul.f32 %v3737, 1.0614054
        %v3936 = vmul.f32 %v3752, 1.0614054
        %v3937 = vmul.f32 %v3767, 1.0614054
        %v3938 = vmul.f32 %v3782, 1.0614054
        %v3939 = vmul.f32 %v3797, 1.0614054
        %v3940 = vmul.f32 %v3812, 1.0614054
        %v3941 = vmul.f32 %v3827, 1.0614054
        %v3942 = vmul.f32 %v3842, 1.0614054
        %v3943 = vmul.f32 %v3857, 1.0614054
        %v3944 = vmul.f32 %v3872, 1.0614054
        %v3945 = vmul.f32 %v3887, 1.0614054
        %v3946 = vmul.f32 %v3902, 1.0614054
        %v3947 = vmul.f32 %v3917, 1.0614054
        %v3948 = vmul.f32 %v3932, 1.0614054
        %v3949 = vadd.f32 %v3933, -1.4531521
        %v3950 = vadd.f32 %v3934, -1.4531521
        %v3951 = vadd.f32 %v3935, -1.4531521
        %v3952 = vadd.f32 %v3936, -1.4531521
        %v3953 = vadd.f32 %v3937, -1.4531521
        %v3954 = vadd.f32 %v3938, -1.4531521
        %v3955 = vadd.f32 %v3939, -1.4531521
        %v3956 = vadd.f32 %v3940, -1.4531521
        %v3957 = vadd.f32 %v3941, -1.4531521
        %v3958 = vadd.f32 %v3942, -1.4531521
        %v3959 = vadd.f32 %v3943, -1.4531521
        %v3960 = vadd.f32 %v3944, -1.4531521
        %v3961 = vadd.f32 %v3945, -1.4531521
        %v3962 = vadd.f32 %v3946, -1.4531521
        %v3963 = vadd.f32 %v3947, -1.4531521
        %v3964 = vadd.f32 %v3948, -1.4531521
        %v3965 = vmul.f32 %v3949, %v3707
        %v3966 = vmul.f32 %v3950, %v3722
        %v3967 = vmul.f32 %v3951, %v3737
        %v3968 = vmul.f32 %v3952, %v3752
        %v3969 = vmul.f32 %v3953, %v3767
        %v3970 = vmul.f32 %v3954, %v3782
        %v3971 = vmul.f32 %v3955, %v3797
        %v3972 = vmul.f32 %v3956, %v3812
        %v3973 = vmul.f32 %v3957, %v3827
        %v3974 = vmul.f32 %v3958, %v3842
        %v3975 = vmul.f32 %v3959, %v3857
        %v3976 = vmul.f32 %v3960, %v3872
        %v3977 = vmul.f32 %v3961, %v3887
        %v3978 = vmul.f32 %v3962, %v3902
        %v3979 = vmul.f32 %v3963, %v3917
        %v3980 = vmul.f32 %v3964, %v3932
        %v3981 = vadd.f32 %v3965, 1.4214138
        %v3982 = vadd.f32 %v3966, 1.4214138
        %v3983 = vadd.f32 %v3967, 1.4214138
        %v3984 = vadd.f32 %v3968, 1.4214138
        %v3985 = vadd.f32 %v3969, 1.4214138
        %v3986 = vadd.f32 %v3970, 1.4214138
        %v3987 = vadd.f32 %v3971, 1.4214138
        %v3988 = vadd.f32 %v3972, 1.4214138
        %v3989 = vadd.f32 %v3973, 1.4214138
        %v3990 = vadd.f32 %v3974, 1.4214138
        %v3991 = vadd.f32 %v3975, 1.4214138
        %v3992 = vadd.f32 %v3976, 1.4214138
        %v3993 = vadd.f32 %v3977, 1.4214138
        %v3994 = vadd.f32 %v3978, 1.4214138
        %v3995 = vadd.f32 %v3979, 1.4214138
        %v3996 = vadd.f32 %v3980, 1.4214138
        %v3997 = vmul.f32 %v3981, %v3707
        %v3998 = vmul.f32 %v3982, %v3722
        %v3999 = vmul.f32 %v3983, %v3737
        %v4000 = vmul.f32 %v3984, %v3752
        %v4001 = vmul.f32 %v3985, %v3767
        %v4002 = vmul.f32 %v3986, %v3782
        %v4003 = vmul.f32 %v3987, %v3797
        %v4004 = vmul.f32 %v3988, %v3812
        %v4005 = vmul.f32 %v3989, %v3827
        %v4006 = vmul.f32 %v3990, %v3842
        %v4007 = vmul.f32 %v3991, %v3857
        %v4008 = vmul.f32 %v3992, %v3872
        %v4009 = vmul.f32 %v3993, %v3887
        %v4010 = vmul.f32 %v3994, %v3902
        %v4011 = vmul.f32 %v3995, %v3917
        %v4012 = vmul.f32 %v3996, %v3932
        %v4013 = vadd.f32 %v3997, -0.28449672
        %v4014 = vadd.f32 %v3998, -0.28449672
        %v4015 = vadd.f32 %v3999, -0.28449672
        %v4016 = vadd.f32 %v4000, -0.28449672
        %v4017 = vadd.f32 %v4001, -0.28449672
        %v4018 = vadd.f32 %v4002, -0.28449672
        %v4019 = vadd.f32 %v4003, -0.28449672
        %v4020 = vadd.f32 %v4004, -0.28449672
        %v4021 = vadd.f32 %v4005, -0.28449672
        %v4022 = vadd.f32 %v4006, -0.28449672
        %v4023 = vadd.f32 %v4007, -0.28449672
        %v4024 = vadd.f32 %v4008, -0.28449672
        %v4025 = vadd.f32 %v4009, -0.28449672
        %v4026 = vadd.f32 %v4010, -0.28449672
        %v4027 = vadd.f32 %v4011, -0.28449672
        %v4028 = vadd.f32 %v4012, -0.28449672
        %v4029 = vmul.f32 %v4013, %v3707
        %v4030 = vmul.f32 %v4014, %v3722
        %v4031 = vmul.f32 %v4015, %v3737
        %v4032 = vmul.f32 %v4016, %v3752
        %v4033 = vmul.f32 %v4017, %v3767
        %v4034 = vmul.f32 %v4018, %v3782
        %v4035 = vmul.f32 %v4019, %v3797
        %v4036 = vmul.f32 %v4020, %v3812
        %v4037 = vmul.f32 %v4021, %v3827
        %v4038 = vmul.f32 %v4022, %v3842
        %v4039 = vmul.f32 %v4023, %v3857
        %v4040 = vmul.f32 %v4024, %v3872
        %v4041 = vmul.f32 %v4025, %v3887
        %v4042 = vmul.f32 %v4026, %v3902
        %v4043 = vmul.f32 %v4027, %v3917
        %v4044 = vmul.f32 %v4028, %v3932
        %v4045 = vadd.f32 %v4029, 0.2548296
        %v4046 = vadd.f32 %v4030, 0.2548296
        %v4047 = vadd.f32 %v4031, 0.2548296
        %v4048 = vadd.f32 %v4032, 0.2548296
        %v4049 = vadd.f32 %v4033, 0.2548296
        %v4050 = vadd.f32 %v4034, 0.2548296
        %v4051 = vadd.f32 %v4035, 0.2548296
        %v4052 = vadd.f32 %v4036, 0.2548296
        %v4053 = vadd.f32 %v4037, 0.2548296
        %v4054 = vadd.f32 %v4038, 0.2548296
        %v4055 = vadd.f32 %v4039, 0.2548296
        %v4056 = vadd.f32 %v4040, 0.2548296
        %v4057 = vadd.f32 %v4041, 0.2548296
        %v4058 = vadd.f32 %v4042, 0.2548296
        %v4059 = vadd.f32 %v4043, 0.2548296
        %v4060 = vadd.f32 %v4044, 0.2548296
        %v4061 = vmul.f32 %v4045, %v3707
        %v4062 = vmul.f32 %v4046, %v3722
        %v4063 = vmul.f32 %v4047, %v3737
        %v4064 = vmul.f32 %v4048, %v3752
        %v4065 = vmul.f32 %v4049, %v3767
        %v4066 = vmul.f32 %v4050, %v3782
        %v4067 = vmul.f32 %v4051, %v3797
        %v4068 = vmul.f32 %v4052, %v3812
        %v4069 = vmul.f32 %v4053, %v3827
        %v4070 = vmul.f32 %v4054, %v3842
        %v4071 = vmul.f32 %v4055, %v3857
        %v4072 = vmul.f32 %v4056, %v3872
        %v4073 = vmul.f32 %v4057, %v3887
        %v4074 = vmul.f32 %v4058, %v3902
        %v4075 = vmul.f32 %v4059, %v3917
        %v4076 = vmul.f32 %v4060, %v3932
        %v4077 = vsub.f32 0.0, %v3645
        %v4078 = vsub.f32 0.0, %v3646
        %v4079 = vsub.f32 0.0, %v3647
        %v4080 = vsub.f32 0.0, %v3648
        %v4081 = vsub.f32 0.0, %v3649
        %v4082 = vsub.f32 0.0, %v3650
        %v4083 = vsub.f32 0.0, %v3651
        %v4084 = vsub.f32 0.0, %v3652
        %v4085 = vsub.f32 0.0, %v3653
        %v4086 = vsub.f32 0.0, %v3654
        %v4087 = vsub.f32 0.0, %v3655
        %v4088 = vsub.f32 0.0, %v3656
        %v4089 = vsub.f32 0.0, %v3657
        %v4090 = vsub.f32 0.0, %v3658
        %v4091 = vsub.f32 0.0, %v3659
        %v4092 = vsub.f32 0.0, %v3660
        %v4093 = vmul.f32 %v4077, %v3645
        %v4094 = vmul.f32 %v4078, %v3646
        %v4095 = vmul.f32 %v4079, %v3647
        %v4096 = vmul.f32 %v4080, %v3648
        %v4097 = vmul.f32 %v4081, %v3649
        %v4098 = vmul.f32 %v4082, %v3650
        %v4099 = vmul.f32 %v4083, %v3651
        %v4100 = vmul.f32 %v4084, %v3652
        %v4101 = vmul.f32 %v4085, %v3653
        %v4102 = vmul.f32 %v4086, %v3654
        %v4103 = vmul.f32 %v4087, %v3655
        %v4104 = vmul.f32 %v4088, %v3656
        %v4105 = vmul.f32 %v4089, %v3657
        %v4106 = vmul.f32 %v4090, %v3658
        %v4107 = vmul.f32 %v4091, %v3659
        %v4108 = vmul.f32 %v4092, %v3660
        %v4109 = vmul.f32 %v4093, 1.442695
        %v4110 = vpow.pop %v4109
        %v4111 = vmul.f32 %v4094, 1.442695
        %v4112 = vpow.pop %v4111
        %v4113 = vmul.f32 %v4095, 1.442695
        %v4114 = vpow.pop %v4113
        %v4115 = vmul.f32 %v4096, 1.442695
        %v4116 = vpow.pop %v4115
        %v4117 = vmul.f32 %v4097, 1.442695
        %v4118 = vpow.pop %v4117
        %v4119 = vmul.f32 %v4098, 1.442695
        %v4120 = vpow.pop %v4119
        %v4121 = vmul.f32 %v4099, 1.442695
        %v4122 = vpow.pop %v4121
        %v4123 = vmul.f32 %v4100, 1.442695
        %v4124 = vpow.pop %v4123
        %v4125 = vmul.f32 %v4101, 1.442695
        %v4126 = vpow.pop %v4125
        %v4127 = vmul.f32 %v4102, 1.442695
        %v4128 = vpow.pop %v4127
        %v4129 = vmul.f32 %v4103, 1.442695
        %v4130 = vpow.pop %v4129
        %v4131 = vmul.f32 %v4104, 1.442695
        %v4132 = vpow.pop %v4131
        %v4133 = vmul.f32 %v4105, 1.442695
        %v4134 = vpow.pop %v4133
        %v4135 = vmul.f32 %v4106, 1.442695
        %v4136 = vpow.pop %v4135
        %v4137 = vmul.f32 %v4107, 1.442695
        %v4138 = vpow.pop %v4137
        %v4139 = vmul.f32 %v4108, 1.442695
        %v4140 = vpow.pop %v4139
        %v4141 = vmul.f32 %v4061, %v4110
        %v4142 = vmul.f32 %v4062, %v4112
        %v4143 = vmul.f32 %v4063, %v4114
        %v4144 = vmul.f32 %v4064, %v4116
        %v4145 = vmul.f32 %v4065, %v4118
        %v4146 = vmul.f32 %v4066, %v4120
        %v4147 = vmul.f32 %v4067, %v4122
        %v4148 = vmul.f32 %v4068, %v4124
        %v4149 = vmul.f32 %v4069, %v4126
        %v4150 = vmul.f32 %v4070, %v4128
        %v4151 = vmul.f32 %v4071, %v4130
        %v4152 = vmul.f32 %v4072, %v4132
        %v4153 = vmul.f32 %v4073, %v4134
        %v4154 = vmul.f32 %v4074, %v4136
        %v4155 = vmul.f32 %v4075, %v4138
        %v4156 = vmul.f32 %v4076, %v4140
        %v4157 = vsub.f32 1.0, %v4141
        %v4158 = vsub.f32 1.0, %v4142
        %v4159 = vsub.f32 1.0, %v4143
        %v4160 = vsub.f32 1.0, %v4144
        %v4161 = vsub.f32 1.0, %v4145
        %v4162 = vsub.f32 1.0, %v4146
        %v4163 = vsub.f32 1.0, %v4147
        %v4164 = vsub.f32 1.0, %v4148
        %v4165 = vsub.f32 1.0, %v4149
        %v4166 = vsub.f32 1.0, %v4150
        %v4167 = vsub.f32 1.0, %v4151
        %v4168 = vsub.f32 1.0, %v4152
        %v4169 = vsub.f32 1.0, %v4153
        %v4170 = vsub.f32 1.0, %v4154
        %v4171 = vsub.f32 1.0, %v4155
        %v4172 = vsub.f32 1.0, %v4156
        %vm4173 = vcmp.ge.f32.partialorder %v3629, 0.0
        %vm4174 = vcmp.ge.f32.partialorder %v3630, 0.0
        %vm4175 = vcmp.ge.f32.partialorder %v3631, 0.0
        %vm4176 = vcmp.ge.f32.partialorder %v3632, 0.0
        %vm4177 = vcmp.ge.f32.partialorder %v3633, 0.0
        %vm4178 = vcmp.ge.f32.partialorder %v3634, 0.0
        %vm4179 = vcmp.ge.f32.partialorder %v3635, 0.0
        %vm4180 = vcmp.ge.f32.partialorder %v3636, 0.0
        %vm4181 = vcmp.ge.f32.partialorder %v3637, 0.0
        %vm4182 = vcmp.ge.f32.partialorder %v3638, 0.0
        %vm4183 = vcmp.ge.f32.partialorder %v3639, 0.0
        %vm4184 = vcmp.ge.f32.partialorder %v3640, 0.0
        %vm4185 = vcmp.ge.f32.partialorder %v3641, 0.0
        %vm4186 = vcmp.ge.f32.partialorder %v3642, 0.0
        %vm4187 = vcmp.ge.f32.partialorder %v3643, 0.0
        %vm4188 = vcmp.ge.f32.partialorder %v3644, 0.0
        %v4189 = vsub.f32 0.0, %v4157
        %v4190 = vsub.f32 0.0, %v4158
        %v4191 = vsub.f32 0.0, %v4159
        %v4192 = vsub.f32 0.0, %v4160
        %v4193 = vsub.f32 0.0, %v4161
        %v4194 = vsub.f32 0.0, %v4162
        %v4195 = vsub.f32 0.0, %v4163
        %v4196 = vsub.f32 0.0, %v4164
        %v4197 = vsub.f32 0.0, %v4165
        %v4198 = vsub.f32 0.0, %v4166
        %v4199 = vsub.f32 0.0, %v4167
        %v4200 = vsub.f32 0.0, %v4168
        %v4201 = vsub.f32 0.0, %v4169
        %v4202 = vsub.f32 0.0, %v4170
        %v4203 = vsub.f32 0.0, %v4171
        %v4204 = vsub.f32 0.0, %v4172
        %v4205 = vsel %vm4173, %v4157, %v4189
        %v4206 = vsel %vm4174, %v4158, %v4190
        %v4207 = vsel %vm4175, %v4159, %v4191
        %v4208 = vsel %vm4176, %v4160, %v4192
        %v4209 = vsel %vm4177, %v4161, %v4193
        %v4210 = vsel %vm4178, %v4162, %v4194
        %v4211 = vsel %vm4179, %v4163, %v4195
        %v4212 = vsel %vm4180, %v4164, %v4196
        %v4213 = vsel %vm4181, %v4165, %v4197
        %v4214 = vsel %vm4182, %v4166, %v4198
        %v4215 = vsel %vm4183, %v4167, %v4199
        %v4216 = vsel %vm4184, %v4168, %v4200
        %v4217 = vsel %vm4185, %v4169, %v4201
        %v4218 = vsel %vm4186, %v4170, %v4202
        %v4219 = vsel %vm4187, %v4171, %v4203
        %v4220 = vsel %vm4188, %v4172, %v4204
        %v4221 = vadd.f32 %v4205, 1.0
        %v4222 = vadd.f32 %v4206, 1.0
        %v4223 = vadd.f32 %v4207, 1.0
        %v4224 = vadd.f32 %v4208, 1.0
        %v4225 = vadd.f32 %v4209, 1.0
        %v4226 = vadd.f32 %v4210, 1.0
        %v4227 = vadd.f32 %v4211, 1.0
        %v4228 = vadd.f32 %v4212, 1.0
        %v4229 = vadd.f32 %v4213, 1.0
        %v4230 = vadd.f32 %v4214, 1.0
        %v4231 = vadd.f32 %v4215, 1.0
        %v4232 = vadd.f32 %v4216, 1.0
        %v4233 = vadd.f32 %v4217, 1.0
        %v4234 = vadd.f32 %v4218, 1.0
        %v4235 = vadd.f32 %v4219, 1.0
        %v4236 = vadd.f32 %v4220, 1.0
        %v4237 = vmul.f32 %v3613, %v4221
        %v4238 = vmul.f32 %v3614, %v4222
        %v4239 = vmul.f32 %v3615, %v4223
        %v4240 = vmul.f32 %v3616, %v4224
        %v4241 = vmul.f32 %v3617, %v4225
        %v4242 = vmul.f32 %v3618, %v4226
        %v4243 = vmul.f32 %v3619, %v4227
        %v4244 = vmul.f32 %v3620, %v4228
        %v4245 = vmul.f32 %v3621, %v4229
        %v4246 = vmul.f32 %v3622, %v4230
        %v4247 = vmul.f32 %v3623, %v4231
        %v4248 = vmul.f32 %v3624, %v4232
        %v4249 = vmul.f32 %v3625, %v4233
        %v4250 = vmul.f32 %v3626, %v4234
        %v4251 = vmul.f32 %v3627, %v4235
        %v4252 = vmul.f32 %v3628, %v4236
        %v4253 = vpack.c.bf16 %v4238, %v4237
        %v4254 = vpack.c.bf16 %v4240, %v4239
        %v4255 = vpack.c.bf16 %v4242, %v4241
        %v4256 = vpack.c.bf16 %v4244, %v4243
        %v4257 = vpack.c.bf16 %v4246, %v4245
        %v4258 = vpack.c.bf16 %v4248, %v4247
        %v4259 = vpack.c.bf16 %v4250, %v4249
        %v4260 = vpack.c.bf16 %v4252, %v4251
        %s4261 = scalar_lea.vmem %s8, 32
        %v4262 = vld [vmem:[%s4261] sm:$0xf]
        %v4263 = vld [vmem:[%s4261 + $0x4] sm:$0xf]
        %v4264 = vld [vmem:[%s4261 + $0x8] sm:$0xf]
        %v4265 = vld [vmem:[%s4261 + $0xc] sm:$0xf]
        %v4266 = vld [vmem:[%s4261 + $0x10] sm:$0xf]
        %v4267 = vld [vmem:[%s4261 + $0x14] sm:$0xf]
        %v4268 = vld [vmem:[%s4261 + $0x18] sm:$0xf]
        %v4269 = vld [vmem:[%s4261 + $0x1c] sm:$0xf]
        %v4270 = vperm.slane %v499, 4
        %v4279 = vunpack.c.l.b16 %v4262
        %v4280 = vunpack.c.l.b16 %v4263
        %v4281 = vunpack.c.l.b16 %v4264
        %v4282 = vunpack.c.l.b16 %v4265
        %v4283 = vunpack.c.l.b16 %v4266
        %v4284 = vunpack.c.l.b16 %v4267
        %v4285 = vunpack.c.l.b16 %v4268
        %v4286 = vunpack.c.l.b16 %v4269
        %v4287 = vpack.c.b16 %v4280, %v4279
        %v4288 = vpack.c.b16 %v4282, %v4281
        %v4289 = vpack.c.b16 %v4284, %v4283
        %v4290 = vpack.c.b16 %v4286, %v4285
        %v4296 = vsel %vm1822, %v4253, 0
        %v4299 = vsel %vm1822, %v4254, 0
        %v4302 = vsel %vm1822, %v4255, 0
        %v4305 = vsel %vm1822, %v4256, 0
        %v4308 = vsel %vm1822, %v4257, 0
        %v4311 = vsel %vm1822, %v4258, 0
        %v4314 = vsel %vm1822, %v4259, 0
        %v4317 = vsel %vm1822, %v4260, 0
        %4319 = vmatpush.bf16.msra.mxu0 0
        %4320 = vmatpush.bf16.msra.mxu0 0
        %4321 = vmatpush.bf16.msra.mxu0 0
        %4322 = vmatpush.bf16.msra.mxu0 0
        %4323 = vmatpush.bf16.msra.mxu0 %v4290
        %4324 = vmatpush.bf16.msra.mxu0 %v4289
        %4325 = vmatpush.bf16.msra.mxu0 %v4288
        %4326 = vmatpush.bf16.msra.mxu0 %v4287
        %4327 = vmatmul.bf16.gmra.mxu0 %v4296
        %v4328 = vpop.f32.mrf.mxu0
        %v4329 = vadd.f32 %v4270, %v4328
        %v4330 = vpop.f32.mrf.mxu0
        %v4331 = vadd.f32 %v4270, %v4330
        %4332 = vmatmul.bf16.gmra.mxu0 %v4299
        %v4333 = vpop.f32.mrf.mxu0
        %v4334 = vadd.f32 %v4270, %v4333
        %v4335 = vpop.f32.mrf.mxu0
        %v4336 = vadd.f32 %v4270, %v4335
        %4337 = vmatmul.bf16.gmra.mxu0 %v4302
        %v4338 = vpop.f32.mrf.mxu0
        %v4339 = vadd.f32 %v4270, %v4338
        %v4340 = vpop.f32.mrf.mxu0
        %v4341 = vadd.f32 %v4270, %v4340
        %4342 = vmatmul.bf16.gmra.mxu0 %v4305
        %v4343 = vpop.f32.mrf.mxu0
        %v4344 = vadd.f32 %v4270, %v4343
        %v4345 = vpop.f32.mrf.mxu0
        %v4346 = vadd.f32 %v4270, %v4345
        %4347 = vmatmul.bf16.gmra.mxu0 %v4308
        %v4348 = vpop.f32.mrf.mxu0
        %v4349 = vadd.f32 %v4270, %v4348
        %v4350 = vpop.f32.mrf.mxu0
        %v4351 = vadd.f32 %v4270, %v4350
        %4352 = vmatmul.bf16.gmra.mxu0 %v4311
        %v4353 = vpop.f32.mrf.mxu0
        %v4354 = vadd.f32 %v4270, %v4353
        %v4355 = vpop.f32.mrf.mxu0
        %v4356 = vadd.f32 %v4270, %v4355
        %4357 = vmatmul.bf16.gmra.mxu0 %v4314
        %v4358 = vpop.f32.mrf.mxu0
        %v4359 = vadd.f32 %v4270, %v4358
        %v4360 = vpop.f32.mrf.mxu0
        %v4361 = vadd.f32 %v4270, %v4360
        %4362 = vmatmul.bf16.gmra.mxu0 %v4317
        %v4363 = vpop.f32.mrf.mxu0
        %v4364 = vadd.f32 %v4270, %v4363
        %v4365 = vpop.f32.mrf.mxu0
        %v4366 = vadd.f32 %v4270, %v4365
        %4367 = vdwg.mxu0
        %v4368 = vadd.f32 %v4329, %v3090
        %v4369 = vadd.f32 %v4331, %v3092
        %v4370 = vadd.f32 %v4334, %v3095
        %v4371 = vadd.f32 %v4336, %v3097
        %v4372 = vadd.f32 %v4339, %v3100
        %v4373 = vadd.f32 %v4341, %v3102
        %v4374 = vadd.f32 %v4344, %v3105
        %v4375 = vadd.f32 %v4346, %v3107
        %v4376 = vadd.f32 %v4349, %v3110
        %v4377 = vadd.f32 %v4351, %v3112
        %v4378 = vadd.f32 %v4354, %v3115
        %v4379 = vadd.f32 %v4356, %v3117
        %v4380 = vadd.f32 %v4359, %v3120
        %v4381 = vadd.f32 %v4361, %v3122
        %v4382 = vadd.f32 %v4364, %v3125
        %v4383 = vadd.f32 %v4366, %v3127
        %s4384 = scalar_lea.vmem %s10, 8
        %v4385 = vld [vmem:[%s4384] sm:$0x1f]
        %s4386 = scalar_lea.vmem %s11, 4
        %v4387 = vld [vmem:[%s4386] sm:$0x7]
        %v4388 = vsel %vm501, %v4368, 0.0
        %4389 = vadd.xlane.f32.xlu0 %v4388
        %v4390 = vpop.xlane.xlu0 %4389
        %v4391 = vsel %vm501, %v4369, 0.0
        %4392 = vadd.xlane.f32.xlu0 %v4391
        %v4393 = vpop.xlane.xlu0 %4392
        %v4394 = vsel %vm501, %v4370, 0.0
        %4395 = vadd.xlane.f32.xlu0 %v4394
        %v4396 = vpop.xlane.xlu0 %4395
        %v4397 = vsel %vm501, %v4371, 0.0
        %4398 = vadd.xlane.f32.xlu0 %v4397
        %v4399 = vpop.xlane.xlu0 %4398
        %v4400 = vsel %vm501, %v4372, 0.0
        %4401 = vadd.xlane.f32.xlu0 %v4400
        %v4402 = vpop.xlane.xlu0 %4401
        %v4403 = vsel %vm501, %v4373, 0.0
        %4404 = vadd.xlane.f32.xlu0 %v4403
        %v4405 = vpop.xlane.xlu0 %4404
        %v4406 = vsel %vm501, %v4374, 0.0
        %4407 = vadd.xlane.f32.xlu0 %v4406
        %v4408 = vpop.xlane.xlu0 %4407
        %v4409 = vsel %vm501, %v4375, 0.0
        %4410 = vadd.xlane.f32.xlu0 %v4409
        %v4411 = vpop.xlane.xlu0 %4410
        %v4412 = vsel %vm501, %v4376, 0.0
        %4413 = vadd.xlane.f32.xlu0 %v4412
        %v4414 = vpop.xlane.xlu0 %4413
        %v4415 = vsel %vm501, %v4377, 0.0
        %4416 = vadd.xlane.f32.xlu0 %v4415
        %v4417 = vpop.xlane.xlu0 %4416
        %v4418 = vsel %vm501, %v4378, 0.0
        %4419 = vadd.xlane.f32.xlu0 %v4418
        %v4420 = vpop.xlane.xlu0 %4419
        %v4421 = vsel %vm501, %v4379, 0.0
        %4422 = vadd.xlane.f32.xlu0 %v4421
        %v4423 = vpop.xlane.xlu0 %4422
        %v4424 = vsel %vm501, %v4380, 0.0
        %4425 = vadd.xlane.f32.xlu0 %v4424
        %v4426 = vpop.xlane.xlu0 %4425
        %v4427 = vsel %vm501, %v4381, 0.0
        %4428 = vadd.xlane.f32.xlu0 %v4427
        %v4429 = vpop.xlane.xlu0 %4428
        %v4430 = vsel %vm501, %v4382, 0.0
        %4431 = vadd.xlane.f32.xlu0 %v4430
        %v4432 = vpop.xlane.xlu0 %4431
        %v4433 = vsel %vm501, %v4383, 0.0
        %4434 = vadd.xlane.f32.xlu0 %v4433
        %v4435 = vpop.xlane.xlu0 %4434
        %v4436 = vmul.f32 %v4390, %v556
        %v4437 = vmul.f32 %v4393, %v556
        %v4438 = vmul.f32 %v4396, %v556
        %v4439 = vmul.f32 %v4399, %v556
        %v4440 = vmul.f32 %v4402, %v556
        %v4441 = vmul.f32 %v4405, %v556
        %v4442 = vmul.f32 %v4408, %v556
        %v4443 = vmul.f32 %v4411, %v556
        %v4444 = vmul.f32 %v4414, %v556
        %v4445 = vmul.f32 %v4417, %v556
        %v4446 = vmul.f32 %v4420, %v556
        %v4447 = vmul.f32 %v4423, %v556
        %v4448 = vmul.f32 %v4426, %v556
        %v4449 = vmul.f32 %v4429, %v556
        %v4450 = vmul.f32 %v4432, %v556
        %v4451 = vmul.f32 %v4435, %v556
        %v4452 = vsub.f32 %v4368, %v4436
        %v4453 = vsub.f32 %v4369, %v4437
        %v4454 = vsub.f32 %v4370, %v4438
        %v4455 = vsub.f32 %v4371, %v4439
        %v4456 = vsub.f32 %v4372, %v4440
        %v4457 = vsub.f32 %v4373, %v4441
        %v4458 = vsub.f32 %v4374, %v4442
        %v4459 = vsub.f32 %v4375, %v4443
        %v4460 = vsub.f32 %v4376, %v4444
        %v4461 = vsub.f32 %v4377, %v4445
        %v4462 = vsub.f32 %v4378, %v4446
        %v4463 = vsub.f32 %v4379, %v4447
        %v4464 = vsub.f32 %v4380, %v4448
        %v4465 = vsub.f32 %v4381, %v4449
        %v4466 = vsub.f32 %v4382, %v4450
        %v4467 = vsub.f32 %v4383, %v4451
        %v4468 = vmul.f32 %v4452, %v4452
        %v4469 = vmul.f32 %v4453, %v4453
        %v4470 = vmul.f32 %v4454, %v4454
        %v4471 = vmul.f32 %v4455, %v4455
        %v4472 = vmul.f32 %v4456, %v4456
        %v4473 = vmul.f32 %v4457, %v4457
        %v4474 = vmul.f32 %v4458, %v4458
        %v4475 = vmul.f32 %v4459, %v4459
        %v4476 = vmul.f32 %v4460, %v4460
        %v4477 = vmul.f32 %v4461, %v4461
        %v4478 = vmul.f32 %v4462, %v4462
        %v4479 = vmul.f32 %v4463, %v4463
        %v4480 = vmul.f32 %v4464, %v4464
        %v4481 = vmul.f32 %v4465, %v4465
        %v4482 = vmul.f32 %v4466, %v4466
        %v4483 = vmul.f32 %v4467, %v4467
        %v4484 = vsel %vm501, %v4468, 0.0
        %4485 = vadd.xlane.f32.xlu0 %v4484
        %v4486 = vpop.xlane.xlu0 %4485
        %v4487 = vsel %vm501, %v4469, 0.0
        %4488 = vadd.xlane.f32.xlu0 %v4487
        %v4489 = vpop.xlane.xlu0 %4488
        %v4490 = vsel %vm501, %v4470, 0.0
        %4491 = vadd.xlane.f32.xlu0 %v4490
        %v4492 = vpop.xlane.xlu0 %4491
        %v4493 = vsel %vm501, %v4471, 0.0
        %4494 = vadd.xlane.f32.xlu0 %v4493
        %v4495 = vpop.xlane.xlu0 %4494
        %v4496 = vsel %vm501, %v4472, 0.0
        %4497 = vadd.xlane.f32.xlu0 %v4496
        %v4498 = vpop.xlane.xlu0 %4497
        %v4499 = vsel %vm501, %v4473, 0.0
        %4500 = vadd.xlane.f32.xlu0 %v4499
        %v4501 = vpop.xlane.xlu0 %4500
        %v4502 = vsel %vm501, %v4474, 0.0
        %4503 = vadd.xlane.f32.xlu0 %v4502
        %v4504 = vpop.xlane.xlu0 %4503
        %v4505 = vsel %vm501, %v4475, 0.0
        %4506 = vadd.xlane.f32.xlu0 %v4505
        %v4507 = vpop.xlane.xlu0 %4506
        %v4508 = vsel %vm501, %v4476, 0.0
        %4509 = vadd.xlane.f32.xlu0 %v4508
        %v4510 = vpop.xlane.xlu0 %4509
        %v4511 = vsel %vm501, %v4477, 0.0
        %4512 = vadd.xlane.f32.xlu0 %v4511
        %v4513 = vpop.xlane.xlu0 %4512
        %v4514 = vsel %vm501, %v4478, 0.0
        %4515 = vadd.xlane.f32.xlu0 %v4514
        %v4516 = vpop.xlane.xlu0 %4515
        %v4517 = vsel %vm501, %v4479, 0.0
        %4518 = vadd.xlane.f32.xlu0 %v4517
        %v4519 = vpop.xlane.xlu0 %4518
        %v4520 = vsel %vm501, %v4480, 0.0
        %4521 = vadd.xlane.f32.xlu0 %v4520
        %v4522 = vpop.xlane.xlu0 %4521
        %v4523 = vsel %vm501, %v4481, 0.0
        %4524 = vadd.xlane.f32.xlu0 %v4523
        %v4525 = vpop.xlane.xlu0 %4524
        %v4526 = vsel %vm501, %v4482, 0.0
        %4527 = vadd.xlane.f32.xlu0 %v4526
        %v4528 = vpop.xlane.xlu0 %4527
        %v4529 = vsel %vm501, %v4483, 0.0
        %4530 = vadd.xlane.f32.xlu0 %v4529
        %v4531 = vpop.xlane.xlu0 %4530
        %v4532 = vmul.f32 %v4486, %v556
        %v4533 = vmul.f32 %v4489, %v556
        %v4534 = vmul.f32 %v4492, %v556
        %v4535 = vmul.f32 %v4495, %v556
        %v4536 = vmul.f32 %v4498, %v556
        %v4537 = vmul.f32 %v4501, %v556
        %v4538 = vmul.f32 %v4504, %v556
        %v4539 = vmul.f32 %v4507, %v556
        %v4540 = vmul.f32 %v4510, %v556
        %v4541 = vmul.f32 %v4513, %v556
        %v4542 = vmul.f32 %v4516, %v556
        %v4543 = vmul.f32 %v4519, %v556
        %v4544 = vmul.f32 %v4522, %v556
        %v4545 = vmul.f32 %v4525, %v556
        %v4546 = vmul.f32 %v4528, %v556
        %v4547 = vmul.f32 %v4531, %v556
        %v4548 = vadd.f32 %v4532, 1e-05
        %v4549 = vadd.f32 %v4533, 1e-05
        %v4550 = vadd.f32 %v4534, 1e-05
        %v4551 = vadd.f32 %v4535, 1e-05
        %v4552 = vadd.f32 %v4536, 1e-05
        %v4553 = vadd.f32 %v4537, 1e-05
        %v4554 = vadd.f32 %v4538, 1e-05
        %v4555 = vadd.f32 %v4539, 1e-05
        %v4556 = vadd.f32 %v4540, 1e-05
        %v4557 = vadd.f32 %v4541, 1e-05
        %v4558 = vadd.f32 %v4542, 1e-05
        %v4559 = vadd.f32 %v4543, 1e-05
        %v4560 = vadd.f32 %v4544, 1e-05
        %v4561 = vadd.f32 %v4545, 1e-05
        %v4562 = vadd.f32 %v4546, 1e-05
        %v4563 = vadd.f32 %v4547, 1e-05
        %v4564 = vrsqrt.pop %v4548
        %v4565 = vmul.f32 %v4564, %v4548
        %v4566 = vmul.f32 %v4565, %v4564
        %v4567 = vmul.f32 0.5, %v4566
        %v4568 = vsub.f32 1.5, %v4567
        %v4569 = vmul.f32 %v4564, %v4568
        %vm4570 = vweird.f32 %v4548
        %vm4571 = vweird.f32 %v4564
        %vm4572 = vmor %vm4570, %vm4571
        %v4573 = vsel %vm4572, %v4564, %v4569
        %v4574 = vrsqrt.pop %v4549
        %v4575 = vmul.f32 %v4574, %v4549
        %v4576 = vmul.f32 %v4575, %v4574
        %v4577 = vmul.f32 0.5, %v4576
        %v4578 = vsub.f32 1.5, %v4577
        %v4579 = vmul.f32 %v4574, %v4578
        %vm4580 = vweird.f32 %v4549
        %vm4581 = vweird.f32 %v4574
        %vm4582 = vmor %vm4580, %vm4581
        %v4583 = vsel %vm4582, %v4574, %v4579
        %v4584 = vrsqrt.pop %v4550
        %v4585 = vmul.f32 %v4584, %v4550
        %v4586 = vmul.f32 %v4585, %v4584
        %v4587 = vmul.f32 0.5, %v4586
        %v4588 = vsub.f32 1.5, %v4587
        %v4589 = vmul.f32 %v4584, %v4588
        %vm4590 = vweird.f32 %v4550
        %vm4591 = vweird.f32 %v4584
        %vm4592 = vmor %vm4590, %vm4591
        %v4593 = vsel %vm4592, %v4584, %v4589
        %v4594 = vrsqrt.pop %v4551
        %v4595 = vmul.f32 %v4594, %v4551
        %v4596 = vmul.f32 %v4595, %v4594
        %v4597 = vmul.f32 0.5, %v4596
        %v4598 = vsub.f32 1.5, %v4597
        %v4599 = vmul.f32 %v4594, %v4598
        %vm4600 = vweird.f32 %v4551
        %vm4601 = vweird.f32 %v4594
        %vm4602 = vmor %vm4600, %vm4601
        %v4603 = vsel %vm4602, %v4594, %v4599
        %v4604 = vrsqrt.pop %v4552
        %v4605 = vmul.f32 %v4604, %v4552
        %v4606 = vmul.f32 %v4605, %v4604
        %v4607 = vmul.f32 0.5, %v4606
        %v4608 = vsub.f32 1.5, %v4607
        %v4609 = vmul.f32 %v4604, %v4608
        %vm4610 = vweird.f32 %v4552
        %vm4611 = vweird.f32 %v4604
        %vm4612 = vmor %vm4610, %vm4611
        %v4613 = vsel %vm4612, %v4604, %v4609
        %v4614 = vrsqrt.pop %v4553
        %v4615 = vmul.f32 %v4614, %v4553
        %v4616 = vmul.f32 %v4615, %v4614
        %v4617 = vmul.f32 0.5, %v4616
        %v4618 = vsub.f32 1.5, %v4617
        %v4619 = vmul.f32 %v4614, %v4618
        %vm4620 = vweird.f32 %v4553
        %vm4621 = vweird.f32 %v4614
        %vm4622 = vmor %vm4620, %vm4621
        %v4623 = vsel %vm4622, %v4614, %v4619
        %v4624 = vrsqrt.pop %v4554
        %v4625 = vmul.f32 %v4624, %v4554
        %v4626 = vmul.f32 %v4625, %v4624
        %v4627 = vmul.f32 0.5, %v4626
        %v4628 = vsub.f32 1.5, %v4627
        %v4629 = vmul.f32 %v4624, %v4628
        %vm4630 = vweird.f32 %v4554
        %vm4631 = vweird.f32 %v4624
        %vm4632 = vmor %vm4630, %vm4631
        %v4633 = vsel %vm4632, %v4624, %v4629
        %v4634 = vrsqrt.pop %v4555
        %v4635 = vmul.f32 %v4634, %v4555
        %v4636 = vmul.f32 %v4635, %v4634
        %v4637 = vmul.f32 0.5, %v4636
        %v4638 = vsub.f32 1.5, %v4637
        %v4639 = vmul.f32 %v4634, %v4638
        %vm4640 = vweird.f32 %v4555
        %vm4641 = vweird.f32 %v4634
        %vm4642 = vmor %vm4640, %vm4641
        %v4643 = vsel %vm4642, %v4634, %v4639
        %v4644 = vrsqrt.pop %v4556
        %v4645 = vmul.f32 %v4644, %v4556
        %v4646 = vmul.f32 %v4645, %v4644
        %v4647 = vmul.f32 0.5, %v4646
        %v4648 = vsub.f32 1.5, %v4647
        %v4649 = vmul.f32 %v4644, %v4648
        %vm4650 = vweird.f32 %v4556
        %vm4651 = vweird.f32 %v4644
        %vm4652 = vmor %vm4650, %vm4651
        %v4653 = vsel %vm4652, %v4644, %v4649
        %v4654 = vrsqrt.pop %v4557
        %v4655 = vmul.f32 %v4654, %v4557
        %v4656 = vmul.f32 %v4655, %v4654
        %v4657 = vmul.f32 0.5, %v4656
        %v4658 = vsub.f32 1.5, %v4657
        %v4659 = vmul.f32 %v4654, %v4658
        %vm4660 = vweird.f32 %v4557
        %vm4661 = vweird.f32 %v4654
        %vm4662 = vmor %vm4660, %vm4661
        %v4663 = vsel %vm4662, %v4654, %v4659
        %v4664 = vrsqrt.pop %v4558
        %v4665 = vmul.f32 %v4664, %v4558
        %v4666 = vmul.f32 %v4665, %v4664
        %v4667 = vmul.f32 0.5, %v4666
        %v4668 = vsub.f32 1.5, %v4667
        %v4669 = vmul.f32 %v4664, %v4668
        %vm4670 = vweird.f32 %v4558
        %vm4671 = vweird.f32 %v4664
        %vm4672 = vmor %vm4670, %vm4671
        %v4673 = vsel %vm4672, %v4664, %v4669
        %v4674 = vrsqrt.pop %v4559
        %v4675 = vmul.f32 %v4674, %v4559
        %v4676 = vmul.f32 %v4675, %v4674
        %v4677 = vmul.f32 0.5, %v4676
        %v4678 = vsub.f32 1.5, %v4677
        %v4679 = vmul.f32 %v4674, %v4678
        %vm4680 = vweird.f32 %v4559
        %vm4681 = vweird.f32 %v4674
        %vm4682 = vmor %vm4680, %vm4681
        %v4683 = vsel %vm4682, %v4674, %v4679
        %v4684 = vrsqrt.pop %v4560
        %v4685 = vmul.f32 %v4684, %v4560
        %v4686 = vmul.f32 %v4685, %v4684
        %v4687 = vmul.f32 0.5, %v4686
        %v4688 = vsub.f32 1.5, %v4687
        %v4689 = vmul.f32 %v4684, %v4688
        %vm4690 = vweird.f32 %v4560
        %vm4691 = vweird.f32 %v4684
        %vm4692 = vmor %vm4690, %vm4691
        %v4693 = vsel %vm4692, %v4684, %v4689
        %v4694 = vrsqrt.pop %v4561
        %v4695 = vmul.f32 %v4694, %v4561
        %v4696 = vmul.f32 %v4695, %v4694
        %v4697 = vmul.f32 0.5, %v4696
        %v4698 = vsub.f32 1.5, %v4697
        %v4699 = vmul.f32 %v4694, %v4698
        %vm4700 = vweird.f32 %v4561
        %vm4701 = vweird.f32 %v4694
        %vm4702 = vmor %vm4700, %vm4701
        %v4703 = vsel %vm4702, %v4694, %v4699
        %v4704 = vrsqrt.pop %v4562
        %v4705 = vmul.f32 %v4704, %v4562
        %v4706 = vmul.f32 %v4705, %v4704
        %v4707 = vmul.f32 0.5, %v4706
        %v4708 = vsub.f32 1.5, %v4707
        %v4709 = vmul.f32 %v4704, %v4708
        %vm4710 = vweird.f32 %v4562
        %vm4711 = vweird.f32 %v4704
        %vm4712 = vmor %vm4710, %vm4711
        %v4713 = vsel %vm4712, %v4704, %v4709
        %v4714 = vrsqrt.pop %v4563
        %v4715 = vmul.f32 %v4714, %v4563
        %v4716 = vmul.f32 %v4715, %v4714
        %v4717 = vmul.f32 0.5, %v4716
        %v4718 = vsub.f32 1.5, %v4717
        %v4719 = vmul.f32 %v4714, %v4718
        %vm4720 = vweird.f32 %v4563
        %vm4721 = vweird.f32 %v4714
        %vm4722 = vmor %vm4720, %vm4721
        %v4723 = vsel %vm4722, %v4714, %v4719
        %v4724 = vmul.f32 %v4452, %v4573
        %v4725 = vmul.f32 %v4453, %v4583
        %v4726 = vmul.f32 %v4454, %v4593
        %v4727 = vmul.f32 %v4455, %v4603
        %v4728 = vmul.f32 %v4456, %v4613
        %v4729 = vmul.f32 %v4457, %v4623
        %v4730 = vmul.f32 %v4458, %v4633
        %v4731 = vmul.f32 %v4459, %v4643
        %v4732 = vmul.f32 %v4460, %v4653
        %v4733 = vmul.f32 %v4461, %v4663
        %v4734 = vmul.f32 %v4462, %v4673
        %v4735 = vmul.f32 %v4463, %v4683
        %v4736 = vmul.f32 %v4464, %v4693
        %v4737 = vmul.f32 %v4465, %v4703
        %v4738 = vmul.f32 %v4466, %v4713
        %v4739 = vmul.f32 %v4467, %v4723
        %v4740 = vperm.slane %v4385, 0
        %v4741 = vmul.f32 %v4724, %v4740
        %v4742 = vmul.f32 %v4725, %v4740
        %v4743 = vmul.f32 %v4726, %v4740
        %v4744 = vmul.f32 %v4727, %v4740
        %v4745 = vmul.f32 %v4728, %v4740
        %v4746 = vmul.f32 %v4729, %v4740
        %v4747 = vmul.f32 %v4730, %v4740
        %v4748 = vmul.f32 %v4731, %v4740
        %v4749 = vmul.f32 %v4732, %v4740
        %v4750 = vmul.f32 %v4733, %v4740
        %v4751 = vmul.f32 %v4734, %v4740
        %v4752 = vmul.f32 %v4735, %v4740
        %v4753 = vmul.f32 %v4736, %v4740
        %v4754 = vmul.f32 %v4737, %v4740
        %v4755 = vmul.f32 %v4738, %v4740
        %v4756 = vmul.f32 %v4739, %v4740
        %v4757 = vperm.slane %v4385, 1
        %v4758 = vadd.f32 %v4741, %v4757
        %v4759 = vadd.f32 %v4742, %v4757
        %v4760 = vadd.f32 %v4743, %v4757
        %v4761 = vadd.f32 %v4744, %v4757
        %v4762 = vadd.f32 %v4745, %v4757
        %v4763 = vadd.f32 %v4746, %v4757
        %v4764 = vadd.f32 %v4747, %v4757
        %v4765 = vadd.f32 %v4748, %v4757
        %v4766 = vadd.f32 %v4749, %v4757
        %v4767 = vadd.f32 %v4750, %v4757
        %v4768 = vadd.f32 %v4751, %v4757
        %v4769 = vadd.f32 %v4752, %v4757
        %v4770 = vadd.f32 %v4753, %v4757
        %v4771 = vadd.f32 %v4754, %v4757
        %v4772 = vadd.f32 %v4755, %v4757
        %v4773 = vadd.f32 %v4756, %v4757
        %v4774 = vpack.c.bf16 %v4759, %v4758
        %v4775 = vpack.c.bf16 %v4761, %v4760
        %v4776 = vpack.c.bf16 %v4763, %v4762
        %v4777 = vpack.c.bf16 %v4765, %v4764
        %v4778 = vpack.c.bf16 %v4767, %v4766
        %v4779 = vpack.c.bf16 %v4769, %v4768
        %v4780 = vpack.c.bf16 %v4771, %v4770
        %v4781 = vpack.c.bf16 %v4773, %v4772
        %s4782 = scalar_lea.vmem %s7, 32
        %v4783 = vld [vmem:[%s4782] sm:$0xf]
        %v4784 = vld [vmem:[%s4782 + $0x4] sm:$0xf]
        %v4785 = vld [vmem:[%s4782 + $0x8] sm:$0xf]
        %v4786 = vld [vmem:[%s4782 + $0xc] sm:$0xf]
        %v4791 = vunpack.c.l.b16 %v4783
        %v4792 = vunpack.c.l.b16 %v4784
        %v4793 = vunpack.c.l.b16 %v4785
        %v4794 = vunpack.c.l.b16 %v4786
        %v4795 = vpack.c.b16 %v4792, %v4791
        %v4796 = vpack.c.b16 %v4794, %v4793
        %v4800 = vsel %vm501, %v4774, 0
        %v4803 = vsel %vm501, %v4775, 0
        %v4806 = vsel %vm501, %v4776, 0
        %v4809 = vsel %vm501, %v4777, 0
        %v4812 = vsel %vm501, %v4778, 0
        %v4815 = vsel %vm501, %v4779, 0
        %v4818 = vsel %vm501, %v4780, 0
        %v4821 = vsel %vm501, %v4781, 0
        %4823 = vmatpush.bf16.msra.mxu0 0
        %4824 = vmatpush.bf16.msra.mxu0 0
        %4825 = vmatpush.bf16.msra.mxu0 0
        %4826 = vmatpush.bf16.msra.mxu0 0
        %4827 = vmatpush.bf16.msra.mxu0 0
        %4828 = vmatpush.bf16.msra.mxu0 0
        %4829 = vmatpush.bf16.msra.mxu0 %v4796
        %4830 = vmatpush.bf16.msra.mxu0 %v4795
        %4831 = vmatmul.bf16.gmra.mxu0 %v4800
        %v4832 = vpop.f32.mrf.mxu0
        %v4833 = vadd.f32 0.0, %v4832
        %v4834 = vpop.f32.mrf.mxu0
        %v4835 = vadd.f32 0.0, %v4834
        %4836 = vmatmul.bf16.gmra.mxu0 %v4803
        %v4837 = vpop.f32.mrf.mxu0
        %v4838 = vadd.f32 0.0, %v4837
        %v4839 = vpop.f32.mrf.mxu0
        %v4840 = vadd.f32 0.0, %v4839
        %4841 = vmatmul.bf16.gmra.mxu0 %v4806
        %v4842 = vpop.f32.mrf.mxu0
        %v4843 = vadd.f32 0.0, %v4842
        %v4844 = vpop.f32.mrf.mxu0
        %v4845 = vadd.f32 0.0, %v4844
        %4846 = vmatmul.bf16.gmra.mxu0 %v4809
        %v4847 = vpop.f32.mrf.mxu0
        %v4848 = vadd.f32 0.0, %v4847
        %v4849 = vpop.f32.mrf.mxu0
        %v4850 = vadd.f32 0.0, %v4849
        %4851 = vmatmul.bf16.gmra.mxu0 %v4812
        %v4852 = vpop.f32.mrf.mxu0
        %v4853 = vadd.f32 0.0, %v4852
        %v4854 = vpop.f32.mrf.mxu0
        %v4855 = vadd.f32 0.0, %v4854
        %4856 = vmatmul.bf16.gmra.mxu0 %v4815
        %v4857 = vpop.f32.mrf.mxu0
        %v4858 = vadd.f32 0.0, %v4857
        %v4859 = vpop.f32.mrf.mxu0
        %v4860 = vadd.f32 0.0, %v4859
        %4861 = vmatmul.bf16.gmra.mxu0 %v4818
        %v4862 = vpop.f32.mrf.mxu0
        %v4863 = vadd.f32 0.0, %v4862
        %v4864 = vpop.f32.mrf.mxu0
        %v4865 = vadd.f32 0.0, %v4864
        %4866 = vmatmul.bf16.gmra.mxu0 %v4821
        %v4867 = vpop.f32.mrf.mxu0
        %v4868 = vadd.f32 0.0, %v4867
        %v4869 = vpop.f32.mrf.mxu0
        %v4870 = vadd.f32 0.0, %v4869
        %4871 = vdwg.mxu0
        %s4872 = scalar_lea.vmem %s7, 48
        %v4873 = vld [vmem:[%s4872] sm:$0xf]
        %v4874 = vld [vmem:[%s4872 + $0x4] sm:$0xf]
        %v4875 = vld [vmem:[%s4872 + $0x8] sm:$0xf]
        %v4876 = vld [vmem:[%s4872 + $0xc] sm:$0xf]
        %v4881 = vunpack.c.l.b16 %v4873
        %v4882 = vunpack.c.l.b16 %v4874
        %v4883 = vunpack.c.l.b16 %v4875
        %v4884 = vunpack.c.l.b16 %v4876
        %v4885 = vpack.c.b16 %v4882, %v4881
        %v4886 = vpack.c.b16 %v4884, %v4883
        %4889 = vmatpush.bf16.msra.mxu0 0
        %4890 = vmatpush.bf16.msra.mxu0 0
        %4891 = vmatpush.bf16.msra.mxu0 0
        %4892 = vmatpush.bf16.msra.mxu0 0
        %4893 = vmatpush.bf16.msra.mxu0 0
        %4894 = vmatpush.bf16.msra.mxu0 0
        %4895 = vmatpush.bf16.msra.mxu0 %v4886
        %4896 = vmatpush.bf16.msra.mxu0 %v4885
        %4897 = vmatmul.bf16.gmra.mxu0 %v4800
        %v4898 = vpop.f32.mrf.mxu0
        %v4899 = vadd.f32 0.0, %v4898
        %v4900 = vpop.f32.mrf.mxu0
        %v4901 = vadd.f32 0.0, %v4900
        %4902 = vmatmul.bf16.gmra.mxu0 %v4803
        %v4903 = vpop.f32.mrf.mxu0
        %v4904 = vadd.f32 0.0, %v4903
        %v4905 = vpop.f32.mrf.mxu0
        %v4906 = vadd.f32 0.0, %v4905
        %4907 = vmatmul.bf16.gmra.mxu0 %v4806
        %v4908 = vpop.f32.mrf.mxu0
        %v4909 = vadd.f32 0.0, %v4908
        %v4910 = vpop.f32.mrf.mxu0
        %v4911 = vadd.f32 0.0, %v4910
        %4912 = vmatmul.bf16.gmra.mxu0 %v4809
        %v4913 = vpop.f32.mrf.mxu0
        %v4914 = vadd.f32 0.0, %v4913
        %v4915 = vpop.f32.mrf.mxu0
        %v4916 = vadd.f32 0.0, %v4915
        %4917 = vmatmul.bf16.gmra.mxu0 %v4812
        %v4918 = vpop.f32.mrf.mxu0
        %v4919 = vadd.f32 0.0, %v4918
        %v4920 = vpop.f32.mrf.mxu0
        %v4921 = vadd.f32 0.0, %v4920
        %4922 = vmatmul.bf16.gmra.mxu0 %v4815
        %v4923 = vpop.f32.mrf.mxu0
        %v4924 = vadd.f32 0.0, %v4923
        %v4925 = vpop.f32.mrf.mxu0
        %v4926 = vadd.f32 0.0, %v4925
        %4927 = vmatmul.bf16.gmra.mxu0 %v4818
        %v4928 = vpop.f32.mrf.mxu0
        %v4929 = vadd.f32 0.0, %v4928
        %v4930 = vpop.f32.mrf.mxu0
        %v4931 = vadd.f32 0.0, %v4930
        %4932 = vmatmul.bf16.gmra.mxu0 %v4821
        %v4933 = vpop.f32.mrf.mxu0
        %v4934 = vadd.f32 0.0, %v4933
        %v4935 = vpop.f32.mrf.mxu0
        %v4936 = vadd.f32 0.0, %v4935
        %4937 = vdwg.mxu0
        %v4938 = vmul.f32 %v4833, %v1058
        %v4939 = vmul.f32 %v4835, %v1059
        %v4940 = vmul.f32 %v4838, %v1060
        %v4941 = vmul.f32 %v4840, %v1061
        %v4942 = vmul.f32 %v4843, %v1062
        %v4943 = vmul.f32 %v4845, %v1063
        %v4944 = vmul.f32 %v4848, %v1064
        %v4945 = vmul.f32 %v4850, %v1065
        %v4946 = vmul.f32 %v4853, %v1066
        %v4947 = vmul.f32 %v4855, %v1067
        %v4948 = vmul.f32 %v4858, %v1068
        %v4949 = vmul.f32 %v4860, %v1069
        %v4950 = vmul.f32 %v4863, %v1070
        %v4951 = vmul.f32 %v4865, %v1071
        %v4952 = vmul.f32 %v4868, %v1072
        %v4953 = vmul.f32 %v4870, %v1073
        %v4954 = vmul.f32 %v4833, %v1124
        %v4955 = vmul.f32 %v4835, %v1126
        %v4956 = vmul.f32 %v4838, %v1128
        %v4957 = vmul.f32 %v4840, %v1130
        %v4958 = vmul.f32 %v4843, %v1132
        %v4959 = vmul.f32 %v4845, %v1134
        %v4960 = vmul.f32 %v4848, %v1136
        %v4961 = vmul.f32 %v4850, %v1138
        %v4962 = vmul.f32 %v4853, %v1140
        %v4963 = vmul.f32 %v4855, %v1142
        %v4964 = vmul.f32 %v4858, %v1144
        %v4965 = vmul.f32 %v4860, %v1146
        %v4966 = vmul.f32 %v4863, %v1148
        %v4967 = vmul.f32 %v4865, %v1150
        %v4968 = vmul.f32 %v4868, %v1152
        %v4969 = vmul.f32 %v4870, %v1154
        %4986 = vrot.lane.b32.xlu0 %v4954, 64
        %v4987 = vpop.permute.xlu0 %4986
        %4988 = vrot.lane.b32.xlu0 %v4955, 64
        %v4989 = vpop.permute.xlu0 %4988
        %4990 = vrot.lane.b32.xlu0 %v4956, 64
        %v4991 = vpop.permute.xlu0 %4990
        %4992 = vrot.lane.b32.xlu0 %v4957, 64
        %v4993 = vpop.permute.xlu0 %4992
        %4994 = vrot.lane.b32.xlu0 %v4958, 64
        %v4995 = vpop.permute.xlu0 %4994
        %4996 = vrot.lane.b32.xlu0 %v4959, 64
        %v4997 = vpop.permute.xlu0 %4996
        %4998 = vrot.lane.b32.xlu0 %v4960, 64
        %v4999 = vpop.permute.xlu0 %4998
        %5000 = vrot.lane.b32.xlu0 %v4961, 64
        %v5001 = vpop.permute.xlu0 %5000
        %5002 = vrot.lane.b32.xlu0 %v4962, 64
        %v5003 = vpop.permute.xlu0 %5002
        %5004 = vrot.lane.b32.xlu0 %v4963, 64
        %v5005 = vpop.permute.xlu0 %5004
        %5006 = vrot.lane.b32.xlu0 %v4964, 64
        %v5007 = vpop.permute.xlu0 %5006
        %5008 = vrot.lane.b32.xlu0 %v4965, 64
        %v5009 = vpop.permute.xlu0 %5008
        %5010 = vrot.lane.b32.xlu0 %v4966, 64
        %v5011 = vpop.permute.xlu0 %5010
        %5012 = vrot.lane.b32.xlu0 %v4967, 64
        %v5013 = vpop.permute.xlu0 %5012
        %5014 = vrot.lane.b32.xlu0 %v4968, 64
        %v5015 = vpop.permute.xlu0 %5014
        %5016 = vrot.lane.b32.xlu0 %v4969, 64
        %v5017 = vpop.permute.xlu0 %5016
        %v5034 = vadd.f32 %v4938, %v4987
        %v5035 = vadd.f32 %v4939, %v4989
        %v5036 = vadd.f32 %v4940, %v4991
        %v5037 = vadd.f32 %v4941, %v4993
        %v5038 = vadd.f32 %v4942, %v4995
        %v5039 = vadd.f32 %v4943, %v4997
        %v5040 = vadd.f32 %v4944, %v4999
        %v5041 = vadd.f32 %v4945, %v5001
        %v5042 = vadd.f32 %v4946, %v5003
        %v5043 = vadd.f32 %v4947, %v5005
        %v5044 = vadd.f32 %v4948, %v5007
        %v5045 = vadd.f32 %v4949, %v5009
        %v5046 = vadd.f32 %v4950, %v5011
        %v5047 = vadd.f32 %v4951, %v5013
        %v5048 = vadd.f32 %v4952, %v5015
        %v5049 = vadd.f32 %v4953, %v5017
        %v5050 = vmul.f32 %v5034, %v1300
        %v5051 = vmul.f32 %v5035, %v1302
        %v5052 = vmul.f32 %v5036, %v1304
        %v5053 = vmul.f32 %v5037, %v1306
        %v5054 = vmul.f32 %v5038, %v1308
        %v5055 = vmul.f32 %v5039, %v1310
        %v5056 = vmul.f32 %v5040, %v1312
        %v5057 = vmul.f32 %v5041, %v1314
        %v5058 = vmul.f32 %v5034, %v1316
        %v5059 = vmul.f32 %v5035, %v1318
        %v5060 = vmul.f32 %v5036, %v1320
        %v5061 = vmul.f32 %v5037, %v1322
        %v5062 = vmul.f32 %v5038, %v1324
        %v5063 = vmul.f32 %v5039, %v1326
        %v5064 = vmul.f32 %v5040, %v1328
        %v5065 = vmul.f32 %v5041, %v1330
        %v5066 = vpack.c.bf16 %v5051, %v5050
        %v5067 = vpack.c.bf16 %v5053, %v5052
        %v5068 = vpack.c.bf16 %v5055, %v5054
        %v5069 = vpack.c.bf16 %v5057, %v5056
        %v5070 = vpack.c.bf16 %v5059, %v5058
        %v5071 = vpack.c.bf16 %v5061, %v5060
        %v5072 = vpack.c.bf16 %v5063, %v5062
        %v5073 = vpack.c.bf16 %v5065, %v5064
        %v5074 = vmul.f32 %v4899, %v1371
        %v5075 = vmul.f32 %v4901, %v1372
        %v5076 = vmul.f32 %v4904, %v1373
        %v5077 = vmul.f32 %v4906, %v1374
        %v5078 = vmul.f32 %v4909, %v1375
        %v5079 = vmul.f32 %v4911, %v1376
        %v5080 = vmul.f32 %v4914, %v1377
        %v5081 = vmul.f32 %v4916, %v1378
        %v5082 = vmul.f32 %v4899, %v1379
        %v5083 = vmul.f32 %v4901, %v1380
        %v5084 = vmul.f32 %v4904, %v1381
        %v5085 = vmul.f32 %v4906, %v1382
        %v5086 = vmul.f32 %v4909, %v1383
        %v5087 = vmul.f32 %v4911, %v1384
        %v5088 = vmul.f32 %v4914, %v1385
        %v5089 = vmul.f32 %v4916, %v1386
        %v5090 = vpack.c.bf16 %v5075, %v5074
        %v5091 = vpack.c.bf16 %v5077, %v5076
        %v5092 = vpack.c.bf16 %v5079, %v5078
        %v5093 = vpack.c.bf16 %v5081, %v5080
        %v5094 = vpack.c.bf16 %v5083, %v5082
        %v5095 = vpack.c.bf16 %v5085, %v5084
        %v5096 = vpack.c.bf16 %v5087, %v5086
        %v5097 = vpack.c.bf16 %v5089, %v5088
        %v5098 = vpack.c.bf16 %v5035, %v5034
        %v5099 = vpack.c.bf16 %v5037, %v5036
        %v5100 = vpack.c.bf16 %v5039, %v5038
        %v5101 = vpack.c.bf16 %v5041, %v5040
        %5110 = vrot.lane.b32.xlu0 %v5066, 96
        %v5111 = vpop.permute.xlu0 %5110
        %5112 = vrot.lane.b32.xlu0 %v5067, 96
        %v5113 = vpop.permute.xlu0 %5112
        %5114 = vrot.lane.b32.xlu0 %v5068, 96
        %v5115 = vpop.permute.xlu0 %5114
        %5116 = vrot.lane.b32.xlu0 %v5069, 96
        %v5117 = vpop.permute.xlu0 %5116
        %5118 = vrot.lane.b32.xlu0 %v5070, 96
        %v5119 = vpop.permute.xlu0 %5118
        %5120 = vrot.lane.b32.xlu0 %v5071, 96
        %v5121 = vpop.permute.xlu0 %5120
        %5122 = vrot.lane.b32.xlu0 %v5072, 96
        %v5123 = vpop.permute.xlu0 %5122
        %5124 = vrot.lane.b32.xlu0 %v5073, 96
        %v5125 = vpop.permute.xlu0 %5124
        %v5127 = vsel %vm501, %v5098, 0
        %v5130 = vsel %vm501, %v5099, 0
        %v5133 = vsel %vm501, %v5100, 0
        %v5136 = vsel %vm501, %v5101, 0
        %v5139 = vsel %vm501, %v5111, 0
        %v5142 = vsel %vm501, %v5113, 0
        %v5145 = vsel %vm501, %v5115, 0
        %v5148 = vsel %vm501, %v5117, 0
        %v5151 = vsel %vm501, %v5119, 0
        %v5154 = vsel %vm501, %v5121, 0
        %v5157 = vsel %vm501, %v5123, 0
        %v5160 = vsel %vm501, %v5125, 0
        %5162 = vmatpush.bf16.xpose.msra.mxu0 %v5160
        %5163 = vmatpush.bf16.xpose.msra.mxu0 %v5157
        %5164 = vmatpush.bf16.xpose.msra.mxu0 %v5154
        %5165 = vmatpush.bf16.xpose.msra.mxu0 %v5151
        %5166 = vmatpush.bf16.xpose.msra.mxu0 %v5148
        %5167 = vmatpush.bf16.xpose.msra.mxu0 %v5145
        %5168 = vmatpush.bf16.xpose.msra.mxu0 %v5142
        %5169 = vmatpush.bf16.xpose.msra.mxu0 %v5139
        %5170 = vmatmul.bf16.gmra.mxu0 %v5127
        %v5171 = vpop.f32.mrf.mxu0
        %v5172 = vadd.f32 0.0, %v5171
        %v5173 = vpop.f32.mrf.mxu0
        %v5174 = vadd.f32 0.0, %v5173
        %5175 = vmatmul.bf16.gmra.mxu0 %v5130
        %v5176 = vpop.f32.mrf.mxu0
        %v5177 = vadd.f32 0.0, %v5176
        %v5178 = vpop.f32.mrf.mxu0
        %v5179 = vadd.f32 0.0, %v5178
        %5180 = vmatmul.bf16.gmra.mxu0 %v5133
        %v5181 = vpop.f32.mrf.mxu0
        %v5182 = vadd.f32 0.0, %v5181
        %v5183 = vpop.f32.mrf.mxu0
        %v5184 = vadd.f32 0.0, %v5183
        %5185 = vmatmul.bf16.gmra.mxu0 %v5136
        %v5186 = vpop.f32.mrf.mxu0
        %v5187 = vadd.f32 0.0, %v5186
        %v5188 = vpop.f32.mrf.mxu0
        %v5189 = vadd.f32 0.0, %v5188
        %5190 = vdwg.mxu0
        %v5191 = vmul.f32 %v5172, %v1504
        %v5192 = vmul.f32 %v5174, %v1505
        %v5193 = vmul.f32 %v5177, %v1506
        %v5194 = vmul.f32 %v5179, %v1507
        %v5195 = vmul.f32 %v5182, %v1508
        %v5196 = vmul.f32 %v5184, %v1509
        %v5197 = vmul.f32 %v5187, %v1510
        %v5198 = vmul.f32 %v5189, %v1511
        %v5199 = vand.u32 2147483647, %v5191
        %v5200 = vand.u32 2147483647, %v5192
        %v5201 = vand.u32 2147483647, %v5193
        %v5202 = vand.u32 2147483647, %v5194
        %v5203 = vand.u32 2147483647, %v5195
        %v5204 = vand.u32 2147483647, %v5196
        %v5205 = vand.u32 2147483647, %v5197
        %v5206 = vand.u32 2147483647, %v5198
        %v5207 = vpack.c.bf16 %v5200, %v5199
        %v5208 = vpack.c.bf16 %v5202, %v5201
        %v5209 = vpack.c.bf16 %v5204, %v5203
        %v5210 = vpack.c.bf16 %v5206, %v5205
        %5211 = vmatpush.bf16.msra.mxu0 %v1587
        %5212 = vmatpush.bf16.msra.mxu0 %v1586
        %5213 = vmatpush.bf16.msra.mxu0 %v1585
        %5214 = vmatpush.bf16.msra.mxu0 %v1584
        %5215 = vmatpush.bf16.msra.mxu0 %v1583
        %5216 = vmatpush.bf16.msra.mxu0 %v1582
        %5217 = vmatpush.bf16.msra.mxu0 %v1581
        %5218 = vmatpush.bf16.msra.mxu0 %v1580
        %5219 = vmatmul.bf16.gmra.mxu0 %v5207
        %v5220 = vpop.f32.mrf.mxu0
        %v5221 = vadd.f32 0.0, %v5220
        %v5222 = vpop.f32.mrf.mxu0
        %v5223 = vadd.f32 0.0, %v5222
        %5224 = vmatmul.bf16.gmra.mxu0 %v5208
        %v5225 = vpop.f32.mrf.mxu0
        %v5226 = vadd.f32 0.0, %v5225
        %v5227 = vpop.f32.mrf.mxu0
        %v5228 = vadd.f32 0.0, %v5227
        %5229 = vmatmul.bf16.gmra.mxu0 %v5209
        %v5230 = vpop.f32.mrf.mxu0
        %v5231 = vadd.f32 0.0, %v5230
        %v5232 = vpop.f32.mrf.mxu0
        %v5233 = vadd.f32 0.0, %v5232
        %5234 = vmatmul.bf16.gmra.mxu0 %v5210
        %v5235 = vpop.f32.mrf.mxu0
        %v5236 = vadd.f32 0.0, %v5235
        %v5237 = vpop.f32.mrf.mxu0
        %v5238 = vadd.f32 0.0, %v5237
        %5239 = vdwg.mxu0
        %v5240 = vmax.f32 %v5221, 1.0
        %v5241 = vmax.f32 %v5223, 1.0
        %v5242 = vmax.f32 %v5226, 1.0
        %v5243 = vmax.f32 %v5228, 1.0
        %v5244 = vmax.f32 %v5231, 1.0
        %v5245 = vmax.f32 %v5233, 1.0
        %v5246 = vmax.f32 %v5236, 1.0
        %v5247 = vmax.f32 %v5238, 1.0
        %v5248 = vrcp.pop %v5240
        %v5249 = vmul.f32 %v5240, %v5248
        %v5250 = vsub.f32 1.0, %v5249
        %v5251 = vmul.f32 %v5248, %v5250
        %v5252 = vadd.f32 %v5248, %v5251
        %vm5253 = vweird.f32 %v5240
        %vm5254 = vweird.f32 %v5248
        %vm5255 = vmor %vm5253, %vm5254
        %v5256 = vsel %vm5255, %v5248, %v5252
        %v5257 = vand.u32 2147483647, %v5240
        %vm5258 = vcmp.eq.f32.partialorder %v5257, 8.507059e+37
        %v5259 = vand.u32 %v5240, 2147483648
        %v5260 = vor.u32 1.1754944e-38, %v5259
        %v5261 = vsel %vm5258, %v5260, %v5256
        %v5262 = vmul.f32 %v5191, %v5261
        %v5263 = vrcp.pop %v5241
        %v5264 = vmul.f32 %v5241, %v5263
        %v5265 = vsub.f32 1.0, %v5264
        %v5266 = vmul.f32 %v5263, %v5265
        %v5267 = vadd.f32 %v5263, %v5266
        %vm5268 = vweird.f32 %v5241
        %vm5269 = vweird.f32 %v5263
        %vm5270 = vmor %vm5268, %vm5269
        %v5271 = vsel %vm5270, %v5263, %v5267
        %v5272 = vand.u32 2147483647, %v5241
        %vm5273 = vcmp.eq.f32.partialorder %v5272, 8.507059e+37
        %v5274 = vand.u32 %v5241, 2147483648
        %v5275 = vor.u32 1.1754944e-38, %v5274
        %v5276 = vsel %vm5273, %v5275, %v5271
        %v5277 = vmul.f32 %v5192, %v5276
        %v5278 = vrcp.pop %v5242
        %v5279 = vmul.f32 %v5242, %v5278
        %v5280 = vsub.f32 1.0, %v5279
        %v5281 = vmul.f32 %v5278, %v5280
        %v5282 = vadd.f32 %v5278, %v5281
        %vm5283 = vweird.f32 %v5242
        %vm5284 = vweird.f32 %v5278
        %vm5285 = vmor %vm5283, %vm5284
        %v5286 = vsel %vm5285, %v5278, %v5282
        %v5287 = vand.u32 2147483647, %v5242
        %vm5288 = vcmp.eq.f32.partialorder %v5287, 8.507059e+37
        %v5289 = vand.u32 %v5242, 2147483648
        %v5290 = vor.u32 1.1754944e-38, %v5289
        %v5291 = vsel %vm5288, %v5290, %v5286
        %v5292 = vmul.f32 %v5193, %v5291
        %v5293 = vrcp.pop %v5243
        %v5294 = vmul.f32 %v5243, %v5293
        %v5295 = vsub.f32 1.0, %v5294
        %v5296 = vmul.f32 %v5293, %v5295
        %v5297 = vadd.f32 %v5293, %v5296
        %vm5298 = vweird.f32 %v5243
        %vm5299 = vweird.f32 %v5293
        %vm5300 = vmor %vm5298, %vm5299
        %v5301 = vsel %vm5300, %v5293, %v5297
        %v5302 = vand.u32 2147483647, %v5243
        %vm5303 = vcmp.eq.f32.partialorder %v5302, 8.507059e+37
        %v5304 = vand.u32 %v5243, 2147483648
        %v5305 = vor.u32 1.1754944e-38, %v5304
        %v5306 = vsel %vm5303, %v5305, %v5301
        %v5307 = vmul.f32 %v5194, %v5306
        %v5308 = vrcp.pop %v5244
        %v5309 = vmul.f32 %v5244, %v5308
        %v5310 = vsub.f32 1.0, %v5309
        %v5311 = vmul.f32 %v5308, %v5310
        %v5312 = vadd.f32 %v5308, %v5311
        %vm5313 = vweird.f32 %v5244
        %vm5314 = vweird.f32 %v5308
        %vm5315 = vmor %vm5313, %vm5314
        %v5316 = vsel %vm5315, %v5308, %v5312
        %v5317 = vand.u32 2147483647, %v5244
        %vm5318 = vcmp.eq.f32.partialorder %v5317, 8.507059e+37
        %v5319 = vand.u32 %v5244, 2147483648
        %v5320 = vor.u32 1.1754944e-38, %v5319
        %v5321 = vsel %vm5318, %v5320, %v5316
        %v5322 = vmul.f32 %v5195, %v5321
        %v5323 = vrcp.pop %v5245
        %v5324 = vmul.f32 %v5245, %v5323
        %v5325 = vsub.f32 1.0, %v5324
        %v5326 = vmul.f32 %v5323, %v5325
        %v5327 = vadd.f32 %v5323, %v5326
        %vm5328 = vweird.f32 %v5245
        %vm5329 = vweird.f32 %v5323
        %vm5330 = vmor %vm5328, %vm5329
        %v5331 = vsel %vm5330, %v5323, %v5327
        %v5332 = vand.u32 2147483647, %v5245
        %vm5333 = vcmp.eq.f32.partialorder %v5332, 8.507059e+37
        %v5334 = vand.u32 %v5245, 2147483648
        %v5335 = vor.u32 1.1754944e-38, %v5334
        %v5336 = vsel %vm5333, %v5335, %v5331
        %v5337 = vmul.f32 %v5196, %v5336
        %v5338 = vrcp.pop %v5246
        %v5339 = vmul.f32 %v5246, %v5338
        %v5340 = vsub.f32 1.0, %v5339
        %v5341 = vmul.f32 %v5338, %v5340
        %v5342 = vadd.f32 %v5338, %v5341
        %vm5343 = vweird.f32 %v5246
        %vm5344 = vweird.f32 %v5338
        %vm5345 = vmor %vm5343, %vm5344
        %v5346 = vsel %vm5345, %v5338, %v5342
        %v5347 = vand.u32 2147483647, %v5246
        %vm5348 = vcmp.eq.f32.partialorder %v5347, 8.507059e+37
        %v5349 = vand.u32 %v5246, 2147483648
        %v5350 = vor.u32 1.1754944e-38, %v5349
        %v5351 = vsel %vm5348, %v5350, %v5346
        %v5352 = vmul.f32 %v5197, %v5351
        %v5353 = vrcp.pop %v5247
        %v5354 = vmul.f32 %v5247, %v5353
        %v5355 = vsub.f32 1.0, %v5354
        %v5356 = vmul.f32 %v5353, %v5355
        %v5357 = vadd.f32 %v5353, %v5356
        %vm5358 = vweird.f32 %v5247
        %vm5359 = vweird.f32 %v5353
        %vm5360 = vmor %vm5358, %vm5359
        %v5361 = vsel %vm5360, %v5353, %v5357
        %v5362 = vand.u32 2147483647, %v5247
        %vm5363 = vcmp.eq.f32.partialorder %v5362, 8.507059e+37
        %v5364 = vand.u32 %v5247, 2147483648
        %v5365 = vor.u32 1.1754944e-38, %v5364
        %v5366 = vsel %vm5363, %v5365, %v5361
        %v5367 = vmul.f32 %v5198, %v5366
        %v5368 = vpack.c.bf16 %v5277, %v5262
        %v5369 = vpack.c.bf16 %v5307, %v5292
        %v5370 = vpack.c.bf16 %v5337, %v5322
        %v5371 = vpack.c.bf16 %v5367, %v5352
        %5372 = vmatpush.bf16.msra.mxu0 %v5097
        %5373 = vmatpush.bf16.msra.mxu0 %v5096
        %5374 = vmatpush.bf16.msra.mxu0 %v5095
        %5375 = vmatpush.bf16.msra.mxu0 %v5094
        %5376 = vmatpush.bf16.msra.mxu0 %v5093
        %5377 = vmatpush.bf16.msra.mxu0 %v5092
        %5378 = vmatpush.bf16.msra.mxu0 %v5091
        %5379 = vmatpush.bf16.msra.mxu0 %v5090
        %5380 = vmatmul.bf16.gmra.mxu0 %v5368
        %v5381 = vpop.f32.mrf.mxu0
        %v5382 = vadd.f32 0.0, %v5381
        %v5383 = vpop.f32.mrf.mxu0
        %v5384 = vadd.f32 0.0, %v5383
        %5385 = vmatmul.bf16.gmra.mxu0 %v5369
        %v5386 = vpop.f32.mrf.mxu0
        %v5387 = vadd.f32 0.0, %v5386
        %v5388 = vpop.f32.mrf.mxu0
        %v5389 = vadd.f32 0.0, %v5388
        %5390 = vmatmul.bf16.gmra.mxu0 %v5370
        %v5391 = vpop.f32.mrf.mxu0
        %v5392 = vadd.f32 0.0, %v5391
        %v5393 = vpop.f32.mrf.mxu0
        %v5394 = vadd.f32 0.0, %v5393
        %5395 = vmatmul.bf16.gmra.mxu0 %v5371
        %v5396 = vpop.f32.mrf.mxu0
        %v5397 = vadd.f32 0.0, %v5396
        %v5398 = vpop.f32.mrf.mxu0
        %v5399 = vadd.f32 0.0, %v5398
        %5400 = vdwg.mxu0
        %v5401 = vpack.c.bf16 %v5384, %v5382
        %v5402 = vpack.c.bf16 %v5389, %v5387
        %v5403 = vpack.c.bf16 %v5394, %v5392
        %v5404 = vpack.c.bf16 %v5399, %v5397
        %v5406 = vsel %vm1822, %v5401, 0
        %v5409 = vsel %vm1822, %v5402, 0
        %v5412 = vsel %vm1822, %v5403, 0
        %v5415 = vsel %vm1822, %v5404, 0
        %5417 = vmatpush.bf16.msra.mxu0 0
        %5418 = vmatpush.bf16.msra.mxu0 0
        %5419 = vmatpush.bf16.msra.mxu0 0
        %5420 = vmatpush.bf16.msra.mxu0 0
        %5421 = vmatpush.bf16.msra.mxu0 %v1817
        %5422 = vmatpush.bf16.msra.mxu0 %v1816
        %5423 = vmatpush.bf16.msra.mxu0 %v1815
        %5424 = vmatpush.bf16.msra.mxu0 %v1814
        %5425 = vmatmul.bf16.gmra.mxu0 %v5406
        %v5426 = vpop.f32.mrf.mxu0
        %v5427 = vadd.f32 0.0, %v5426
        %v5428 = vpop.f32.mrf.mxu0
        %v5429 = vadd.f32 0.0, %v5428
        %5430 = vmatmul.bf16.gmra.mxu0 %v5409
        %v5431 = vpop.f32.mrf.mxu0
        %v5432 = vadd.f32 0.0, %v5431
        %v5433 = vpop.f32.mrf.mxu0
        %v5434 = vadd.f32 0.0, %v5433
        %5435 = vmatmul.bf16.gmra.mxu0 %v5412
        %v5436 = vpop.f32.mrf.mxu0
        %v5437 = vadd.f32 0.0, %v5436
        %v5438 = vpop.f32.mrf.mxu0
        %v5439 = vadd.f32 0.0, %v5438
        %5440 = vmatmul.bf16.gmra.mxu0 %v5415
        %v5441 = vpop.f32.mrf.mxu0
        %v5442 = vadd.f32 0.0, %v5441
        %v5443 = vpop.f32.mrf.mxu0
        %v5444 = vadd.f32 0.0, %v5443
        %5445 = vdwg.mxu0
        %v5446 = vsub.f32 %v5382, %v5427
        %v5447 = vsub.f32 %v5384, %v5429
        %v5448 = vsub.f32 %v5387, %v5432
        %v5449 = vsub.f32 %v5389, %v5434
        %v5450 = vsub.f32 %v5392, %v5437
        %v5451 = vsub.f32 %v5394, %v5439
        %v5452 = vsub.f32 %v5397, %v5442
        %v5453 = vsub.f32 %v5399, %v5444
        %v5454 = vmul.f32 %v5446, %v5446
        %v5455 = vmul.f32 %v5447, %v5447
        %v5456 = vmul.f32 %v5448, %v5448
        %v5457 = vmul.f32 %v5449, %v5449
        %v5458 = vmul.f32 %v5450, %v5450
        %v5459 = vmul.f32 %v5451, %v5451
        %v5460 = vmul.f32 %v5452, %v5452
        %v5461 = vmul.f32 %v5453, %v5453
        %v5462 = vpack.c.bf16 %v5455, %v5454
        %v5463 = vpack.c.bf16 %v5457, %v5456
        %v5464 = vpack.c.bf16 %v5459, %v5458
        %v5465 = vpack.c.bf16 %v5461, %v5460
        %v5467 = vsel %vm1822, %v5462, 0
        %v5470 = vsel %vm1822, %v5463, 0
        %v5473 = vsel %vm1822, %v5464, 0
        %v5476 = vsel %vm1822, %v5465, 0
        %5478 = vmatpush.bf16.msra.mxu0 0
        %5479 = vmatpush.bf16.msra.mxu0 0
        %5480 = vmatpush.bf16.msra.mxu0 0
        %5481 = vmatpush.bf16.msra.mxu0 0
        %5482 = vmatpush.bf16.msra.mxu0 %v1817
        %5483 = vmatpush.bf16.msra.mxu0 %v1816
        %5484 = vmatpush.bf16.msra.mxu0 %v1815
        %5485 = vmatpush.bf16.msra.mxu0 %v1814
        %5486 = vmatmul.bf16.gmra.mxu0 %v5467
        %v5487 = vpop.f32.mrf.mxu0
        %v5488 = vadd.f32 1e-05, %v5487
        %v5489 = vpop.f32.mrf.mxu0
        %v5490 = vadd.f32 1e-05, %v5489
        %5491 = vmatmul.bf16.gmra.mxu0 %v5470
        %v5492 = vpop.f32.mrf.mxu0
        %v5493 = vadd.f32 1e-05, %v5492
        %v5494 = vpop.f32.mrf.mxu0
        %v5495 = vadd.f32 1e-05, %v5494
        %5496 = vmatmul.bf16.gmra.mxu0 %v5473
        %v5497 = vpop.f32.mrf.mxu0
        %v5498 = vadd.f32 1e-05, %v5497
        %v5499 = vpop.f32.mrf.mxu0
        %v5500 = vadd.f32 1e-05, %v5499
        %5501 = vmatmul.bf16.gmra.mxu0 %v5476
        %v5502 = vpop.f32.mrf.mxu0
        %v5503 = vadd.f32 1e-05, %v5502
        %v5504 = vpop.f32.mrf.mxu0
        %v5505 = vadd.f32 1e-05, %v5504
        %5506 = vdwg.mxu0
        %v5507 = vrsqrt.pop %v5488
        %v5508 = vmul.f32 %v5507, %v5488
        %v5509 = vmul.f32 %v5508, %v5507
        %v5510 = vmul.f32 0.5, %v5509
        %v5511 = vsub.f32 1.5, %v5510
        %v5512 = vmul.f32 %v5507, %v5511
        %vm5513 = vweird.f32 %v5488
        %vm5514 = vweird.f32 %v5507
        %vm5515 = vmor %vm5513, %vm5514
        %v5516 = vsel %vm5515, %v5507, %v5512
        %v5517 = vrsqrt.pop %v5490
        %v5518 = vmul.f32 %v5517, %v5490
        %v5519 = vmul.f32 %v5518, %v5517
        %v5520 = vmul.f32 0.5, %v5519
        %v5521 = vsub.f32 1.5, %v5520
        %v5522 = vmul.f32 %v5517, %v5521
        %vm5523 = vweird.f32 %v5490
        %vm5524 = vweird.f32 %v5517
        %vm5525 = vmor %vm5523, %vm5524
        %v5526 = vsel %vm5525, %v5517, %v5522
        %v5527 = vrsqrt.pop %v5493
        %v5528 = vmul.f32 %v5527, %v5493
        %v5529 = vmul.f32 %v5528, %v5527
        %v5530 = vmul.f32 0.5, %v5529
        %v5531 = vsub.f32 1.5, %v5530
        %v5532 = vmul.f32 %v5527, %v5531
        %vm5533 = vweird.f32 %v5493
        %vm5534 = vweird.f32 %v5527
        %vm5535 = vmor %vm5533, %vm5534
        %v5536 = vsel %vm5535, %v5527, %v5532
        %v5537 = vrsqrt.pop %v5495
        %v5538 = vmul.f32 %v5537, %v5495
        %v5539 = vmul.f32 %v5538, %v5537
        %v5540 = vmul.f32 0.5, %v5539
        %v5541 = vsub.f32 1.5, %v5540
        %v5542 = vmul.f32 %v5537, %v5541
        %vm5543 = vweird.f32 %v5495
        %vm5544 = vweird.f32 %v5537
        %vm5545 = vmor %vm5543, %vm5544
        %v5546 = vsel %vm5545, %v5537, %v5542
        %v5547 = vrsqrt.pop %v5498
        %v5548 = vmul.f32 %v5547, %v5498
        %v5549 = vmul.f32 %v5548, %v5547
        %v5550 = vmul.f32 0.5, %v5549
        %v5551 = vsub.f32 1.5, %v5550
        %v5552 = vmul.f32 %v5547, %v5551
        %vm5553 = vweird.f32 %v5498
        %vm5554 = vweird.f32 %v5547
        %vm5555 = vmor %vm5553, %vm5554
        %v5556 = vsel %vm5555, %v5547, %v5552
        %v5557 = vrsqrt.pop %v5500
        %v5558 = vmul.f32 %v5557, %v5500
        %v5559 = vmul.f32 %v5558, %v5557
        %v5560 = vmul.f32 0.5, %v5559
        %v5561 = vsub.f32 1.5, %v5560
        %v5562 = vmul.f32 %v5557, %v5561
        %vm5563 = vweird.f32 %v5500
        %vm5564 = vweird.f32 %v5557
        %vm5565 = vmor %vm5563, %vm5564
        %v5566 = vsel %vm5565, %v5557, %v5562
        %v5567 = vrsqrt.pop %v5503
        %v5568 = vmul.f32 %v5567, %v5503
        %v5569 = vmul.f32 %v5568, %v5567
        %v5570 = vmul.f32 0.5, %v5569
        %v5571 = vsub.f32 1.5, %v5570
        %v5572 = vmul.f32 %v5567, %v5571
        %vm5573 = vweird.f32 %v5503
        %vm5574 = vweird.f32 %v5567
        %vm5575 = vmor %vm5573, %vm5574
        %v5576 = vsel %vm5575, %v5567, %v5572
        %v5577 = vrsqrt.pop %v5505
        %v5578 = vmul.f32 %v5577, %v5505
        %v5579 = vmul.f32 %v5578, %v5577
        %v5580 = vmul.f32 0.5, %v5579
        %v5581 = vsub.f32 1.5, %v5580
        %v5582 = vmul.f32 %v5577, %v5581
        %vm5583 = vweird.f32 %v5505
        %vm5584 = vweird.f32 %v5577
        %vm5585 = vmor %vm5583, %vm5584
        %v5586 = vsel %vm5585, %v5577, %v5582
        %v5587 = vmul.f32 %v5446, %v5516
        %v5588 = vmul.f32 %v5447, %v5526
        %v5589 = vmul.f32 %v5448, %v5536
        %v5590 = vmul.f32 %v5449, %v5546
        %v5591 = vmul.f32 %v5450, %v5556
        %v5592 = vmul.f32 %v5451, %v5566
        %v5593 = vmul.f32 %v5452, %v5576
        %v5594 = vmul.f32 %v5453, %v5586
        %v5595 = vmul.f32 %v5042, %v1300
        %v5596 = vmul.f32 %v5043, %v1302
        %v5597 = vmul.f32 %v5044, %v1304
        %v5598 = vmul.f32 %v5045, %v1306
        %v5599 = vmul.f32 %v5046, %v1308
        %v5600 = vmul.f32 %v5047, %v1310
        %v5601 = vmul.f32 %v5048, %v1312
        %v5602 = vmul.f32 %v5049, %v1314
        %v5603 = vmul.f32 %v5042, %v1316
        %v5604 = vmul.f32 %v5043, %v1318
        %v5605 = vmul.f32 %v5044, %v1320
        %v5606 = vmul.f32 %v5045, %v1322
        %v5607 = vmul.f32 %v5046, %v1324
        %v5608 = vmul.f32 %v5047, %v1326
        %v5609 = vmul.f32 %v5048, %v1328
        %v5610 = vmul.f32 %v5049, %v1330
        %v5611 = vpack.c.bf16 %v5596, %v5595
        %v5612 = vpack.c.bf16 %v5598, %v5597
        %v5613 = vpack.c.bf16 %v5600, %v5599
        %v5614 = vpack.c.bf16 %v5602, %v5601
        %v5615 = vpack.c.bf16 %v5604, %v5603
        %v5616 = vpack.c.bf16 %v5606, %v5605
        %v5617 = vpack.c.bf16 %v5608, %v5607
        %v5618 = vpack.c.bf16 %v5610, %v5609
        %v5619 = vmul.f32 %v4919, %v1371
        %v5620 = vmul.f32 %v4921, %v1372
        %v5621 = vmul.f32 %v4924, %v1373
        %v5622 = vmul.f32 %v4926, %v1374
        %v5623 = vmul.f32 %v4929, %v1375
        %v5624 = vmul.f32 %v4931, %v1376
        %v5625 = vmul.f32 %v4934, %v1377
        %v5626 = vmul.f32 %v4936, %v1378
        %v5627 = vmul.f32 %v4919, %v1379
        %v5628 = vmul.f32 %v4921, %v1380
        %v5629 = vmul.f32 %v4924, %v1381
        %v5630 = vmul.f32 %v4926, %v1382
        %v5631 = vmul.f32 %v4929, %v1383
        %v5632 = vmul.f32 %v4931, %v1384
        %v5633 = vmul.f32 %v4934, %v1385
        %v5634 = vmul.f32 %v4936, %v1386
        %v5635 = vpack.c.bf16 %v5620, %v5619
        %v5636 = vpack.c.bf16 %v5622, %v5621
        %v5637 = vpack.c.bf16 %v5624, %v5623
        %v5638 = vpack.c.bf16 %v5626, %v5625
        %v5639 = vpack.c.bf16 %v5628, %v5627
        %v5640 = vpack.c.bf16 %v5630, %v5629
        %v5641 = vpack.c.bf16 %v5632, %v5631
        %v5642 = vpack.c.bf16 %v5634, %v5633
        %v5643 = vpack.c.bf16 %v5043, %v5042
        %v5644 = vpack.c.bf16 %v5045, %v5044
        %v5645 = vpack.c.bf16 %v5047, %v5046
        %v5646 = vpack.c.bf16 %v5049, %v5048
        %5655 = vrot.lane.b32.xlu0 %v5611, 96
        %v5656 = vpop.permute.xlu0 %5655
        %5657 = vrot.lane.b32.xlu0 %v5612, 96
        %v5658 = vpop.permute.xlu0 %5657
        %5659 = vrot.lane.b32.xlu0 %v5613, 96
        %v5660 = vpop.permute.xlu0 %5659
        %5661 = vrot.lane.b32.xlu0 %v5614, 96
        %v5662 = vpop.permute.xlu0 %5661
        %5663 = vrot.lane.b32.xlu0 %v5615, 96
        %v5664 = vpop.permute.xlu0 %5663
        %5665 = vrot.lane.b32.xlu0 %v5616, 96
        %v5666 = vpop.permute.xlu0 %5665
        %5667 = vrot.lane.b32.xlu0 %v5617, 96
        %v5668 = vpop.permute.xlu0 %5667
        %5669 = vrot.lane.b32.xlu0 %v5618, 96
        %v5670 = vpop.permute.xlu0 %5669
        %v5672 = vsel %vm501, %v5643, 0
        %v5675 = vsel %vm501, %v5644, 0
        %v5678 = vsel %vm501, %v5645, 0
        %v5681 = vsel %vm501, %v5646, 0
        %v5684 = vsel %vm501, %v5656, 0
        %v5687 = vsel %vm501, %v5658, 0
        %v5690 = vsel %vm501, %v5660, 0
        %v5693 = vsel %vm501, %v5662, 0
        %v5696 = vsel %vm501, %v5664, 0
        %v5699 = vsel %vm501, %v5666, 0
        %v5702 = vsel %vm501, %v5668, 0
        %v5705 = vsel %vm501, %v5670, 0
        %5707 = vmatpush.bf16.xpose.msra.mxu0 %v5705
        %5708 = vmatpush.bf16.xpose.msra.mxu0 %v5702
        %5709 = vmatpush.bf16.xpose.msra.mxu0 %v5699
        %5710 = vmatpush.bf16.xpose.msra.mxu0 %v5696
        %5711 = vmatpush.bf16.xpose.msra.mxu0 %v5693
        %5712 = vmatpush.bf16.xpose.msra.mxu0 %v5690
        %5713 = vmatpush.bf16.xpose.msra.mxu0 %v5687
        %5714 = vmatpush.bf16.xpose.msra.mxu0 %v5684
        %5715 = vmatmul.bf16.gmra.mxu0 %v5672
        %v5716 = vpop.f32.mrf.mxu0
        %v5717 = vadd.f32 0.0, %v5716
        %v5718 = vpop.f32.mrf.mxu0
        %v5719 = vadd.f32 0.0, %v5718
        %5720 = vmatmul.bf16.gmra.mxu0 %v5675
        %v5721 = vpop.f32.mrf.mxu0
        %v5722 = vadd.f32 0.0, %v5721
        %v5723 = vpop.f32.mrf.mxu0
        %v5724 = vadd.f32 0.0, %v5723
        %5725 = vmatmul.bf16.gmra.mxu0 %v5678
        %v5726 = vpop.f32.mrf.mxu0
        %v5727 = vadd.f32 0.0, %v5726
        %v5728 = vpop.f32.mrf.mxu0
        %v5729 = vadd.f32 0.0, %v5728
        %5730 = vmatmul.bf16.gmra.mxu0 %v5681
        %v5731 = vpop.f32.mrf.mxu0
        %v5732 = vadd.f32 0.0, %v5731
        %v5733 = vpop.f32.mrf.mxu0
        %v5734 = vadd.f32 0.0, %v5733
        %5735 = vdwg.mxu0
        %v5736 = vmul.f32 %v5717, %v1504
        %v5737 = vmul.f32 %v5719, %v1505
        %v5738 = vmul.f32 %v5722, %v1506
        %v5739 = vmul.f32 %v5724, %v1507
        %v5740 = vmul.f32 %v5727, %v1508
        %v5741 = vmul.f32 %v5729, %v1509
        %v5742 = vmul.f32 %v5732, %v1510
        %v5743 = vmul.f32 %v5734, %v1511
        %v5744 = vand.u32 2147483647, %v5736
        %v5745 = vand.u32 2147483647, %v5737
        %v5746 = vand.u32 2147483647, %v5738
        %v5747 = vand.u32 2147483647, %v5739
        %v5748 = vand.u32 2147483647, %v5740
        %v5749 = vand.u32 2147483647, %v5741
        %v5750 = vand.u32 2147483647, %v5742
        %v5751 = vand.u32 2147483647, %v5743
        %v5752 = vpack.c.bf16 %v5745, %v5744
        %v5753 = vpack.c.bf16 %v5747, %v5746
        %v5754 = vpack.c.bf16 %v5749, %v5748
        %v5755 = vpack.c.bf16 %v5751, %v5750
        %5756 = vmatpush.bf16.msra.mxu0 %v1587
        %5757 = vmatpush.bf16.msra.mxu0 %v1586
        %5758 = vmatpush.bf16.msra.mxu0 %v1585
        %5759 = vmatpush.bf16.msra.mxu0 %v1584
        %5760 = vmatpush.bf16.msra.mxu0 %v1583
        %5761 = vmatpush.bf16.msra.mxu0 %v1582
        %5762 = vmatpush.bf16.msra.mxu0 %v1581
        %5763 = vmatpush.bf16.msra.mxu0 %v1580
        %5764 = vmatmul.bf16.gmra.mxu0 %v5752
        %v5765 = vpop.f32.mrf.mxu0
        %v5766 = vadd.f32 0.0, %v5765
        %v5767 = vpop.f32.mrf.mxu0
        %v5768 = vadd.f32 0.0, %v5767
        %5769 = vmatmul.bf16.gmra.mxu0 %v5753
        %v5770 = vpop.f32.mrf.mxu0
        %v5771 = vadd.f32 0.0, %v5770
        %v5772 = vpop.f32.mrf.mxu0
        %v5773 = vadd.f32 0.0, %v5772
        %5774 = vmatmul.bf16.gmra.mxu0 %v5754
        %v5775 = vpop.f32.mrf.mxu0
        %v5776 = vadd.f32 0.0, %v5775
        %v5777 = vpop.f32.mrf.mxu0
        %v5778 = vadd.f32 0.0, %v5777
        %5779 = vmatmul.bf16.gmra.mxu0 %v5755
        %v5780 = vpop.f32.mrf.mxu0
        %v5781 = vadd.f32 0.0, %v5780
        %v5782 = vpop.f32.mrf.mxu0
        %v5783 = vadd.f32 0.0, %v5782
        %5784 = vdwg.mxu0
        %v5785 = vmax.f32 %v5766, 1.0
        %v5786 = vmax.f32 %v5768, 1.0
        %v5787 = vmax.f32 %v5771, 1.0
        %v5788 = vmax.f32 %v5773, 1.0
        %v5789 = vmax.f32 %v5776, 1.0
        %v5790 = vmax.f32 %v5778, 1.0
        %v5791 = vmax.f32 %v5781, 1.0
        %v5792 = vmax.f32 %v5783, 1.0
        %v5793 = vrcp.pop %v5785
        %v5794 = vmul.f32 %v5785, %v5793
        %v5795 = vsub.f32 1.0, %v5794
        %v5796 = vmul.f32 %v5793, %v5795
        %v5797 = vadd.f32 %v5793, %v5796
        %vm5798 = vweird.f32 %v5785
        %vm5799 = vweird.f32 %v5793
        %vm5800 = vmor %vm5798, %vm5799
        %v5801 = vsel %vm5800, %v5793, %v5797
        %v5802 = vand.u32 2147483647, %v5785
        %vm5803 = vcmp.eq.f32.partialorder %v5802, 8.507059e+37
        %v5804 = vand.u32 %v5785, 2147483648
        %v5805 = vor.u32 1.1754944e-38, %v5804
        %v5806 = vsel %vm5803, %v5805, %v5801
        %v5807 = vmul.f32 %v5736, %v5806
        %v5808 = vrcp.pop %v5786
        %v5809 = vmul.f32 %v5786, %v5808
        %v5810 = vsub.f32 1.0, %v5809
        %v5811 = vmul.f32 %v5808, %v5810
        %v5812 = vadd.f32 %v5808, %v5811
        %vm5813 = vweird.f32 %v5786
        %vm5814 = vweird.f32 %v5808
        %vm5815 = vmor %vm5813, %vm5814
        %v5816 = vsel %vm5815, %v5808, %v5812
        %v5817 = vand.u32 2147483647, %v5786
        %vm5818 = vcmp.eq.f32.partialorder %v5817, 8.507059e+37
        %v5819 = vand.u32 %v5786, 2147483648
        %v5820 = vor.u32 1.1754944e-38, %v5819
        %v5821 = vsel %vm5818, %v5820, %v5816
        %v5822 = vmul.f32 %v5737, %v5821
        %v5823 = vrcp.pop %v5787
        %v5824 = vmul.f32 %v5787, %v5823
        %v5825 = vsub.f32 1.0, %v5824
        %v5826 = vmul.f32 %v5823, %v5825
        %v5827 = vadd.f32 %v5823, %v5826
        %vm5828 = vweird.f32 %v5787
        %vm5829 = vweird.f32 %v5823
        %vm5830 = vmor %vm5828, %vm5829
        %v5831 = vsel %vm5830, %v5823, %v5827
        %v5832 = vand.u32 2147483647, %v5787
        %vm5833 = vcmp.eq.f32.partialorder %v5832, 8.507059e+37
        %v5834 = vand.u32 %v5787, 2147483648
        %v5835 = vor.u32 1.1754944e-38, %v5834
        %v5836 = vsel %vm5833, %v5835, %v5831
        %v5837 = vmul.f32 %v5738, %v5836
        %v5838 = vrcp.pop %v5788
        %v5839 = vmul.f32 %v5788, %v5838
        %v5840 = vsub.f32 1.0, %v5839
        %v5841 = vmul.f32 %v5838, %v5840
        %v5842 = vadd.f32 %v5838, %v5841
        %vm5843 = vweird.f32 %v5788
        %vm5844 = vweird.f32 %v5838
        %vm5845 = vmor %vm5843, %vm5844
        %v5846 = vsel %vm5845, %v5838, %v5842
        %v5847 = vand.u32 2147483647, %v5788
        %vm5848 = vcmp.eq.f32.partialorder %v5847, 8.507059e+37
        %v5849 = vand.u32 %v5788, 2147483648
        %v5850 = vor.u32 1.1754944e-38, %v5849
        %v5851 = vsel %vm5848, %v5850, %v5846
        %v5852 = vmul.f32 %v5739, %v5851
        %v5853 = vrcp.pop %v5789
        %v5854 = vmul.f32 %v5789, %v5853
        %v5855 = vsub.f32 1.0, %v5854
        %v5856 = vmul.f32 %v5853, %v5855
        %v5857 = vadd.f32 %v5853, %v5856
        %vm5858 = vweird.f32 %v5789
        %vm5859 = vweird.f32 %v5853
        %vm5860 = vmor %vm5858, %vm5859
        %v5861 = vsel %vm5860, %v5853, %v5857
        %v5862 = vand.u32 2147483647, %v5789
        %vm5863 = vcmp.eq.f32.partialorder %v5862, 8.507059e+37
        %v5864 = vand.u32 %v5789, 2147483648
        %v5865 = vor.u32 1.1754944e-38, %v5864
        %v5866 = vsel %vm5863, %v5865, %v5861
        %v5867 = vmul.f32 %v5740, %v5866
        %v5868 = vrcp.pop %v5790
        %v5869 = vmul.f32 %v5790, %v5868
        %v5870 = vsub.f32 1.0, %v5869
        %v5871 = vmul.f32 %v5868, %v5870
        %v5872 = vadd.f32 %v5868, %v5871
        %vm5873 = vweird.f32 %v5790
        %vm5874 = vweird.f32 %v5868
        %vm5875 = vmor %vm5873, %vm5874
        %v5876 = vsel %vm5875, %v5868, %v5872
        %v5877 = vand.u32 2147483647, %v5790
        %vm5878 = vcmp.eq.f32.partialorder %v5877, 8.507059e+37
        %v5879 = vand.u32 %v5790, 2147483648
        %v5880 = vor.u32 1.1754944e-38, %v5879
        %v5881 = vsel %vm5878, %v5880, %v5876
        %v5882 = vmul.f32 %v5741, %v5881
        %v5883 = vrcp.pop %v5791
        %v5884 = vmul.f32 %v5791, %v5883
        %v5885 = vsub.f32 1.0, %v5884
        %v5886 = vmul.f32 %v5883, %v5885
        %v5887 = vadd.f32 %v5883, %v5886
        %vm5888 = vweird.f32 %v5791
        %vm5889 = vweird.f32 %v5883
        %vm5890 = vmor %vm5888, %vm5889
        %v5891 = vsel %vm5890, %v5883, %v5887
        %v5892 = vand.u32 2147483647, %v5791
        %vm5893 = vcmp.eq.f32.partialorder %v5892, 8.507059e+37
        %v5894 = vand.u32 %v5791, 2147483648
        %v5895 = vor.u32 1.1754944e-38, %v5894
        %v5896 = vsel %vm5893, %v5895, %v5891
        %v5897 = vmul.f32 %v5742, %v5896
        %v5898 = vrcp.pop %v5792
        %v5899 = vmul.f32 %v5792, %v5898
        %v5900 = vsub.f32 1.0, %v5899
        %v5901 = vmul.f32 %v5898, %v5900
        %v5902 = vadd.f32 %v5898, %v5901
        %vm5903 = vweird.f32 %v5792
        %vm5904 = vweird.f32 %v5898
        %vm5905 = vmor %vm5903, %vm5904
        %v5906 = vsel %vm5905, %v5898, %v5902
        %v5907 = vand.u32 2147483647, %v5792
        %vm5908 = vcmp.eq.f32.partialorder %v5907, 8.507059e+37
        %v5909 = vand.u32 %v5792, 2147483648
        %v5910 = vor.u32 1.1754944e-38, %v5909
        %v5911 = vsel %vm5908, %v5910, %v5906
        %v5912 = vmul.f32 %v5743, %v5911
        %v5913 = vpack.c.bf16 %v5822, %v5807
        %v5914 = vpack.c.bf16 %v5852, %v5837
        %v5915 = vpack.c.bf16 %v5882, %v5867
        %v5916 = vpack.c.bf16 %v5912, %v5897
        %5917 = vmatpush.bf16.msra.mxu0 %v5642
        %5918 = vmatpush.bf16.msra.mxu0 %v5641
        %5919 = vmatpush.bf16.msra.mxu0 %v5640
        %5920 = vmatpush.bf16.msra.mxu0 %v5639
        %5921 = vmatpush.bf16.msra.mxu0 %v5638
        %5922 = vmatpush.bf16.msra.mxu0 %v5637
        %5923 = vmatpush.bf16.msra.mxu0 %v5636
        %5924 = vmatpush.bf16.msra.mxu0 %v5635
        %5925 = vmatmul.bf16.gmra.mxu0 %v5913
        %v5926 = vpop.f32.mrf.mxu0
        %v5927 = vadd.f32 0.0, %v5926
        %v5928 = vpop.f32.mrf.mxu0
        %v5929 = vadd.f32 0.0, %v5928
        %5930 = vmatmul.bf16.gmra.mxu0 %v5914
        %v5931 = vpop.f32.mrf.mxu0
        %v5932 = vadd.f32 0.0, %v5931
        %v5933 = vpop.f32.mrf.mxu0
        %v5934 = vadd.f32 0.0, %v5933
        %5935 = vmatmul.bf16.gmra.mxu0 %v5915
        %v5936 = vpop.f32.mrf.mxu0
        %v5937 = vadd.f32 0.0, %v5936
        %v5938 = vpop.f32.mrf.mxu0
        %v5939 = vadd.f32 0.0, %v5938
        %5940 = vmatmul.bf16.gmra.mxu0 %v5916
        %v5941 = vpop.f32.mrf.mxu0
        %v5942 = vadd.f32 0.0, %v5941
        %v5943 = vpop.f32.mrf.mxu0
        %v5944 = vadd.f32 0.0, %v5943
        %5945 = vdwg.mxu0
        %v5946 = vpack.c.bf16 %v5929, %v5927
        %v5947 = vpack.c.bf16 %v5934, %v5932
        %v5948 = vpack.c.bf16 %v5939, %v5937
        %v5949 = vpack.c.bf16 %v5944, %v5942
        %v5951 = vsel %vm1822, %v5946, 0
        %v5954 = vsel %vm1822, %v5947, 0
        %v5957 = vsel %vm1822, %v5948, 0
        %v5960 = vsel %vm1822, %v5949, 0
        %5962 = vmatpush.bf16.msra.mxu0 0
        %5963 = vmatpush.bf16.msra.mxu0 0
        %5964 = vmatpush.bf16.msra.mxu0 0
        %5965 = vmatpush.bf16.msra.mxu0 0
        %5966 = vmatpush.bf16.msra.mxu0 %v1817
        %5967 = vmatpush.bf16.msra.mxu0 %v1816
        %5968 = vmatpush.bf16.msra.mxu0 %v1815
        %5969 = vmatpush.bf16.msra.mxu0 %v1814
        %5970 = vmatmul.bf16.gmra.mxu0 %v5951
        %v5971 = vpop.f32.mrf.mxu0
        %v5972 = vadd.f32 0.0, %v5971
        %v5973 = vpop.f32.mrf.mxu0
        %v5974 = vadd.f32 0.0, %v5973
        %5975 = vmatmul.bf16.gmra.mxu0 %v5954
        %v5976 = vpop.f32.mrf.mxu0
        %v5977 = vadd.f32 0.0, %v5976
        %v5978 = vpop.f32.mrf.mxu0
        %v5979 = vadd.f32 0.0, %v5978
        %5980 = vmatmul.bf16.gmra.mxu0 %v5957
        %v5981 = vpop.f32.mrf.mxu0
        %v5982 = vadd.f32 0.0, %v5981
        %v5983 = vpop.f32.mrf.mxu0
        %v5984 = vadd.f32 0.0, %v5983
        %5985 = vmatmul.bf16.gmra.mxu0 %v5960
        %v5986 = vpop.f32.mrf.mxu0
        %v5987 = vadd.f32 0.0, %v5986
        %v5988 = vpop.f32.mrf.mxu0
        %v5989 = vadd.f32 0.0, %v5988
        %5990 = vdwg.mxu0
        %v5991 = vsub.f32 %v5927, %v5972
        %v5992 = vsub.f32 %v5929, %v5974
        %v5993 = vsub.f32 %v5932, %v5977
        %v5994 = vsub.f32 %v5934, %v5979
        %v5995 = vsub.f32 %v5937, %v5982
        %v5996 = vsub.f32 %v5939, %v5984
        %v5997 = vsub.f32 %v5942, %v5987
        %v5998 = vsub.f32 %v5944, %v5989
        %v5999 = vmul.f32 %v5991, %v5991
        %v6000 = vmul.f32 %v5992, %v5992
        %v6001 = vmul.f32 %v5993, %v5993
        %v6002 = vmul.f32 %v5994, %v5994
        %v6003 = vmul.f32 %v5995, %v5995
        %v6004 = vmul.f32 %v5996, %v5996
        %v6005 = vmul.f32 %v5997, %v5997
        %v6006 = vmul.f32 %v5998, %v5998
        %v6007 = vpack.c.bf16 %v6000, %v5999
        %v6008 = vpack.c.bf16 %v6002, %v6001
        %v6009 = vpack.c.bf16 %v6004, %v6003
        %v6010 = vpack.c.bf16 %v6006, %v6005
        %v6012 = vsel %vm1822, %v6007, 0
        %v6015 = vsel %vm1822, %v6008, 0
        %v6018 = vsel %vm1822, %v6009, 0
        %v6021 = vsel %vm1822, %v6010, 0
        %6023 = vmatpush.bf16.msra.mxu0 0
        %6024 = vmatpush.bf16.msra.mxu0 0
        %6025 = vmatpush.bf16.msra.mxu0 0
        %6026 = vmatpush.bf16.msra.mxu0 0
        %6027 = vmatpush.bf16.msra.mxu0 %v1817
        %6028 = vmatpush.bf16.msra.mxu0 %v1816
        %6029 = vmatpush.bf16.msra.mxu0 %v1815
        %6030 = vmatpush.bf16.msra.mxu0 %v1814
        %6031 = vmatmul.bf16.gmra.mxu0 %v6012
        %v6032 = vpop.f32.mrf.mxu0
        %v6033 = vadd.f32 1e-05, %v6032
        %v6034 = vpop.f32.mrf.mxu0
        %v6035 = vadd.f32 1e-05, %v6034
        %6036 = vmatmul.bf16.gmra.mxu0 %v6015
        %v6037 = vpop.f32.mrf.mxu0
        %v6038 = vadd.f32 1e-05, %v6037
        %v6039 = vpop.f32.mrf.mxu0
        %v6040 = vadd.f32 1e-05, %v6039
        %6041 = vmatmul.bf16.gmra.mxu0 %v6018
        %v6042 = vpop.f32.mrf.mxu0
        %v6043 = vadd.f32 1e-05, %v6042
        %v6044 = vpop.f32.mrf.mxu0
        %v6045 = vadd.f32 1e-05, %v6044
        %6046 = vmatmul.bf16.gmra.mxu0 %v6021
        %v6047 = vpop.f32.mrf.mxu0
        %v6048 = vadd.f32 1e-05, %v6047
        %v6049 = vpop.f32.mrf.mxu0
        %v6050 = vadd.f32 1e-05, %v6049
        %6051 = vdwg.mxu0
        %v6052 = vrsqrt.pop %v6033
        %v6053 = vmul.f32 %v6052, %v6033
        %v6054 = vmul.f32 %v6053, %v6052
        %v6055 = vmul.f32 0.5, %v6054
        %v6056 = vsub.f32 1.5, %v6055
        %v6057 = vmul.f32 %v6052, %v6056
        %vm6058 = vweird.f32 %v6033
        %vm6059 = vweird.f32 %v6052
        %vm6060 = vmor %vm6058, %vm6059
        %v6061 = vsel %vm6060, %v6052, %v6057
        %v6062 = vrsqrt.pop %v6035
        %v6063 = vmul.f32 %v6062, %v6035
        %v6064 = vmul.f32 %v6063, %v6062
        %v6065 = vmul.f32 0.5, %v6064
        %v6066 = vsub.f32 1.5, %v6065
        %v6067 = vmul.f32 %v6062, %v6066
        %vm6068 = vweird.f32 %v6035
        %vm6069 = vweird.f32 %v6062
        %vm6070 = vmor %vm6068, %vm6069
        %v6071 = vsel %vm6070, %v6062, %v6067
        %v6072 = vrsqrt.pop %v6038
        %v6073 = vmul.f32 %v6072, %v6038
        %v6074 = vmul.f32 %v6073, %v6072
        %v6075 = vmul.f32 0.5, %v6074
        %v6076 = vsub.f32 1.5, %v6075
        %v6077 = vmul.f32 %v6072, %v6076
        %vm6078 = vweird.f32 %v6038
        %vm6079 = vweird.f32 %v6072
        %vm6080 = vmor %vm6078, %vm6079
        %v6081 = vsel %vm6080, %v6072, %v6077
        %v6082 = vrsqrt.pop %v6040
        %v6083 = vmul.f32 %v6082, %v6040
        %v6084 = vmul.f32 %v6083, %v6082
        %v6085 = vmul.f32 0.5, %v6084
        %v6086 = vsub.f32 1.5, %v6085
        %v6087 = vmul.f32 %v6082, %v6086
        %vm6088 = vweird.f32 %v6040
        %vm6089 = vweird.f32 %v6082
        %vm6090 = vmor %vm6088, %vm6089
        %v6091 = vsel %vm6090, %v6082, %v6087
        %v6092 = vrsqrt.pop %v6043
        %v6093 = vmul.f32 %v6092, %v6043
        %v6094 = vmul.f32 %v6093, %v6092
        %v6095 = vmul.f32 0.5, %v6094
        %v6096 = vsub.f32 1.5, %v6095
        %v6097 = vmul.f32 %v6092, %v6096
        %vm6098 = vweird.f32 %v6043
        %vm6099 = vweird.f32 %v6092
        %vm6100 = vmor %vm6098, %vm6099
        %v6101 = vsel %vm6100, %v6092, %v6097
        %v6102 = vrsqrt.pop %v6045
        %v6103 = vmul.f32 %v6102, %v6045
        %v6104 = vmul.f32 %v6103, %v6102
        %v6105 = vmul.f32 0.5, %v6104
        %v6106 = vsub.f32 1.5, %v6105
        %v6107 = vmul.f32 %v6102, %v6106
        %vm6108 = vweird.f32 %v6045
        %vm6109 = vweird.f32 %v6102
        %vm6110 = vmor %vm6108, %vm6109
        %v6111 = vsel %vm6110, %v6102, %v6107
        %v6112 = vrsqrt.pop %v6048
        %v6113 = vmul.f32 %v6112, %v6048
        %v6114 = vmul.f32 %v6113, %v6112
        %v6115 = vmul.f32 0.5, %v6114
        %v6116 = vsub.f32 1.5, %v6115
        %v6117 = vmul.f32 %v6112, %v6116
        %vm6118 = vweird.f32 %v6048
        %vm6119 = vweird.f32 %v6112
        %vm6120 = vmor %vm6118, %vm6119
        %v6121 = vsel %vm6120, %v6112, %v6117
        %v6122 = vrsqrt.pop %v6050
        %v6123 = vmul.f32 %v6122, %v6050
        %v6124 = vmul.f32 %v6123, %v6122
        %v6125 = vmul.f32 0.5, %v6124
        %v6126 = vsub.f32 1.5, %v6125
        %v6127 = vmul.f32 %v6122, %v6126
        %vm6128 = vweird.f32 %v6050
        %vm6129 = vweird.f32 %v6122
        %vm6130 = vmor %vm6128, %vm6129
        %v6131 = vsel %vm6130, %v6122, %v6127
        %v6132 = vmul.f32 %v5991, %v6061
        %v6133 = vmul.f32 %v5992, %v6071
        %v6134 = vmul.f32 %v5993, %v6081
        %v6135 = vmul.f32 %v5994, %v6091
        %v6136 = vmul.f32 %v5995, %v6101
        %v6137 = vmul.f32 %v5996, %v6111
        %v6138 = vmul.f32 %v5997, %v6121
        %v6139 = vmul.f32 %v5998, %v6131
        %v6140 = vperm.slane %v4387, 0
        %v6141 = vmul.f32 %v5587, %v6140
        %v6142 = vmul.f32 %v5588, %v6140
        %v6143 = vmul.f32 %v5589, %v6140
        %v6144 = vmul.f32 %v5590, %v6140
        %v6145 = vmul.f32 %v5591, %v6140
        %v6146 = vmul.f32 %v5592, %v6140
        %v6147 = vmul.f32 %v5593, %v6140
        %v6148 = vmul.f32 %v5594, %v6140
        %v6149 = vmul.f32 %v6132, %v6140
        %v6150 = vmul.f32 %v6133, %v6140
        %v6151 = vmul.f32 %v6134, %v6140
        %v6152 = vmul.f32 %v6135, %v6140
        %v6153 = vmul.f32 %v6136, %v6140
        %v6154 = vmul.f32 %v6137, %v6140
        %v6155 = vmul.f32 %v6138, %v6140
        %v6156 = vmul.f32 %v6139, %v6140
        %v6157 = vperm.slane %v4387, 1
        %v6158 = vadd.f32 %v6141, %v6157
        %v6159 = vadd.f32 %v6142, %v6157
        %v6160 = vadd.f32 %v6143, %v6157
        %v6161 = vadd.f32 %v6144, %v6157
        %v6162 = vadd.f32 %v6145, %v6157
        %v6163 = vadd.f32 %v6146, %v6157
        %v6164 = vadd.f32 %v6147, %v6157
        %v6165 = vadd.f32 %v6148, %v6157
        %v6166 = vadd.f32 %v6149, %v6157
        %v6167 = vadd.f32 %v6150, %v6157
        %v6168 = vadd.f32 %v6151, %v6157
        %v6169 = vadd.f32 %v6152, %v6157
        %v6170 = vadd.f32 %v6153, %v6157
        %v6171 = vadd.f32 %v6154, %v6157
        %v6172 = vadd.f32 %v6155, %v6157
        %v6173 = vadd.f32 %v6156, %v6157
        %v6174 = vxor.u32 %v4899, 2147483648
        %v6175 = vxor.u32 %v4901, 2147483648
        %v6176 = vxor.u32 %v4904, 2147483648
        %v6177 = vxor.u32 %v4906, 2147483648
        %v6178 = vxor.u32 %v4909, 2147483648
        %v6179 = vxor.u32 %v4911, 2147483648
        %v6180 = vxor.u32 %v4914, 2147483648
        %v6181 = vxor.u32 %v4916, 2147483648
        %v6182 = vxor.u32 %v4919, 2147483648
        %v6183 = vxor.u32 %v4921, 2147483648
        %v6184 = vxor.u32 %v4924, 2147483648
        %v6185 = vxor.u32 %v4926, 2147483648
        %v6186 = vxor.u32 %v4929, 2147483648
        %v6187 = vxor.u32 %v4931, 2147483648
        %v6188 = vxor.u32 %v4934, 2147483648
        %v6189 = vxor.u32 %v4936, 2147483648
        %v6190 = vmul.f32 %v6174, 1.442695
        %v6191 = vpow.pop %v6190
        %v6192 = vmul.f32 %v6175, 1.442695
        %v6193 = vpow.pop %v6192
        %v6194 = vmul.f32 %v6176, 1.442695
        %v6195 = vpow.pop %v6194
        %v6196 = vmul.f32 %v6177, 1.442695
        %v6197 = vpow.pop %v6196
        %v6198 = vmul.f32 %v6178, 1.442695
        %v6199 = vpow.pop %v6198
        %v6200 = vmul.f32 %v6179, 1.442695
        %v6201 = vpow.pop %v6200
        %v6202 = vmul.f32 %v6180, 1.442695
        %v6203 = vpow.pop %v6202
        %v6204 = vmul.f32 %v6181, 1.442695
        %v6205 = vpow.pop %v6204
        %v6206 = vmul.f32 %v6182, 1.442695
        %v6207 = vpow.pop %v6206
        %v6208 = vmul.f32 %v6183, 1.442695
        %v6209 = vpow.pop %v6208
        %v6210 = vmul.f32 %v6184, 1.442695
        %v6211 = vpow.pop %v6210
        %v6212 = vmul.f32 %v6185, 1.442695
        %v6213 = vpow.pop %v6212
        %v6214 = vmul.f32 %v6186, 1.442695
        %v6215 = vpow.pop %v6214
        %v6216 = vmul.f32 %v6187, 1.442695
        %v6217 = vpow.pop %v6216
        %v6218 = vmul.f32 %v6188, 1.442695
        %v6219 = vpow.pop %v6218
        %v6220 = vmul.f32 %v6189, 1.442695
        %v6221 = vpow.pop %v6220
        %v6222 = vadd.f32 %v6191, 1.0
        %v6223 = vadd.f32 %v6193, 1.0
        %v6224 = vadd.f32 %v6195, 1.0
        %v6225 = vadd.f32 %v6197, 1.0
        %v6226 = vadd.f32 %v6199, 1.0
        %v6227 = vadd.f32 %v6201, 1.0
        %v6228 = vadd.f32 %v6203, 1.0
        %v6229 = vadd.f32 %v6205, 1.0
        %v6230 = vadd.f32 %v6207, 1.0
        %v6231 = vadd.f32 %v6209, 1.0
        %v6232 = vadd.f32 %v6211, 1.0
        %v6233 = vadd.f32 %v6213, 1.0
        %v6234 = vadd.f32 %v6215, 1.0
        %v6235 = vadd.f32 %v6217, 1.0
        %v6236 = vadd.f32 %v6219, 1.0
        %v6237 = vadd.f32 %v6221, 1.0
        %v6238 = vrcp.pop %v6222
        %v6239 = vmul.f32 %v6222, %v6238
        %v6240 = vsub.f32 1.0, %v6239
        %v6241 = vmul.f32 %v6238, %v6240
        %v6242 = vadd.f32 %v6238, %v6241
        %vm6243 = vweird.f32 %v6222
        %vm6244 = vweird.f32 %v6238
        %vm6245 = vmor %vm6243, %vm6244
        %v6246 = vsel %vm6245, %v6238, %v6242
        %v6247 = vand.u32 2147483647, %v6222
        %vm6248 = vcmp.eq.f32.partialorder %v6247, 8.507059e+37
        %v6249 = vand.u32 %v6222, 2147483648
        %v6250 = vor.u32 1.1754944e-38, %v6249
        %v6251 = vsel %vm6248, %v6250, %v6246
        %v6252 = vmul.f32 1.0, %v6251
        %v6253 = vrcp.pop %v6223
        %v6254 = vmul.f32 %v6223, %v6253
        %v6255 = vsub.f32 1.0, %v6254
        %v6256 = vmul.f32 %v6253, %v6255
        %v6257 = vadd.f32 %v6253, %v6256
        %vm6258 = vweird.f32 %v6223
        %vm6259 = vweird.f32 %v6253
        %vm6260 = vmor %vm6258, %vm6259
        %v6261 = vsel %vm6260, %v6253, %v6257
        %v6262 = vand.u32 2147483647, %v6223
        %vm6263 = vcmp.eq.f32.partialorder %v6262, 8.507059e+37
        %v6264 = vand.u32 %v6223, 2147483648
        %v6265 = vor.u32 1.1754944e-38, %v6264
        %v6266 = vsel %vm6263, %v6265, %v6261
        %v6267 = vmul.f32 1.0, %v6266
        %v6268 = vrcp.pop %v6224
        %v6269 = vmul.f32 %v6224, %v6268
        %v6270 = vsub.f32 1.0, %v6269
        %v6271 = vmul.f32 %v6268, %v6270
        %v6272 = vadd.f32 %v6268, %v6271
        %vm6273 = vweird.f32 %v6224
        %vm6274 = vweird.f32 %v6268
        %vm6275 = vmor %vm6273, %vm6274
        %v6276 = vsel %vm6275, %v6268, %v6272
        %v6277 = vand.u32 2147483647, %v6224
        %vm6278 = vcmp.eq.f32.partialorder %v6277, 8.507059e+37
        %v6279 = vand.u32 %v6224, 2147483648
        %v6280 = vor.u32 1.1754944e-38, %v6279
        %v6281 = vsel %vm6278, %v6280, %v6276
        %v6282 = vmul.f32 1.0, %v6281
        %v6283 = vrcp.pop %v6225
        %v6284 = vmul.f32 %v6225, %v6283
        %v6285 = vsub.f32 1.0, %v6284
        %v6286 = vmul.f32 %v6283, %v6285
        %v6287 = vadd.f32 %v6283, %v6286
        %vm6288 = vweird.f32 %v6225
        %vm6289 = vweird.f32 %v6283
        %vm6290 = vmor %vm6288, %vm6289
        %v6291 = vsel %vm6290, %v6283, %v6287
        %v6292 = vand.u32 2147483647, %v6225
        %vm6293 = vcmp.eq.f32.partialorder %v6292, 8.507059e+37
        %v6294 = vand.u32 %v6225, 2147483648
        %v6295 = vor.u32 1.1754944e-38, %v6294
        %v6296 = vsel %vm6293, %v6295, %v6291
        %v6297 = vmul.f32 1.0, %v6296
        %v6298 = vrcp.pop %v6226
        %v6299 = vmul.f32 %v6226, %v6298
        %v6300 = vsub.f32 1.0, %v6299
        %v6301 = vmul.f32 %v6298, %v6300
        %v6302 = vadd.f32 %v6298, %v6301
        %vm6303 = vweird.f32 %v6226
        %vm6304 = vweird.f32 %v6298
        %vm6305 = vmor %vm6303, %vm6304
        %v6306 = vsel %vm6305, %v6298, %v6302
        %v6307 = vand.u32 2147483647, %v6226
        %vm6308 = vcmp.eq.f32.partialorder %v6307, 8.507059e+37
        %v6309 = vand.u32 %v6226, 2147483648
        %v6310 = vor.u32 1.1754944e-38, %v6309
        %v6311 = vsel %vm6308, %v6310, %v6306
        %v6312 = vmul.f32 1.0, %v6311
        %v6313 = vrcp.pop %v6227
        %v6314 = vmul.f32 %v6227, %v6313
        %v6315 = vsub.f32 1.0, %v6314
        %v6316 = vmul.f32 %v6313, %v6315
        %v6317 = vadd.f32 %v6313, %v6316
        %vm6318 = vweird.f32 %v6227
        %vm6319 = vweird.f32 %v6313
        %vm6320 = vmor %vm6318, %vm6319
        %v6321 = vsel %vm6320, %v6313, %v6317
        %v6322 = vand.u32 2147483647, %v6227
        %vm6323 = vcmp.eq.f32.partialorder %v6322, 8.507059e+37
        %v6324 = vand.u32 %v6227, 2147483648
        %v6325 = vor.u32 1.1754944e-38, %v6324
        %v6326 = vsel %vm6323, %v6325, %v6321
        %v6327 = vmul.f32 1.0, %v6326
        %v6328 = vrcp.pop %v6228
        %v6329 = vmul.f32 %v6228, %v6328
        %v6330 = vsub.f32 1.0, %v6329
        %v6331 = vmul.f32 %v6328, %v6330
        %v6332 = vadd.f32 %v6328, %v6331
        %vm6333 = vweird.f32 %v6228
        %vm6334 = vweird.f32 %v6328
        %vm6335 = vmor %vm6333, %vm6334
        %v6336 = vsel %vm6335, %v6328, %v6332
        %v6337 = vand.u32 2147483647, %v6228
        %vm6338 = vcmp.eq.f32.partialorder %v6337, 8.507059e+37
        %v6339 = vand.u32 %v6228, 2147483648
        %v6340 = vor.u32 1.1754944e-38, %v6339
        %v6341 = vsel %vm6338, %v6340, %v6336
        %v6342 = vmul.f32 1.0, %v6341
        %v6343 = vrcp.pop %v6229
        %v6344 = vmul.f32 %v6229, %v6343
        %v6345 = vsub.f32 1.0, %v6344
        %v6346 = vmul.f32 %v6343, %v6345
        %v6347 = vadd.f32 %v6343, %v6346
        %vm6348 = vweird.f32 %v6229
        %vm6349 = vweird.f32 %v6343
        %vm6350 = vmor %vm6348, %vm6349
        %v6351 = vsel %vm6350, %v6343, %v6347
        %v6352 = vand.u32 2147483647, %v6229
        %vm6353 = vcmp.eq.f32.partialorder %v6352, 8.507059e+37
        %v6354 = vand.u32 %v6229, 2147483648
        %v6355 = vor.u32 1.1754944e-38, %v6354
        %v6356 = vsel %vm6353, %v6355, %v6351
        %v6357 = vmul.f32 1.0, %v6356
        %v6358 = vrcp.pop %v6230
        %v6359 = vmul.f32 %v6230, %v6358
        %v6360 = vsub.f32 1.0, %v6359
        %v6361 = vmul.f32 %v6358, %v6360
        %v6362 = vadd.f32 %v6358, %v6361
        %vm6363 = vweird.f32 %v6230
        %vm6364 = vweird.f32 %v6358
        %vm6365 = vmor %vm6363, %vm6364
        %v6366 = vsel %vm6365, %v6358, %v6362
        %v6367 = vand.u32 2147483647, %v6230
        %vm6368 = vcmp.eq.f32.partialorder %v6367, 8.507059e+37
        %v6369 = vand.u32 %v6230, 2147483648
        %v6370 = vor.u32 1.1754944e-38, %v6369
        %v6371 = vsel %vm6368, %v6370, %v6366
        %v6372 = vmul.f32 1.0, %v6371
        %v6373 = vrcp.pop %v6231
        %v6374 = vmul.f32 %v6231, %v6373
        %v6375 = vsub.f32 1.0, %v6374
        %v6376 = vmul.f32 %v6373, %v6375
        %v6377 = vadd.f32 %v6373, %v6376
        %vm6378 = vweird.f32 %v6231
        %vm6379 = vweird.f32 %v6373
        %vm6380 = vmor %vm6378, %vm6379
        %v6381 = vsel %vm6380, %v6373, %v6377
        %v6382 = vand.u32 2147483647, %v6231
        %vm6383 = vcmp.eq.f32.partialorder %v6382, 8.507059e+37
        %v6384 = vand.u32 %v6231, 2147483648
        %v6385 = vor.u32 1.1754944e-38, %v6384
        %v6386 = vsel %vm6383, %v6385, %v6381
        %v6387 = vmul.f32 1.0, %v6386
        %v6388 = vrcp.pop %v6232
        %v6389 = vmul.f32 %v6232, %v6388
        %v6390 = vsub.f32 1.0, %v6389
        %v6391 = vmul.f32 %v6388, %v6390
        %v6392 = vadd.f32 %v6388, %v6391
        %vm6393 = vweird.f32 %v6232
        %vm6394 = vweird.f32 %v6388
        %vm6395 = vmor %vm6393, %vm6394
        %v6396 = vsel %vm6395, %v6388, %v6392
        %v6397 = vand.u32 2147483647, %v6232
        %vm6398 = vcmp.eq.f32.partialorder %v6397, 8.507059e+37
        %v6399 = vand.u32 %v6232, 2147483648
        %v6400 = vor.u32 1.1754944e-38, %v6399
        %v6401 = vsel %vm6398, %v6400, %v6396
        %v6402 = vmul.f32 1.0, %v6401
        %v6403 = vrcp.pop %v6233
        %v6404 = vmul.f32 %v6233, %v6403
        %v6405 = vsub.f32 1.0, %v6404
        %v6406 = vmul.f32 %v6403, %v6405
        %v6407 = vadd.f32 %v6403, %v6406
        %vm6408 = vweird.f32 %v6233
        %vm6409 = vweird.f32 %v6403
        %vm6410 = vmor %vm6408, %vm6409
        %v6411 = vsel %vm6410, %v6403, %v6407
        %v6412 = vand.u32 2147483647, %v6233
        %vm6413 = vcmp.eq.f32.partialorder %v6412, 8.507059e+37
        %v6414 = vand.u32 %v6233, 2147483648
        %v6415 = vor.u32 1.1754944e-38, %v6414
        %v6416 = vsel %vm6413, %v6415, %v6411
        %v6417 = vmul.f32 1.0, %v6416
        %v6418 = vrcp.pop %v6234
        %v6419 = vmul.f32 %v6234, %v6418
        %v6420 = vsub.f32 1.0, %v6419
        %v6421 = vmul.f32 %v6418, %v6420
        %v6422 = vadd.f32 %v6418, %v6421
        %vm6423 = vweird.f32 %v6234
        %vm6424 = vweird.f32 %v6418
        %vm6425 = vmor %vm6423, %vm6424
        %v6426 = vsel %vm6425, %v6418, %v6422
        %v6427 = vand.u32 2147483647, %v6234
        %vm6428 = vcmp.eq.f32.partialorder %v6427, 8.507059e+37
        %v6429 = vand.u32 %v6234, 2147483648
        %v6430 = vor.u32 1.1754944e-38, %v6429
        %v6431 = vsel %vm6428, %v6430, %v6426
        %v6432 = vmul.f32 1.0, %v6431
        %v6433 = vrcp.pop %v6235
        %v6434 = vmul.f32 %v6235, %v6433
        %v6435 = vsub.f32 1.0, %v6434
        %v6436 = vmul.f32 %v6433, %v6435
        %v6437 = vadd.f32 %v6433, %v6436
        %vm6438 = vweird.f32 %v6235
        %vm6439 = vweird.f32 %v6433
        %vm6440 = vmor %vm6438, %vm6439
        %v6441 = vsel %vm6440, %v6433, %v6437
        %v6442 = vand.u32 2147483647, %v6235
        %vm6443 = vcmp.eq.f32.partialorder %v6442, 8.507059e+37
        %v6444 = vand.u32 %v6235, 2147483648
        %v6445 = vor.u32 1.1754944e-38, %v6444
        %v6446 = vsel %vm6443, %v6445, %v6441
        %v6447 = vmul.f32 1.0, %v6446
        %v6448 = vrcp.pop %v6236
        %v6449 = vmul.f32 %v6236, %v6448
        %v6450 = vsub.f32 1.0, %v6449
        %v6451 = vmul.f32 %v6448, %v6450
        %v6452 = vadd.f32 %v6448, %v6451
        %vm6453 = vweird.f32 %v6236
        %vm6454 = vweird.f32 %v6448
        %vm6455 = vmor %vm6453, %vm6454
        %v6456 = vsel %vm6455, %v6448, %v6452
        %v6457 = vand.u32 2147483647, %v6236
        %vm6458 = vcmp.eq.f32.partialorder %v6457, 8.507059e+37
        %v6459 = vand.u32 %v6236, 2147483648
        %v6460 = vor.u32 1.1754944e-38, %v6459
        %v6461 = vsel %vm6458, %v6460, %v6456
        %v6462 = vmul.f32 1.0, %v6461
        %v6463 = vrcp.pop %v6237
        %v6464 = vmul.f32 %v6237, %v6463
        %v6465 = vsub.f32 1.0, %v6464
        %v6466 = vmul.f32 %v6463, %v6465
        %v6467 = vadd.f32 %v6463, %v6466
        %vm6468 = vweird.f32 %v6237
        %vm6469 = vweird.f32 %v6463
        %vm6470 = vmor %vm6468, %vm6469
        %v6471 = vsel %vm6470, %v6463, %v6467
        %v6472 = vand.u32 2147483647, %v6237
        %vm6473 = vcmp.eq.f32.partialorder %v6472, 8.507059e+37
        %v6474 = vand.u32 %v6237, 2147483648
        %v6475 = vor.u32 1.1754944e-38, %v6474
        %v6476 = vsel %vm6473, %v6475, %v6471
        %v6477 = vmul.f32 1.0, %v6476
        %v6478 = vmul.f32 %v4899, %v6252
        %v6479 = vmul.f32 %v4901, %v6267
        %v6480 = vmul.f32 %v4904, %v6282
        %v6481 = vmul.f32 %v4906, %v6297
        %v6482 = vmul.f32 %v4909, %v6312
        %v6483 = vmul.f32 %v4911, %v6327
        %v6484 = vmul.f32 %v4914, %v6342
        %v6485 = vmul.f32 %v4916, %v6357
        %v6486 = vmul.f32 %v4919, %v6372
        %v6487 = vmul.f32 %v4921, %v6387
        %v6488 = vmul.f32 %v4924, %v6402
        %v6489 = vmul.f32 %v4926, %v6417
        %v6490 = vmul.f32 %v4929, %v6432
        %v6491 = vmul.f32 %v4931, %v6447
        %v6492 = vmul.f32 %v4934, %v6462
        %v6493 = vmul.f32 %v4936, %v6477
        %6510 = vrot.lane.b32.xlu0 %v6158, 64
        %v6511 = vpop.permute.xlu0 %6510
        %6512 = vrot.lane.b32.xlu0 %v6159, 64
        %v6513 = vpop.permute.xlu0 %6512
        %6514 = vrot.lane.b32.xlu0 %v6160, 64
        %v6515 = vpop.permute.xlu0 %6514
        %6516 = vrot.lane.b32.xlu0 %v6161, 64
        %v6517 = vpop.permute.xlu0 %6516
        %6518 = vrot.lane.b32.xlu0 %v6162, 64
        %v6519 = vpop.permute.xlu0 %6518
        %6520 = vrot.lane.b32.xlu0 %v6163, 64
        %v6521 = vpop.permute.xlu0 %6520
        %6522 = vrot.lane.b32.xlu0 %v6164, 64
        %v6523 = vpop.permute.xlu0 %6522
        %6524 = vrot.lane.b32.xlu0 %v6165, 64
        %v6525 = vpop.permute.xlu0 %6524
        %6526 = vrot.lane.b32.xlu0 %v6166, 64
        %v6527 = vpop.permute.xlu0 %6526
        %6528 = vrot.lane.b32.xlu0 %v6167, 64
        %v6529 = vpop.permute.xlu0 %6528
        %6530 = vrot.lane.b32.xlu0 %v6168, 64
        %v6531 = vpop.permute.xlu0 %6530
        %6532 = vrot.lane.b32.xlu0 %v6169, 64
        %v6533 = vpop.permute.xlu0 %6532
        %6534 = vrot.lane.b32.xlu0 %v6170, 64
        %v6535 = vpop.permute.xlu0 %6534
        %6536 = vrot.lane.b32.xlu0 %v6171, 64
        %v6537 = vpop.permute.xlu0 %6536
        %6538 = vrot.lane.b32.xlu0 %v6172, 64
        %v6539 = vpop.permute.xlu0 %6538
        %6540 = vrot.lane.b32.xlu0 %v6173, 64
        %v6541 = vpop.permute.xlu0 %6540
        %v6558 = vmul.f32 %v6478, %v6511
        %v6559 = vmul.f32 %v6479, %v6513
        %v6560 = vmul.f32 %v6480, %v6515
        %v6561 = vmul.f32 %v6481, %v6517
        %v6562 = vmul.f32 %v6482, %v6519
        %v6563 = vmul.f32 %v6483, %v6521
        %v6564 = vmul.f32 %v6484, %v6523
        %v6565 = vmul.f32 %v6485, %v6525
        %v6566 = vmul.f32 %v6486, %v6527
        %v6567 = vmul.f32 %v6487, %v6529
        %v6568 = vmul.f32 %v6488, %v6531
        %v6569 = vmul.f32 %v6489, %v6533
        %v6570 = vmul.f32 %v6490, %v6535
        %v6571 = vmul.f32 %v6491, %v6537
        %v6572 = vmul.f32 %v6492, %v6539
        %v6573 = vmul.f32 %v6493, %v6541
        %v6574 = vpack.c.bf16 %v6559, %v6558
        %v6575 = vpack.c.bf16 %v6561, %v6560
        %v6576 = vpack.c.bf16 %v6563, %v6562
        %v6577 = vpack.c.bf16 %v6565, %v6564
        %v6578 = vpack.c.bf16 %v6567, %v6566
        %v6579 = vpack.c.bf16 %v6569, %v6568
        %v6580 = vpack.c.bf16 %v6571, %v6570
        %v6581 = vpack.c.bf16 %v6573, %v6572
        %s6582 = scalar_lea.vmem %s8, 64
        %v6583 = vld [vmem:[%s6582] sm:$0xf]
        %v6584 = vld [vmem:[%s6582 + $0x4] sm:$0xf]
        %v6585 = vld [vmem:[%s6582 + $0x8] sm:$0xf]
        %v6586 = vld [vmem:[%s6582 + $0xc] sm:$0xf]
        %v6587 = vld [vmem:[%s6582 + $0x10] sm:$0xf]
        %v6588 = vld [vmem:[%s6582 + $0x14] sm:$0xf]
        %v6589 = vld [vmem:[%s6582 + $0x18] sm:$0xf]
        %v6590 = vld [vmem:[%s6582 + $0x1c] sm:$0xf]
        %6599 = vrot.lane.b32.xlu0 %v6574, 64
        %v6600 = vpop.permute.xlu0 %6599
        %6601 = vrot.lane.b32.xlu0 %v6575, 64
        %v6602 = vpop.permute.xlu0 %6601
        %6603 = vrot.lane.b32.xlu0 %v6576, 64
        %v6604 = vpop.permute.xlu0 %6603
        %6605 = vrot.lane.b32.xlu0 %v6577, 64
        %v6606 = vpop.permute.xlu0 %6605
        %6607 = vrot.lane.b32.xlu0 %v6578, 64
        %v6608 = vpop.permute.xlu0 %6607
        %6609 = vrot.lane.b32.xlu0 %v6579, 64
        %v6610 = vpop.permute.xlu0 %6609
        %6611 = vrot.lane.b32.xlu0 %v6580, 64
        %v6612 = vpop.permute.xlu0 %6611
        %6613 = vrot.lane.b32.xlu0 %v6581, 64
        %v6614 = vpop.permute.xlu0 %6613
        %v6623 = vunpack.c.l.b16 %v6583
        %v6624 = vunpack.c.l.b16 %v6584
        %v6625 = vunpack.c.l.b16 %v6585
        %v6626 = vunpack.c.l.b16 %v6586
        %v6627 = vunpack.c.l.b16 %v6587
        %v6628 = vunpack.c.l.b16 %v6588
        %v6629 = vunpack.c.l.b16 %v6589
        %v6630 = vunpack.c.l.b16 %v6590
        %v6631 = vpack.c.b16 %v6624, %v6623
        %v6632 = vpack.c.b16 %v6626, %v6625
        %v6633 = vpack.c.b16 %v6628, %v6627
        %v6634 = vpack.c.b16 %v6630, %v6629
        %v6640 = vsel %vm1822, %v6600, 0
        %v6643 = vsel %vm1822, %v6602, 0
        %v6646 = vsel %vm1822, %v6604, 0
        %v6649 = vsel %vm1822, %v6606, 0
        %v6652 = vsel %vm1822, %v6608, 0
        %v6655 = vsel %vm1822, %v6610, 0
        %v6658 = vsel %vm1822, %v6612, 0
        %v6661 = vsel %vm1822, %v6614, 0
        %6663 = vmatpush.bf16.msra.mxu0 0
        %6664 = vmatpush.bf16.msra.mxu0 0
        %6665 = vmatpush.bf16.msra.mxu0 0
        %6666 = vmatpush.bf16.msra.mxu0 0
        %6667 = vmatpush.bf16.msra.mxu0 %v6634
        %6668 = vmatpush.bf16.msra.mxu0 %v6633
        %6669 = vmatpush.bf16.msra.mxu0 %v6632
        %6670 = vmatpush.bf16.msra.mxu0 %v6631
        %6671 = vmatmul.bf16.gmra.mxu0 %v6640
        %v6672 = vpop.f32.mrf.mxu0
        %v6673 = vadd.f32 %v4368, %v6672
        %v6674 = vpop.f32.mrf.mxu0
        %v6675 = vadd.f32 %v4369, %v6674
        %6676 = vmatmul.bf16.gmra.mxu0 %v6643
        %v6677 = vpop.f32.mrf.mxu0
        %v6678 = vadd.f32 %v4370, %v6677
        %v6679 = vpop.f32.mrf.mxu0
        %v6680 = vadd.f32 %v4371, %v6679
        %6681 = vmatmul.bf16.gmra.mxu0 %v6646
        %v6682 = vpop.f32.mrf.mxu0
        %v6683 = vadd.f32 %v4372, %v6682
        %v6684 = vpop.f32.mrf.mxu0
        %v6685 = vadd.f32 %v4373, %v6684
        %6686 = vmatmul.bf16.gmra.mxu0 %v6649
        %v6687 = vpop.f32.mrf.mxu0
        %v6688 = vadd.f32 %v4374, %v6687
        %v6689 = vpop.f32.mrf.mxu0
        %v6690 = vadd.f32 %v4375, %v6689
        %6691 = vmatmul.bf16.gmra.mxu0 %v6652
        %v6692 = vpop.f32.mrf.mxu0
        %v6693 = vadd.f32 %v4376, %v6692
        %v6694 = vpop.f32.mrf.mxu0
        %v6695 = vadd.f32 %v4377, %v6694
        %6696 = vmatmul.bf16.gmra.mxu0 %v6655
        %v6697 = vpop.f32.mrf.mxu0
        %v6698 = vadd.f32 %v4378, %v6697
        %v6699 = vpop.f32.mrf.mxu0
        %v6700 = vadd.f32 %v4379, %v6699
        %6701 = vmatmul.bf16.gmra.mxu0 %v6658
        %v6702 = vpop.f32.mrf.mxu0
        %v6703 = vadd.f32 %v4380, %v6702
        %v6704 = vpop.f32.mrf.mxu0
        %v6705 = vadd.f32 %v4381, %v6704
        %6706 = vmatmul.bf16.gmra.mxu0 %v6661
        %v6707 = vpop.f32.mrf.mxu0
        %v6708 = vadd.f32 %v4382, %v6707
        %v6709 = vpop.f32.mrf.mxu0
        %v6710 = vadd.f32 %v4383, %v6709
        %6711 = vdwg.mxu0
        %v6712 = vsel %vm501, %v6673, 0.0
        %6713 = vadd.xlane.f32.xlu0 %v6712
        %v6714 = vpop.xlane.xlu0 %6713
        %v6715 = vsel %vm501, %v6675, 0.0
        %6716 = vadd.xlane.f32.xlu0 %v6715
        %v6717 = vpop.xlane.xlu0 %6716
        %v6718 = vsel %vm501, %v6678, 0.0
        %6719 = vadd.xlane.f32.xlu0 %v6718
        %v6720 = vpop.xlane.xlu0 %6719
        %v6721 = vsel %vm501, %v6680, 0.0
        %6722 = vadd.xlane.f32.xlu0 %v6721
        %v6723 = vpop.xlane.xlu0 %6722
        %v6724 = vsel %vm501, %v6683, 0.0
        %6725 = vadd.xlane.f32.xlu0 %v6724
        %v6726 = vpop.xlane.xlu0 %6725
        %v6727 = vsel %vm501, %v6685, 0.0
        %6728 = vadd.xlane.f32.xlu0 %v6727
        %v6729 = vpop.xlane.xlu0 %6728
        %v6730 = vsel %vm501, %v6688, 0.0
        %6731 = vadd.xlane.f32.xlu0 %v6730
        %v6732 = vpop.xlane.xlu0 %6731
        %v6733 = vsel %vm501, %v6690, 0.0
        %6734 = vadd.xlane.f32.xlu0 %v6733
        %v6735 = vpop.xlane.xlu0 %6734
        %v6736 = vsel %vm501, %v6693, 0.0
        %6737 = vadd.xlane.f32.xlu0 %v6736
        %v6738 = vpop.xlane.xlu0 %6737
        %v6739 = vsel %vm501, %v6695, 0.0
        %6740 = vadd.xlane.f32.xlu0 %v6739
        %v6741 = vpop.xlane.xlu0 %6740
        %v6742 = vsel %vm501, %v6698, 0.0
        %6743 = vadd.xlane.f32.xlu0 %v6742
        %v6744 = vpop.xlane.xlu0 %6743
        %v6745 = vsel %vm501, %v6700, 0.0
        %6746 = vadd.xlane.f32.xlu0 %v6745
        %v6747 = vpop.xlane.xlu0 %6746
        %v6748 = vsel %vm501, %v6703, 0.0
        %6749 = vadd.xlane.f32.xlu0 %v6748
        %v6750 = vpop.xlane.xlu0 %6749
        %v6751 = vsel %vm501, %v6705, 0.0
        %6752 = vadd.xlane.f32.xlu0 %v6751
        %v6753 = vpop.xlane.xlu0 %6752
        %v6754 = vsel %vm501, %v6708, 0.0
        %6755 = vadd.xlane.f32.xlu0 %v6754
        %v6756 = vpop.xlane.xlu0 %6755
        %v6757 = vsel %vm501, %v6710, 0.0
        %6758 = vadd.xlane.f32.xlu0 %v6757
        %v6759 = vpop.xlane.xlu0 %6758
        %v6760 = vmul.f32 %v6714, %v556
        %v6761 = vmul.f32 %v6717, %v556
        %v6762 = vmul.f32 %v6720, %v556
        %v6763 = vmul.f32 %v6723, %v556
        %v6764 = vmul.f32 %v6726, %v556
        %v6765 = vmul.f32 %v6729, %v556
        %v6766 = vmul.f32 %v6732, %v556
        %v6767 = vmul.f32 %v6735, %v556
        %v6768 = vmul.f32 %v6738, %v556
        %v6769 = vmul.f32 %v6741, %v556
        %v6770 = vmul.f32 %v6744, %v556
        %v6771 = vmul.f32 %v6747, %v556
        %v6772 = vmul.f32 %v6750, %v556
        %v6773 = vmul.f32 %v6753, %v556
        %v6774 = vmul.f32 %v6756, %v556
        %v6775 = vmul.f32 %v6759, %v556
        %v6776 = vsub.f32 %v6673, %v6760
        %v6777 = vsub.f32 %v6675, %v6761
        %v6778 = vsub.f32 %v6678, %v6762
        %v6779 = vsub.f32 %v6680, %v6763
        %v6780 = vsub.f32 %v6683, %v6764
        %v6781 = vsub.f32 %v6685, %v6765
        %v6782 = vsub.f32 %v6688, %v6766
        %v6783 = vsub.f32 %v6690, %v6767
        %v6784 = vsub.f32 %v6693, %v6768
        %v6785 = vsub.f32 %v6695, %v6769
        %v6786 = vsub.f32 %v6698, %v6770
        %v6787 = vsub.f32 %v6700, %v6771
        %v6788 = vsub.f32 %v6703, %v6772
        %v6789 = vsub.f32 %v6705, %v6773
        %v6790 = vsub.f32 %v6708, %v6774
        %v6791 = vsub.f32 %v6710, %v6775
        %v6792 = vmul.f32 %v6776, %v6776
        %v6793 = vmul.f32 %v6777, %v6777
        %v6794 = vmul.f32 %v6778, %v6778
        %v6795 = vmul.f32 %v6779, %v6779
        %v6796 = vmul.f32 %v6780, %v6780
        %v6797 = vmul.f32 %v6781, %v6781
        %v6798 = vmul.f32 %v6782, %v6782
        %v6799 = vmul.f32 %v6783, %v6783
        %v6800 = vmul.f32 %v6784, %v6784
        %v6801 = vmul.f32 %v6785, %v6785
        %v6802 = vmul.f32 %v6786, %v6786
        %v6803 = vmul.f32 %v6787, %v6787
        %v6804 = vmul.f32 %v6788, %v6788
        %v6805 = vmul.f32 %v6789, %v6789
        %v6806 = vmul.f32 %v6790, %v6790
        %v6807 = vmul.f32 %v6791, %v6791
        %v6808 = vsel %vm501, %v6792, 0.0
        %6809 = vadd.xlane.f32.xlu0 %v6808
        %v6810 = vpop.xlane.xlu0 %6809
        %v6811 = vsel %vm501, %v6793, 0.0
        %6812 = vadd.xlane.f32.xlu0 %v6811
        %v6813 = vpop.xlane.xlu0 %6812
        %v6814 = vsel %vm501, %v6794, 0.0
        %6815 = vadd.xlane.f32.xlu0 %v6814
        %v6816 = vpop.xlane.xlu0 %6815
        %v6817 = vsel %vm501, %v6795, 0.0
        %6818 = vadd.xlane.f32.xlu0 %v6817
        %v6819 = vpop.xlane.xlu0 %6818
        %v6820 = vsel %vm501, %v6796, 0.0
        %6821 = vadd.xlane.f32.xlu0 %v6820
        %v6822 = vpop.xlane.xlu0 %6821
        %v6823 = vsel %vm501, %v6797, 0.0
        %6824 = vadd.xlane.f32.xlu0 %v6823
        %v6825 = vpop.xlane.xlu0 %6824
        %v6826 = vsel %vm501, %v6798, 0.0
        %6827 = vadd.xlane.f32.xlu0 %v6826
        %v6828 = vpop.xlane.xlu0 %6827
        %v6829 = vsel %vm501, %v6799, 0.0
        %6830 = vadd.xlane.f32.xlu0 %v6829
        %v6831 = vpop.xlane.xlu0 %6830
        %v6832 = vsel %vm501, %v6800, 0.0
        %6833 = vadd.xlane.f32.xlu0 %v6832
        %v6834 = vpop.xlane.xlu0 %6833
        %v6835 = vsel %vm501, %v6801, 0.0
        %6836 = vadd.xlane.f32.xlu0 %v6835
        %v6837 = vpop.xlane.xlu0 %6836
        %v6838 = vsel %vm501, %v6802, 0.0
        %6839 = vadd.xlane.f32.xlu0 %v6838
        %v6840 = vpop.xlane.xlu0 %6839
        %v6841 = vsel %vm501, %v6803, 0.0
        %6842 = vadd.xlane.f32.xlu0 %v6841
        %v6843 = vpop.xlane.xlu0 %6842
        %v6844 = vsel %vm501, %v6804, 0.0
        %6845 = vadd.xlane.f32.xlu0 %v6844
        %v6846 = vpop.xlane.xlu0 %6845
        %v6847 = vsel %vm501, %v6805, 0.0
        %6848 = vadd.xlane.f32.xlu0 %v6847
        %v6849 = vpop.xlane.xlu0 %6848
        %v6850 = vsel %vm501, %v6806, 0.0
        %6851 = vadd.xlane.f32.xlu0 %v6850
        %v6852 = vpop.xlane.xlu0 %6851
        %v6853 = vsel %vm501, %v6807, 0.0
        %6854 = vadd.xlane.f32.xlu0 %v6853
        %v6855 = vpop.xlane.xlu0 %6854
        %v6856 = vmul.f32 %v6810, %v556
        %v6857 = vmul.f32 %v6813, %v556
        %v6858 = vmul.f32 %v6816, %v556
        %v6859 = vmul.f32 %v6819, %v556
        %v6860 = vmul.f32 %v6822, %v556
        %v6861 = vmul.f32 %v6825, %v556
        %v6862 = vmul.f32 %v6828, %v556
        %v6863 = vmul.f32 %v6831, %v556
        %v6864 = vmul.f32 %v6834, %v556
        %v6865 = vmul.f32 %v6837, %v556
        %v6866 = vmul.f32 %v6840, %v556
        %v6867 = vmul.f32 %v6843, %v556
        %v6868 = vmul.f32 %v6846, %v556
        %v6869 = vmul.f32 %v6849, %v556
        %v6870 = vmul.f32 %v6852, %v556
        %v6871 = vmul.f32 %v6855, %v556
        %v6872 = vadd.f32 %v6856, 1e-05
        %v6873 = vadd.f32 %v6857, 1e-05
        %v6874 = vadd.f32 %v6858, 1e-05
        %v6875 = vadd.f32 %v6859, 1e-05
        %v6876 = vadd.f32 %v6860, 1e-05
        %v6877 = vadd.f32 %v6861, 1e-05
        %v6878 = vadd.f32 %v6862, 1e-05
        %v6879 = vadd.f32 %v6863, 1e-05
        %v6880 = vadd.f32 %v6864, 1e-05
        %v6881 = vadd.f32 %v6865, 1e-05
        %v6882 = vadd.f32 %v6866, 1e-05
        %v6883 = vadd.f32 %v6867, 1e-05
        %v6884 = vadd.f32 %v6868, 1e-05
        %v6885 = vadd.f32 %v6869, 1e-05
        %v6886 = vadd.f32 %v6870, 1e-05
        %v6887 = vadd.f32 %v6871, 1e-05
        %v6888 = vrsqrt.pop %v6872
        %v6889 = vmul.f32 %v6888, %v6872
        %v6890 = vmul.f32 %v6889, %v6888
        %v6891 = vmul.f32 0.5, %v6890
        %v6892 = vsub.f32 1.5, %v6891
        %v6893 = vmul.f32 %v6888, %v6892
        %vm6894 = vweird.f32 %v6872
        %vm6895 = vweird.f32 %v6888
        %vm6896 = vmor %vm6894, %vm6895
        %v6897 = vsel %vm6896, %v6888, %v6893
        %v6898 = vrsqrt.pop %v6873
        %v6899 = vmul.f32 %v6898, %v6873
        %v6900 = vmul.f32 %v6899, %v6898
        %v6901 = vmul.f32 0.5, %v6900
        %v6902 = vsub.f32 1.5, %v6901
        %v6903 = vmul.f32 %v6898, %v6902
        %vm6904 = vweird.f32 %v6873
        %vm6905 = vweird.f32 %v6898
        %vm6906 = vmor %vm6904, %vm6905
        %v6907 = vsel %vm6906, %v6898, %v6903
        %v6908 = vrsqrt.pop %v6874
        %v6909 = vmul.f32 %v6908, %v6874
        %v6910 = vmul.f32 %v6909, %v6908
        %v6911 = vmul.f32 0.5, %v6910
        %v6912 = vsub.f32 1.5, %v6911
        %v6913 = vmul.f32 %v6908, %v6912
        %vm6914 = vweird.f32 %v6874
        %vm6915 = vweird.f32 %v6908
        %vm6916 = vmor %vm6914, %vm6915
        %v6917 = vsel %vm6916, %v6908, %v6913
        %v6918 = vrsqrt.pop %v6875
        %v6919 = vmul.f32 %v6918, %v6875
        %v6920 = vmul.f32 %v6919, %v6918
        %v6921 = vmul.f32 0.5, %v6920
        %v6922 = vsub.f32 1.5, %v6921
        %v6923 = vmul.f32 %v6918, %v6922
        %vm6924 = vweird.f32 %v6875
        %vm6925 = vweird.f32 %v6918
        %vm6926 = vmor %vm6924, %vm6925
        %v6927 = vsel %vm6926, %v6918, %v6923
        %v6928 = vrsqrt.pop %v6876
        %v6929 = vmul.f32 %v6928, %v6876
        %v6930 = vmul.f32 %v6929, %v6928
        %v6931 = vmul.f32 0.5, %v6930
        %v6932 = vsub.f32 1.5, %v6931
        %v6933 = vmul.f32 %v6928, %v6932
        %vm6934 = vweird.f32 %v6876
        %vm6935 = vweird.f32 %v6928
        %vm6936 = vmor %vm6934, %vm6935
        %v6937 = vsel %vm6936, %v6928, %v6933
        %v6938 = vrsqrt.pop %v6877
        %v6939 = vmul.f32 %v6938, %v6877
        %v6940 = vmul.f32 %v6939, %v6938
        %v6941 = vmul.f32 0.5, %v6940
        %v6942 = vsub.f32 1.5, %v6941
        %v6943 = vmul.f32 %v6938, %v6942
        %vm6944 = vweird.f32 %v6877
        %vm6945 = vweird.f32 %v6938
        %vm6946 = vmor %vm6944, %vm6945
        %v6947 = vsel %vm6946, %v6938, %v6943
        %v6948 = vrsqrt.pop %v6878
        %v6949 = vmul.f32 %v6948, %v6878
        %v6950 = vmul.f32 %v6949, %v6948
        %v6951 = vmul.f32 0.5, %v6950
        %v6952 = vsub.f32 1.5, %v6951
        %v6953 = vmul.f32 %v6948, %v6952
        %vm6954 = vweird.f32 %v6878
        %vm6955 = vweird.f32 %v6948
        %vm6956 = vmor %vm6954, %vm6955
        %v6957 = vsel %vm6956, %v6948, %v6953
        %v6958 = vrsqrt.pop %v6879
        %v6959 = vmul.f32 %v6958, %v6879
        %v6960 = vmul.f32 %v6959, %v6958
        %v6961 = vmul.f32 0.5, %v6960
        %v6962 = vsub.f32 1.5, %v6961
        %v6963 = vmul.f32 %v6958, %v6962
        %vm6964 = vweird.f32 %v6879
        %vm6965 = vweird.f32 %v6958
        %vm6966 = vmor %vm6964, %vm6965
        %v6967 = vsel %vm6966, %v6958, %v6963
        %v6968 = vrsqrt.pop %v6880
        %v6969 = vmul.f32 %v6968, %v6880
        %v6970 = vmul.f32 %v6969, %v6968
        %v6971 = vmul.f32 0.5, %v6970
        %v6972 = vsub.f32 1.5, %v6971
        %v6973 = vmul.f32 %v6968, %v6972
        %vm6974 = vweird.f32 %v6880
        %vm6975 = vweird.f32 %v6968
        %vm6976 = vmor %vm6974, %vm6975
        %v6977 = vsel %vm6976, %v6968, %v6973
        %v6978 = vrsqrt.pop %v6881
        %v6979 = vmul.f32 %v6978, %v6881
        %v6980 = vmul.f32 %v6979, %v6978
        %v6981 = vmul.f32 0.5, %v6980
        %v6982 = vsub.f32 1.5, %v6981
        %v6983 = vmul.f32 %v6978, %v6982
        %vm6984 = vweird.f32 %v6881
        %vm6985 = vweird.f32 %v6978
        %vm6986 = vmor %vm6984, %vm6985
        %v6987 = vsel %vm6986, %v6978, %v6983
        %v6988 = vrsqrt.pop %v6882
        %v6989 = vmul.f32 %v6988, %v6882
        %v6990 = vmul.f32 %v6989, %v6988
        %v6991 = vmul.f32 0.5, %v6990
        %v6992 = vsub.f32 1.5, %v6991
        %v6993 = vmul.f32 %v6988, %v6992
        %vm6994 = vweird.f32 %v6882
        %vm6995 = vweird.f32 %v6988
        %vm6996 = vmor %vm6994, %vm6995
        %v6997 = vsel %vm6996, %v6988, %v6993
        %v6998 = vrsqrt.pop %v6883
        %v6999 = vmul.f32 %v6998, %v6883
        %v7000 = vmul.f32 %v6999, %v6998
        %v7001 = vmul.f32 0.5, %v7000
        %v7002 = vsub.f32 1.5, %v7001
        %v7003 = vmul.f32 %v6998, %v7002
        %vm7004 = vweird.f32 %v6883
        %vm7005 = vweird.f32 %v6998
        %vm7006 = vmor %vm7004, %vm7005
        %v7007 = vsel %vm7006, %v6998, %v7003
        %v7008 = vrsqrt.pop %v6884
        %v7009 = vmul.f32 %v7008, %v6884
        %v7010 = vmul.f32 %v7009, %v7008
        %v7011 = vmul.f32 0.5, %v7010
        %v7012 = vsub.f32 1.5, %v7011
        %v7013 = vmul.f32 %v7008, %v7012
        %vm7014 = vweird.f32 %v6884
        %vm7015 = vweird.f32 %v7008
        %vm7016 = vmor %vm7014, %vm7015
        %v7017 = vsel %vm7016, %v7008, %v7013
        %v7018 = vrsqrt.pop %v6885
        %v7019 = vmul.f32 %v7018, %v6885
        %v7020 = vmul.f32 %v7019, %v7018
        %v7021 = vmul.f32 0.5, %v7020
        %v7022 = vsub.f32 1.5, %v7021
        %v7023 = vmul.f32 %v7018, %v7022
        %vm7024 = vweird.f32 %v6885
        %vm7025 = vweird.f32 %v7018
        %vm7026 = vmor %vm7024, %vm7025
        %v7027 = vsel %vm7026, %v7018, %v7023
        %v7028 = vrsqrt.pop %v6886
        %v7029 = vmul.f32 %v7028, %v6886
        %v7030 = vmul.f32 %v7029, %v7028
        %v7031 = vmul.f32 0.5, %v7030
        %v7032 = vsub.f32 1.5, %v7031
        %v7033 = vmul.f32 %v7028, %v7032
        %vm7034 = vweird.f32 %v6886
        %vm7035 = vweird.f32 %v7028
        %vm7036 = vmor %vm7034, %vm7035
        %v7037 = vsel %vm7036, %v7028, %v7033
        %v7038 = vrsqrt.pop %v6887
        %v7039 = vmul.f32 %v7038, %v6887
        %v7040 = vmul.f32 %v7039, %v7038
        %v7041 = vmul.f32 0.5, %v7040
        %v7042 = vsub.f32 1.5, %v7041
        %v7043 = vmul.f32 %v7038, %v7042
        %vm7044 = vweird.f32 %v6887
        %vm7045 = vweird.f32 %v7038
        %vm7046 = vmor %vm7044, %vm7045
        %v7047 = vsel %vm7046, %v7038, %v7043
        %v7048 = vmul.f32 %v6776, %v6897
        %v7049 = vmul.f32 %v6777, %v6907
        %v7050 = vmul.f32 %v6778, %v6917
        %v7051 = vmul.f32 %v6779, %v6927
        %v7052 = vmul.f32 %v6780, %v6937
        %v7053 = vmul.f32 %v6781, %v6947
        %v7054 = vmul.f32 %v6782, %v6957
        %v7055 = vmul.f32 %v6783, %v6967
        %v7056 = vmul.f32 %v6784, %v6977
        %v7057 = vmul.f32 %v6785, %v6987
        %v7058 = vmul.f32 %v6786, %v6997
        %v7059 = vmul.f32 %v6787, %v7007
        %v7060 = vmul.f32 %v6788, %v7017
        %v7061 = vmul.f32 %v6789, %v7027
        %v7062 = vmul.f32 %v6790, %v7037
        %v7063 = vmul.f32 %v6791, %v7047
        %v7064 = vperm.slane %v4385, 2
        %v7065 = vmul.f32 %v7048, %v7064
        %v7066 = vmul.f32 %v7049, %v7064
        %v7067 = vmul.f32 %v7050, %v7064
        %v7068 = vmul.f32 %v7051, %v7064
        %v7069 = vmul.f32 %v7052, %v7064
        %v7070 = vmul.f32 %v7053, %v7064
        %v7071 = vmul.f32 %v7054, %v7064
        %v7072 = vmul.f32 %v7055, %v7064
        %v7073 = vmul.f32 %v7056, %v7064
        %v7074 = vmul.f32 %v7057, %v7064
        %v7075 = vmul.f32 %v7058, %v7064
        %v7076 = vmul.f32 %v7059, %v7064
        %v7077 = vmul.f32 %v7060, %v7064
        %v7078 = vmul.f32 %v7061, %v7064
        %v7079 = vmul.f32 %v7062, %v7064
        %v7080 = vmul.f32 %v7063, %v7064
        %v7081 = vperm.slane %v4385, 3
        %v7082 = vadd.f32 %v7065, %v7081
        %v7083 = vadd.f32 %v7066, %v7081
        %v7084 = vadd.f32 %v7067, %v7081
        %v7085 = vadd.f32 %v7068, %v7081
        %v7086 = vadd.f32 %v7069, %v7081
        %v7087 = vadd.f32 %v7070, %v7081
        %v7088 = vadd.f32 %v7071, %v7081
        %v7089 = vadd.f32 %v7072, %v7081
        %v7090 = vadd.f32 %v7073, %v7081
        %v7091 = vadd.f32 %v7074, %v7081
        %v7092 = vadd.f32 %v7075, %v7081
        %v7093 = vadd.f32 %v7076, %v7081
        %v7094 = vadd.f32 %v7077, %v7081
        %v7095 = vadd.f32 %v7078, %v7081
        %v7096 = vadd.f32 %v7079, %v7081
        %v7097 = vadd.f32 %v7080, %v7081
        %v7098 = vpack.c.bf16 %v7083, %v7082
        %v7099 = vpack.c.bf16 %v7085, %v7084
        %v7100 = vpack.c.bf16 %v7087, %v7086
        %v7101 = vpack.c.bf16 %v7089, %v7088
        %v7102 = vpack.c.bf16 %v7091, %v7090
        %v7103 = vpack.c.bf16 %v7093, %v7092
        %v7104 = vpack.c.bf16 %v7095, %v7094
        %v7105 = vpack.c.bf16 %v7097, %v7096
        %s7106 = scalar_lea.vmem %s9, 16
        %v7107 = vld [vmem:[%s7106] sm:$0xf]
        %v7108 = vld [vmem:[%s7106 + $0x4] sm:$0xf]
        %v7109 = vld [vmem:[%s7106 + $0x8] sm:$0xf]
        %v7110 = vld [vmem:[%s7106 + $0xc] sm:$0xf]
        %v7111 = vperm.slane %v4387, 2
        %v7116 = vunpack.c.l.b16 %v7107
        %v7117 = vunpack.c.l.b16 %v7108
        %v7118 = vunpack.c.l.b16 %v7109
        %v7119 = vunpack.c.l.b16 %v7110
        %v7120 = vpack.c.b16 %v7117, %v7116
        %v7121 = vpack.c.b16 %v7119, %v7118
        %v7125 = vsel %vm501, %v7098, 0
        %v7128 = vsel %vm501, %v7099, 0
        %v7131 = vsel %vm501, %v7100, 0
        %v7134 = vsel %vm501, %v7101, 0
        %v7137 = vsel %vm501, %v7102, 0
        %v7140 = vsel %vm501, %v7103, 0
        %v7143 = vsel %vm501, %v7104, 0
        %v7146 = vsel %vm501, %v7105, 0
        %7148 = vmatpush.bf16.msra.mxu0 0
        %7149 = vmatpush.bf16.msra.mxu0 0
        %7150 = vmatpush.bf16.msra.mxu0 0
        %7151 = vmatpush.bf16.msra.mxu0 0
        %7152 = vmatpush.bf16.msra.mxu0 0
        %7153 = vmatpush.bf16.msra.mxu0 0
        %7154 = vmatpush.bf16.msra.mxu0 %v7121
        %7155 = vmatpush.bf16.msra.mxu0 %v7120
        %7156 = vmatmul.bf16.gmra.mxu0 %v7125
        %v7157 = vpop.f32.mrf.mxu0
        %v7158 = vadd.f32 %v7111, %v7157
        %v7159 = vpop.f32.mrf.mxu0
        %v7160 = vadd.f32 %v7111, %v7159
        %7161 = vmatmul.bf16.gmra.mxu0 %v7128
        %v7162 = vpop.f32.mrf.mxu0
        %v7163 = vadd.f32 %v7111, %v7162
        %v7164 = vpop.f32.mrf.mxu0
        %v7165 = vadd.f32 %v7111, %v7164
        %7166 = vmatmul.bf16.gmra.mxu0 %v7131
        %v7167 = vpop.f32.mrf.mxu0
        %v7168 = vadd.f32 %v7111, %v7167
        %v7169 = vpop.f32.mrf.mxu0
        %v7170 = vadd.f32 %v7111, %v7169
        %7171 = vmatmul.bf16.gmra.mxu0 %v7134
        %v7172 = vpop.f32.mrf.mxu0
        %v7173 = vadd.f32 %v7111, %v7172
        %v7174 = vpop.f32.mrf.mxu0
        %v7175 = vadd.f32 %v7111, %v7174
        %7176 = vmatmul.bf16.gmra.mxu0 %v7137
        %v7177 = vpop.f32.mrf.mxu0
        %v7178 = vadd.f32 %v7111, %v7177
        %v7179 = vpop.f32.mrf.mxu0
        %v7180 = vadd.f32 %v7111, %v7179
        %7181 = vmatmul.bf16.gmra.mxu0 %v7140
        %v7182 = vpop.f32.mrf.mxu0
        %v7183 = vadd.f32 %v7111, %v7182
        %v7184 = vpop.f32.mrf.mxu0
        %v7185 = vadd.f32 %v7111, %v7184
        %7186 = vmatmul.bf16.gmra.mxu0 %v7143
        %v7187 = vpop.f32.mrf.mxu0
        %v7188 = vadd.f32 %v7111, %v7187
        %v7189 = vpop.f32.mrf.mxu0
        %v7190 = vadd.f32 %v7111, %v7189
        %7191 = vmatmul.bf16.gmra.mxu0 %v7146
        %v7192 = vpop.f32.mrf.mxu0
        %v7193 = vadd.f32 %v7111, %v7192
        %v7194 = vpop.f32.mrf.mxu0
        %v7195 = vadd.f32 %v7111, %v7194
        %7196 = vdwg.mxu0
        %v7197 = vmul.f32 %v7158, 0.5
        %v7198 = vmul.f32 %v7160, 0.5
        %v7199 = vmul.f32 %v7163, 0.5
        %v7200 = vmul.f32 %v7165, 0.5
        %v7201 = vmul.f32 %v7168, 0.5
        %v7202 = vmul.f32 %v7170, 0.5
        %v7203 = vmul.f32 %v7173, 0.5
        %v7204 = vmul.f32 %v7175, 0.5
        %v7205 = vmul.f32 %v7178, 0.5
        %v7206 = vmul.f32 %v7180, 0.5
        %v7207 = vmul.f32 %v7183, 0.5
        %v7208 = vmul.f32 %v7185, 0.5
        %v7209 = vmul.f32 %v7188, 0.5
        %v7210 = vmul.f32 %v7190, 0.5
        %v7211 = vmul.f32 %v7193, 0.5
        %v7212 = vmul.f32 %v7195, 0.5
        %v7213 = vmul.f32 %v7158, 0.70710677
        %v7214 = vmul.f32 %v7160, 0.70710677
        %v7215 = vmul.f32 %v7163, 0.70710677
        %v7216 = vmul.f32 %v7165, 0.70710677
        %v7217 = vmul.f32 %v7168, 0.70710677
        %v7218 = vmul.f32 %v7170, 0.70710677
        %v7219 = vmul.f32 %v7173, 0.70710677
        %v7220 = vmul.f32 %v7175, 0.70710677
        %v7221 = vmul.f32 %v7178, 0.70710677
        %v7222 = vmul.f32 %v7180, 0.70710677
        %v7223 = vmul.f32 %v7183, 0.70710677
        %v7224 = vmul.f32 %v7185, 0.70710677
        %v7225 = vmul.f32 %v7188, 0.70710677
        %v7226 = vmul.f32 %v7190, 0.70710677
        %v7227 = vmul.f32 %v7193, 0.70710677
        %v7228 = vmul.f32 %v7195, 0.70710677
        %v7229 = vand.u32 2147483647, %v7213
        %v7230 = vand.u32 2147483647, %v7214
        %v7231 = vand.u32 2147483647, %v7215
        %v7232 = vand.u32 2147483647, %v7216
        %v7233 = vand.u32 2147483647, %v7217
        %v7234 = vand.u32 2147483647, %v7218
        %v7235 = vand.u32 2147483647, %v7219
        %v7236 = vand.u32 2147483647, %v7220
        %v7237 = vand.u32 2147483647, %v7221
        %v7238 = vand.u32 2147483647, %v7222
        %v7239 = vand.u32 2147483647, %v7223
        %v7240 = vand.u32 2147483647, %v7224
        %v7241 = vand.u32 2147483647, %v7225
        %v7242 = vand.u32 2147483647, %v7226
        %v7243 = vand.u32 2147483647, %v7227
        %v7244 = vand.u32 2147483647, %v7228
        %v7245 = vmul.f32 %v7229, 0.3275911
        %v7246 = vmul.f32 %v7230, 0.3275911
        %v7247 = vmul.f32 %v7231, 0.3275911
        %v7248 = vmul.f32 %v7232, 0.3275911
        %v7249 = vmul.f32 %v7233, 0.3275911
        %v7250 = vmul.f32 %v7234, 0.3275911
        %v7251 = vmul.f32 %v7235, 0.3275911
        %v7252 = vmul.f32 %v7236, 0.3275911
        %v7253 = vmul.f32 %v7237, 0.3275911
        %v7254 = vmul.f32 %v7238, 0.3275911
        %v7255 = vmul.f32 %v7239, 0.3275911
        %v7256 = vmul.f32 %v7240, 0.3275911
        %v7257 = vmul.f32 %v7241, 0.3275911
        %v7258 = vmul.f32 %v7242, 0.3275911
        %v7259 = vmul.f32 %v7243, 0.3275911
        %v7260 = vmul.f32 %v7244, 0.3275911
        %v7261 = vadd.f32 %v7245, 1.0
        %v7262 = vadd.f32 %v7246, 1.0
        %v7263 = vadd.f32 %v7247, 1.0
        %v7264 = vadd.f32 %v7248, 1.0
        %v7265 = vadd.f32 %v7249, 1.0
        %v7266 = vadd.f32 %v7250, 1.0
        %v7267 = vadd.f32 %v7251, 1.0
        %v7268 = vadd.f32 %v7252, 1.0
        %v7269 = vadd.f32 %v7253, 1.0
        %v7270 = vadd.f32 %v7254, 1.0
        %v7271 = vadd.f32 %v7255, 1.0
        %v7272 = vadd.f32 %v7256, 1.0
        %v7273 = vadd.f32 %v7257, 1.0
        %v7274 = vadd.f32 %v7258, 1.0
        %v7275 = vadd.f32 %v7259, 1.0
        %v7276 = vadd.f32 %v7260, 1.0
        %v7277 = vrcp.pop %v7261
        %v7278 = vmul.f32 %v7261, %v7277
        %v7279 = vsub.f32 1.0, %v7278
        %v7280 = vmul.f32 %v7277, %v7279
        %v7281 = vadd.f32 %v7277, %v7280
        %vm7282 = vweird.f32 %v7261
        %vm7283 = vweird.f32 %v7277
        %vm7284 = vmor %vm7282, %vm7283
        %v7285 = vsel %vm7284, %v7277, %v7281
        %v7286 = vand.u32 2147483647, %v7261
        %vm7287 = vcmp.eq.f32.partialorder %v7286, 8.507059e+37
        %v7288 = vand.u32 %v7261, 2147483648
        %v7289 = vor.u32 1.1754944e-38, %v7288
        %v7290 = vsel %vm7287, %v7289, %v7285
        %v7291 = vmul.f32 1.0, %v7290
        %v7292 = vrcp.pop %v7262
        %v7293 = vmul.f32 %v7262, %v7292
        %v7294 = vsub.f32 1.0, %v7293
        %v7295 = vmul.f32 %v7292, %v7294
        %v7296 = vadd.f32 %v7292, %v7295
        %vm7297 = vweird.f32 %v7262
        %vm7298 = vweird.f32 %v7292
        %vm7299 = vmor %vm7297, %vm7298
        %v7300 = vsel %vm7299, %v7292, %v7296
        %v7301 = vand.u32 2147483647, %v7262
        %vm7302 = vcmp.eq.f32.partialorder %v7301, 8.507059e+37
        %v7303 = vand.u32 %v7262, 2147483648
        %v7304 = vor.u32 1.1754944e-38, %v7303
        %v7305 = vsel %vm7302, %v7304, %v7300
        %v7306 = vmul.f32 1.0, %v7305
        %v7307 = vrcp.pop %v7263
        %v7308 = vmul.f32 %v7263, %v7307
        %v7309 = vsub.f32 1.0, %v7308
        %v7310 = vmul.f32 %v7307, %v7309
        %v7311 = vadd.f32 %v7307, %v7310
        %vm7312 = vweird.f32 %v7263
        %vm7313 = vweird.f32 %v7307
        %vm7314 = vmor %vm7312, %vm7313
        %v7315 = vsel %vm7314, %v7307, %v7311
        %v7316 = vand.u32 2147483647, %v7263
        %vm7317 = vcmp.eq.f32.partialorder %v7316, 8.507059e+37
        %v7318 = vand.u32 %v7263, 2147483648
        %v7319 = vor.u32 1.1754944e-38, %v7318
        %v7320 = vsel %vm7317, %v7319, %v7315
        %v7321 = vmul.f32 1.0, %v7320
        %v7322 = vrcp.pop %v7264
        %v7323 = vmul.f32 %v7264, %v7322
        %v7324 = vsub.f32 1.0, %v7323
        %v7325 = vmul.f32 %v7322, %v7324
        %v7326 = vadd.f32 %v7322, %v7325
        %vm7327 = vweird.f32 %v7264
        %vm7328 = vweird.f32 %v7322
        %vm7329 = vmor %vm7327, %vm7328
        %v7330 = vsel %vm7329, %v7322, %v7326
        %v7331 = vand.u32 2147483647, %v7264
        %vm7332 = vcmp.eq.f32.partialorder %v7331, 8.507059e+37
        %v7333 = vand.u32 %v7264, 2147483648
        %v7334 = vor.u32 1.1754944e-38, %v7333
        %v7335 = vsel %vm7332, %v7334, %v7330
        %v7336 = vmul.f32 1.0, %v7335
        %v7337 = vrcp.pop %v7265
        %v7338 = vmul.f32 %v7265, %v7337
        %v7339 = vsub.f32 1.0, %v7338
        %v7340 = vmul.f32 %v7337, %v7339
        %v7341 = vadd.f32 %v7337, %v7340
        %vm7342 = vweird.f32 %v7265
        %vm7343 = vweird.f32 %v7337
        %vm7344 = vmor %vm7342, %vm7343
        %v7345 = vsel %vm7344, %v7337, %v7341
        %v7346 = vand.u32 2147483647, %v7265
        %vm7347 = vcmp.eq.f32.partialorder %v7346, 8.507059e+37
        %v7348 = vand.u32 %v7265, 2147483648
        %v7349 = vor.u32 1.1754944e-38, %v7348
        %v7350 = vsel %vm7347, %v7349, %v7345
        %v7351 = vmul.f32 1.0, %v7350
        %v7352 = vrcp.pop %v7266
        %v7353 = vmul.f32 %v7266, %v7352
        %v7354 = vsub.f32 1.0, %v7353
        %v7355 = vmul.f32 %v7352, %v7354
        %v7356 = vadd.f32 %v7352, %v7355
        %vm7357 = vweird.f32 %v7266
        %vm7358 = vweird.f32 %v7352
        %vm7359 = vmor %vm7357, %vm7358
        %v7360 = vsel %vm7359, %v7352, %v7356
        %v7361 = vand.u32 2147483647, %v7266
        %vm7362 = vcmp.eq.f32.partialorder %v7361, 8.507059e+37
        %v7363 = vand.u32 %v7266, 2147483648
        %v7364 = vor.u32 1.1754944e-38, %v7363
        %v7365 = vsel %vm7362, %v7364, %v7360
        %v7366 = vmul.f32 1.0, %v7365
        %v7367 = vrcp.pop %v7267
        %v7368 = vmul.f32 %v7267, %v7367
        %v7369 = vsub.f32 1.0, %v7368
        %v7370 = vmul.f32 %v7367, %v7369
        %v7371 = vadd.f32 %v7367, %v7370
        %vm7372 = vweird.f32 %v7267
        %vm7373 = vweird.f32 %v7367
        %vm7374 = vmor %vm7372, %vm7373
        %v7375 = vsel %vm7374, %v7367, %v7371
        %v7376 = vand.u32 2147483647, %v7267
        %vm7377 = vcmp.eq.f32.partialorder %v7376, 8.507059e+37
        %v7378 = vand.u32 %v7267, 2147483648
        %v7379 = vor.u32 1.1754944e-38, %v7378
        %v7380 = vsel %vm7377, %v7379, %v7375
        %v7381 = vmul.f32 1.0, %v7380
        %v7382 = vrcp.pop %v7268
        %v7383 = vmul.f32 %v7268, %v7382
        %v7384 = vsub.f32 1.0, %v7383
        %v7385 = vmul.f32 %v7382, %v7384
        %v7386 = vadd.f32 %v7382, %v7385
        %vm7387 = vweird.f32 %v7268
        %vm7388 = vweird.f32 %v7382
        %vm7389 = vmor %vm7387, %vm7388
        %v7390 = vsel %vm7389, %v7382, %v7386
        %v7391 = vand.u32 2147483647, %v7268
        %vm7392 = vcmp.eq.f32.partialorder %v7391, 8.507059e+37
        %v7393 = vand.u32 %v7268, 2147483648
        %v7394 = vor.u32 1.1754944e-38, %v7393
        %v7395 = vsel %vm7392, %v7394, %v7390
        %v7396 = vmul.f32 1.0, %v7395
        %v7397 = vrcp.pop %v7269
        %v7398 = vmul.f32 %v7269, %v7397
        %v7399 = vsub.f32 1.0, %v7398
        %v7400 = vmul.f32 %v7397, %v7399
        %v7401 = vadd.f32 %v7397, %v7400
        %vm7402 = vweird.f32 %v7269
        %vm7403 = vweird.f32 %v7397
        %vm7404 = vmor %vm7402, %vm7403
        %v7405 = vsel %vm7404, %v7397, %v7401
        %v7406 = vand.u32 2147483647, %v7269
        %vm7407 = vcmp.eq.f32.partialorder %v7406, 8.507059e+37
        %v7408 = vand.u32 %v7269, 2147483648
        %v7409 = vor.u32 1.1754944e-38, %v7408
        %v7410 = vsel %vm7407, %v7409, %v7405
        %v7411 = vmul.f32 1.0, %v7410
        %v7412 = vrcp.pop %v7270
        %v7413 = vmul.f32 %v7270, %v7412
        %v7414 = vsub.f32 1.0, %v7413
        %v7415 = vmul.f32 %v7412, %v7414
        %v7416 = vadd.f32 %v7412, %v7415
        %vm7417 = vweird.f32 %v7270
        %vm7418 = vweird.f32 %v7412
        %vm7419 = vmor %vm7417, %vm7418
        %v7420 = vsel %vm7419, %v7412, %v7416
        %v7421 = vand.u32 2147483647, %v7270
        %vm7422 = vcmp.eq.f32.partialorder %v7421, 8.507059e+37
        %v7423 = vand.u32 %v7270, 2147483648
        %v7424 = vor.u32 1.1754944e-38, %v7423
        %v7425 = vsel %vm7422, %v7424, %v7420
        %v7426 = vmul.f32 1.0, %v7425
        %v7427 = vrcp.pop %v7271
        %v7428 = vmul.f32 %v7271, %v7427
        %v7429 = vsub.f32 1.0, %v7428
        %v7430 = vmul.f32 %v7427, %v7429
        %v7431 = vadd.f32 %v7427, %v7430
        %vm7432 = vweird.f32 %v7271
        %vm7433 = vweird.f32 %v7427
        %vm7434 = vmor %vm7432, %vm7433
        %v7435 = vsel %vm7434, %v7427, %v7431
        %v7436 = vand.u32 2147483647, %v7271
        %vm7437 = vcmp.eq.f32.partialorder %v7436, 8.507059e+37
        %v7438 = vand.u32 %v7271, 2147483648
        %v7439 = vor.u32 1.1754944e-38, %v7438
        %v7440 = vsel %vm7437, %v7439, %v7435
        %v7441 = vmul.f32 1.0, %v7440
        %v7442 = vrcp.pop %v7272
        %v7443 = vmul.f32 %v7272, %v7442
        %v7444 = vsub.f32 1.0, %v7443
        %v7445 = vmul.f32 %v7442, %v7444
        %v7446 = vadd.f32 %v7442, %v7445
        %vm7447 = vweird.f32 %v7272
        %vm7448 = vweird.f32 %v7442
        %vm7449 = vmor %vm7447, %vm7448
        %v7450 = vsel %vm7449, %v7442, %v7446
        %v7451 = vand.u32 2147483647, %v7272
        %vm7452 = vcmp.eq.f32.partialorder %v7451, 8.507059e+37
        %v7453 = vand.u32 %v7272, 2147483648
        %v7454 = vor.u32 1.1754944e-38, %v7453
        %v7455 = vsel %vm7452, %v7454, %v7450
        %v7456 = vmul.f32 1.0, %v7455
        %v7457 = vrcp.pop %v7273
        %v7458 = vmul.f32 %v7273, %v7457
        %v7459 = vsub.f32 1.0, %v7458
        %v7460 = vmul.f32 %v7457, %v7459
        %v7461 = vadd.f32 %v7457, %v7460
        %vm7462 = vweird.f32 %v7273
        %vm7463 = vweird.f32 %v7457
        %vm7464 = vmor %vm7462, %vm7463
        %v7465 = vsel %vm7464, %v7457, %v7461
        %v7466 = vand.u32 2147483647, %v7273
        %vm7467 = vcmp.eq.f32.partialorder %v7466, 8.507059e+37
        %v7468 = vand.u32 %v7273, 2147483648
        %v7469 = vor.u32 1.1754944e-38, %v7468
        %v7470 = vsel %vm7467, %v7469, %v7465
        %v7471 = vmul.f32 1.0, %v7470
        %v7472 = vrcp.pop %v7274
        %v7473 = vmul.f32 %v7274, %v7472
        %v7474 = vsub.f32 1.0, %v7473
        %v7475 = vmul.f32 %v7472, %v7474
        %v7476 = vadd.f32 %v7472, %v7475
        %vm7477 = vweird.f32 %v7274
        %vm7478 = vweird.f32 %v7472
        %vm7479 = vmor %vm7477, %vm7478
        %v7480 = vsel %vm7479, %v7472, %v7476
        %v7481 = vand.u32 2147483647, %v7274
        %vm7482 = vcmp.eq.f32.partialorder %v7481, 8.507059e+37
        %v7483 = vand.u32 %v7274, 2147483648
        %v7484 = vor.u32 1.1754944e-38, %v7483
        %v7485 = vsel %vm7482, %v7484, %v7480
        %v7486 = vmul.f32 1.0, %v7485
        %v7487 = vrcp.pop %v7275
        %v7488 = vmul.f32 %v7275, %v7487
        %v7489 = vsub.f32 1.0, %v7488
        %v7490 = vmul.f32 %v7487, %v7489
        %v7491 = vadd.f32 %v7487, %v7490
        %vm7492 = vweird.f32 %v7275
        %vm7493 = vweird.f32 %v7487
        %vm7494 = vmor %vm7492, %vm7493
        %v7495 = vsel %vm7494, %v7487, %v7491
        %v7496 = vand.u32 2147483647, %v7275
        %vm7497 = vcmp.eq.f32.partialorder %v7496, 8.507059e+37
        %v7498 = vand.u32 %v7275, 2147483648
        %v7499 = vor.u32 1.1754944e-38, %v7498
        %v7500 = vsel %vm7497, %v7499, %v7495
        %v7501 = vmul.f32 1.0, %v7500
        %v7502 = vrcp.pop %v7276
        %v7503 = vmul.f32 %v7276, %v7502
        %v7504 = vsub.f32 1.0, %v7503
        %v7505 = vmul.f32 %v7502, %v7504
        %v7506 = vadd.f32 %v7502, %v7505
        %vm7507 = vweird.f32 %v7276
        %vm7508 = vweird.f32 %v7502
        %vm7509 = vmor %vm7507, %vm7508
        %v7510 = vsel %vm7509, %v7502, %v7506
        %v7511 = vand.u32 2147483647, %v7276
        %vm7512 = vcmp.eq.f32.partialorder %v7511, 8.507059e+37
        %v7513 = vand.u32 %v7276, 2147483648
        %v7514 = vor.u32 1.1754944e-38, %v7513
        %v7515 = vsel %vm7512, %v7514, %v7510
        %v7516 = vmul.f32 1.0, %v7515
        %v7517 = vmul.f32 %v7291, 1.0614054
        %v7518 = vmul.f32 %v7306, 1.0614054
        %v7519 = vmul.f32 %v7321, 1.0614054
        %v7520 = vmul.f32 %v7336, 1.0614054
        %v7521 = vmul.f32 %v7351, 1.0614054
        %v7522 = vmul.f32 %v7366, 1.0614054
        %v7523 = vmul.f32 %v7381, 1.0614054
        %v7524 = vmul.f32 %v7396, 1.0614054
        %v7525 = vmul.f32 %v7411, 1.0614054
        %v7526 = vmul.f32 %v7426, 1.0614054
        %v7527 = vmul.f32 %v7441, 1.0614054
        %v7528 = vmul.f32 %v7456, 1.0614054
        %v7529 = vmul.f32 %v7471, 1.0614054
        %v7530 = vmul.f32 %v7486, 1.0614054
        %v7531 = vmul.f32 %v7501, 1.0614054
        %v7532 = vmul.f32 %v7516, 1.0614054
        %v7533 = vadd.f32 %v7517, -1.4531521
        %v7534 = vadd.f32 %v7518, -1.4531521
        %v7535 = vadd.f32 %v7519, -1.4531521
        %v7536 = vadd.f32 %v7520, -1.4531521
        %v7537 = vadd.f32 %v7521, -1.4531521
        %v7538 = vadd.f32 %v7522, -1.4531521
        %v7539 = vadd.f32 %v7523, -1.4531521
        %v7540 = vadd.f32 %v7524, -1.4531521
        %v7541 = vadd.f32 %v7525, -1.4531521
        %v7542 = vadd.f32 %v7526, -1.4531521
        %v7543 = vadd.f32 %v7527, -1.4531521
        %v7544 = vadd.f32 %v7528, -1.4531521
        %v7545 = vadd.f32 %v7529, -1.4531521
        %v7546 = vadd.f32 %v7530, -1.4531521
        %v7547 = vadd.f32 %v7531, -1.4531521
        %v7548 = vadd.f32 %v7532, -1.4531521
        %v7549 = vmul.f32 %v7533, %v7291
        %v7550 = vmul.f32 %v7534, %v7306
        %v7551 = vmul.f32 %v7535, %v7321
        %v7552 = vmul.f32 %v7536, %v7336
        %v7553 = vmul.f32 %v7537, %v7351
        %v7554 = vmul.f32 %v7538, %v7366
        %v7555 = vmul.f32 %v7539, %v7381
        %v7556 = vmul.f32 %v7540, %v7396
        %v7557 = vmul.f32 %v7541, %v7411
        %v7558 = vmul.f32 %v7542, %v7426
        %v7559 = vmul.f32 %v7543, %v7441
        %v7560 = vmul.f32 %v7544, %v7456
        %v7561 = vmul.f32 %v7545, %v7471
        %v7562 = vmul.f32 %v7546, %v7486
        %v7563 = vmul.f32 %v7547, %v7501
        %v7564 = vmul.f32 %v7548, %v7516
        %v7565 = vadd.f32 %v7549, 1.4214138
        %v7566 = vadd.f32 %v7550, 1.4214138
        %v7567 = vadd.f32 %v7551, 1.4214138
        %v7568 = vadd.f32 %v7552, 1.4214138
        %v7569 = vadd.f32 %v7553, 1.4214138
        %v7570 = vadd.f32 %v7554, 1.4214138
        %v7571 = vadd.f32 %v7555, 1.4214138
        %v7572 = vadd.f32 %v7556, 1.4214138
        %v7573 = vadd.f32 %v7557, 1.4214138
        %v7574 = vadd.f32 %v7558, 1.4214138
        %v7575 = vadd.f32 %v7559, 1.4214138
        %v7576 = vadd.f32 %v7560, 1.4214138
        %v7577 = vadd.f32 %v7561, 1.4214138
        %v7578 = vadd.f32 %v7562, 1.4214138
        %v7579 = vadd.f32 %v7563, 1.4214138
        %v7580 = vadd.f32 %v7564, 1.4214138
        %v7581 = vmul.f32 %v7565, %v7291
        %v7582 = vmul.f32 %v7566, %v7306
        %v7583 = vmul.f32 %v7567, %v7321
        %v7584 = vmul.f32 %v7568, %v7336
        %v7585 = vmul.f32 %v7569, %v7351
        %v7586 = vmul.f32 %v7570, %v7366
        %v7587 = vmul.f32 %v7571, %v7381
        %v7588 = vmul.f32 %v7572, %v7396
        %v7589 = vmul.f32 %v7573, %v7411
        %v7590 = vmul.f32 %v7574, %v7426
        %v7591 = vmul.f32 %v7575, %v7441
        %v7592 = vmul.f32 %v7576, %v7456
        %v7593 = vmul.f32 %v7577, %v7471
        %v7594 = vmul.f32 %v7578, %v7486
        %v7595 = vmul.f32 %v7579, %v7501
        %v7596 = vmul.f32 %v7580, %v7516
        %v7597 = vadd.f32 %v7581, -0.28449672
        %v7598 = vadd.f32 %v7582, -0.28449672
        %v7599 = vadd.f32 %v7583, -0.28449672
        %v7600 = vadd.f32 %v7584, -0.28449672
        %v7601 = vadd.f32 %v7585, -0.28449672
        %v7602 = vadd.f32 %v7586, -0.28449672
        %v7603 = vadd.f32 %v7587, -0.28449672
        %v7604 = vadd.f32 %v7588, -0.28449672
        %v7605 = vadd.f32 %v7589, -0.28449672
        %v7606 = vadd.f32 %v7590, -0.28449672
        %v7607 = vadd.f32 %v7591, -0.28449672
        %v7608 = vadd.f32 %v7592, -0.28449672
        %v7609 = vadd.f32 %v7593, -0.28449672
        %v7610 = vadd.f32 %v7594, -0.28449672
        %v7611 = vadd.f32 %v7595, -0.28449672
        %v7612 = vadd.f32 %v7596, -0.28449672
        %v7613 = vmul.f32 %v7597, %v7291
        %v7614 = vmul.f32 %v7598, %v7306
        %v7615 = vmul.f32 %v7599, %v7321
        %v7616 = vmul.f32 %v7600, %v7336
        %v7617 = vmul.f32 %v7601, %v7351
        %v7618 = vmul.f32 %v7602, %v7366
        %v7619 = vmul.f32 %v7603, %v7381
        %v7620 = vmul.f32 %v7604, %v7396
        %v7621 = vmul.f32 %v7605, %v7411
        %v7622 = vmul.f32 %v7606, %v7426
        %v7623 = vmul.f32 %v7607, %v7441
        %v7624 = vmul.f32 %v7608, %v7456
        %v7625 = vmul.f32 %v7609, %v7471
        %v7626 = vmul.f32 %v7610, %v7486
        %v7627 = vmul.f32 %v7611, %v7501
        %v7628 = vmul.f32 %v7612, %v7516
        %v7629 = vadd.f32 %v7613, 0.2548296
        %v7630 = vadd.f32 %v7614, 0.2548296
        %v7631 = vadd.f32 %v7615, 0.2548296
        %v7632 = vadd.f32 %v7616, 0.2548296
        %v7633 = vadd.f32 %v7617, 0.2548296
        %v7634 = vadd.f32 %v7618, 0.2548296
        %v7635 = vadd.f32 %v7619, 0.2548296
        %v7636 = vadd.f32 %v7620, 0.2548296
        %v7637 = vadd.f32 %v7621, 0.2548296
        %v7638 = vadd.f32 %v7622, 0.2548296
        %v7639 = vadd.f32 %v7623, 0.2548296
        %v7640 = vadd.f32 %v7624, 0.2548296
        %v7641 = vadd.f32 %v7625, 0.2548296
        %v7642 = vadd.f32 %v7626, 0.2548296
        %v7643 = vadd.f32 %v7627, 0.2548296
        %v7644 = vadd.f32 %v7628, 0.2548296
        %v7645 = vmul.f32 %v7629, %v7291
        %v7646 = vmul.f32 %v7630, %v7306
        %v7647 = vmul.f32 %v7631, %v7321
        %v7648 = vmul.f32 %v7632, %v7336
        %v7649 = vmul.f32 %v7633, %v7351
        %v7650 = vmul.f32 %v7634, %v7366
        %v7651 = vmul.f32 %v7635, %v7381
        %v7652 = vmul.f32 %v7636, %v7396
        %v7653 = vmul.f32 %v7637, %v7411
        %v7654 = vmul.f32 %v7638, %v7426
        %v7655 = vmul.f32 %v7639, %v7441
        %v7656 = vmul.f32 %v7640, %v7456
        %v7657 = vmul.f32 %v7641, %v7471
        %v7658 = vmul.f32 %v7642, %v7486
        %v7659 = vmul.f32 %v7643, %v7501
        %v7660 = vmul.f32 %v7644, %v7516
        %v7661 = vsub.f32 0.0, %v7229
        %v7662 = vsub.f32 0.0, %v7230
        %v7663 = vsub.f32 0.0, %v7231
        %v7664 = vsub.f32 0.0, %v7232
        %v7665 = vsub.f32 0.0, %v7233
        %v7666 = vsub.f32 0.0, %v7234
        %v7667 = vsub.f32 0.0, %v7235
        %v7668 = vsub.f32 0.0, %v7236
        %v7669 = vsub.f32 0.0, %v7237
        %v7670 = vsub.f32 0.0, %v7238
        %v7671 = vsub.f32 0.0, %v7239
        %v7672 = vsub.f32 0.0, %v7240
        %v7673 = vsub.f32 0.0, %v7241
        %v7674 = vsub.f32 0.0, %v7242
        %v7675 = vsub.f32 0.0, %v7243
        %v7676 = vsub.f32 0.0, %v7244
        %v7677 = vmul.f32 %v7661, %v7229
        %v7678 = vmul.f32 %v7662, %v7230
        %v7679 = vmul.f32 %v7663, %v7231
        %v7680 = vmul.f32 %v7664, %v7232
        %v7681 = vmul.f32 %v7665, %v7233
        %v7682 = vmul.f32 %v7666, %v7234
        %v7683 = vmul.f32 %v7667, %v7235
        %v7684 = vmul.f32 %v7668, %v7236
        %v7685 = vmul.f32 %v7669, %v7237
        %v7686 = vmul.f32 %v7670, %v7238
        %v7687 = vmul.f32 %v7671, %v7239
        %v7688 = vmul.f32 %v7672, %v7240
        %v7689 = vmul.f32 %v7673, %v7241
        %v7690 = vmul.f32 %v7674, %v7242
        %v7691 = vmul.f32 %v7675, %v7243
        %v7692 = vmul.f32 %v7676, %v7244
        %v7693 = vmul.f32 %v7677, 1.442695
        %v7694 = vpow.pop %v7693
        %v7695 = vmul.f32 %v7678, 1.442695
        %v7696 = vpow.pop %v7695
        %v7697 = vmul.f32 %v7679, 1.442695
        %v7698 = vpow.pop %v7697
        %v7699 = vmul.f32 %v7680, 1.442695
        %v7700 = vpow.pop %v7699
        %v7701 = vmul.f32 %v7681, 1.442695
        %v7702 = vpow.pop %v7701
        %v7703 = vmul.f32 %v7682, 1.442695
        %v7704 = vpow.pop %v7703
        %v7705 = vmul.f32 %v7683, 1.442695
        %v7706 = vpow.pop %v7705
        %v7707 = vmul.f32 %v7684, 1.442695
        %v7708 = vpow.pop %v7707
        %v7709 = vmul.f32 %v7685, 1.442695
        %v7710 = vpow.pop %v7709
        %v7711 = vmul.f32 %v7686, 1.442695
        %v7712 = vpow.pop %v7711
        %v7713 = vmul.f32 %v7687, 1.442695
        %v7714 = vpow.pop %v7713
        %v7715 = vmul.f32 %v7688, 1.442695
        %v7716 = vpow.pop %v7715
        %v7717 = vmul.f32 %v7689, 1.442695
        %v7718 = vpow.pop %v7717
        %v7719 = vmul.f32 %v7690, 1.442695
        %v7720 = vpow.pop %v7719
        %v7721 = vmul.f32 %v7691, 1.442695
        %v7722 = vpow.pop %v7721
        %v7723 = vmul.f32 %v7692, 1.442695
        %v7724 = vpow.pop %v7723
        %v7725 = vmul.f32 %v7645, %v7694
        %v7726 = vmul.f32 %v7646, %v7696
        %v7727 = vmul.f32 %v7647, %v7698
        %v7728 = vmul.f32 %v7648, %v7700
        %v7729 = vmul.f32 %v7649, %v7702
        %v7730 = vmul.f32 %v7650, %v7704
        %v7731 = vmul.f32 %v7651, %v7706
        %v7732 = vmul.f32 %v7652, %v7708
        %v7733 = vmul.f32 %v7653, %v7710
        %v7734 = vmul.f32 %v7654, %v7712
        %v7735 = vmul.f32 %v7655, %v7714
        %v7736 = vmul.f32 %v7656, %v7716
        %v7737 = vmul.f32 %v7657, %v7718
        %v7738 = vmul.f32 %v7658, %v7720
        %v7739 = vmul.f32 %v7659, %v7722
        %v7740 = vmul.f32 %v7660, %v7724
        %v7741 = vsub.f32 1.0, %v7725
        %v7742 = vsub.f32 1.0, %v7726
        %v7743 = vsub.f32 1.0, %v7727
        %v7744 = vsub.f32 1.0, %v7728
        %v7745 = vsub.f32 1.0, %v7729
        %v7746 = vsub.f32 1.0, %v7730
        %v7747 = vsub.f32 1.0, %v7731
        %v7748 = vsub.f32 1.0, %v7732
        %v7749 = vsub.f32 1.0, %v7733
        %v7750 = vsub.f32 1.0, %v7734
        %v7751 = vsub.f32 1.0, %v7735
        %v7752 = vsub.f32 1.0, %v7736
        %v7753 = vsub.f32 1.0, %v7737
        %v7754 = vsub.f32 1.0, %v7738
        %v7755 = vsub.f32 1.0, %v7739
        %v7756 = vsub.f32 1.0, %v7740
        %vm7757 = vcmp.ge.f32.partialorder %v7213, 0.0
        %vm7758 = vcmp.ge.f32.partialorder %v7214, 0.0
        %vm7759 = vcmp.ge.f32.partialorder %v7215, 0.0
        %vm7760 = vcmp.ge.f32.partialorder %v7216, 0.0
        %vm7761 = vcmp.ge.f32.partialorder %v7217, 0.0
        %vm7762 = vcmp.ge.f32.partialorder %v7218, 0.0
        %vm7763 = vcmp.ge.f32.partialorder %v7219, 0.0
        %vm7764 = vcmp.ge.f32.partialorder %v7220, 0.0
        %vm7765 = vcmp.ge.f32.partialorder %v7221, 0.0
        %vm7766 = vcmp.ge.f32.partialorder %v7222, 0.0
        %vm7767 = vcmp.ge.f32.partialorder %v7223, 0.0
        %vm7768 = vcmp.ge.f32.partialorder %v7224, 0.0
        %vm7769 = vcmp.ge.f32.partialorder %v7225, 0.0
        %vm7770 = vcmp.ge.f32.partialorder %v7226, 0.0
        %vm7771 = vcmp.ge.f32.partialorder %v7227, 0.0
        %vm7772 = vcmp.ge.f32.partialorder %v7228, 0.0
        %v7773 = vsub.f32 0.0, %v7741
        %v7774 = vsub.f32 0.0, %v7742
        %v7775 = vsub.f32 0.0, %v7743
        %v7776 = vsub.f32 0.0, %v7744
        %v7777 = vsub.f32 0.0, %v7745
        %v7778 = vsub.f32 0.0, %v7746
        %v7779 = vsub.f32 0.0, %v7747
        %v7780 = vsub.f32 0.0, %v7748
        %v7781 = vsub.f32 0.0, %v7749
        %v7782 = vsub.f32 0.0, %v7750
        %v7783 = vsub.f32 0.0, %v7751
        %v7784 = vsub.f32 0.0, %v7752
        %v7785 = vsub.f32 0.0, %v7753
        %v7786 = vsub.f32 0.0, %v7754
        %v7787 = vsub.f32 0.0, %v7755
        %v7788 = vsub.f32 0.0, %v7756
        %v7789 = vsel %vm7757, %v7741, %v7773
        %v7790 = vsel %vm7758, %v7742, %v7774
        %v7791 = vsel %vm7759, %v7743, %v7775
        %v7792 = vsel %vm7760, %v7744, %v7776
        %v7793 = vsel %vm7761, %v7745, %v7777
        %v7794 = vsel %vm7762, %v7746, %v7778
        %v7795 = vsel %vm7763, %v7747, %v7779
        %v7796 = vsel %vm7764, %v7748, %v7780
        %v7797 = vsel %vm7765, %v7749, %v7781
        %v7798 = vsel %vm7766, %v7750, %v7782
        %v7799 = vsel %vm7767, %v7751, %v7783
        %v7800 = vsel %vm7768, %v7752, %v7784
        %v7801 = vsel %vm7769, %v7753, %v7785
        %v7802 = vsel %vm7770, %v7754, %v7786
        %v7803 = vsel %vm7771, %v7755, %v7787
        %v7804 = vsel %vm7772, %v7756, %v7788
        %v7805 = vadd.f32 %v7789, 1.0
        %v7806 = vadd.f32 %v7790, 1.0
        %v7807 = vadd.f32 %v7791, 1.0
        %v7808 = vadd.f32 %v7792, 1.0
        %v7809 = vadd.f32 %v7793, 1.0
        %v7810 = vadd.f32 %v7794, 1.0
        %v7811 = vadd.f32 %v7795, 1.0
        %v7812 = vadd.f32 %v7796, 1.0
        %v7813 = vadd.f32 %v7797, 1.0
        %v7814 = vadd.f32 %v7798, 1.0
        %v7815 = vadd.f32 %v7799, 1.0
        %v7816 = vadd.f32 %v7800, 1.0
        %v7817 = vadd.f32 %v7801, 1.0
        %v7818 = vadd.f32 %v7802, 1.0
        %v7819 = vadd.f32 %v7803, 1.0
        %v7820 = vadd.f32 %v7804, 1.0
        %v7821 = vmul.f32 %v7197, %v7805
        %v7822 = vmul.f32 %v7198, %v7806
        %v7823 = vmul.f32 %v7199, %v7807
        %v7824 = vmul.f32 %v7200, %v7808
        %v7825 = vmul.f32 %v7201, %v7809
        %v7826 = vmul.f32 %v7202, %v7810
        %v7827 = vmul.f32 %v7203, %v7811
        %v7828 = vmul.f32 %v7204, %v7812
        %v7829 = vmul.f32 %v7205, %v7813
        %v7830 = vmul.f32 %v7206, %v7814
        %v7831 = vmul.f32 %v7207, %v7815
        %v7832 = vmul.f32 %v7208, %v7816
        %v7833 = vmul.f32 %v7209, %v7817
        %v7834 = vmul.f32 %v7210, %v7818
        %v7835 = vmul.f32 %v7211, %v7819
        %v7836 = vmul.f32 %v7212, %v7820
        %v7837 = vpack.c.bf16 %v7822, %v7821
        %v7838 = vpack.c.bf16 %v7824, %v7823
        %v7839 = vpack.c.bf16 %v7826, %v7825
        %v7840 = vpack.c.bf16 %v7828, %v7827
        %v7841 = vpack.c.bf16 %v7830, %v7829
        %v7842 = vpack.c.bf16 %v7832, %v7831
        %v7843 = vpack.c.bf16 %v7834, %v7833
        %v7844 = vpack.c.bf16 %v7836, %v7835
        %s7845 = scalar_lea.vmem %s8, 96
        %v7846 = vld [vmem:[%s7845] sm:$0xf]
        %v7847 = vld [vmem:[%s7845 + $0x4] sm:$0xf]
        %v7848 = vld [vmem:[%s7845 + $0x8] sm:$0xf]
        %v7849 = vld [vmem:[%s7845 + $0xc] sm:$0xf]
        %v7850 = vld [vmem:[%s7845 + $0x10] sm:$0xf]
        %v7851 = vld [vmem:[%s7845 + $0x14] sm:$0xf]
        %v7852 = vld [vmem:[%s7845 + $0x18] sm:$0xf]
        %v7853 = vld [vmem:[%s7845 + $0x1c] sm:$0xf]
        %v7854 = vperm.slane %v4385, 4
        %v7863 = vunpack.c.l.b16 %v7846
        %v7864 = vunpack.c.l.b16 %v7847
        %v7865 = vunpack.c.l.b16 %v7848
        %v7866 = vunpack.c.l.b16 %v7849
        %v7867 = vunpack.c.l.b16 %v7850
        %v7868 = vunpack.c.l.b16 %v7851
        %v7869 = vunpack.c.l.b16 %v7852
        %v7870 = vunpack.c.l.b16 %v7853
        %v7871 = vpack.c.b16 %v7864, %v7863
        %v7872 = vpack.c.b16 %v7866, %v7865
        %v7873 = vpack.c.b16 %v7868, %v7867
        %v7874 = vpack.c.b16 %v7870, %v7869
        %v7880 = vsel %vm1822, %v7837, 0
        %v7883 = vsel %vm1822, %v7838, 0
        %v7886 = vsel %vm1822, %v7839, 0
        %v7889 = vsel %vm1822, %v7840, 0
        %v7892 = vsel %vm1822, %v7841, 0
        %v7895 = vsel %vm1822, %v7842, 0
        %v7898 = vsel %vm1822, %v7843, 0
        %v7901 = vsel %vm1822, %v7844, 0
        %7903 = vmatpush.bf16.msra.mxu0 0
        %7904 = vmatpush.bf16.msra.mxu0 0
        %7905 = vmatpush.bf16.msra.mxu0 0
        %7906 = vmatpush.bf16.msra.mxu0 0
        %7907 = vmatpush.bf16.msra.mxu0 %v7874
        %7908 = vmatpush.bf16.msra.mxu0 %v7873
        %7909 = vmatpush.bf16.msra.mxu0 %v7872
        %7910 = vmatpush.bf16.msra.mxu0 %v7871
        %7911 = vmatmul.bf16.gmra.mxu0 %v7880
        %v7912 = vpop.f32.mrf.mxu0
        %v7913 = vadd.f32 %v7854, %v7912
        %v7914 = vpop.f32.mrf.mxu0
        %v7915 = vadd.f32 %v7854, %v7914
        %7916 = vmatmul.bf16.gmra.mxu0 %v7883
        %v7917 = vpop.f32.mrf.mxu0
        %v7918 = vadd.f32 %v7854, %v7917
        %v7919 = vpop.f32.mrf.mxu0
        %v7920 = vadd.f32 %v7854, %v7919
        %7921 = vmatmul.bf16.gmra.mxu0 %v7886
        %v7922 = vpop.f32.mrf.mxu0
        %v7923 = vadd.f32 %v7854, %v7922
        %v7924 = vpop.f32.mrf.mxu0
        %v7925 = vadd.f32 %v7854, %v7924
        %7926 = vmatmul.bf16.gmra.mxu0 %v7889
        %v7927 = vpop.f32.mrf.mxu0
        %v7928 = vadd.f32 %v7854, %v7927
        %v7929 = vpop.f32.mrf.mxu0
        %v7930 = vadd.f32 %v7854, %v7929
        %7931 = vmatmul.bf16.gmra.mxu0 %v7892
        %v7932 = vpop.f32.mrf.mxu0
        %v7933 = vadd.f32 %v7854, %v7932
        %v7934 = vpop.f32.mrf.mxu0
        %v7935 = vadd.f32 %v7854, %v7934
        %7936 = vmatmul.bf16.gmra.mxu0 %v7895
        %v7937 = vpop.f32.mrf.mxu0
        %v7938 = vadd.f32 %v7854, %v7937
        %v7939 = vpop.f32.mrf.mxu0
        %v7940 = vadd.f32 %v7854, %v7939
        %7941 = vmatmul.bf16.gmra.mxu0 %v7898
        %v7942 = vpop.f32.mrf.mxu0
        %v7943 = vadd.f32 %v7854, %v7942
        %v7944 = vpop.f32.mrf.mxu0
        %v7945 = vadd.f32 %v7854, %v7944
        %7946 = vmatmul.bf16.gmra.mxu0 %v7901
        %v7947 = vpop.f32.mrf.mxu0
        %v7948 = vadd.f32 %v7854, %v7947
        %v7949 = vpop.f32.mrf.mxu0
        %v7950 = vadd.f32 %v7854, %v7949
        %7951 = vdwg.mxu0
        %v7952 = vadd.f32 %v7913, %v6673
        %v7953 = vadd.f32 %v7915, %v6675
        %v7954 = vadd.f32 %v7918, %v6678
        %v7955 = vadd.f32 %v7920, %v6680
        %v7956 = vadd.f32 %v7923, %v6683
        %v7957 = vadd.f32 %v7925, %v6685
        %v7958 = vadd.f32 %v7928, %v6688
        %v7959 = vadd.f32 %v7930, %v6690
        %v7960 = vadd.f32 %v7933, %v6693
        %v7961 = vadd.f32 %v7935, %v6695
        %v7962 = vadd.f32 %v7938, %v6698
        %v7963 = vadd.f32 %v7940, %v6700
        %v7964 = vadd.f32 %v7943, %v6703
        %v7965 = vadd.f32 %v7945, %v6705
        %v7966 = vadd.f32 %v7948, %v6708
        %v7967 = vadd.f32 %v7950, %v6710
        %7968 = vst.msk [vmem:[%s474] sm:$0xff] %vm501, %v7952
        %7969 = vst.msk [vmem:[%s474 + $0x8] sm:$0xff] %vm501, %v7953
        %7970 = vst.msk [vmem:[%s474 + $0x10] sm:$0xff] %vm501, %v7954
        %7971 = vst.msk [vmem:[%s474 + $0x18] sm:$0xff] %vm501, %v7955
        %7972 = vst.msk [vmem:[%s474 + $0x20] sm:$0xff] %vm501, %v7956
        %7973 = vst.msk [vmem:[%s474 + $0x28] sm:$0xff] %vm501, %v7957
        %7974 = vst.msk [vmem:[%s474 + $0x30] sm:$0xff] %vm501, %v7958
        %7975 = vst.msk [vmem:[%s474 + $0x38] sm:$0xff] %vm501, %v7959
        %7976 = vst.msk [vmem:[%s474 + $0x40] sm:$0xff] %vm501, %v7960
        %7977 = vst.msk [vmem:[%s474 + $0x48] sm:$0xff] %vm501, %v7961
        %7978 = vst.msk [vmem:[%s474 + $0x50] sm:$0xff] %vm501, %v7962
        %7979 = vst.msk [vmem:[%s474 + $0x58] sm:$0xff] %vm501, %v7963
        %7980 = vst.msk [vmem:[%s474 + $0x60] sm:$0xff] %vm501, %v7964
        %7981 = vst.msk [vmem:[%s474 + $0x68] sm:$0xff] %vm501, %v7965
        %7982 = vst.msk [vmem:[%s474 + $0x70] sm:$0xff] %vm501, %v7966
        %7983 = vst.msk [vmem:[%s474 + $0x78] sm:$0xff] %vm501, %v7967
        %s7984 = sand.u32 %s294, 1
        %s7985 = scalar_lea.sflag [#allocation4], %s7984
        %s7986 = sand.u32 %s294, 1
        %s7987 = smul.addr %s7986, 128
        %s7988 = scalar_lea.vmem [#allocation10], %s7987
        // Predicated region
        $region85: #{retnet_forward.1} parent=67 // pred_check
          %p7989 = pneg %p304
        $region86: #{retnet_forward.1} parent=67 // pred_check_branch
          %7991 = sbr.rel (%p7989) target = $region88
        $region87: #{retnet_forward.1} parent=67 // pred_region
          %s7992 = smul.u32 16, %s29
          %7994 = vsyncadd %s7985, 0
          %s7995 = smul.addr %s7992, 8
          %s7996 = scalar_lea.hbm %s12, %s7995
          %s7997 = sshll.u32 %s7988, 4
          %s7998 = int_to_ptr.vmem [resolvable:$true] %s7997
          %s7999 = sshll.u32 %s7996, 4
          %s8000 = int_to_ptr.hbm [resolvable:$true] %s7999
          %8005 = dma.vmem_to_hbm [thread:$0]  %s7998, 2048, %s8000, %s7985, 128, 128, 8
        $region88: #{retnet_forward.1} parent=67 // pred_fallthru
          _
      $region68: #{retnet_forward.1} parent=5 // pred_fallthru
        _
      %p8006 = scmp.le.s32.totalorder 2, %s24
      // Predicated region
      $region89: #{retnet_forward.1} parent=5 // pred_check
        %p8007 = pneg %p8006
      $region90: #{retnet_forward.1} parent=5 // pred_check_branch
        %8009 = sbr.rel (%p8007) target = $region92
      $region91: #{retnet_forward.1} parent=5 // pred_region
        %s8010 = ssub.s32 %s24, 2
        // Predicated region
        $region93: #{retnet_forward.1} parent=91 // pred_check
          %p8011 = pneg %p310
        $region94: #{retnet_forward.1} parent=91 // pred_check_branch
          %8013 = sbr.rel (%p8011) target = $region96
        $region95: #{retnet_forward.1} parent=91 // pred_region
          %s8014 = sand.u32 %s295, 1
          %s8015 = scalar_lea.sflag [#allocation4], %s8014
          %s8016 = sand.u32 %s295, 1
          %s8017 = smul.addr %s8016, 128
          %s8018 = scalar_lea.vmem [#allocation10], %s8017
          %8020 = dma.done %s8015, 2048
        $region96: #{retnet_forward.1} parent=91 // pred_fallthru
          _
      $region92: #{retnet_forward.1} parent=5 // pred_fallthru
        _
    $region6: #{retnet_forward.1} parent=1 // loop_footer
      %s28 = sadd.s32 1, %s24
    $region7: #{retnet_forward.1} parent=1 // loop_footer_branch
      %23 = sbr.rel target = $region3
    $region8: #{retnet_forward.1} parent=1 // loop_exit
      _
    %8021 = vsyncpa [#allocation3], 1
    %s8022 = scalar_lea.sflag [#allocation3], 1
    %8023 = vsyncpa %s8022, 1
    %8024 = vsyncpa [#allocation6], 1
    %8025 = vsyncpa [#allocation9], 1
    %8026 = vsyncpa [#allocation4], 1
    %s8027 = scalar_lea.sflag [#allocation4], 1
    %8028 = vsyncpa %s8027, 1

</llo_original>
